<compile_context>
chip_gen: v7x
topology: tpu7x:2x2x1
jax: 0.10.0
libtpu: 0.0.40
codegen_flags: <defaults>
</compile_context>

<pallas_src>
import numpy as np
import jax
import jax.numpy as jnp
from jax.experimental import pallas as pl
from jax.experimental.pallas import tpu as pltpu


# ----------------------------------------------------------------------------
# host-side static helpers
# ----------------------------------------------------------------------------
def gen_mask_np(L):
    col = np.concatenate([np.arange(L), np.arange(L - 2, -1, -1)])
    mask = np.abs(col[None, :] - (L - 1)) <= np.arange(L)[:, None]
    return mask.reshape(-1)  # (L*(2L-1),) bool, |m| <= l


def fs_size(nu, Li):
    return 2 * nu * (Li - 1) + 1


def reused_levels(correlation):
    """fs levels that are consumed by a later convolution (must live in scratch)."""
    s = set()
    for nu in range(2, correlation + 1):
        s.add(nu // 2)
        s.add(nu - nu // 2)
    return sorted(s)


# ----------------------------------------------------------------------------
# Pallas kernel factory (coefficient tables are trace-time constants)
# ----------------------------------------------------------------------------
def make_emtp_kernel(Li, Lo, correlation, TN, C, Y_re, Y_im, H_re, H_im):
    M1 = 2 * Li - 1
    Mo = 2 * Lo - 1
    sizes = {nu: fs_size(nu, Li) for nu in range(1, correlation + 1)}
    reused = reused_levels(correlation)
    reused_set = set(reused)

    def kernel(feat_ref, w_ref, out_ref, *scratch_refs):
        zero = jnp.zeros((TN, C), jnp.float32)

        def fin(acc):
            return zero if acc is None else acc

        def cmadd(acc, x, c):
            # acc += x * c with exact-zero constant skipping (constants are static).
            c = float(c)
            if c == 0.0:
                return acc
            t = x * c
            return t if acc is None else acc + t

        fs_refs = {}
        i = 0
        for nu in reused:
            fs_refs[nu] = (scratch_refs[i], scratch_refs[i + 1])
            i += 2

        feat = feat_ref[...]                              # (Li, M1, TN, C)

        # ---- nu = 1 term: windowed features * per-node weights (register acc) ----
        w1 = [w_ref[0, l] for l in range(Lo)]             # (TN, C) each
        out_acc = [[feat[l, Li - Lo + mi] * w1[l] for mi in range(Mo)]
                   for l in range(Lo)]

        # ---- fs1 = sh2fs(feat, Y): fs1[u, m] = sum_l feat[l, m] * Y[l, u, m] ----
        if 1 in reused_set:
            re_ref, im_ref = fs_refs[1]
            for u in range(M1):
                for m in range(M1):
                    acc_re, acc_im = None, None
                    for l in range(Li):
                        f = feat[l, m]
                        acc_re = cmadd(acc_re, f, Y_re[l, u, m])
                        acc_im = cmadd(acc_im, f, Y_im[l, u, m])
                    re_ref[u, m] = fin(acc_re)
                    im_ref[u, m] = fin(acc_im)

        def conv_column(a_nu, b_nu, m):
            """Column m (all u) of conv2d_full(fs[a_nu], fs[b_nu]); register accumulation.
            NOTE: fs grids are square (U x U) by construction."""
            Ua, Ub = sizes[a_nu], sizes[b_nu]
            Uo = Ua + Ub - 1
            a_re_ref, a_im_ref = fs_refs[a_nu]
            b_re_ref, b_im_ref = fs_refs[b_nu]
            col_re = [None] * Uo
            col_im = [None] * Uo
            for j_a in range(Ua):
                j_b = m - j_a
                if j_b < 0 or j_b >= Ub:
                    continue
                # hoist the needed b column (loaded once per (j_a, m))
                b_col = [(b_re_ref[i_b, j_b], b_im_ref[i_b, j_b]) for i_b in range(Ub)]
                for i_a in range(Ua):
                    a_re = a_re_ref[i_a, j_a]
                    a_im = a_im_ref[i_a, j_a]
                    for i_b in range(Ub):
                        b_re, b_im = b_col[i_b]
                        u = i_a + i_b
                        t_re = a_re * b_re - a_im * b_im
                        t_im = a_re * b_im + a_im * b_re
                        col_re[u] = t_re if col_re[u] is None else col_re[u] + t_re
                        col_im[u] = t_im if col_im[u] is None else col_im[u] + t_im
            return [fin(x) for x in col_re], [fin(x) for x in col_im]

        # ---- higher correlations: conv (+ optional materialize) fused with fs2sh ----
        for nu in range(2, correlation + 1):
            a_nu, b_nu = nu // 2, nu - nu // 2
            Uo = sizes[nu]
            lmax = nu * (Li - 1)
            off = lmax - Lo + 1
            Hre, Him = H_re[nu], H_im[nu]
            w_nu = [w_ref[nu - 1, l] for l in range(Lo)]

            materialize = nu in reused_set
            m_range = range(Uo) if materialize else range(off, off + Mo)
            for m in m_range:
                col_re, col_im = conv_column(a_nu, b_nu, m)
                if materialize:
                    re_ref, im_ref = fs_refs[nu]
                    for u in range(Uo):
                        re_ref[u, m] = col_re[u]
                        im_ref[u, m] = col_im[u]
                if off <= m < off + Mo:
                    mi = m - off
                    for l in range(Lo):
                        # Re( sum_u fs[u,m] * H[l,u,m] )
                        sh = None
                        for u in range(Uo):
                            sh = cmadd(sh, col_re[u], Hre[l, u, m])
                            sh = cmadd(sh, col_im[u], -Him[l, u, m])
                        if sh is not None:
                            out_acc[l][mi] = out_acc[l][mi] + sh * w_nu[l]

        # ---- single aligned store per output slab ----
        for l in range(Lo):
            for mi in range(Mo):
                out_ref[l, mi] = out_acc[l][mi]

    return kernel


# ----------------------------------------------------------------------------
# wrapper (glue: mask scatter, weight selection, final irreps rearrangement)
# ----------------------------------------------------------------------------
def efficient_multi_tensor_product(atom_feat, atom_type, weights, coeffs,
                                   Li, Lo, correlation, tile_nodes=8):
    """atom_feat: (n, C, Li**2) f32 (torch layout); atom_type: (n, E) f32.
    weights: {nu: (E, C, Lo)}; coeffs: 'Y_re','Y_im', ('H_re',nu), ('H_im',nu).
    Returns (n, C * Lo**2)."""
    n, C, _ = atom_feat.shape
    M1 = 2 * Li - 1
    Mo = 2 * Lo - 1
    TN = tile_nodes
    assert Lo <= Li
    assert TN % 8 == 0 and n % TN == 0, "node tile must be a multiple of 8 and divide n"

    idx_i = np.nonzero(gen_mask_np(Li))[0]
    idx_o = np.nonzero(gen_mask_np(Lo))[0]

    # scatter into dense (l, m) grid, then kernel layout (Li, M1, n, C)
    # (nodes on the sublane axis, channels on the 128-lane axis)
    feat3D = jnp.zeros((n, C, Li * M1), jnp.float32).at[:, :, idx_i].set(
        atom_feat.astype(jnp.float32))
    feat_k = feat3D.reshape(n, C, Li, M1).transpose(2, 3, 0, 1)

    # per-node weight selection, packed into ONE (correlation, Lo, n, C) input
    w_packed = jnp.stack(
        [jnp.einsum('ne,ecl->lnc', atom_type, weights[nu]).astype(jnp.float32)
         for nu in range(1, correlation + 1)], axis=0)

    # static coefficient tables -> trace-time constants baked into the kernel
    Y_re = np.asarray(coeffs['Y_re'], np.float32)
    Y_im = np.asarray(coeffs['Y_im'], np.float32)
    H_re = {nu: np.asarray(coeffs[('H_re', nu)], np.float32)
            for nu in range(2, correlation + 1)}
    H_im = {nu: np.asarray(coeffs[('H_im', nu)], np.float32)
            for nu in range(2, correlation + 1)}

    kernel = make_emtp_kernel(Li, Lo, correlation, TN, C, Y_re, Y_im, H_re, H_im)

    def node_spec(d0, d1):
        return pl.BlockSpec((d0, d1, TN, C), lambda i: (0, 0, i, 0))

    # scratch only for fs levels reused by a later convolution;
    # VMEM use = 2 * sum(U_nu^2) * TN * C * 4 B  (tiny at these angular sizes; stays well
    # under v7x's 64 MiB even for TN up to ~64-128).
    scratch = []
    for nu in reused_levels(correlation):
        s = fs_size(nu, Li)
        scratch += [pltpu.VMEM((s, s, TN, C), jnp.float32),
                    pltpu.VMEM((s, s, TN, C), jnp.float32)]

    result4D = pl.pallas_call(
        kernel,
        out_shape=jax.ShapeDtypeStruct((Lo, Mo, n, C), jnp.float32),
        grid_spec=pltpu.PrefetchScalarGridSpec(
            num_scalar_prefetch=0,
            grid=(n // TN,),
            in_specs=[node_spec(Li, M1), node_spec(correlation, Lo)],
            out_specs=node_spec(Lo, Mo),
            scratch_shapes=scratch),
        compiler_params=pltpu.CompilerParams(
            dimension_semantics=("parallel",)),
    )(feat_k, w_packed)

    # back to torch layout, mask gather, split per-l / flatten / concat
    # TODO(synk): final irreps flatten interleaves channel (lane) and m axes; kept in XLA
    # (tiny tensor) rather than forcing a lane<->m transpose inside the kernel.
    result = result4D.transpose(2, 3, 0, 1).reshape(n, C, Lo * Mo)
    result3D = result[:, :, idx_o]                      # (n, C, Lo**2)
    pieces, s = [], 0
    for l in range(Lo):
        sz = 2 * l + 1
        pieces.append(result3D[:, :, s:s + sz].reshape(n, C * sz))
        s += sz
    return jnp.concatenate(pieces, axis=-1)


# ----------------------------------------------------------------------------
# pure numpy reference (mirrors the torch forward semantics)
# ----------------------------------------------------------------------------
def reference_forward_np(atom_feat, atom_type, weights, coeffs, Li, Lo, correlation):
    af = np.asarray(atom_feat, np.float64)
    at = np.asarray(atom_type, np.float64)
    n, C, _ = af.shape
    M1 = 2 * Li - 1
    feat3D = np.zeros((n, C, Li * M1))
    feat3D[:, :, np.nonzero(gen_mask_np(Li))[0]] = af
    feat4D = feat3D.reshape(n, C, Li, M1)
    Y = np.asarray(coeffs['Y_re'], np.float64) + 1j * np.asarray(coeffs['Y_im'], np.float64)

    def sel_w(nu):
        return np.einsum('ne,ecl->ncl', at, np.asarray(weights[nu], np.float64))[..., None]

    def conv2d_full(a, b):
        n_, c_, Ua, Ma = a.shape
        _, _, Ub, Mb = b.shape
        out = np.zeros((n_, c_, Ua + Ub - 1, Ma + Mb - 1), np.complex128)
        for i in range(Ua):
            for j in range(Ma):
                out[:, :, i:i + Ub, j:j + Mb] += a[:, :, i:i + 1, j:j + 1] * b
        return out

    result = feat4D[:, :, :Lo, Li - Lo: Li + Lo - 1] * sel_w(1)
    fs = {1: np.einsum('nclm,lum->ncum', feat4D, Y)}
    for nu in range(2, correlation + 1):
        fs[nu] = conv2d_full(fs[nu // 2], fs[nu - nu // 2])
        H = (np.asarray(coeffs[('H_re', nu)], np.float64)
             + 1j * np.asarray(coeffs[('H_im', nu)], np.float64))
        sh = np.einsum('ncum,lum->nclm', fs[nu], H).real
        lmax = nu * (Li - 1)
        result += sel_w(nu) * sh[:, :, :Lo, lmax - Lo + 1: lmax + Lo]

    result3D = result.reshape(n, C, -1)[:, :, np.nonzero(gen_mask_np(Lo))[0]]
    pieces, s = [], 0
    for l in range(Lo):
        sz = 2 * l + 1
        pieces.append(result3D[:, :, s:s + sz].reshape(n, -1))
        s += sz
    return np.concatenate(pieces, axis=-1)


# ----------------------------------------------------------------------------
if __name__ == "__main__":
    Li, Lo, correlation = 2, 2, 3     # irreps_in lmax=1, irreps_out lmax=1
    C = 128                           # "dimensions" (channel multiplicity) -> lane axis
    num_elements = 3
    n_nodes = 64                      # 8 grid steps at TN=8 (keeps both v7x TCs busy)

    key = jax.random.PRNGKey(0)
    keys = jax.random.split(key, 16)

    atom_feat = jax.random.normal(keys[0], (n_nodes, C, Li * Li), jnp.float32)
    types = jax.random.randint(keys[1], (n_nodes,), 0, num_elements)
    atom_type = jax.nn.one_hot(types, num_elements, dtype=jnp.float32)

    # learnable weights (torch shape (1, num_elements, dimensions, Lo) -> (E, C, Lo))
    weights = {}
    for nu in range(1, correlation + 1):
        weights[nu] = 0.5 * jax.random.normal(keys[2 + nu], (num_elements, C, Lo), jnp.float32)

    # TODO(synk): the real module loads precomputed sh<->fourier conversion tables
    # (coefficient_sh2fs.pt / coefficient_fs2sh.pt); synthesized deterministically here.
    coeffs = {}
    k = 8
    coeffs['Y_re'] = 0.3 * jax.random.normal(keys[k], (Li, 2 * Li - 1, 2 * Li - 1), jnp.float32); k += 1
    coeffs['Y_im'] = 0.3 * jax.random.normal(keys[k], (Li, 2 * Li - 1, 2 * Li - 1), jnp.float32); k += 1
    for nu in range(2, correlation + 1):
        lmax = nu * (Li - 1)
        shp = (lmax + 1, 2 * lmax + 1, 2 * lmax + 1)
        coeffs[('H_re', nu)] = 0.2 * jax.random.normal(keys[k], shp, jnp.float32); k += 1
        coeffs[('H_im', nu)] = 0.2 * jax.random.normal(keys[k], shp, jnp.float32); k += 1

    out = efficient_multi_tensor_product(atom_feat, atom_type, weights, coeffs,
                                         Li, Lo, correlation, tile_nodes=8)
    out = jax.block_until_ready(out)

    ref = reference_forward_np(np.asarray(atom_feat), np.asarray(atom_type),
                               {nu: np.asarray(w) for nu, w in weights.items()},
                               {kk: np.asarray(v) for kk, v in coeffs.items()},
                               Li, Lo, correlation)
    assert out.shape == (n_nodes, C * Lo * Lo)
    np.testing.assert_allclose(np.asarray(out), ref, rtol=2e-3, atol=2e-3)
    print("KERNEL_OK")
</pallas_src>

<mosaic_0001>
module attributes {stable_mosaic.version = 11 : i64} {
  func.func @kernel(%arg0: i32, %arg1: memref<2x3x8x128xf32, #tpu.memory_space<vmem>>, %arg2: memref<3x2x8x128xf32, #tpu.memory_space<vmem>>, %arg3: memref<2x3x8x128xf32, #tpu.memory_space<vmem>>, %arg4: memref<3x3x8x128xf32, #tpu.memory_space<vmem>>, %arg5: memref<3x3x8x128xf32, #tpu.memory_space<vmem>>, %arg6: memref<5x5x8x128xf32, #tpu.memory_space<vmem>>, %arg7: memref<5x5x8x128xf32, #tpu.memory_space<vmem>>) attributes {dimension_semantics = [#tpu.dimension_semantics<parallel>], iteration_bounds = array<i64: 8>, scalar_prefetch = 0 : i64, scratch_operands = 4 : i64, tpu.core_type = #tpu.core_type<tc>, window_params = [{transform_indices = @transform_0, window_bounds = array<i64: 2, 3, 8, 128>}, {transform_indices = @transform_1, window_bounds = array<i64: 3, 2, 8, 128>}, {transform_indices = @transform_2, window_bounds = array<i64: 2, 3, 8, 128>}]} {
    %c0 = arith.constant 0 : index
    %c0_0 = arith.constant 0 : index
    %c0_1 = arith.constant 0 : index
    %c0_2 = arith.constant 0 : index
    %0 = vector.load %arg1[%c0, %c0_0, %c0_1, %c0_2] : memref<2x3x8x128xf32, #tpu.memory_space<vmem>>, vector<2x3x8x128xf32>
    %c0_3 = arith.constant 0 : index
    %c0_4 = arith.constant 0 : index
    %c0_5 = arith.constant 0 : index
    %c0_6 = arith.constant 0 : index
    %1 = vector.load %arg2[%c0_3, %c0_4, %c0_5, %c0_6] : memref<3x2x8x128xf32, #tpu.memory_space<vmem>>, vector<1x1x8x128xf32>
    %2 = vector.shape_cast %1 : vector<1x1x8x128xf32> to vector<8x128xf32>
    %c0_7 = arith.constant 0 : index
    %c1 = arith.constant 1 : index
    %c0_8 = arith.constant 0 : index
    %c0_9 = arith.constant 0 : index
    %3 = vector.load %arg2[%c0_7, %c1, %c0_8, %c0_9] : memref<3x2x8x128xf32, #tpu.memory_space<vmem>>, vector<1x1x8x128xf32>
    %4 = vector.shape_cast %3 : vector<1x1x8x128xf32> to vector<8x128xf32>
    %5 = vector.extract_strided_slice %0 {offsets = [0, 0, 0, 0], sizes = [1, 1, 8, 128], strides = [1, 1, 1, 1]} : vector<2x3x8x128xf32> to vector<1x1x8x128xf32>
    %6 = vector.shape_cast %5 : vector<1x1x8x128xf32> to vector<8x128xf32>
    %7 = arith.mulf %6, %2 : vector<8x128xf32>
    %8 = vector.extract_strided_slice %0 {offsets = [0, 1, 0, 0], sizes = [1, 1, 8, 128], strides = [1, 1, 1, 1]} : vector<2x3x8x128xf32> to vector<1x1x8x128xf32>
    %9 = vector.shape_cast %8 : vector<1x1x8x128xf32> to vector<8x128xf32>
    %10 = arith.mulf %9, %2 : vector<8x128xf32>
    %11 = vector.extract_strided_slice %0 {offsets = [0, 2, 0, 0], sizes = [1, 1, 8, 128], strides = [1, 1, 1, 1]} : vector<2x3x8x128xf32> to vector<1x1x8x128xf32>
    %12 = vector.shape_cast %11 : vector<1x1x8x128xf32> to vector<8x128xf32>
    %13 = arith.mulf %12, %2 : vector<8x128xf32>
    %14 = vector.extract_strided_slice %0 {offsets = [1, 0, 0, 0], sizes = [1, 1, 8, 128], strides = [1, 1, 1, 1]} : vector<2x3x8x128xf32> to vector<1x1x8x128xf32>
    %15 = vector.shape_cast %14 : vector<1x1x8x128xf32> to vector<8x128xf32>
    %16 = arith.mulf %15, %4 : vector<8x128xf32>
    %17 = vector.extract_strided_slice %0 {offsets = [1, 1, 0, 0], sizes = [1, 1, 8, 128], strides = [1, 1, 1, 1]} : vector<2x3x8x128xf32> to vector<1x1x8x128xf32>
    %18 = vector.shape_cast %17 : vector<1x1x8x128xf32> to vector<8x128xf32>
    %19 = arith.mulf %18, %4 : vector<8x128xf32>
    %20 = vector.extract_strided_slice %0 {offsets = [1, 2, 0, 0], sizes = [1, 1, 8, 128], strides = [1, 1, 1, 1]} : vector<2x3x8x128xf32> to vector<1x1x8x128xf32>
    %21 = vector.shape_cast %20 : vector<1x1x8x128xf32> to vector<8x128xf32>
    %22 = arith.mulf %21, %4 : vector<8x128xf32>
    %23 = vector.extract_strided_slice %0 {offsets = [0, 0, 0, 0], sizes = [1, 1, 8, 128], strides = [1, 1, 1, 1]} : vector<2x3x8x128xf32> to vector<1x1x8x128xf32>
    %24 = vector.shape_cast %23 : vector<1x1x8x128xf32> to vector<8x128xf32>
    %cst = arith.constant -0.193757266 : f32
    %25 = vector.broadcast %cst : f32 to vector<8x128xf32>
    %26 = arith.mulf %24, %25 : vector<8x128xf32>
    %cst_10 = arith.constant 0.0216295868 : f32
    %27 = vector.broadcast %cst_10 : f32 to vector<8x128xf32>
    %28 = arith.mulf %24, %27 : vector<8x128xf32>
    %29 = vector.extract_strided_slice %0 {offsets = [1, 0, 0, 0], sizes = [1, 1, 8, 128], strides = [1, 1, 1, 1]} : vector<2x3x8x128xf32> to vector<1x1x8x128xf32>
    %30 = vector.shape_cast %29 : vector<1x1x8x128xf32> to vector<8x128xf32>
    %cst_11 = arith.constant -0.116234392 : f32
    %31 = vector.broadcast %cst_11 : f32 to vector<8x128xf32>
    %32 = arith.mulf %30, %31 : vector<8x128xf32>
    %33 = arith.addf %26, %32 : vector<8x128xf32>
    %cst_12 = arith.constant 0.252957523 : f32
    %34 = vector.broadcast %cst_12 : f32 to vector<8x128xf32>
    %35 = arith.mulf %30, %34 : vector<8x128xf32>
    %36 = arith.addf %28, %35 : vector<8x128xf32>
    %c0_13 = arith.constant 0 : index
    %c0_14 = arith.constant 0 : index
    %c0_15 = arith.constant 0 : index
    %c0_16 = arith.constant 0 : index
    %37 = vector.load %arg4[%c0_13, %c0_14, %c0_15, %c0_16] : memref<3x3x8x128xf32, #tpu.memory_space<vmem>>, vector<1x1x8x128xf32>
    %38 = vector.shape_cast %37 : vector<1x1x8x128xf32> to vector<8x128xf32>
    %39 = vector.shape_cast %33 : vector<8x128xf32> to vector<1x1x8x128xf32>
    tpu.vector_store %arg4[%c0_13, %c0_14, %c0_15, %c0_16], %39 {strides = array<i32>} : memref<3x3x8x128xf32, #tpu.memory_space<vmem>>, vector<1x1x8x128xf32>,
    %c0_17 = arith.constant 0 : index
    %c0_18 = arith.constant 0 : index
    %c0_19 = arith.constant 0 : index
    %c0_20 = arith.constant 0 : index
    %40 = vector.load %arg5[%c0_17, %c0_18, %c0_19, %c0_20] : memref<3x3x8x128xf32, #tpu.memory_space<vmem>>, vector<1x1x8x128xf32>
    %41 = vector.shape_cast %40 : vector<1x1x8x128xf32> to vector<8x128xf32>
    %42 = vector.shape_cast %36 : vector<8x128xf32> to vector<1x1x8x128xf32>
    tpu.vector_store %arg5[%c0_17, %c0_18, %c0_19, %c0_20], %42 {strides = array<i32>} : memref<3x3x8x128xf32, #tpu.memory_space<vmem>>, vector<1x1x8x128xf32>,
    %43 = vector.extract_strided_slice %0 {offsets = [0, 1, 0, 0], sizes = [1, 1, 8, 128], strides = [1, 1, 1, 1]} : vector<2x3x8x128xf32> to vector<1x1x8x128xf32>
    %44 = vector.shape_cast %43 : vector<1x1x8x128xf32> to vector<8x128xf32>
    %cst_21 = arith.constant -0.458097398 : f32
    %45 = vector.broadcast %cst_21 : f32 to vector<8x128xf32>
    %46 = arith.mulf %44, %45 : vector<8x128xf32>
    %cst_22 = arith.constant -0.0885539054 : f32
    %47 = vector.broadcast %cst_22 : f32 to vector<8x128xf32>
    %48 = arith.mulf %44, %47 : vector<8x128xf32>
    %49 = vector.extract_strided_slice %0 {offsets = [1, 1, 0, 0], sizes = [1, 1, 8, 128], strides = [1, 1, 1, 1]} : vector<2x3x8x128xf32> to vector<1x1x8x128xf32>
    %50 = vector.shape_cast %49 : vector<1x1x8x128xf32> to vector<8x128xf32>
    %cst_23 = arith.constant -0.288491935 : f32
    %51 = vector.broadcast %cst_23 : f32 to vector<8x128xf32>
    %52 = arith.mulf %50, %51 : vector<8x128xf32>
    %53 = arith.addf %46, %52 : vector<8x128xf32>
    %cst_24 = arith.constant -0.223307088 : f32
    %54 = vector.broadcast %cst_24 : f32 to vector<8x128xf32>
    %55 = arith.mulf %50, %54 : vector<8x128xf32>
    %56 = arith.addf %48, %55 : vector<8x128xf32>
    %c0_25 = arith.constant 0 : index
    %c1_26 = arith.constant 1 : index
    %c0_27 = arith.constant 0 : index
    %c0_28 = arith.constant 0 : index
    %57 = vector.load %arg4[%c0_25, %c1_26, %c0_27, %c0_28] : memref<3x3x8x128xf32, #tpu.memory_space<vmem>>, vector<1x1x8x128xf32>
    %58 = vector.shape_cast %57 : vector<1x1x8x128xf32> to vector<8x128xf32>
    %59 = vector.shape_cast %53 : vector<8x128xf32> to vector<1x1x8x128xf32>
    tpu.vector_store %arg4[%c0_25, %c1_26, %c0_27, %c0_28], %59 {strides = array<i32>} : memref<3x3x8x128xf32, #tpu.memory_space<vmem>>, vector<1x1x8x128xf32>,
    %c0_29 = arith.constant 0 : index
    %c1_30 = arith.constant 1 : index
    %c0_31 = arith.constant 0 : index
    %c0_32 = arith.constant 0 : index
    %60 = vector.load %arg5[%c0_29, %c1_30, %c0_31, %c0_32] : memref<3x3x8x128xf32, #tpu.memory_space<vmem>>, vector<1x1x8x128xf32>
    %61 = vector.shape_cast %60 : vector<1x1x8x128xf32> to vector<8x128xf32>
    %62 = vector.shape_cast %56 : vector<8x128xf32> to vector<1x1x8x128xf32>
    tpu.vector_store %arg5[%c0_29, %c1_30, %c0_31, %c0_32], %62 {strides = array<i32>} : memref<3x3x8x128xf32, #tpu.memory_space<vmem>>, vector<1x1x8x128xf32>,
    %63 = vector.extract_strided_slice %0 {offsets = [0, 2, 0, 0], sizes = [1, 1, 8, 128], strides = [1, 1, 1, 1]} : vector<2x3x8x128xf32> to vector<1x1x8x128xf32>
    %64 = vector.shape_cast %63 : vector<1x1x8x128xf32> to vector<8x128xf32>
    %cst_33 = arith.constant 0.191693038 : f32
    %65 = vector.broadcast %cst_33 : f32 to vector<8x128xf32>
    %66 = arith.mulf %64, %65 : vector<8x128xf32>
    %cst_34 = arith.constant -0.264333487 : f32
    %67 = vector.broadcast %cst_34 : f32 to vector<8x128xf32>
    %68 = arith.mulf %64, %67 : vector<8x128xf32>
    %69 = vector.extract_strided_slice %0 {offsets = [1, 2, 0, 0], sizes = [1, 1, 8, 128], strides = [1, 1, 1, 1]} : vector<2x3x8x128xf32> to vector<1x1x8x128xf32>
    %70 = vector.shape_cast %69 : vector<1x1x8x128xf32> to vector<8x128xf32>
    %cst_35 = arith.constant -0.214565337 : f32
    %71 = vector.broadcast %cst_35 : f32 to vector<8x128xf32>
    %72 = arith.mulf %70, %71 : vector<8x128xf32>
    %73 = arith.addf %66, %72 : vector<8x128xf32>
    %cst_36 = arith.constant -0.594283462 : f32
    %74 = vector.broadcast %cst_36 : f32 to vector<8x128xf32>
    %75 = arith.mulf %70, %74 : vector<8x128xf32>
    %76 = arith.addf %68, %75 : vector<8x128xf32>
    %c0_37 = arith.constant 0 : index
    %c2 = arith.constant 2 : index
    %c0_38 = arith.constant 0 : index
    %c0_39 = arith.constant 0 : index
    %77 = vector.load %arg4[%c0_37, %c2, %c0_38, %c0_39] : memref<3x3x8x128xf32, #tpu.memory_space<vmem>>, vector<1x1x8x128xf32>
    %78 = vector.shape_cast %77 : vector<1x1x8x128xf32> to vector<8x128xf32>
    %79 = vector.shape_cast %73 : vector<8x128xf32> to vector<1x1x8x128xf32>
    tpu.vector_store %arg4[%c0_37, %c2, %c0_38, %c0_39], %79 {strides = array<i32>} : memref<3x3x8x128xf32, #tpu.memory_space<vmem>>, vector<1x1x8x128xf32>,
    %c0_40 = arith.constant 0 : index
    %c2_41 = arith.constant 2 : index
    %c0_42 = arith.constant 0 : index
    %c0_43 = arith.constant 0 : index
    %80 = vector.load %arg5[%c0_40, %c2_41, %c0_42, %c0_43] : memref<3x3x8x128xf32, #tpu.memory_space<vmem>>, vector<1x1x8x128xf32>
    %81 = vector.shape_cast %80 : vector<1x1x8x128xf32> to vector<8x128xf32>
    %82 = vector.shape_cast %76 : vector<8x128xf32> to vector<1x1x8x128xf32>
    tpu.vector_store %arg5[%c0_40, %c2_41, %c0_42, %c0_43], %82 {strides = array<i32>} : memref<3x3x8x128xf32, #tpu.memory_space<vmem>>, vector<1x1x8x128xf32>,
    %83 = vector.extract_strided_slice %0 {offsets = [0, 0, 0, 0], sizes = [1, 1, 8, 128], strides = [1, 1, 1, 1]} : vector<2x3x8x128xf32> to vector<1x1x8x128xf32>
    %84 = vector.shape_cast %83 : vector<1x1x8x128xf32> to vector<8x128xf32>
    %cst_44 = arith.constant -0.868261933 : f32
    %85 = vector.broadcast %cst_44 : f32 to vector<8x128xf32>
    %86 = arith.mulf %84, %85 : vector<8x128xf32>
    %cst_45 = arith.constant -1.970920e-01 : f32
    %87 = vector.broadcast %cst_45 : f32 to vector<8x128xf32>
    %88 = arith.mulf %84, %87 : vector<8x128xf32>
    %89 = vector.extract_strided_slice %0 {offsets = [1, 0, 0, 0], sizes = [1, 1, 8, 128], strides = [1, 1, 1, 1]} : vector<2x3x8x128xf32> to vector<1x1x8x128xf32>
    %90 = vector.shape_cast %89 : vector<1x1x8x128xf32> to vector<8x128xf32>
    %cst_46 = arith.constant 0.624560832 : f32
    %91 = vector.broadcast %cst_46 : f32 to vector<8x128xf32>
    %92 = arith.mulf %90, %91 : vector<8x128xf32>
    %93 = arith.addf %86, %92 : vector<8x128xf32>
    %cst_47 = arith.constant -0.333054423 : f32
    %94 = vector.broadcast %cst_47 : f32 to vector<8x128xf32>
    %95 = arith.mulf %90, %94 : vector<8x128xf32>
    %96 = arith.addf %88, %95 : vector<8x128xf32>
    %c1_48 = arith.constant 1 : index
    %c0_49 = arith.constant 0 : index
    %c0_50 = arith.constant 0 : index
    %c0_51 = arith.constant 0 : index
    %97 = vector.load %arg4[%c1_48, %c0_49, %c0_50, %c0_51] : memref<3x3x8x128xf32, #tpu.memory_space<vmem>>, vector<1x1x8x128xf32>
    %98 = vector.shape_cast %97 : vector<1x1x8x128xf32> to vector<8x128xf32>
    %99 = vector.shape_cast %93 : vector<8x128xf32> to vector<1x1x8x128xf32>
    tpu.vector_store %arg4[%c1_48, %c0_49, %c0_50, %c0_51], %99 {strides = array<i32>} : memref<3x3x8x128xf32, #tpu.memory_space<vmem>>, vector<1x1x8x128xf32>,
    %c1_52 = arith.constant 1 : index
    %c0_53 = arith.constant 0 : index
    %c0_54 = arith.constant 0 : index
    %c0_55 = arith.constant 0 : index
    %100 = vector.load %arg5[%c1_52, %c0_53, %c0_54, %c0_55] : memref<3x3x8x128xf32, #tpu.memory_space<vmem>>, vector<1x1x8x128xf32>
    %101 = vector.shape_cast %100 : vector<1x1x8x128xf32> to vector<8x128xf32>
    %102 = vector.shape_cast %96 : vector<8x128xf32> to vector<1x1x8x128xf32>
    tpu.vector_store %arg5[%c1_52, %c0_53, %c0_54, %c0_55], %102 {strides = array<i32>} : memref<3x3x8x128xf32, #tpu.memory_space<vmem>>, vector<1x1x8x128xf32>,
    %103 = vector.extract_strided_slice %0 {offsets = [0, 1, 0, 0], sizes = [1, 1, 8, 128], strides = [1, 1, 1, 1]} : vector<2x3x8x128xf32> to vector<1x1x8x128xf32>
    %104 = vector.shape_cast %103 : vector<1x1x8x128xf32> to vector<8x128xf32>
    %cst_56 = arith.constant -0.384246051 : f32
    %105 = vector.broadcast %cst_56 : f32 to vector<8x128xf32>
    %106 = arith.mulf %104, %105 : vector<8x128xf32>
    %cst_57 = arith.constant 0.700767636 : f32
    %107 = vector.broadcast %cst_57 : f32 to vector<8x128xf32>
    %108 = arith.mulf %104, %107 : vector<8x128xf32>
    %109 = vector.extract_strided_slice %0 {offsets = [1, 1, 0, 0], sizes = [1, 1, 8, 128], strides = [1, 1, 1, 1]} : vector<2x3x8x128xf32> to vector<1x1x8x128xf32>
    %110 = vector.shape_cast %109 : vector<1x1x8x128xf32> to vector<8x128xf32>
    %cst_58 = arith.constant -0.0783554837 : f32
    %111 = vector.broadcast %cst_58 : f32 to vector<8x128xf32>
    %112 = arith.mulf %110, %111 : vector<8x128xf32>
    %113 = arith.addf %106, %112 : vector<8x128xf32>
    %cst_59 = arith.constant 0.351439208 : f32
    %114 = vector.broadcast %cst_59 : f32 to vector<8x128xf32>
    %115 = arith.mulf %110, %114 : vector<8x128xf32>
    %116 = arith.addf %108, %115 : vector<8x128xf32>
    %c1_60 = arith.constant 1 : index
    %c1_61 = arith.constant 1 : index
    %c0_62 = arith.constant 0 : index
    %c0_63 = arith.constant 0 : index
    %117 = vector.load %arg4[%c1_60, %c1_61, %c0_62, %c0_63] : memref<3x3x8x128xf32, #tpu.memory_space<vmem>>, vector<1x1x8x128xf32>
    %118 = vector.shape_cast %117 : vector<1x1x8x128xf32> to vector<8x128xf32>
    %119 = vector.shape_cast %113 : vector<8x128xf32> to vector<1x1x8x128xf32>
    tpu.vector_store %arg4[%c1_60, %c1_61, %c0_62, %c0_63], %119 {strides = array<i32>} : memref<3x3x8x128xf32, #tpu.memory_space<vmem>>, vector<1x1x8x128xf32>,
    %c1_64 = arith.constant 1 : index
    %c1_65 = arith.constant 1 : index
    %c0_66 = arith.constant 0 : index
    %c0_67 = arith.constant 0 : index
    %120 = vector.load %arg5[%c1_64, %c1_65, %c0_66, %c0_67] : memref<3x3x8x128xf32, #tpu.memory_space<vmem>>, vector<1x1x8x128xf32>
    %121 = vector.shape_cast %120 : vector<1x1x8x128xf32> to vector<8x128xf32>
    %122 = vector.shape_cast %116 : vector<8x128xf32> to vector<1x1x8x128xf32>
    tpu.vector_store %arg5[%c1_64, %c1_65, %c0_66, %c0_67], %122 {strides = array<i32>} : memref<3x3x8x128xf32, #tpu.memory_space<vmem>>, vector<1x1x8x128xf32>,
    %123 = vector.extract_strided_slice %0 {offsets = [0, 2, 0, 0], sizes = [1, 1, 8, 128], strides = [1, 1, 1, 1]} : vector<2x3x8x128xf32> to vector<1x1x8x128xf32>
    %124 = vector.shape_cast %123 : vector<1x1x8x128xf32> to vector<8x128xf32>
    %cst_68 = arith.constant -0.113982461 : f32
    %125 = vector.broadcast %cst_68 : f32 to vector<8x128xf32>
    %126 = arith.mulf %124, %125 : vector<8x128xf32>
    %cst_69 = arith.constant 0.431795031 : f32
    %127 = vector.broadcast %cst_69 : f32 to vector<8x128xf32>
    %128 = arith.mulf %124, %127 : vector<8x128xf32>
    %129 = vector.extract_strided_slice %0 {offsets = [1, 2, 0, 0], sizes = [1, 1, 8, 128], strides = [1, 1, 1, 1]} : vector<2x3x8x128xf32> to vector<1x1x8x128xf32>
    %130 = vector.shape_cast %129 : vector<1x1x8x128xf32> to vector<8x128xf32>
    %cst_70 = arith.constant -0.168799818 : f32
    %131 = vector.broadcast %cst_70 : f32 to vector<8x128xf32>
    %132 = arith.mulf %130, %131 : vector<8x128xf32>
    %133 = arith.addf %126, %132 : vector<8x128xf32>
    %cst_71 = arith.constant 0.209910065 : f32
    %134 = vector.broadcast %cst_71 : f32 to vector<8x128xf32>
    %135 = arith.mulf %130, %134 : vector<8x128xf32>
    %136 = arith.addf %128, %135 : vector<8x128xf32>
    %c1_72 = arith.constant 1 : index
    %c2_73 = arith.constant 2 : index
    %c0_74 = arith.constant 0 : index
    %c0_75 = arith.constant 0 : index
    %137 = vector.load %arg4[%c1_72, %c2_73, %c0_74, %c0_75] : memref<3x3x8x128xf32, #tpu.memory_space<vmem>>, vector<1x1x8x128xf32>
    %138 = vector.shape_cast %137 : vector<1x1x8x128xf32> to vector<8x128xf32>
    %139 = vector.shape_cast %133 : vector<8x128xf32> to vector<1x1x8x128xf32>
    tpu.vector_store %arg4[%c1_72, %c2_73, %c0_74, %c0_75], %139 {strides = array<i32>} : memref<3x3x8x128xf32, #tpu.memory_space<vmem>>, vector<1x1x8x128xf32>,
    %c1_76 = arith.constant 1 : index
    %c2_77 = arith.constant 2 : index
    %c0_78 = arith.constant 0 : index
    %c0_79 = arith.constant 0 : index
    %140 = vector.load %arg5[%c1_76, %c2_77, %c0_78, %c0_79] : memref<3x3x8x128xf32, #tpu.memory_space<vmem>>, vector<1x1x8x128xf32>
    %141 = vector.shape_cast %140 : vector<1x1x8x128xf32> to vector<8x128xf32>
    %142 = vector.shape_cast %136 : vector<8x128xf32> to vector<1x1x8x128xf32>
    tpu.vector_store %arg5[%c1_76, %c2_77, %c0_78, %c0_79], %142 {strides = array<i32>} : memref<3x3x8x128xf32, #tpu.memory_space<vmem>>, vector<1x1x8x128xf32>,
    %143 = vector.extract_strided_slice %0 {offsets = [0, 0, 0, 0], sizes = [1, 1, 8, 128], strides = [1, 1, 1, 1]} : vector<2x3x8x128xf32> to vector<1x1x8x128xf32>
    %144 = vector.shape_cast %143 : vector<1x1x8x128xf32> to vector<8x128xf32>
    %cst_80 = arith.constant 0.253494382 : f32
    %145 = vector.broadcast %cst_80 : f32 to vector<8x128xf32>
    %146 = arith.mulf %144, %145 : vector<8x128xf32>
    %cst_81 = arith.constant 0.178908348 : f32
    %147 = vector.broadcast %cst_81 : f32 to vector<8x128xf32>
    %148 = arith.mulf %144, %147 : vector<8x128xf32>
    %149 = vector.extract_strided_slice %0 {offsets = [1, 0, 0, 0], sizes = [1, 1, 8, 128], strides = [1, 1, 1, 1]} : vector<2x3x8x128xf32> to vector<1x1x8x128xf32>
    %150 = vector.shape_cast %149 : vector<1x1x8x128xf32> to vector<8x128xf32>
    %cst_82 = arith.constant 0.356974542 : f32
    %151 = vector.broadcast %cst_82 : f32 to vector<8x128xf32>
    %152 = arith.mulf %150, %151 : vector<8x128xf32>
    %153 = arith.addf %146, %152 : vector<8x128xf32>
    %cst_83 = arith.constant -0.0315703526 : f32
    %154 = vector.broadcast %cst_83 : f32 to vector<8x128xf32>
    %155 = arith.mulf %150, %154 : vector<8x128xf32>
    %156 = arith.addf %148, %155 : vector<8x128xf32>
    %c2_84 = arith.constant 2 : index
    %c0_85 = arith.constant 0 : index
    %c0_86 = arith.constant 0 : index
    %c0_87 = arith.constant 0 : index
    %157 = vector.load %arg4[%c2_84, %c0_85, %c0_86, %c0_87] : memref<3x3x8x128xf32, #tpu.memory_space<vmem>>, vector<1x1x8x128xf32>
    %158 = vector.shape_cast %157 : vector<1x1x8x128xf32> to vector<8x128xf32>
    %159 = vector.shape_cast %153 : vector<8x128xf32> to vector<1x1x8x128xf32>
    tpu.vector_store %arg4[%c2_84, %c0_85, %c0_86, %c0_87], %159 {strides = array<i32>} : memref<3x3x8x128xf32, #tpu.memory_space<vmem>>, vector<1x1x8x128xf32>,
    %c2_88 = arith.constant 2 : index
    %c0_89 = arith.constant 0 : index
    %c0_90 = arith.constant 0 : index
    %c0_91 = arith.constant 0 : index
    %160 = vector.load %arg5[%c2_88, %c0_89, %c0_90, %c0_91] : memref<3x3x8x128xf32, #tpu.memory_space<vmem>>, vector<1x1x8x128xf32>
    %161 = vector.shape_cast %160 : vector<1x1x8x128xf32> to vector<8x128xf32>
    %162 = vector.shape_cast %156 : vector<8x128xf32> to vector<1x1x8x128xf32>
    tpu.vector_store %arg5[%c2_88, %c0_89, %c0_90, %c0_91], %162 {strides = array<i32>} : memref<3x3x8x128xf32, #tpu.memory_space<vmem>>, vector<1x1x8x128xf32>,
    %163 = vector.extract_strided_slice %0 {offsets = [0, 1, 0, 0], sizes = [1, 1, 8, 128], strides = [1, 1, 1, 1]} : vector<2x3x8x128xf32> to vector<1x1x8x128xf32>
    %164 = vector.shape_cast %163 : vector<1x1x8x128xf32> to vector<8x128xf32>
    %cst_92 = arith.constant 0.0431989506 : f32
    %165 = vector.broadcast %cst_92 : f32 to vector<8x128xf32>
    %166 = arith.mulf %164, %165 : vector<8x128xf32>
    %cst_93 = arith.constant -0.0361407697 : f32
    %167 = vector.broadcast %cst_93 : f32 to vector<8x128xf32>
    %168 = arith.mulf %164, %167 : vector<8x128xf32>
    %169 = vector.extract_strided_slice %0 {offsets = [1, 1, 0, 0], sizes = [1, 1, 8, 128], strides = [1, 1, 1, 1]} : vector<2x3x8x128xf32> to vector<1x1x8x128xf32>
    %170 = vector.shape_cast %169 : vector<1x1x8x128xf32> to vector<8x128xf32>
    %cst_94 = arith.constant -0.227657244 : f32
    %171 = vector.broadcast %cst_94 : f32 to vector<8x128xf32>
    %172 = arith.mulf %170, %171 : vector<8x128xf32>
    %173 = arith.addf %166, %172 : vector<8x128xf32>
    %cst_95 = arith.constant -0.0791184529 : f32
    %174 = vector.broadcast %cst_95 : f32 to vector<8x128xf32>
    %175 = arith.mulf %170, %174 : vector<8x128xf32>
    %176 = arith.addf %168, %175 : vector<8x128xf32>
    %c2_96 = arith.constant 2 : index
    %c1_97 = arith.constant 1 : index
    %c0_98 = arith.constant 0 : index
    %c0_99 = arith.constant 0 : index
    %177 = vector.load %arg4[%c2_96, %c1_97, %c0_98, %c0_99] : memref<3x3x8x128xf32, #tpu.memory_space<vmem>>, vector<1x1x8x128xf32>
    %178 = vector.shape_cast %177 : vector<1x1x8x128xf32> to vector<8x128xf32>
    %179 = vector.shape_cast %173 : vector<8x128xf32> to vector<1x1x8x128xf32>
    tpu.vector_store %arg4[%c2_96, %c1_97, %c0_98, %c0_99], %179 {strides = array<i32>} : memref<3x3x8x128xf32, #tpu.memory_space<vmem>>, vector<1x1x8x128xf32>,
    %c2_100 = arith.constant 2 : index
    %c1_101 = arith.constant 1 : index
    %c0_102 = arith.constant 0 : index
    %c0_103 = arith.constant 0 : index
    %180 = vector.load %arg5[%c2_100, %c1_101, %c0_102, %c0_103] : memref<3x3x8x128xf32, #tpu.memory_space<vmem>>, vector<1x1x8x128xf32>
    %181 = vector.shape_cast %180 : vector<1x1x8x128xf32> to vector<8x128xf32>
    %182 = vector.shape_cast %176 : vector<8x128xf32> to vector<1x1x8x128xf32>
    tpu.vector_store %arg5[%c2_100, %c1_101, %c0_102, %c0_103], %182 {strides = array<i32>} : memref<3x3x8x128xf32, #tpu.memory_space<vmem>>, vector<1x1x8x128xf32>,
    %183 = vector.extract_strided_slice %0 {offsets = [0, 2, 0, 0], sizes = [1, 1, 8, 128], strides = [1, 1, 1, 1]} : vector<2x3x8x128xf32> to vector<1x1x8x128xf32>
    %184 = vector.shape_cast %183 : vector<1x1x8x128xf32> to vector<8x128xf32>
    %cst_104 = arith.constant -0.0623371563 : f32
    %185 = vector.broadcast %cst_104 : f32 to vector<8x128xf32>
    %186 = arith.mulf %184, %185 : vector<8x128xf32>
    %cst_105 = arith.constant 0.105438687 : f32
    %187 = vector.broadcast %cst_105 : f32 to vector<8x128xf32>
    %188 = arith.mulf %184, %187 : vector<8x128xf32>
    %189 = vector.extract_strided_slice %0 {offsets = [1, 2, 0, 0], sizes = [1, 1, 8, 128], strides = [1, 1, 1, 1]} : vector<2x3x8x128xf32> to vector<1x1x8x128xf32>
    %190 = vector.shape_cast %189 : vector<1x1x8x128xf32> to vector<8x128xf32>
    %cst_106 = arith.constant -0.149785146 : f32
    %191 = vector.broadcast %cst_106 : f32 to vector<8x128xf32>
    %192 = arith.mulf %190, %191 : vector<8x128xf32>
    %193 = arith.addf %186, %192 : vector<8x128xf32>
    %cst_107 = arith.constant -0.243485779 : f32
    %194 = vector.broadcast %cst_107 : f32 to vector<8x128xf32>
    %195 = arith.mulf %190, %194 : vector<8x128xf32>
    %196 = arith.addf %188, %195 : vector<8x128xf32>
    %c2_108 = arith.constant 2 : index
    %c2_109 = arith.constant 2 : index
    %c0_110 = arith.constant 0 : index
    %c0_111 = arith.constant 0 : index
    %197 = vector.load %arg4[%c2_108, %c2_109, %c0_110, %c0_111] : memref<3x3x8x128xf32, #tpu.memory_space<vmem>>, vector<1x1x8x128xf32>
    %198 = vector.shape_cast %197 : vector<1x1x8x128xf32> to vector<8x128xf32>
    %199 = vector.shape_cast %193 : vector<8x128xf32> to vector<1x1x8x128xf32>
    tpu.vector_store %arg4[%c2_108, %c2_109, %c0_110, %c0_111], %199 {strides = array<i32>} : memref<3x3x8x128xf32, #tpu.memory_space<vmem>>, vector<1x1x8x128xf32>,
    %c2_112 = arith.constant 2 : index
    %c2_113 = arith.constant 2 : index
    %c0_114 = arith.constant 0 : index
    %c0_115 = arith.constant 0 : index
    %200 = vector.load %arg5[%c2_112, %c2_113, %c0_114, %c0_115] : memref<3x3x8x128xf32, #tpu.memory_space<vmem>>, vector<1x1x8x128xf32>
    %201 = vector.shape_cast %200 : vector<1x1x8x128xf32> to vector<8x128xf32>
    %202 = vector.shape_cast %196 : vector<8x128xf32> to vector<1x1x8x128xf32>
    tpu.vector_store %arg5[%c2_112, %c2_113, %c0_114, %c0_115], %202 {strides = array<i32>} : memref<3x3x8x128xf32, #tpu.memory_space<vmem>>, vector<1x1x8x128xf32>,
    %c1_116 = arith.constant 1 : index
    %c0_117 = arith.constant 0 : index
    %c0_118 = arith.constant 0 : index
    %c0_119 = arith.constant 0 : index
    %203 = vector.load %arg2[%c1_116, %c0_117, %c0_118, %c0_119] : memref<3x2x8x128xf32, #tpu.memory_space<vmem>>, vector<1x1x8x128xf32>
    %204 = vector.shape_cast %203 : vector<1x1x8x128xf32> to vector<8x128xf32>
    %c1_120 = arith.constant 1 : index
    %c1_121 = arith.constant 1 : index
    %c0_122 = arith.constant 0 : index
    %c0_123 = arith.constant 0 : index
    %205 = vector.load %arg2[%c1_120, %c1_121, %c0_122, %c0_123] : memref<3x2x8x128xf32, #tpu.memory_space<vmem>>, vector<1x1x8x128xf32>
    %206 = vector.shape_cast %205 : vector<1x1x8x128xf32> to vector<8x128xf32>
    %c0_124 = arith.constant 0 : index
    %c0_125 = arith.constant 0 : index
    %c0_126 = arith.constant 0 : index
    %c0_127 = arith.constant 0 : index
    %207 = vector.load %arg4[%c0_124, %c0_125, %c0_126, %c0_127] : memref<3x3x8x128xf32, #tpu.memory_space<vmem>>, vector<1x1x8x128xf32>
    %208 = vector.shape_cast %207 : vector<1x1x8x128xf32> to vector<8x128xf32>
    %c0_128 = arith.constant 0 : index
    %c0_129 = arith.constant 0 : index
    %c0_130 = arith.constant 0 : index
    %c0_131 = arith.constant 0 : index
    %209 = vector.load %arg5[%c0_128, %c0_129, %c0_130, %c0_131] : memref<3x3x8x128xf32, #tpu.memory_space<vmem>>, vector<1x1x8x128xf32>
    %210 = vector.shape_cast %209 : vector<1x1x8x128xf32> to vector<8x128xf32>
    %c1_132 = arith.constant 1 : index
    %c0_133 = arith.constant 0 : index
    %c0_134 = arith.constant 0 : index
    %c0_135 = arith.constant 0 : index
    %211 = vector.load %arg4[%c1_132, %c0_133, %c0_134, %c0_135] : memref<3x3x8x128xf32, #tpu.memory_space<vmem>>, vector<1x1x8x128xf32>
    %212 = vector.shape_cast %211 : vector<1x1x8x128xf32> to vector<8x128xf32>
    %c1_136 = arith.constant 1 : index
    %c0_137 = arith.constant 0 : index
    %c0_138 = arith.constant 0 : index
    %c0_139 = arith.constant 0 : index
    %213 = vector.load %arg5[%c1_136, %c0_137, %c0_138, %c0_139] : memref<3x3x8x128xf32, #tpu.memory_space<vmem>>, vector<1x1x8x128xf32>
    %214 = vector.shape_cast %213 : vector<1x1x8x128xf32> to vector<8x128xf32>
    %c2_140 = arith.constant 2 : index
    %c0_141 = arith.constant 0 : index
    %c0_142 = arith.constant 0 : index
    %c0_143 = arith.constant 0 : index
    %215 = vector.load %arg4[%c2_140, %c0_141, %c0_142, %c0_143] : memref<3x3x8x128xf32, #tpu.memory_space<vmem>>, vector<1x1x8x128xf32>
    %216 = vector.shape_cast %215 : vector<1x1x8x128xf32> to vector<8x128xf32>
    %c2_144 = arith.constant 2 : index
    %c0_145 = arith.constant 0 : index
    %c0_146 = arith.constant 0 : index
    %c0_147 = arith.constant 0 : index
    %217 = vector.load %arg5[%c2_144, %c0_145, %c0_146, %c0_147] : memref<3x3x8x128xf32, #tpu.memory_space<vmem>>, vector<1x1x8x128xf32>
    %218 = vector.shape_cast %217 : vector<1x1x8x128xf32> to vector<8x128xf32>
    %c0_148 = arith.constant 0 : index
    %c0_149 = arith.constant 0 : index
    %c0_150 = arith.constant 0 : index
    %c0_151 = arith.constant 0 : index
    %219 = vector.load %arg4[%c0_148, %c0_149, %c0_150, %c0_151] : memref<3x3x8x128xf32, #tpu.memory_space<vmem>>, vector<1x1x8x128xf32>
    %220 = vector.shape_cast %219 : vector<1x1x8x128xf32> to vector<8x128xf32>
    %c0_152 = arith.constant 0 : index
    %c0_153 = arith.constant 0 : index
    %c0_154 = arith.constant 0 : index
    %c0_155 = arith.constant 0 : index
    %221 = vector.load %arg5[%c0_152, %c0_153, %c0_154, %c0_155] : memref<3x3x8x128xf32, #tpu.memory_space<vmem>>, vector<1x1x8x128xf32>
    %222 = vector.shape_cast %221 : vector<1x1x8x128xf32> to vector<8x128xf32>
    %223 = arith.mulf %220, %208 : vector<8x128xf32>
    %224 = arith.mulf %222, %210 : vector<8x128xf32>
    %225 = arith.subf %223, %224 : vector<8x128xf32>
    %226 = arith.mulf %220, %210 : vector<8x128xf32>
    %227 = arith.mulf %222, %208 : vector<8x128xf32>
    %228 = arith.addf %226, %227 : vector<8x128xf32>
    %229 = arith.mulf %220, %212 : vector<8x128xf32>
    %230 = arith.mulf %222, %214 : vector<8x128xf32>
    %231 = arith.subf %229, %230 : vector<8x128xf32>
    %232 = arith.mulf %220, %214 : vector<8x128xf32>
    %233 = arith.mulf %222, %212 : vector<8x128xf32>
    %234 = arith.addf %232, %233 : vector<8x128xf32>
    %235 = arith.mulf %220, %216 : vector<8x128xf32>
    %236 = arith.mulf %222, %218 : vector<8x128xf32>
    %237 = arith.subf %235, %236 : vector<8x128xf32>
    %238 = arith.mulf %220, %218 : vector<8x128xf32>
    %239 = arith.mulf %222, %216 : vector<8x128xf32>
    %240 = arith.addf %238, %239 : vector<8x128xf32>
    %c1_156 = arith.constant 1 : index
    %c0_157 = arith.constant 0 : index
    %c0_158 = arith.constant 0 : index
    %c0_159 = arith.constant 0 : index
    %241 = vector.load %arg4[%c1_156, %c0_157, %c0_158, %c0_159] : memref<3x3x8x128xf32, #tpu.memory_space<vmem>>, vector<1x1x8x128xf32>
    %242 = vector.shape_cast %241 : vector<1x1x8x128xf32> to vector<8x128xf32>
    %c1_160 = arith.constant 1 : index
    %c0_161 = arith.constant 0 : index
    %c0_162 = arith.constant 0 : index
    %c0_163 = arith.constant 0 : index
    %243 = vector.load %arg5[%c1_160, %c0_161, %c0_162, %c0_163] : memref<3x3x8x128xf32, #tpu.memory_space<vmem>>, vector<1x1x8x128xf32>
    %244 = vector.shape_cast %243 : vector<1x1x8x128xf32> to vector<8x128xf32>
    %245 = arith.mulf %242, %208 : vector<8x128xf32>
    %246 = arith.mulf %244, %210 : vector<8x128xf32>
    %247 = arith.subf %245, %246 : vector<8x128xf32>
    %248 = arith.mulf %242, %210 : vector<8x128xf32>
    %249 = arith.mulf %244, %208 : vector<8x128xf32>
    %250 = arith.addf %248, %249 : vector<8x128xf32>
    %251 = arith.addf %231, %247 : vector<8x128xf32>
    %252 = arith.addf %234, %250 : vector<8x128xf32>
    %253 = arith.mulf %242, %212 : vector<8x128xf32>
    %254 = arith.mulf %244, %214 : vector<8x128xf32>
    %255 = arith.subf %253, %254 : vector<8x128xf32>
    %256 = arith.mulf %242, %214 : vector<8x128xf32>
    %257 = arith.mulf %244, %212 : vector<8x128xf32>
    %258 = arith.addf %256, %257 : vector<8x128xf32>
    %259 = arith.addf %237, %255 : vector<8x128xf32>
    %260 = arith.addf %240, %258 : vector<8x128xf32>
    %261 = arith.mulf %242, %216 : vector<8x128xf32>
    %262 = arith.mulf %244, %218 : vector<8x128xf32>
    %263 = arith.subf %261, %262 : vector<8x128xf32>
    %264 = arith.mulf %242, %218 : vector<8x128xf32>
    %265 = arith.mulf %244, %216 : vector<8x128xf32>
    %266 = arith.addf %264, %265 : vector<8x128xf32>
    %c2_164 = arith.constant 2 : index
    %c0_165 = arith.constant 0 : index
    %c0_166 = arith.constant 0 : index
    %c0_167 = arith.constant 0 : index
    %267 = vector.load %arg4[%c2_164, %c0_165, %c0_166, %c0_167] : memref<3x3x8x128xf32, #tpu.memory_space<vmem>>, vector<1x1x8x128xf32>
    %268 = vector.shape_cast %267 : vector<1x1x8x128xf32> to vector<8x128xf32>
    %c2_168 = arith.constant 2 : index
    %c0_169 = arith.constant 0 : index
    %c0_170 = arith.constant 0 : index
    %c0_171 = arith.constant 0 : index
    %269 = vector.load %arg5[%c2_168, %c0_169, %c0_170, %c0_171] : memref<3x3x8x128xf32, #tpu.memory_space<vmem>>, vector<1x1x8x128xf32>
    %270 = vector.shape_cast %269 : vector<1x1x8x128xf32> to vector<8x128xf32>
    %271 = arith.mulf %268, %208 : vector<8x128xf32>
    %272 = arith.mulf %270, %210 : vector<8x128xf32>
    %273 = arith.subf %271, %272 : vector<8x128xf32>
    %274 = arith.mulf %268, %210 : vector<8x128xf32>
    %275 = arith.mulf %270, %208 : vector<8x128xf32>
    %276 = arith.addf %274, %275 : vector<8x128xf32>
    %277 = arith.addf %259, %273 : vector<8x128xf32>
    %278 = arith.addf %260, %276 : vector<8x128xf32>
    %279 = arith.mulf %268, %212 : vector<8x128xf32>
    %280 = arith.mulf %270, %214 : vector<8x128xf32>
    %281 = arith.subf %279, %280 : vector<8x128xf32>
    %282 = arith.mulf %268, %214 : vector<8x128xf32>
    %283 = arith.mulf %270, %212 : vector<8x128xf32>
    %284 = arith.addf %282, %283 : vector<8x128xf32>
    %285 = arith.addf %263, %281 : vector<8x128xf32>
    %286 = arith.addf %266, %284 : vector<8x128xf32>
    %287 = arith.mulf %268, %216 : vector<8x128xf32>
    %288 = arith.mulf %270, %218 : vector<8x128xf32>
    %289 = arith.subf %287, %288 : vector<8x128xf32>
    %290 = arith.mulf %268, %218 : vector<8x128xf32>
    %291 = arith.mulf %270, %216 : vector<8x128xf32>
    %292 = arith.addf %290, %291 : vector<8x128xf32>
    %c0_172 = arith.constant 0 : index
    %c0_173 = arith.constant 0 : index
    %c0_174 = arith.constant 0 : index
    %c0_175 = arith.constant 0 : index
    %293 = vector.load %arg6[%c0_172, %c0_173, %c0_174, %c0_175] : memref<5x5x8x128xf32, #tpu.memory_space<vmem>>, vector<1x1x8x128xf32>
    %294 = vector.shape_cast %293 : vector<1x1x8x128xf32> to vector<8x128xf32>
    %295 = vector.shape_cast %225 : vector<8x128xf32> to vector<1x1x8x128xf32>
    tpu.vector_store %arg6[%c0_172, %c0_173, %c0_174, %c0_175], %295 {strides = array<i32>} : memref<5x5x8x128xf32, #tpu.memory_space<vmem>>, vector<1x1x8x128xf32>,
    %c0_176 = arith.constant 0 : index
    %c0_177 = arith.constant 0 : index
    %c0_178 = arith.constant 0 : index
    %c0_179 = arith.constant 0 : index
    %296 = vector.load %arg7[%c0_176, %c0_177, %c0_178, %c0_179] : memref<5x5x8x128xf32, #tpu.memory_space<vmem>>, vector<1x1x8x128xf32>
    %297 = vector.shape_cast %296 : vector<1x1x8x128xf32> to vector<8x128xf32>
    %298 = vector.shape_cast %228 : vector<8x128xf32> to vector<1x1x8x128xf32>
    tpu.vector_store %arg7[%c0_176, %c0_177, %c0_178, %c0_179], %298 {strides = array<i32>} : memref<5x5x8x128xf32, #tpu.memory_space<vmem>>, vector<1x1x8x128xf32>,
    %c1_180 = arith.constant 1 : index
    %c0_181 = arith.constant 0 : index
    %c0_182 = arith.constant 0 : index
    %c0_183 = arith.constant 0 : index
    %299 = vector.load %arg6[%c1_180, %c0_181, %c0_182, %c0_183] : memref<5x5x8x128xf32, #tpu.memory_space<vmem>>, vector<1x1x8x128xf32>
    %300 = vector.shape_cast %299 : vector<1x1x8x128xf32> to vector<8x128xf32>
    %301 = vector.shape_cast %251 : vector<8x128xf32> to vector<1x1x8x128xf32>
    tpu.vector_store %arg6[%c1_180, %c0_181, %c0_182, %c0_183], %301 {strides = array<i32>} : memref<5x5x8x128xf32, #tpu.memory_space<vmem>>, vector<1x1x8x128xf32>,
    %c1_184 = arith.constant 1 : index
    %c0_185 = arith.constant 0 : index
    %c0_186 = arith.constant 0 : index
    %c0_187 = arith.constant 0 : index
    %302 = vector.load %arg7[%c1_184, %c0_185, %c0_186, %c0_187] : memref<5x5x8x128xf32, #tpu.memory_space<vmem>>, vector<1x1x8x128xf32>
    %303 = vector.shape_cast %302 : vector<1x1x8x128xf32> to vector<8x128xf32>
    %304 = vector.shape_cast %252 : vector<8x128xf32> to vector<1x1x8x128xf32>
    tpu.vector_store %arg7[%c1_184, %c0_185, %c0_186, %c0_187], %304 {strides = array<i32>} : memref<5x5x8x128xf32, #tpu.memory_space<vmem>>, vector<1x1x8x128xf32>,
    %c2_188 = arith.constant 2 : index
    %c0_189 = arith.constant 0 : index
    %c0_190 = arith.constant 0 : index
    %c0_191 = arith.constant 0 : index
    %305 = vector.load %arg6[%c2_188, %c0_189, %c0_190, %c0_191] : memref<5x5x8x128xf32, #tpu.memory_space<vmem>>, vector<1x1x8x128xf32>
    %306 = vector.shape_cast %305 : vector<1x1x8x128xf32> to vector<8x128xf32>
    %307 = vector.shape_cast %277 : vector<8x128xf32> to vector<1x1x8x128xf32>
    tpu.vector_store %arg6[%c2_188, %c0_189, %c0_190, %c0_191], %307 {strides = array<i32>} : memref<5x5x8x128xf32, #tpu.memory_space<vmem>>, vector<1x1x8x128xf32>,
    %c2_192 = arith.constant 2 : index
    %c0_193 = arith.constant 0 : index
    %c0_194 = arith.constant 0 : index
    %c0_195 = arith.constant 0 : index
    %308 = vector.load %arg7[%c2_192, %c0_193, %c0_194, %c0_195] : memref<5x5x8x128xf32, #tpu.memory_space<vmem>>, vector<1x1x8x128xf32>
    %309 = vector.shape_cast %308 : vector<1x1x8x128xf32> to vector<8x128xf32>
    %310 = vector.shape_cast %278 : vector<8x128xf32> to vector<1x1x8x128xf32>
    tpu.vector_store %arg7[%c2_192, %c0_193, %c0_194, %c0_195], %310 {strides = array<i32>} : memref<5x5x8x128xf32, #tpu.memory_space<vmem>>, vector<1x1x8x128xf32>,
    %c3 = arith.constant 3 : index
    %c0_196 = arith.constant 0 : index
    %c0_197 = arith.constant 0 : index
    %c0_198 = arith.constant 0 : index
    %311 = vector.load %arg6[%c3, %c0_196, %c0_197, %c0_198] : memref<5x5x8x128xf32, #tpu.memory_space<vmem>>, vector<1x1x8x128xf32>
    %312 = vector.shape_cast %311 : vector<1x1x8x128xf32> to vector<8x128xf32>
    %313 = vector.shape_cast %285 : vector<8x128xf32> to vector<1x1x8x128xf32>
    tpu.vector_store %arg6[%c3, %c0_196, %c0_197, %c0_198], %313 {strides = array<i32>} : memref<5x5x8x128xf32, #tpu.memory_space<vmem>>, vector<1x1x8x128xf32>,
    %c3_199 = arith.constant 3 : index
    %c0_200 = arith.constant 0 : index
    %c0_201 = arith.constant 0 : index
    %c0_202 = arith.constant 0 : index
    %314 = vector.load %arg7[%c3_199, %c0_200, %c0_201, %c0_202] : memref<5x5x8x128xf32, #tpu.memory_space<vmem>>, vector<1x1x8x128xf32>
    %315 = vector.shape_cast %314 : vector<1x1x8x128xf32> to vector<8x128xf32>
    %316 = vector.shape_cast %286 : vector<8x128xf32> to vector<1x1x8x128xf32>
    tpu.vector_store %arg7[%c3_199, %c0_200, %c0_201, %c0_202], %316 {strides = array<i32>} : memref<5x5x8x128xf32, #tpu.memory_space<vmem>>, vector<1x1x8x128xf32>,
    %c4 = arith.constant 4 : index
    %c0_203 = arith.constant 0 : index
    %c0_204 = arith.constant 0 : index
    %c0_205 = arith.constant 0 : index
    %317 = vector.load %arg6[%c4, %c0_203, %c0_204, %c0_205] : memref<5x5x8x128xf32, #tpu.memory_space<vmem>>, vector<1x1x8x128xf32>
    %318 = vector.shape_cast %317 : vector<1x1x8x128xf32> to vector<8x128xf32>
    %319 = vector.shape_cast %289 : vector<8x128xf32> to vector<1x1x8x128xf32>
    tpu.vector_store %arg6[%c4, %c0_203, %c0_204, %c0_205], %319 {strides = array<i32>} : memref<5x5x8x128xf32, #tpu.memory_space<vmem>>, vector<1x1x8x128xf32>,
    %c4_206 = arith.constant 4 : index
    %c0_207 = arith.constant 0 : index
    %c0_208 = arith.constant 0 : index
    %c0_209 = arith.constant 0 : index
    %320 = vector.load %arg7[%c4_206, %c0_207, %c0_208, %c0_209] : memref<5x5x8x128xf32, #tpu.memory_space<vmem>>, vector<1x1x8x128xf32>
    %321 = vector.shape_cast %320 : vector<1x1x8x128xf32> to vector<8x128xf32>
    %322 = vector.shape_cast %292 : vector<8x128xf32> to vector<1x1x8x128xf32>
    tpu.vector_store %arg7[%c4_206, %c0_207, %c0_208, %c0_209], %322 {strides = array<i32>} : memref<5x5x8x128xf32, #tpu.memory_space<vmem>>, vector<1x1x8x128xf32>,
    %c0_210 = arith.constant 0 : index
    %c1_211 = arith.constant 1 : index
    %c0_212 = arith.constant 0 : index
    %c0_213 = arith.constant 0 : index
    %323 = vector.load %arg4[%c0_210, %c1_211, %c0_212, %c0_213] : memref<3x3x8x128xf32, #tpu.memory_space<vmem>>, vector<1x1x8x128xf32>
    %324 = vector.shape_cast %323 : vector<1x1x8x128xf32> to vector<8x128xf32>
    %c0_214 = arith.constant 0 : index
    %c1_215 = arith.constant 1 : index
    %c0_216 = arith.constant 0 : index
    %c0_217 = arith.constant 0 : index
    %325 = vector.load %arg5[%c0_214, %c1_215, %c0_216, %c0_217] : memref<3x3x8x128xf32, #tpu.memory_space<vmem>>, vector<1x1x8x128xf32>
    %326 = vector.shape_cast %325 : vector<1x1x8x128xf32> to vector<8x128xf32>
    %c1_218 = arith.constant 1 : index
    %c1_219 = arith.constant 1 : index
    %c0_220 = arith.constant 0 : index
    %c0_221 = arith.constant 0 : index
    %327 = vector.load %arg4[%c1_218, %c1_219, %c0_220, %c0_221] : memref<3x3x8x128xf32, #tpu.memory_space<vmem>>, vector<1x1x8x128xf32>
    %328 = vector.shape_cast %327 : vector<1x1x8x128xf32> to vector<8x128xf32>
    %c1_222 = arith.constant 1 : index
    %c1_223 = arith.constant 1 : index
    %c0_224 = arith.constant 0 : index
    %c0_225 = arith.constant 0 : index
    %329 = vector.load %arg5[%c1_222, %c1_223, %c0_224, %c0_225] : memref<3x3x8x128xf32, #tpu.memory_space<vmem>>, vector<1x1x8x128xf32>
    %330 = vector.shape_cast %329 : vector<1x1x8x128xf32> to vector<8x128xf32>
    %c2_226 = arith.constant 2 : index
    %c1_227 = arith.constant 1 : index
    %c0_228 = arith.constant 0 : index
    %c0_229 = arith.constant 0 : index
    %331 = vector.load %arg4[%c2_226, %c1_227, %c0_228, %c0_229] : memref<3x3x8x128xf32, #tpu.memory_space<vmem>>, vector<1x1x8x128xf32>
    %332 = vector.shape_cast %331 : vector<1x1x8x128xf32> to vector<8x128xf32>
    %c2_230 = arith.constant 2 : index
    %c1_231 = arith.constant 1 : index
    %c0_232 = arith.constant 0 : index
    %c0_233 = arith.constant 0 : index
    %333 = vector.load %arg5[%c2_230, %c1_231, %c0_232, %c0_233] : memref<3x3x8x128xf32, #tpu.memory_space<vmem>>, vector<1x1x8x128xf32>
    %334 = vector.shape_cast %333 : vector<1x1x8x128xf32> to vector<8x128xf32>
    %c0_234 = arith.constant 0 : index
    %c0_235 = arith.constant 0 : index
    %c0_236 = arith.constant 0 : index
    %c0_237 = arith.constant 0 : index
    %335 = vector.load %arg4[%c0_234, %c0_235, %c0_236, %c0_237] : memref<3x3x8x128xf32, #tpu.memory_space<vmem>>, vector<1x1x8x128xf32>
    %336 = vector.shape_cast %335 : vector<1x1x8x128xf32> to vector<8x128xf32>
    %c0_238 = arith.constant 0 : index
    %c0_239 = arith.constant 0 : index
    %c0_240 = arith.constant 0 : index
    %c0_241 = arith.constant 0 : index
    %337 = vector.load %arg5[%c0_238, %c0_239, %c0_240, %c0_241] : memref<3x3x8x128xf32, #tpu.memory_space<vmem>>, vector<1x1x8x128xf32>
    %338 = vector.shape_cast %337 : vector<1x1x8x128xf32> to vector<8x128xf32>
    %339 = arith.mulf %336, %324 : vector<8x128xf32>
    %340 = arith.mulf %338, %326 : vector<8x128xf32>
    %341 = arith.subf %339, %340 : vector<8x128xf32>
    %342 = arith.mulf %336, %326 : vector<8x128xf32>
    %343 = arith.mulf %338, %324 : vector<8x128xf32>
    %344 = arith.addf %342, %343 : vector<8x128xf32>
    %345 = arith.mulf %336, %328 : vector<8x128xf32>
    %346 = arith.mulf %338, %330 : vector<8x128xf32>
    %347 = arith.subf %345, %346 : vector<8x128xf32>
    %348 = arith.mulf %336, %330 : vector<8x128xf32>
    %349 = arith.mulf %338, %328 : vector<8x128xf32>
    %350 = arith.addf %348, %349 : vector<8x128xf32>
    %351 = arith.mulf %336, %332 : vector<8x128xf32>
    %352 = arith.mulf %338, %334 : vector<8x128xf32>
    %353 = arith.subf %351, %352 : vector<8x128xf32>
    %354 = arith.mulf %336, %334 : vector<8x128xf32>
    %355 = arith.mulf %338, %332 : vector<8x128xf32>
    %356 = arith.addf %354, %355 : vector<8x128xf32>
    %c1_242 = arith.constant 1 : index
    %c0_243 = arith.constant 0 : index
    %c0_244 = arith.constant 0 : index
    %c0_245 = arith.constant 0 : index
    %357 = vector.load %arg4[%c1_242, %c0_243, %c0_244, %c0_245] : memref<3x3x8x128xf32, #tpu.memory_space<vmem>>, vector<1x1x8x128xf32>
    %358 = vector.shape_cast %357 : vector<1x1x8x128xf32> to vector<8x128xf32>
    %c1_246 = arith.constant 1 : index
    %c0_247 = arith.constant 0 : index
    %c0_248 = arith.constant 0 : index
    %c0_249 = arith.constant 0 : index
    %359 = vector.load %arg5[%c1_246, %c0_247, %c0_248, %c0_249] : memref<3x3x8x128xf32, #tpu.memory_space<vmem>>, vector<1x1x8x128xf32>
    %360 = vector.shape_cast %359 : vector<1x1x8x128xf32> to vector<8x128xf32>
    %361 = arith.mulf %358, %324 : vector<8x128xf32>
    %362 = arith.mulf %360, %326 : vector<8x128xf32>
    %363 = arith.subf %361, %362 : vector<8x128xf32>
    %364 = arith.mulf %358, %326 : vector<8x128xf32>
    %365 = arith.mulf %360, %324 : vector<8x128xf32>
    %366 = arith.addf %364, %365 : vector<8x128xf32>
    %367 = arith.addf %347, %363 : vector<8x128xf32>
    %368 = arith.addf %350, %366 : vector<8x128xf32>
    %369 = arith.mulf %358, %328 : vector<8x128xf32>
    %370 = arith.mulf %360, %330 : vector<8x128xf32>
    %371 = arith.subf %369, %370 : vector<8x128xf32>
    %372 = arith.mulf %358, %330 : vector<8x128xf32>
    %373 = arith.mulf %360, %328 : vector<8x128xf32>
    %374 = arith.addf %372, %373 : vector<8x128xf32>
    %375 = arith.addf %353, %371 : vector<8x128xf32>
    %376 = arith.addf %356, %374 : vector<8x128xf32>
    %377 = arith.mulf %358, %332 : vector<8x128xf32>
    %378 = arith.mulf %360, %334 : vector<8x128xf32>
    %379 = arith.subf %377, %378 : vector<8x128xf32>
    %380 = arith.mulf %358, %334 : vector<8x128xf32>
    %381 = arith.mulf %360, %332 : vector<8x128xf32>
    %382 = arith.addf %380, %381 : vector<8x128xf32>
    %c2_250 = arith.constant 2 : index
    %c0_251 = arith.constant 0 : index
    %c0_252 = arith.constant 0 : index
    %c0_253 = arith.constant 0 : index
    %383 = vector.load %arg4[%c2_250, %c0_251, %c0_252, %c0_253] : memref<3x3x8x128xf32, #tpu.memory_space<vmem>>, vector<1x1x8x128xf32>
    %384 = vector.shape_cast %383 : vector<1x1x8x128xf32> to vector<8x128xf32>
    %c2_254 = arith.constant 2 : index
    %c0_255 = arith.constant 0 : index
    %c0_256 = arith.constant 0 : index
    %c0_257 = arith.constant 0 : index
    %385 = vector.load %arg5[%c2_254, %c0_255, %c0_256, %c0_257] : memref<3x3x8x128xf32, #tpu.memory_space<vmem>>, vector<1x1x8x128xf32>
    %386 = vector.shape_cast %385 : vector<1x1x8x128xf32> to vector<8x128xf32>
    %387 = arith.mulf %384, %324 : vector<8x128xf32>
    %388 = arith.mulf %386, %326 : vector<8x128xf32>
    %389 = arith.subf %387, %388 : vector<8x128xf32>
    %390 = arith.mulf %384, %326 : vector<8x128xf32>
    %391 = arith.mulf %386, %324 : vector<8x128xf32>
    %392 = arith.addf %390, %391 : vector<8x128xf32>
    %393 = arith.addf %375, %389 : vector<8x128xf32>
    %394 = arith.addf %376, %392 : vector<8x128xf32>
    %395 = arith.mulf %384, %328 : vector<8x128xf32>
    %396 = arith.mulf %386, %330 : vector<8x128xf32>
    %397 = arith.subf %395, %396 : vector<8x128xf32>
    %398 = arith.mulf %384, %330 : vector<8x128xf32>
    %399 = arith.mulf %386, %328 : vector<8x128xf32>
    %400 = arith.addf %398, %399 : vector<8x128xf32>
    %401 = arith.addf %379, %397 : vector<8x128xf32>
    %402 = arith.addf %382, %400 : vector<8x128xf32>
    %403 = arith.mulf %384, %332 : vector<8x128xf32>
    %404 = arith.mulf %386, %334 : vector<8x128xf32>
    %405 = arith.subf %403, %404 : vector<8x128xf32>
    %406 = arith.mulf %384, %334 : vector<8x128xf32>
    %407 = arith.mulf %386, %332 : vector<8x128xf32>
    %408 = arith.addf %406, %407 : vector<8x128xf32>
    %c0_258 = arith.constant 0 : index
    %c0_259 = arith.constant 0 : index
    %c0_260 = arith.constant 0 : index
    %c0_261 = arith.constant 0 : index
    %409 = vector.load %arg4[%c0_258, %c0_259, %c0_260, %c0_261] : memref<3x3x8x128xf32, #tpu.memory_space<vmem>>, vector<1x1x8x128xf32>
    %410 = vector.shape_cast %409 : vector<1x1x8x128xf32> to vector<8x128xf32>
    %c0_262 = arith.constant 0 : index
    %c0_263 = arith.constant 0 : index
    %c0_264 = arith.constant 0 : index
    %c0_265 = arith.constant 0 : index
    %411 = vector.load %arg5[%c0_262, %c0_263, %c0_264, %c0_265] : memref<3x3x8x128xf32, #tpu.memory_space<vmem>>, vector<1x1x8x128xf32>
    %412 = vector.shape_cast %411 : vector<1x1x8x128xf32> to vector<8x128xf32>
    %c1_266 = arith.constant 1 : index
    %c0_267 = arith.constant 0 : index
    %c0_268 = arith.constant 0 : index
    %c0_269 = arith.constant 0 : index
    %413 = vector.load %arg4[%c1_266, %c0_267, %c0_268, %c0_269] : memref<3x3x8x128xf32, #tpu.memory_space<vmem>>, vector<1x1x8x128xf32>
    %414 = vector.shape_cast %413 : vector<1x1x8x128xf32> to vector<8x128xf32>
    %c1_270 = arith.constant 1 : index
    %c0_271 = arith.constant 0 : index
    %c0_272 = arith.constant 0 : index
    %c0_273 = arith.constant 0 : index
    %415 = vector.load %arg5[%c1_270, %c0_271, %c0_272, %c0_273] : memref<3x3x8x128xf32, #tpu.memory_space<vmem>>, vector<1x1x8x128xf32>
    %416 = vector.shape_cast %415 : vector<1x1x8x128xf32> to vector<8x128xf32>
    %c2_274 = arith.constant 2 : index
    %c0_275 = arith.constant 0 : index
    %c0_276 = arith.constant 0 : index
    %c0_277 = arith.constant 0 : index
    %417 = vector.load %arg4[%c2_274, %c0_275, %c0_276, %c0_277] : memref<3x3x8x128xf32, #tpu.memory_space<vmem>>, vector<1x1x8x128xf32>
    %418 = vector.shape_cast %417 : vector<1x1x8x128xf32> to vector<8x128xf32>
    %c2_278 = arith.constant 2 : index
    %c0_279 = arith.constant 0 : index
    %c0_280 = arith.constant 0 : index
    %c0_281 = arith.constant 0 : index
    %419 = vector.load %arg5[%c2_278, %c0_279, %c0_280, %c0_281] : memref<3x3x8x128xf32, #tpu.memory_space<vmem>>, vector<1x1x8x128xf32>
    %420 = vector.shape_cast %419 : vector<1x1x8x128xf32> to vector<8x128xf32>
    %c0_282 = arith.constant 0 : index
    %c1_283 = arith.constant 1 : index
    %c0_284 = arith.constant 0 : index
    %c0_285 = arith.constant 0 : index
    %421 = vector.load %arg4[%c0_282, %c1_283, %c0_284, %c0_285] : memref<3x3x8x128xf32, #tpu.memory_space<vmem>>, vector<1x1x8x128xf32>
    %422 = vector.shape_cast %421 : vector<1x1x8x128xf32> to vector<8x128xf32>
    %c0_286 = arith.constant 0 : index
    %c1_287 = arith.constant 1 : index
    %c0_288 = arith.constant 0 : index
    %c0_289 = arith.constant 0 : index
    %423 = vector.load %arg5[%c0_286, %c1_287, %c0_288, %c0_289] : memref<3x3x8x128xf32, #tpu.memory_space<vmem>>, vector<1x1x8x128xf32>
    %424 = vector.shape_cast %423 : vector<1x1x8x128xf32> to vector<8x128xf32>
    %425 = arith.mulf %422, %410 : vector<8x128xf32>
    %426 = arith.mulf %424, %412 : vector<8x128xf32>
    %427 = arith.subf %425, %426 : vector<8x128xf32>
    %428 = arith.mulf %422, %412 : vector<8x128xf32>
    %429 = arith.mulf %424, %410 : vector<8x128xf32>
    %430 = arith.addf %428, %429 : vector<8x128xf32>
    %431 = arith.addf %341, %427 : vector<8x128xf32>
    %432 = arith.addf %344, %430 : vector<8x128xf32>
    %433 = arith.mulf %422, %414 : vector<8x128xf32>
    %434 = arith.mulf %424, %416 : vector<8x128xf32>
    %435 = arith.subf %433, %434 : vector<8x128xf32>
    %436 = arith.mulf %422, %416 : vector<8x128xf32>
    %437 = arith.mulf %424, %414 : vector<8x128xf32>
    %438 = arith.addf %436, %437 : vector<8x128xf32>
    %439 = arith.addf %367, %435 : vector<8x128xf32>
    %440 = arith.addf %368, %438 : vector<8x128xf32>
    %441 = arith.mulf %422, %418 : vector<8x128xf32>
    %442 = arith.mulf %424, %420 : vector<8x128xf32>
    %443 = arith.subf %441, %442 : vector<8x128xf32>
    %444 = arith.mulf %422, %420 : vector<8x128xf32>
    %445 = arith.mulf %424, %418 : vector<8x128xf32>
    %446 = arith.addf %444, %445 : vector<8x128xf32>
    %447 = arith.addf %393, %443 : vector<8x128xf32>
    %448 = arith.addf %394, %446 : vector<8x128xf32>
    %c1_290 = arith.constant 1 : index
    %c1_291 = arith.constant 1 : index
    %c0_292 = arith.constant 0 : index
    %c0_293 = arith.constant 0 : index
    %449 = vector.load %arg4[%c1_290, %c1_291, %c0_292, %c0_293] : memref<3x3x8x128xf32, #tpu.memory_space<vmem>>, vector<1x1x8x128xf32>
    %450 = vector.shape_cast %449 : vector<1x1x8x128xf32> to vector<8x128xf32>
    %c1_294 = arith.constant 1 : index
    %c1_295 = arith.constant 1 : index
    %c0_296 = arith.constant 0 : index
    %c0_297 = arith.constant 0 : index
    %451 = vector.load %arg5[%c1_294, %c1_295, %c0_296, %c0_297] : memref<3x3x8x128xf32, #tpu.memory_space<vmem>>, vector<1x1x8x128xf32>
    %452 = vector.shape_cast %451 : vector<1x1x8x128xf32> to vector<8x128xf32>
    %453 = arith.mulf %450, %410 : vector<8x128xf32>
    %454 = arith.mulf %452, %412 : vector<8x128xf32>
    %455 = arith.subf %453, %454 : vector<8x128xf32>
    %456 = arith.mulf %450, %412 : vector<8x128xf32>
    %457 = arith.mulf %452, %410 : vector<8x128xf32>
    %458 = arith.addf %456, %457 : vector<8x128xf32>
    %459 = arith.addf %439, %455 : vector<8x128xf32>
    %460 = arith.addf %440, %458 : vector<8x128xf32>
    %461 = arith.mulf %450, %414 : vector<8x128xf32>
    %462 = arith.mulf %452, %416 : vector<8x128xf32>
    %463 = arith.subf %461, %462 : vector<8x128xf32>
    %464 = arith.mulf %450, %416 : vector<8x128xf32>
    %465 = arith.mulf %452, %414 : vector<8x128xf32>
    %466 = arith.addf %464, %465 : vector<8x128xf32>
    %467 = arith.addf %447, %463 : vector<8x128xf32>
    %468 = arith.addf %448, %466 : vector<8x128xf32>
    %469 = arith.mulf %450, %418 : vector<8x128xf32>
    %470 = arith.mulf %452, %420 : vector<8x128xf32>
    %471 = arith.subf %469, %470 : vector<8x128xf32>
    %472 = arith.mulf %450, %420 : vector<8x128xf32>
    %473 = arith.mulf %452, %418 : vector<8x128xf32>
    %474 = arith.addf %472, %473 : vector<8x128xf32>
    %475 = arith.addf %401, %471 : vector<8x128xf32>
    %476 = arith.addf %402, %474 : vector<8x128xf32>
    %c2_298 = arith.constant 2 : index
    %c1_299 = arith.constant 1 : index
    %c0_300 = arith.constant 0 : index
    %c0_301 = arith.constant 0 : index
    %477 = vector.load %arg4[%c2_298, %c1_299, %c0_300, %c0_301] : memref<3x3x8x128xf32, #tpu.memory_space<vmem>>, vector<1x1x8x128xf32>
    %478 = vector.shape_cast %477 : vector<1x1x8x128xf32> to vector<8x128xf32>
    %c2_302 = arith.constant 2 : index
    %c1_303 = arith.constant 1 : index
    %c0_304 = arith.constant 0 : index
    %c0_305 = arith.constant 0 : index
    %479 = vector.load %arg5[%c2_302, %c1_303, %c0_304, %c0_305] : memref<3x3x8x128xf32, #tpu.memory_space<vmem>>, vector<1x1x8x128xf32>
    %480 = vector.shape_cast %479 : vector<1x1x8x128xf32> to vector<8x128xf32>
    %481 = arith.mulf %478, %410 : vector<8x128xf32>
    %482 = arith.mulf %480, %412 : vector<8x128xf32>
    %483 = arith.subf %481, %482 : vector<8x128xf32>
    %484 = arith.mulf %478, %412 : vector<8x128xf32>
    %485 = arith.mulf %480, %410 : vector<8x128xf32>
    %486 = arith.addf %484, %485 : vector<8x128xf32>
    %487 = arith.addf %467, %483 : vector<8x128xf32>
    %488 = arith.addf %468, %486 : vector<8x128xf32>
    %489 = arith.mulf %478, %414 : vector<8x128xf32>
    %490 = arith.mulf %480, %416 : vector<8x128xf32>
    %491 = arith.subf %489, %490 : vector<8x128xf32>
    %492 = arith.mulf %478, %416 : vector<8x128xf32>
    %493 = arith.mulf %480, %414 : vector<8x128xf32>
    %494 = arith.addf %492, %493 : vector<8x128xf32>
    %495 = arith.addf %475, %491 : vector<8x128xf32>
    %496 = arith.addf %476, %494 : vector<8x128xf32>
    %497 = arith.mulf %478, %418 : vector<8x128xf32>
    %498 = arith.mulf %480, %420 : vector<8x128xf32>
    %499 = arith.subf %497, %498 : vector<8x128xf32>
    %500 = arith.mulf %478, %420 : vector<8x128xf32>
    %501 = arith.mulf %480, %418 : vector<8x128xf32>
    %502 = arith.addf %500, %501 : vector<8x128xf32>
    %503 = arith.addf %405, %499 : vector<8x128xf32>
    %504 = arith.addf %408, %502 : vector<8x128xf32>
    %c0_306 = arith.constant 0 : index
    %c1_307 = arith.constant 1 : index
    %c0_308 = arith.constant 0 : index
    %c0_309 = arith.constant 0 : index
    %505 = vector.load %arg6[%c0_306, %c1_307, %c0_308, %c0_309] : memref<5x5x8x128xf32, #tpu.memory_space<vmem>>, vector<1x1x8x128xf32>
    %506 = vector.shape_cast %505 : vector<1x1x8x128xf32> to vector<8x128xf32>
    %507 = vector.shape_cast %431 : vector<8x128xf32> to vector<1x1x8x128xf32>
    tpu.vector_store %arg6[%c0_306, %c1_307, %c0_308, %c0_309], %507 {strides = array<i32>} : memref<5x5x8x128xf32, #tpu.memory_space<vmem>>, vector<1x1x8x128xf32>,
    %c0_310 = arith.constant 0 : index
    %c1_311 = arith.constant 1 : index
    %c0_312 = arith.constant 0 : index
    %c0_313 = arith.constant 0 : index
    %508 = vector.load %arg7[%c0_310, %c1_311, %c0_312, %c0_313] : memref<5x5x8x128xf32, #tpu.memory_space<vmem>>, vector<1x1x8x128xf32>
    %509 = vector.shape_cast %508 : vector<1x1x8x128xf32> to vector<8x128xf32>
    %510 = vector.shape_cast %432 : vector<8x128xf32> to vector<1x1x8x128xf32>
    tpu.vector_store %arg7[%c0_310, %c1_311, %c0_312, %c0_313], %510 {strides = array<i32>} : memref<5x5x8x128xf32, #tpu.memory_space<vmem>>, vector<1x1x8x128xf32>,
    %c1_314 = arith.constant 1 : index
    %c1_315 = arith.constant 1 : index
    %c0_316 = arith.constant 0 : index
    %c0_317 = arith.constant 0 : index
    %511 = vector.load %arg6[%c1_314, %c1_315, %c0_316, %c0_317] : memref<5x5x8x128xf32, #tpu.memory_space<vmem>>, vector<1x1x8x128xf32>
    %512 = vector.shape_cast %511 : vector<1x1x8x128xf32> to vector<8x128xf32>
    %513 = vector.shape_cast %459 : vector<8x128xf32> to vector<1x1x8x128xf32>
    tpu.vector_store %arg6[%c1_314, %c1_315, %c0_316, %c0_317], %513 {strides = array<i32>} : memref<5x5x8x128xf32, #tpu.memory_space<vmem>>, vector<1x1x8x128xf32>,
    %c1_318 = arith.constant 1 : index
    %c1_319 = arith.constant 1 : index
    %c0_320 = arith.constant 0 : index
    %c0_321 = arith.constant 0 : index
    %514 = vector.load %arg7[%c1_318, %c1_319, %c0_320, %c0_321] : memref<5x5x8x128xf32, #tpu.memory_space<vmem>>, vector<1x1x8x128xf32>
    %515 = vector.shape_cast %514 : vector<1x1x8x128xf32> to vector<8x128xf32>
    %516 = vector.shape_cast %460 : vector<8x128xf32> to vector<1x1x8x128xf32>
    tpu.vector_store %arg7[%c1_318, %c1_319, %c0_320, %c0_321], %516 {strides = array<i32>} : memref<5x5x8x128xf32, #tpu.memory_space<vmem>>, vector<1x1x8x128xf32>,
    %c2_322 = arith.constant 2 : index
    %c1_323 = arith.constant 1 : index
    %c0_324 = arith.constant 0 : index
    %c0_325 = arith.constant 0 : index
    %517 = vector.load %arg6[%c2_322, %c1_323, %c0_324, %c0_325] : memref<5x5x8x128xf32, #tpu.memory_space<vmem>>, vector<1x1x8x128xf32>
    %518 = vector.shape_cast %517 : vector<1x1x8x128xf32> to vector<8x128xf32>
    %519 = vector.shape_cast %487 : vector<8x128xf32> to vector<1x1x8x128xf32>
    tpu.vector_store %arg6[%c2_322, %c1_323, %c0_324, %c0_325], %519 {strides = array<i32>} : memref<5x5x8x128xf32, #tpu.memory_space<vmem>>, vector<1x1x8x128xf32>,
    %c2_326 = arith.constant 2 : index
    %c1_327 = arith.constant 1 : index
    %c0_328 = arith.constant 0 : index
    %c0_329 = arith.constant 0 : index
    %520 = vector.load %arg7[%c2_326, %c1_327, %c0_328, %c0_329] : memref<5x5x8x128xf32, #tpu.memory_space<vmem>>, vector<1x1x8x128xf32>
    %521 = vector.shape_cast %520 : vector<1x1x8x128xf32> to vector<8x128xf32>
    %522 = vector.shape_cast %488 : vector<8x128xf32> to vector<1x1x8x128xf32>
    tpu.vector_store %arg7[%c2_326, %c1_327, %c0_328, %c0_329], %522 {strides = array<i32>} : memref<5x5x8x128xf32, #tpu.memory_space<vmem>>, vector<1x1x8x128xf32>,
    %c3_330 = arith.constant 3 : index
    %c1_331 = arith.constant 1 : index
    %c0_332 = arith.constant 0 : index
    %c0_333 = arith.constant 0 : index
    %523 = vector.load %arg6[%c3_330, %c1_331, %c0_332, %c0_333] : memref<5x5x8x128xf32, #tpu.memory_space<vmem>>, vector<1x1x8x128xf32>
    %524 = vector.shape_cast %523 : vector<1x1x8x128xf32> to vector<8x128xf32>
    %525 = vector.shape_cast %495 : vector<8x128xf32> to vector<1x1x8x128xf32>
    tpu.vector_store %arg6[%c3_330, %c1_331, %c0_332, %c0_333], %525 {strides = array<i32>} : memref<5x5x8x128xf32, #tpu.memory_space<vmem>>, vector<1x1x8x128xf32>,
    %c3_334 = arith.constant 3 : index
    %c1_335 = arith.constant 1 : index
    %c0_336 = arith.constant 0 : index
    %c0_337 = arith.constant 0 : index
    %526 = vector.load %arg7[%c3_334, %c1_335, %c0_336, %c0_337] : memref<5x5x8x128xf32, #tpu.memory_space<vmem>>, vector<1x1x8x128xf32>
    %527 = vector.shape_cast %526 : vector<1x1x8x128xf32> to vector<8x128xf32>
    %528 = vector.shape_cast %496 : vector<8x128xf32> to vector<1x1x8x128xf32>
    tpu.vector_store %arg7[%c3_334, %c1_335, %c0_336, %c0_337], %528 {strides = array<i32>} : memref<5x5x8x128xf32, #tpu.memory_space<vmem>>, vector<1x1x8x128xf32>,
    %c4_338 = arith.constant 4 : index
    %c1_339 = arith.constant 1 : index
    %c0_340 = arith.constant 0 : index
    %c0_341 = arith.constant 0 : index
    %529 = vector.load %arg6[%c4_338, %c1_339, %c0_340, %c0_341] : memref<5x5x8x128xf32, #tpu.memory_space<vmem>>, vector<1x1x8x128xf32>
    %530 = vector.shape_cast %529 : vector<1x1x8x128xf32> to vector<8x128xf32>
    %531 = vector.shape_cast %503 : vector<8x128xf32> to vector<1x1x8x128xf32>
    tpu.vector_store %arg6[%c4_338, %c1_339, %c0_340, %c0_341], %531 {strides = array<i32>} : memref<5x5x8x128xf32, #tpu.memory_space<vmem>>, vector<1x1x8x128xf32>,
    %c4_342 = arith.constant 4 : index
    %c1_343 = arith.constant 1 : index
    %c0_344 = arith.constant 0 : index
    %c0_345 = arith.constant 0 : index
    %532 = vector.load %arg7[%c4_342, %c1_343, %c0_344, %c0_345] : memref<5x5x8x128xf32, #tpu.memory_space<vmem>>, vector<1x1x8x128xf32>
    %533 = vector.shape_cast %532 : vector<1x1x8x128xf32> to vector<8x128xf32>
    %534 = vector.shape_cast %504 : vector<8x128xf32> to vector<1x1x8x128xf32>
    tpu.vector_store %arg7[%c4_342, %c1_343, %c0_344, %c0_345], %534 {strides = array<i32>} : memref<5x5x8x128xf32, #tpu.memory_space<vmem>>, vector<1x1x8x128xf32>,
    %cst_346 = arith.constant -0.0794172138 : f32
    %535 = vector.broadcast %cst_346 : f32 to vector<8x128xf32>
    %536 = arith.mulf %431, %535 : vector<8x128xf32>
    %cst_347 = arith.constant 0.00870088767 : f32
    %537 = vector.broadcast %cst_347 : f32 to vector<8x128xf32>
    %538 = arith.mulf %432, %537 : vector<8x128xf32>
    %539 = arith.addf %536, %538 : vector<8x128xf32>
    %cst_348 = arith.constant -0.216697052 : f32
    %540 = vector.broadcast %cst_348 : f32 to vector<8x128xf32>
    %541 = arith.mulf %459, %540 : vector<8x128xf32>
    %542 = arith.addf %539, %541 : vector<8x128xf32>
    %cst_349 = arith.constant 0.0764605179 : f32
    %543 = vector.broadcast %cst_349 : f32 to vector<8x128xf32>
    %544 = arith.mulf %460, %543 : vector<8x128xf32>
    %545 = arith.addf %542, %544 : vector<8x128xf32>
    %cst_350 = arith.constant -0.216479287 : f32
    %546 = vector.broadcast %cst_350 : f32 to vector<8x128xf32>
    %547 = arith.mulf %487, %546 : vector<8x128xf32>
    %548 = arith.addf %545, %547 : vector<8x128xf32>
    %cst_351 = arith.constant -0.0207985174 : f32
    %549 = vector.broadcast %cst_351 : f32 to vector<8x128xf32>
    %550 = arith.mulf %488, %549 : vector<8x128xf32>
    %551 = arith.addf %548, %550 : vector<8x128xf32>
    %cst_352 = arith.constant -2.760510e-01 : f32
    %552 = vector.broadcast %cst_352 : f32 to vector<8x128xf32>
    %553 = arith.mulf %495, %552 : vector<8x128xf32>
    %554 = arith.addf %551, %553 : vector<8x128xf32>
    %cst_353 = arith.constant 0.0956211909 : f32
    %555 = vector.broadcast %cst_353 : f32 to vector<8x128xf32>
    %556 = arith.mulf %496, %555 : vector<8x128xf32>
    %557 = arith.addf %554, %556 : vector<8x128xf32>
    %cst_354 = arith.constant 0.380173892 : f32
    %558 = vector.broadcast %cst_354 : f32 to vector<8x128xf32>
    %559 = arith.mulf %503, %558 : vector<8x128xf32>
    %560 = arith.addf %557, %559 : vector<8x128xf32>
    %cst_355 = arith.constant 0.123860799 : f32
    %561 = vector.broadcast %cst_355 : f32 to vector<8x128xf32>
    %562 = arith.mulf %504, %561 : vector<8x128xf32>
    %563 = arith.addf %560, %562 : vector<8x128xf32>
    %564 = arith.mulf %563, %204 : vector<8x128xf32>
    %565 = arith.addf %7, %564 : vector<8x128xf32>
    %cst_356 = arith.constant -0.109752551 : f32
    %566 = vector.broadcast %cst_356 : f32 to vector<8x128xf32>
    %567 = arith.mulf %431, %566 : vector<8x128xf32>
    %cst_357 = arith.constant 0.0538209677 : f32
    %568 = vector.broadcast %cst_357 : f32 to vector<8x128xf32>
    %569 = arith.mulf %432, %568 : vector<8x128xf32>
    %570 = arith.addf %567, %569 : vector<8x128xf32>
    %cst_358 = arith.constant 0.0503442958 : f32
    %571 = vector.broadcast %cst_358 : f32 to vector<8x128xf32>
    %572 = arith.mulf %459, %571 : vector<8x128xf32>
    %573 = arith.addf %570, %572 : vector<8x128xf32>
    %cst_359 = arith.constant 0.0506667681 : f32
    %574 = vector.broadcast %cst_359 : f32 to vector<8x128xf32>
    %575 = arith.mulf %460, %574 : vector<8x128xf32>
    %576 = arith.addf %573, %575 : vector<8x128xf32>
    %cst_360 = arith.constant 0.235894367 : f32
    %577 = vector.broadcast %cst_360 : f32 to vector<8x128xf32>
    %578 = arith.mulf %487, %577 : vector<8x128xf32>
    %579 = arith.addf %576, %578 : vector<8x128xf32>
    %cst_361 = arith.constant -0.14315784 : f32
    %580 = vector.broadcast %cst_361 : f32 to vector<8x128xf32>
    %581 = arith.mulf %488, %580 : vector<8x128xf32>
    %582 = arith.addf %579, %581 : vector<8x128xf32>
    %cst_362 = arith.constant 0.198860273 : f32
    %583 = vector.broadcast %cst_362 : f32 to vector<8x128xf32>
    %584 = arith.mulf %495, %583 : vector<8x128xf32>
    %585 = arith.addf %582, %584 : vector<8x128xf32>
    %cst_363 = arith.constant -0.00447440054 : f32
    %586 = vector.broadcast %cst_363 : f32 to vector<8x128xf32>
    %587 = arith.mulf %496, %586 : vector<8x128xf32>
    %588 = arith.addf %585, %587 : vector<8x128xf32>
    %cst_364 = arith.constant -0.269729227 : f32
    %589 = vector.broadcast %cst_364 : f32 to vector<8x128xf32>
    %590 = arith.mulf %503, %589 : vector<8x128xf32>
    %591 = arith.addf %588, %590 : vector<8x128xf32>
    %cst_365 = arith.constant -0.0248427894 : f32
    %592 = vector.broadcast %cst_365 : f32 to vector<8x128xf32>
    %593 = arith.mulf %504, %592 : vector<8x128xf32>
    %594 = arith.addf %591, %593 : vector<8x128xf32>
    %595 = arith.mulf %594, %206 : vector<8x128xf32>
    %596 = arith.addf %16, %595 : vector<8x128xf32>
    %c0_366 = arith.constant 0 : index
    %c2_367 = arith.constant 2 : index
    %c0_368 = arith.constant 0 : index
    %c0_369 = arith.constant 0 : index
    %597 = vector.load %arg4[%c0_366, %c2_367, %c0_368, %c0_369] : memref<3x3x8x128xf32, #tpu.memory_space<vmem>>, vector<1x1x8x128xf32>
    %598 = vector.shape_cast %597 : vector<1x1x8x128xf32> to vector<8x128xf32>
    %c0_370 = arith.constant 0 : index
    %c2_371 = arith.constant 2 : index
    %c0_372 = arith.constant 0 : index
    %c0_373 = arith.constant 0 : index
    %599 = vector.load %arg5[%c0_370, %c2_371, %c0_372, %c0_373] : memref<3x3x8x128xf32, #tpu.memory_space<vmem>>, vector<1x1x8x128xf32>
    %600 = vector.shape_cast %599 : vector<1x1x8x128xf32> to vector<8x128xf32>
    %c1_374 = arith.constant 1 : index
    %c2_375 = arith.constant 2 : index
    %c0_376 = arith.constant 0 : index
    %c0_377 = arith.constant 0 : index
    %601 = vector.load %arg4[%c1_374, %c2_375, %c0_376, %c0_377] : memref<3x3x8x128xf32, #tpu.memory_space<vmem>>, vector<1x1x8x128xf32>
    %602 = vector.shape_cast %601 : vector<1x1x8x128xf32> to vector<8x128xf32>
    %c1_378 = arith.constant 1 : index
    %c2_379 = arith.constant 2 : index
    %c0_380 = arith.constant 0 : index
    %c0_381 = arith.constant 0 : index
    %603 = vector.load %arg5[%c1_378, %c2_379, %c0_380, %c0_381] : memref<3x3x8x128xf32, #tpu.memory_space<vmem>>, vector<1x1x8x128xf32>
    %604 = vector.shape_cast %603 : vector<1x1x8x128xf32> to vector<8x128xf32>
    %c2_382 = arith.constant 2 : index
    %c2_383 = arith.constant 2 : index
    %c0_384 = arith.constant 0 : index
    %c0_385 = arith.constant 0 : index
    %605 = vector.load %arg4[%c2_382, %c2_383, %c0_384, %c0_385] : memref<3x3x8x128xf32, #tpu.memory_space<vmem>>, vector<1x1x8x128xf32>
    %606 = vector.shape_cast %605 : vector<1x1x8x128xf32> to vector<8x128xf32>
    %c2_386 = arith.constant 2 : index
    %c2_387 = arith.constant 2 : index
    %c0_388 = arith.constant 0 : index
    %c0_389 = arith.constant 0 : index
    %607 = vector.load %arg5[%c2_386, %c2_387, %c0_388, %c0_389] : memref<3x3x8x128xf32, #tpu.memory_space<vmem>>, vector<1x1x8x128xf32>
    %608 = vector.shape_cast %607 : vector<1x1x8x128xf32> to vector<8x128xf32>
    %c0_390 = arith.constant 0 : index
    %c0_391 = arith.constant 0 : index
    %c0_392 = arith.constant 0 : index
    %c0_393 = arith.constant 0 : index
    %609 = vector.load %arg4[%c0_390, %c0_391, %c0_392, %c0_393] : memref<3x3x8x128xf32, #tpu.memory_space<vmem>>, vector<1x1x8x128xf32>
    %610 = vector.shape_cast %609 : vector<1x1x8x128xf32> to vector<8x128xf32>
    %c0_394 = arith.constant 0 : index
    %c0_395 = arith.constant 0 : index
    %c0_396 = arith.constant 0 : index
    %c0_397 = arith.constant 0 : index
    %611 = vector.load %arg5[%c0_394, %c0_395, %c0_396, %c0_397] : memref<3x3x8x128xf32, #tpu.memory_space<vmem>>, vector<1x1x8x128xf32>
    %612 = vector.shape_cast %611 : vector<1x1x8x128xf32> to vector<8x128xf32>
    %613 = arith.mulf %610, %598 : vector<8x128xf32>
    %614 = arith.mulf %612, %600 : vector<8x128xf32>
    %615 = arith.subf %613, %614 : vector<8x128xf32>
    %616 = arith.mulf %610, %600 : vector<8x128xf32>
    %617 = arith.mulf %612, %598 : vector<8x128xf32>
    %618 = arith.addf %616, %617 : vector<8x128xf32>
    %619 = arith.mulf %610, %602 : vector<8x128xf32>
    %620 = arith.mulf %612, %604 : vector<8x128xf32>
    %621 = arith.subf %619, %620 : vector<8x128xf32>
    %622 = arith.mulf %610, %604 : vector<8x128xf32>
    %623 = arith.mulf %612, %602 : vector<8x128xf32>
    %624 = arith.addf %622, %623 : vector<8x128xf32>
    %625 = arith.mulf %610, %606 : vector<8x128xf32>
    %626 = arith.mulf %612, %608 : vector<8x128xf32>
    %627 = arith.subf %625, %626 : vector<8x128xf32>
    %628 = arith.mulf %610, %608 : vector<8x128xf32>
    %629 = arith.mulf %612, %606 : vector<8x128xf32>
    %630 = arith.addf %628, %629 : vector<8x128xf32>
    %c1_398 = arith.constant 1 : index
    %c0_399 = arith.constant 0 : index
    %c0_400 = arith.constant 0 : index
    %c0_401 = arith.constant 0 : index
    %631 = vector.load %arg4[%c1_398, %c0_399, %c0_400, %c0_401] : memref<3x3x8x128xf32, #tpu.memory_space<vmem>>, vector<1x1x8x128xf32>
    %632 = vector.shape_cast %631 : vector<1x1x8x128xf32> to vector<8x128xf32>
    %c1_402 = arith.constant 1 : index
    %c0_403 = arith.constant 0 : index
    %c0_404 = arith.constant 0 : index
    %c0_405 = arith.constant 0 : index
    %633 = vector.load %arg5[%c1_402, %c0_403, %c0_404, %c0_405] : memref<3x3x8x128xf32, #tpu.memory_space<vmem>>, vector<1x1x8x128xf32>
    %634 = vector.shape_cast %633 : vector<1x1x8x128xf32> to vector<8x128xf32>
    %635 = arith.mulf %632, %598 : vector<8x128xf32>
    %636 = arith.mulf %634, %600 : vector<8x128xf32>
    %637 = arith.subf %635, %636 : vector<8x128xf32>
    %638 = arith.mulf %632, %600 : vector<8x128xf32>
    %639 = arith.mulf %634, %598 : vector<8x128xf32>
    %640 = arith.addf %638, %639 : vector<8x128xf32>
    %641 = arith.addf %621, %637 : vector<8x128xf32>
    %642 = arith.addf %624, %640 : vector<8x128xf32>
    %643 = arith.mulf %632, %602 : vector<8x128xf32>
    %644 = arith.mulf %634, %604 : vector<8x128xf32>
    %645 = arith.subf %643, %644 : vector<8x128xf32>
    %646 = arith.mulf %632, %604 : vector<8x128xf32>
    %647 = arith.mulf %634, %602 : vector<8x128xf32>
    %648 = arith.addf %646, %647 : vector<8x128xf32>
    %649 = arith.addf %627, %645 : vector<8x128xf32>
    %650 = arith.addf %630, %648 : vector<8x128xf32>
    %651 = arith.mulf %632, %606 : vector<8x128xf32>
    %652 = arith.mulf %634, %608 : vector<8x128xf32>
    %653 = arith.subf %651, %652 : vector<8x128xf32>
    %654 = arith.mulf %632, %608 : vector<8x128xf32>
    %655 = arith.mulf %634, %606 : vector<8x128xf32>
    %656 = arith.addf %654, %655 : vector<8x128xf32>
    %c2_406 = arith.constant 2 : index
    %c0_407 = arith.constant 0 : index
    %c0_408 = arith.constant 0 : index
    %c0_409 = arith.constant 0 : index
    %657 = vector.load %arg4[%c2_406, %c0_407, %c0_408, %c0_409] : memref<3x3x8x128xf32, #tpu.memory_space<vmem>>, vector<1x1x8x128xf32>
    %658 = vector.shape_cast %657 : vector<1x1x8x128xf32> to vector<8x128xf32>
    %c2_410 = arith.constant 2 : index
    %c0_411 = arith.constant 0 : index
    %c0_412 = arith.constant 0 : index
    %c0_413 = arith.constant 0 : index
    %659 = vector.load %arg5[%c2_410, %c0_411, %c0_412, %c0_413] : memref<3x3x8x128xf32, #tpu.memory_space<vmem>>, vector<1x1x8x128xf32>
    %660 = vector.shape_cast %659 : vector<1x1x8x128xf32> to vector<8x128xf32>
    %661 = arith.mulf %658, %598 : vector<8x128xf32>
    %662 = arith.mulf %660, %600 : vector<8x128xf32>
    %663 = arith.subf %661, %662 : vector<8x128xf32>
    %664 = arith.mulf %658, %600 : vector<8x128xf32>
    %665 = arith.mulf %660, %598 : vector<8x128xf32>
    %666 = arith.addf %664, %665 : vector<8x128xf32>
    %667 = arith.addf %649, %663 : vector<8x128xf32>
    %668 = arith.addf %650, %666 : vector<8x128xf32>
    %669 = arith.mulf %658, %602 : vector<8x128xf32>
    %670 = arith.mulf %660, %604 : vector<8x128xf32>
    %671 = arith.subf %669, %670 : vector<8x128xf32>
    %672 = arith.mulf %658, %604 : vector<8x128xf32>
    %673 = arith.mulf %660, %602 : vector<8x128xf32>
    %674 = arith.addf %672, %673 : vector<8x128xf32>
    %675 = arith.addf %653, %671 : vector<8x128xf32>
    %676 = arith.addf %656, %674 : vector<8x128xf32>
    %677 = arith.mulf %658, %606 : vector<8x128xf32>
    %678 = arith.mulf %660, %608 : vector<8x128xf32>
    %679 = arith.subf %677, %678 : vector<8x128xf32>
    %680 = arith.mulf %658, %608 : vector<8x128xf32>
    %681 = arith.mulf %660, %606 : vector<8x128xf32>
    %682 = arith.addf %680, %681 : vector<8x128xf32>
    %c0_414 = arith.constant 0 : index
    %c1_415 = arith.constant 1 : index
    %c0_416 = arith.constant 0 : index
    %c0_417 = arith.constant 0 : index
    %683 = vector.load %arg4[%c0_414, %c1_415, %c0_416, %c0_417] : memref<3x3x8x128xf32, #tpu.memory_space<vmem>>, vector<1x1x8x128xf32>
    %684 = vector.shape_cast %683 : vector<1x1x8x128xf32> to vector<8x128xf32>
    %c0_418 = arith.constant 0 : index
    %c1_419 = arith.constant 1 : index
    %c0_420 = arith.constant 0 : index
    %c0_421 = arith.constant 0 : index
    %685 = vector.load %arg5[%c0_418, %c1_419, %c0_420, %c0_421] : memref<3x3x8x128xf32, #tpu.memory_space<vmem>>, vector<1x1x8x128xf32>
    %686 = vector.shape_cast %685 : vector<1x1x8x128xf32> to vector<8x128xf32>
    %c1_422 = arith.constant 1 : index
    %c1_423 = arith.constant 1 : index
    %c0_424 = arith.constant 0 : index
    %c0_425 = arith.constant 0 : index
    %687 = vector.load %arg4[%c1_422, %c1_423, %c0_424, %c0_425] : memref<3x3x8x128xf32, #tpu.memory_space<vmem>>, vector<1x1x8x128xf32>
    %688 = vector.shape_cast %687 : vector<1x1x8x128xf32> to vector<8x128xf32>
    %c1_426 = arith.constant 1 : index
    %c1_427 = arith.constant 1 : index
    %c0_428 = arith.constant 0 : index
    %c0_429 = arith.constant 0 : index
    %689 = vector.load %arg5[%c1_426, %c1_427, %c0_428, %c0_429] : memref<3x3x8x128xf32, #tpu.memory_space<vmem>>, vector<1x1x8x128xf32>
    %690 = vector.shape_cast %689 : vector<1x1x8x128xf32> to vector<8x128xf32>
    %c2_430 = arith.constant 2 : index
    %c1_431 = arith.constant 1 : index
    %c0_432 = arith.constant 0 : index
    %c0_433 = arith.constant 0 : index
    %691 = vector.load %arg4[%c2_430, %c1_431, %c0_432, %c0_433] : memref<3x3x8x128xf32, #tpu.memory_space<vmem>>, vector<1x1x8x128xf32>
    %692 = vector.shape_cast %691 : vector<1x1x8x128xf32> to vector<8x128xf32>
    %c2_434 = arith.constant 2 : index
    %c1_435 = arith.constant 1 : index
    %c0_436 = arith.constant 0 : index
    %c0_437 = arith.constant 0 : index
    %693 = vector.load %arg5[%c2_434, %c1_435, %c0_436, %c0_437] : memref<3x3x8x128xf32, #tpu.memory_space<vmem>>, vector<1x1x8x128xf32>
    %694 = vector.shape_cast %693 : vector<1x1x8x128xf32> to vector<8x128xf32>
    %c0_438 = arith.constant 0 : index
    %c1_439 = arith.constant 1 : index
    %c0_440 = arith.constant 0 : index
    %c0_441 = arith.constant 0 : index
    %695 = vector.load %arg4[%c0_438, %c1_439, %c0_440, %c0_441] : memref<3x3x8x128xf32, #tpu.memory_space<vmem>>, vector<1x1x8x128xf32>
    %696 = vector.shape_cast %695 : vector<1x1x8x128xf32> to vector<8x128xf32>
    %c0_442 = arith.constant 0 : index
    %c1_443 = arith.constant 1 : index
    %c0_444 = arith.constant 0 : index
    %c0_445 = arith.constant 0 : index
    %697 = vector.load %arg5[%c0_442, %c1_443, %c0_444, %c0_445] : memref<3x3x8x128xf32, #tpu.memory_space<vmem>>, vector<1x1x8x128xf32>
    %698 = vector.shape_cast %697 : vector<1x1x8x128xf32> to vector<8x128xf32>
    %699 = arith.mulf %696, %684 : vector<8x128xf32>
    %700 = arith.mulf %698, %686 : vector<8x128xf32>
    %701 = arith.subf %699, %700 : vector<8x128xf32>
    %702 = arith.mulf %696, %686 : vector<8x128xf32>
    %703 = arith.mulf %698, %684 : vector<8x128xf32>
    %704 = arith.addf %702, %703 : vector<8x128xf32>
    %705 = arith.addf %615, %701 : vector<8x128xf32>
    %706 = arith.addf %618, %704 : vector<8x128xf32>
    %707 = arith.mulf %696, %688 : vector<8x128xf32>
    %708 = arith.mulf %698, %690 : vector<8x128xf32>
    %709 = arith.subf %707, %708 : vector<8x128xf32>
    %710 = arith.mulf %696, %690 : vector<8x128xf32>
    %711 = arith.mulf %698, %688 : vector<8x128xf32>
    %712 = arith.addf %710, %711 : vector<8x128xf32>
    %713 = arith.addf %641, %709 : vector<8x128xf32>
    %714 = arith.addf %642, %712 : vector<8x128xf32>
    %715 = arith.mulf %696, %692 : vector<8x128xf32>
    %716 = arith.mulf %698, %694 : vector<8x128xf32>
    %717 = arith.subf %715, %716 : vector<8x128xf32>
    %718 = arith.mulf %696, %694 : vector<8x128xf32>
    %719 = arith.mulf %698, %692 : vector<8x128xf32>
    %720 = arith.addf %718, %719 : vector<8x128xf32>
    %721 = arith.addf %667, %717 : vector<8x128xf32>
    %722 = arith.addf %668, %720 : vector<8x128xf32>
    %c1_446 = arith.constant 1 : index
    %c1_447 = arith.constant 1 : index
    %c0_448 = arith.constant 0 : index
    %c0_449 = arith.constant 0 : index
    %723 = vector.load %arg4[%c1_446, %c1_447, %c0_448, %c0_449] : memref<3x3x8x128xf32, #tpu.memory_space<vmem>>, vector<1x1x8x128xf32>
    %724 = vector.shape_cast %723 : vector<1x1x8x128xf32> to vector<8x128xf32>
    %c1_450 = arith.constant 1 : index
    %c1_451 = arith.constant 1 : index
    %c0_452 = arith.constant 0 : index
    %c0_453 = arith.constant 0 : index
    %725 = vector.load %arg5[%c1_450, %c1_451, %c0_452, %c0_453] : memref<3x3x8x128xf32, #tpu.memory_space<vmem>>, vector<1x1x8x128xf32>
    %726 = vector.shape_cast %725 : vector<1x1x8x128xf32> to vector<8x128xf32>
    %727 = arith.mulf %724, %684 : vector<8x128xf32>
    %728 = arith.mulf %726, %686 : vector<8x128xf32>
    %729 = arith.subf %727, %728 : vector<8x128xf32>
    %730 = arith.mulf %724, %686 : vector<8x128xf32>
    %731 = arith.mulf %726, %684 : vector<8x128xf32>
    %732 = arith.addf %730, %731 : vector<8x128xf32>
    %733 = arith.addf %713, %729 : vector<8x128xf32>
    %734 = arith.addf %714, %732 : vector<8x128xf32>
    %735 = arith.mulf %724, %688 : vector<8x128xf32>
    %736 = arith.mulf %726, %690 : vector<8x128xf32>
    %737 = arith.subf %735, %736 : vector<8x128xf32>
    %738 = arith.mulf %724, %690 : vector<8x128xf32>
    %739 = arith.mulf %726, %688 : vector<8x128xf32>
    %740 = arith.addf %738, %739 : vector<8x128xf32>
    %741 = arith.addf %721, %737 : vector<8x128xf32>
    %742 = arith.addf %722, %740 : vector<8x128xf32>
    %743 = arith.mulf %724, %692 : vector<8x128xf32>
    %744 = arith.mulf %726, %694 : vector<8x128xf32>
    %745 = arith.subf %743, %744 : vector<8x128xf32>
    %746 = arith.mulf %724, %694 : vector<8x128xf32>
    %747 = arith.mulf %726, %692 : vector<8x128xf32>
    %748 = arith.addf %746, %747 : vector<8x128xf32>
    %749 = arith.addf %675, %745 : vector<8x128xf32>
    %750 = arith.addf %676, %748 : vector<8x128xf32>
    %c2_454 = arith.constant 2 : index
    %c1_455 = arith.constant 1 : index
    %c0_456 = arith.constant 0 : index
    %c0_457 = arith.constant 0 : index
    %751 = vector.load %arg4[%c2_454, %c1_455, %c0_456, %c0_457] : memref<3x3x8x128xf32, #tpu.memory_space<vmem>>, vector<1x1x8x128xf32>
    %752 = vector.shape_cast %751 : vector<1x1x8x128xf32> to vector<8x128xf32>
    %c2_458 = arith.constant 2 : index
    %c1_459 = arith.constant 1 : index
    %c0_460 = arith.constant 0 : index
    %c0_461 = arith.constant 0 : index
    %753 = vector.load %arg5[%c2_458, %c1_459, %c0_460, %c0_461] : memref<3x3x8x128xf32, #tpu.memory_space<vmem>>, vector<1x1x8x128xf32>
    %754 = vector.shape_cast %753 : vector<1x1x8x128xf32> to vector<8x128xf32>
    %755 = arith.mulf %752, %684 : vector<8x128xf32>
    %756 = arith.mulf %754, %686 : vector<8x128xf32>
    %757 = arith.subf %755, %756 : vector<8x128xf32>
    %758 = arith.mulf %752, %686 : vector<8x128xf32>
    %759 = arith.mulf %754, %684 : vector<8x128xf32>
    %760 = arith.addf %758, %759 : vector<8x128xf32>
    %761 = arith.addf %741, %757 : vector<8x128xf32>
    %762 = arith.addf %742, %760 : vector<8x128xf32>
    %763 = arith.mulf %752, %688 : vector<8x128xf32>
    %764 = arith.mulf %754, %690 : vector<8x128xf32>
    %765 = arith.subf %763, %764 : vector<8x128xf32>
    %766 = arith.mulf %752, %690 : vector<8x128xf32>
    %767 = arith.mulf %754, %688 : vector<8x128xf32>
    %768 = arith.addf %766, %767 : vector<8x128xf32>
    %769 = arith.addf %749, %765 : vector<8x128xf32>
    %770 = arith.addf %750, %768 : vector<8x128xf32>
    %771 = arith.mulf %752, %692 : vector<8x128xf32>
    %772 = arith.mulf %754, %694 : vector<8x128xf32>
    %773 = arith.subf %771, %772 : vector<8x128xf32>
    %774 = arith.mulf %752, %694 : vector<8x128xf32>
    %775 = arith.mulf %754, %692 : vector<8x128xf32>
    %776 = arith.addf %774, %775 : vector<8x128xf32>
    %777 = arith.addf %679, %773 : vector<8x128xf32>
    %778 = arith.addf %682, %776 : vector<8x128xf32>
    %c0_462 = arith.constant 0 : index
    %c0_463 = arith.constant 0 : index
    %c0_464 = arith.constant 0 : index
    %c0_465 = arith.constant 0 : index
    %779 = vector.load %arg4[%c0_462, %c0_463, %c0_464, %c0_465] : memref<3x3x8x128xf32, #tpu.memory_space<vmem>>, vector<1x1x8x128xf32>
    %780 = vector.shape_cast %779 : vector<1x1x8x128xf32> to vector<8x128xf32>
    %c0_466 = arith.constant 0 : index
    %c0_467 = arith.constant 0 : index
    %c0_468 = arith.constant 0 : index
    %c0_469 = arith.constant 0 : index
    %781 = vector.load %arg5[%c0_466, %c0_467, %c0_468, %c0_469] : memref<3x3x8x128xf32, #tpu.memory_space<vmem>>, vector<1x1x8x128xf32>
    %782 = vector.shape_cast %781 : vector<1x1x8x128xf32> to vector<8x128xf32>
    %c1_470 = arith.constant 1 : index
    %c0_471 = arith.constant 0 : index
    %c0_472 = arith.constant 0 : index
    %c0_473 = arith.constant 0 : index
    %783 = vector.load %arg4[%c1_470, %c0_471, %c0_472, %c0_473] : memref<3x3x8x128xf32, #tpu.memory_space<vmem>>, vector<1x1x8x128xf32>
    %784 = vector.shape_cast %783 : vector<1x1x8x128xf32> to vector<8x128xf32>
    %c1_474 = arith.constant 1 : index
    %c0_475 = arith.constant 0 : index
    %c0_476 = arith.constant 0 : index
    %c0_477 = arith.constant 0 : index
    %785 = vector.load %arg5[%c1_474, %c0_475, %c0_476, %c0_477] : memref<3x3x8x128xf32, #tpu.memory_space<vmem>>, vector<1x1x8x128xf32>
    %786 = vector.shape_cast %785 : vector<1x1x8x128xf32> to vector<8x128xf32>
    %c2_478 = arith.constant 2 : index
    %c0_479 = arith.constant 0 : index
    %c0_480 = arith.constant 0 : index
    %c0_481 = arith.constant 0 : index
    %787 = vector.load %arg4[%c2_478, %c0_479, %c0_480, %c0_481] : memref<3x3x8x128xf32, #tpu.memory_space<vmem>>, vector<1x1x8x128xf32>
    %788 = vector.shape_cast %787 : vector<1x1x8x128xf32> to vector<8x128xf32>
    %c2_482 = arith.constant 2 : index
    %c0_483 = arith.constant 0 : index
    %c0_484 = arith.constant 0 : index
    %c0_485 = arith.constant 0 : index
    %789 = vector.load %arg5[%c2_482, %c0_483, %c0_484, %c0_485] : memref<3x3x8x128xf32, #tpu.memory_space<vmem>>, vector<1x1x8x128xf32>
    %790 = vector.shape_cast %789 : vector<1x1x8x128xf32> to vector<8x128xf32>
    %c0_486 = arith.constant 0 : index
    %c2_487 = arith.constant 2 : index
    %c0_488 = arith.constant 0 : index
    %c0_489 = arith.constant 0 : index
    %791 = vector.load %arg4[%c0_486, %c2_487, %c0_488, %c0_489] : memref<3x3x8x128xf32, #tpu.memory_space<vmem>>, vector<1x1x8x128xf32>
    %792 = vector.shape_cast %791 : vector<1x1x8x128xf32> to vector<8x128xf32>
    %c0_490 = arith.constant 0 : index
    %c2_491 = arith.constant 2 : index
    %c0_492 = arith.constant 0 : index
    %c0_493 = arith.constant 0 : index
    %793 = vector.load %arg5[%c0_490, %c2_491, %c0_492, %c0_493] : memref<3x3x8x128xf32, #tpu.memory_space<vmem>>, vector<1x1x8x128xf32>
    %794 = vector.shape_cast %793 : vector<1x1x8x128xf32> to vector<8x128xf32>
    %795 = arith.mulf %792, %780 : vector<8x128xf32>
    %796 = arith.mulf %794, %782 : vector<8x128xf32>
    %797 = arith.subf %795, %796 : vector<8x128xf32>
    %798 = arith.mulf %792, %782 : vector<8x128xf32>
    %799 = arith.mulf %794, %780 : vector<8x128xf32>
    %800 = arith.addf %798, %799 : vector<8x128xf32>
    %801 = arith.addf %705, %797 : vector<8x128xf32>
    %802 = arith.addf %706, %800 : vector<8x128xf32>
    %803 = arith.mulf %792, %784 : vector<8x128xf32>
    %804 = arith.mulf %794, %786 : vector<8x128xf32>
    %805 = arith.subf %803, %804 : vector<8x128xf32>
    %806 = arith.mulf %792, %786 : vector<8x128xf32>
    %807 = arith.mulf %794, %784 : vector<8x128xf32>
    %808 = arith.addf %806, %807 : vector<8x128xf32>
    %809 = arith.addf %733, %805 : vector<8x128xf32>
    %810 = arith.addf %734, %808 : vector<8x128xf32>
    %811 = arith.mulf %792, %788 : vector<8x128xf32>
    %812 = arith.mulf %794, %790 : vector<8x128xf32>
    %813 = arith.subf %811, %812 : vector<8x128xf32>
    %814 = arith.mulf %792, %790 : vector<8x128xf32>
    %815 = arith.mulf %794, %788 : vector<8x128xf32>
    %816 = arith.addf %814, %815 : vector<8x128xf32>
    %817 = arith.addf %761, %813 : vector<8x128xf32>
    %818 = arith.addf %762, %816 : vector<8x128xf32>
    %c1_494 = arith.constant 1 : index
    %c2_495 = arith.constant 2 : index
    %c0_496 = arith.constant 0 : index
    %c0_497 = arith.constant 0 : index
    %819 = vector.load %arg4[%c1_494, %c2_495, %c0_496, %c0_497] : memref<3x3x8x128xf32, #tpu.memory_space<vmem>>, vector<1x1x8x128xf32>
    %820 = vector.shape_cast %819 : vector<1x1x8x128xf32> to vector<8x128xf32>
    %c1_498 = arith.constant 1 : index
    %c2_499 = arith.constant 2 : index
    %c0_500 = arith.constant 0 : index
    %c0_501 = arith.constant 0 : index
    %821 = vector.load %arg5[%c1_498, %c2_499, %c0_500, %c0_501] : memref<3x3x8x128xf32, #tpu.memory_space<vmem>>, vector<1x1x8x128xf32>
    %822 = vector.shape_cast %821 : vector<1x1x8x128xf32> to vector<8x128xf32>
    %823 = arith.mulf %820, %780 : vector<8x128xf32>
    %824 = arith.mulf %822, %782 : vector<8x128xf32>
    %825 = arith.subf %823, %824 : vector<8x128xf32>
    %826 = arith.mulf %820, %782 : vector<8x128xf32>
    %827 = arith.mulf %822, %780 : vector<8x128xf32>
    %828 = arith.addf %826, %827 : vector<8x128xf32>
    %829 = arith.addf %809, %825 : vector<8x128xf32>
    %830 = arith.addf %810, %828 : vector<8x128xf32>
    %831 = arith.mulf %820, %784 : vector<8x128xf32>
    %832 = arith.mulf %822, %786 : vector<8x128xf32>
    %833 = arith.subf %831, %832 : vector<8x128xf32>
    %834 = arith.mulf %820, %786 : vector<8x128xf32>
    %835 = arith.mulf %822, %784 : vector<8x128xf32>
    %836 = arith.addf %834, %835 : vector<8x128xf32>
    %837 = arith.addf %817, %833 : vector<8x128xf32>
    %838 = arith.addf %818, %836 : vector<8x128xf32>
    %839 = arith.mulf %820, %788 : vector<8x128xf32>
    %840 = arith.mulf %822, %790 : vector<8x128xf32>
    %841 = arith.subf %839, %840 : vector<8x128xf32>
    %842 = arith.mulf %820, %790 : vector<8x128xf32>
    %843 = arith.mulf %822, %788 : vector<8x128xf32>
    %844 = arith.addf %842, %843 : vector<8x128xf32>
    %845 = arith.addf %769, %841 : vector<8x128xf32>
    %846 = arith.addf %770, %844 : vector<8x128xf32>
    %c2_502 = arith.constant 2 : index
    %c2_503 = arith.constant 2 : index
    %c0_504 = arith.constant 0 : index
    %c0_505 = arith.constant 0 : index
    %847 = vector.load %arg4[%c2_502, %c2_503, %c0_504, %c0_505] : memref<3x3x8x128xf32, #tpu.memory_space<vmem>>, vector<1x1x8x128xf32>
    %848 = vector.shape_cast %847 : vector<1x1x8x128xf32> to vector<8x128xf32>
    %c2_506 = arith.constant 2 : index
    %c2_507 = arith.constant 2 : index
    %c0_508 = arith.constant 0 : index
    %c0_509 = arith.constant 0 : index
    %849 = vector.load %arg5[%c2_506, %c2_507, %c0_508, %c0_509] : memref<3x3x8x128xf32, #tpu.memory_space<vmem>>, vector<1x1x8x128xf32>
    %850 = vector.shape_cast %849 : vector<1x1x8x128xf32> to vector<8x128xf32>
    %851 = arith.mulf %848, %780 : vector<8x128xf32>
    %852 = arith.mulf %850, %782 : vector<8x128xf32>
    %853 = arith.subf %851, %852 : vector<8x128xf32>
    %854 = arith.mulf %848, %782 : vector<8x128xf32>
    %855 = arith.mulf %850, %780 : vector<8x128xf32>
    %856 = arith.addf %854, %855 : vector<8x128xf32>
    %857 = arith.addf %837, %853 : vector<8x128xf32>
    %858 = arith.addf %838, %856 : vector<8x128xf32>
    %859 = arith.mulf %848, %784 : vector<8x128xf32>
    %860 = arith.mulf %850, %786 : vector<8x128xf32>
    %861 = arith.subf %859, %860 : vector<8x128xf32>
    %862 = arith.mulf %848, %786 : vector<8x128xf32>
    %863 = arith.mulf %850, %784 : vector<8x128xf32>
    %864 = arith.addf %862, %863 : vector<8x128xf32>
    %865 = arith.addf %845, %861 : vector<8x128xf32>
    %866 = arith.addf %846, %864 : vector<8x128xf32>
    %867 = arith.mulf %848, %788 : vector<8x128xf32>
    %868 = arith.mulf %850, %790 : vector<8x128xf32>
    %869 = arith.subf %867, %868 : vector<8x128xf32>
    %870 = arith.mulf %848, %790 : vector<8x128xf32>
    %871 = arith.mulf %850, %788 : vector<8x128xf32>
    %872 = arith.addf %870, %871 : vector<8x128xf32>
    %873 = arith.addf %777, %869 : vector<8x128xf32>
    %874 = arith.addf %778, %872 : vector<8x128xf32>
    %c0_510 = arith.constant 0 : index
    %c2_511 = arith.constant 2 : index
    %c0_512 = arith.constant 0 : index
    %c0_513 = arith.constant 0 : index
    %875 = vector.load %arg6[%c0_510, %c2_511, %c0_512, %c0_513] : memref<5x5x8x128xf32, #tpu.memory_space<vmem>>, vector<1x1x8x128xf32>
    %876 = vector.shape_cast %875 : vector<1x1x8x128xf32> to vector<8x128xf32>
    %877 = vector.shape_cast %801 : vector<8x128xf32> to vector<1x1x8x128xf32>
    tpu.vector_store %arg6[%c0_510, %c2_511, %c0_512, %c0_513], %877 {strides = array<i32>} : memref<5x5x8x128xf32, #tpu.memory_space<vmem>>, vector<1x1x8x128xf32>,
    %c0_514 = arith.constant 0 : index
    %c2_515 = arith.constant 2 : index
    %c0_516 = arith.constant 0 : index
    %c0_517 = arith.constant 0 : index
    %878 = vector.load %arg7[%c0_514, %c2_515, %c0_516, %c0_517] : memref<5x5x8x128xf32, #tpu.memory_space<vmem>>, vector<1x1x8x128xf32>
    %879 = vector.shape_cast %878 : vector<1x1x8x128xf32> to vector<8x128xf32>
    %880 = vector.shape_cast %802 : vector<8x128xf32> to vector<1x1x8x128xf32>
    tpu.vector_store %arg7[%c0_514, %c2_515, %c0_516, %c0_517], %880 {strides = array<i32>} : memref<5x5x8x128xf32, #tpu.memory_space<vmem>>, vector<1x1x8x128xf32>,
    %c1_518 = arith.constant 1 : index
    %c2_519 = arith.constant 2 : index
    %c0_520 = arith.constant 0 : index
    %c0_521 = arith.constant 0 : index
    %881 = vector.load %arg6[%c1_518, %c2_519, %c0_520, %c0_521] : memref<5x5x8x128xf32, #tpu.memory_space<vmem>>, vector<1x1x8x128xf32>
    %882 = vector.shape_cast %881 : vector<1x1x8x128xf32> to vector<8x128xf32>
    %883 = vector.shape_cast %829 : vector<8x128xf32> to vector<1x1x8x128xf32>
    tpu.vector_store %arg6[%c1_518, %c2_519, %c0_520, %c0_521], %883 {strides = array<i32>} : memref<5x5x8x128xf32, #tpu.memory_space<vmem>>, vector<1x1x8x128xf32>,
    %c1_522 = arith.constant 1 : index
    %c2_523 = arith.constant 2 : index
    %c0_524 = arith.constant 0 : index
    %c0_525 = arith.constant 0 : index
    %884 = vector.load %arg7[%c1_522, %c2_523, %c0_524, %c0_525] : memref<5x5x8x128xf32, #tpu.memory_space<vmem>>, vector<1x1x8x128xf32>
    %885 = vector.shape_cast %884 : vector<1x1x8x128xf32> to vector<8x128xf32>
    %886 = vector.shape_cast %830 : vector<8x128xf32> to vector<1x1x8x128xf32>
    tpu.vector_store %arg7[%c1_522, %c2_523, %c0_524, %c0_525], %886 {strides = array<i32>} : memref<5x5x8x128xf32, #tpu.memory_space<vmem>>, vector<1x1x8x128xf32>,
    %c2_526 = arith.constant 2 : index
    %c2_527 = arith.constant 2 : index
    %c0_528 = arith.constant 0 : index
    %c0_529 = arith.constant 0 : index
    %887 = vector.load %arg6[%c2_526, %c2_527, %c0_528, %c0_529] : memref<5x5x8x128xf32, #tpu.memory_space<vmem>>, vector<1x1x8x128xf32>
    %888 = vector.shape_cast %887 : vector<1x1x8x128xf32> to vector<8x128xf32>
    %889 = vector.shape_cast %857 : vector<8x128xf32> to vector<1x1x8x128xf32>
    tpu.vector_store %arg6[%c2_526, %c2_527, %c0_528, %c0_529], %889 {strides = array<i32>} : memref<5x5x8x128xf32, #tpu.memory_space<vmem>>, vector<1x1x8x128xf32>,
    %c2_530 = arith.constant 2 : index
    %c2_531 = arith.constant 2 : index
    %c0_532 = arith.constant 0 : index
    %c0_533 = arith.constant 0 : index
    %890 = vector.load %arg7[%c2_530, %c2_531, %c0_532, %c0_533] : memref<5x5x8x128xf32, #tpu.memory_space<vmem>>, vector<1x1x8x128xf32>
    %891 = vector.shape_cast %890 : vector<1x1x8x128xf32> to vector<8x128xf32>
    %892 = vector.shape_cast %858 : vector<8x128xf32> to vector<1x1x8x128xf32>
    tpu.vector_store %arg7[%c2_530, %c2_531, %c0_532, %c0_533], %892 {strides = array<i32>} : memref<5x5x8x128xf32, #tpu.memory_space<vmem>>, vector<1x1x8x128xf32>,
    %c3_534 = arith.constant 3 : index
    %c2_535 = arith.constant 2 : index
    %c0_536 = arith.constant 0 : index
    %c0_537 = arith.constant 0 : index
    %893 = vector.load %arg6[%c3_534, %c2_535, %c0_536, %c0_537] : memref<5x5x8x128xf32, #tpu.memory_space<vmem>>, vector<1x1x8x128xf32>
    %894 = vector.shape_cast %893 : vector<1x1x8x128xf32> to vector<8x128xf32>
    %895 = vector.shape_cast %865 : vector<8x128xf32> to vector<1x1x8x128xf32>
    tpu.vector_store %arg6[%c3_534, %c2_535, %c0_536, %c0_537], %895 {strides = array<i32>} : memref<5x5x8x128xf32, #tpu.memory_space<vmem>>, vector<1x1x8x128xf32>,
    %c3_538 = arith.constant 3 : index
    %c2_539 = arith.constant 2 : index
    %c0_540 = arith.constant 0 : index
    %c0_541 = arith.constant 0 : index
    %896 = vector.load %arg7[%c3_538, %c2_539, %c0_540, %c0_541] : memref<5x5x8x128xf32, #tpu.memory_space<vmem>>, vector<1x1x8x128xf32>
    %897 = vector.shape_cast %896 : vector<1x1x8x128xf32> to vector<8x128xf32>
    %898 = vector.shape_cast %866 : vector<8x128xf32> to vector<1x1x8x128xf32>
    tpu.vector_store %arg7[%c3_538, %c2_539, %c0_540, %c0_541], %898 {strides = array<i32>} : memref<5x5x8x128xf32, #tpu.memory_space<vmem>>, vector<1x1x8x128xf32>,
    %c4_542 = arith.constant 4 : index
    %c2_543 = arith.constant 2 : index
    %c0_544 = arith.constant 0 : index
    %c0_545 = arith.constant 0 : index
    %899 = vector.load %arg6[%c4_542, %c2_543, %c0_544, %c0_545] : memref<5x5x8x128xf32, #tpu.memory_space<vmem>>, vector<1x1x8x128xf32>
    %900 = vector.shape_cast %899 : vector<1x1x8x128xf32> to vector<8x128xf32>
    %901 = vector.shape_cast %873 : vector<8x128xf32> to vector<1x1x8x128xf32>
    tpu.vector_store %arg6[%c4_542, %c2_543, %c0_544, %c0_545], %901 {strides = array<i32>} : memref<5x5x8x128xf32, #tpu.memory_space<vmem>>, vector<1x1x8x128xf32>,
    %c4_546 = arith.constant 4 : index
    %c2_547 = arith.constant 2 : index
    %c0_548 = arith.constant 0 : index
    %c0_549 = arith.constant 0 : index
    %902 = vector.load %arg7[%c4_546, %c2_547, %c0_548, %c0_549] : memref<5x5x8x128xf32, #tpu.memory_space<vmem>>, vector<1x1x8x128xf32>
    %903 = vector.shape_cast %902 : vector<1x1x8x128xf32> to vector<8x128xf32>
    %904 = vector.shape_cast %874 : vector<8x128xf32> to vector<1x1x8x128xf32>
    tpu.vector_store %arg7[%c4_546, %c2_547, %c0_548, %c0_549], %904 {strides = array<i32>} : memref<5x5x8x128xf32, #tpu.memory_space<vmem>>, vector<1x1x8x128xf32>,
    %cst_550 = arith.constant 0.294185042 : f32
    %905 = vector.broadcast %cst_550 : f32 to vector<8x128xf32>
    %906 = arith.mulf %801, %905 : vector<8x128xf32>
    %cst_551 = arith.constant -0.00938326679 : f32
    %907 = vector.broadcast %cst_551 : f32 to vector<8x128xf32>
    %908 = arith.mulf %802, %907 : vector<8x128xf32>
    %909 = arith.addf %906, %908 : vector<8x128xf32>
    %cst_552 = arith.constant 0.0414184891 : f32
    %910 = vector.broadcast %cst_552 : f32 to vector<8x128xf32>
    %911 = arith.mulf %829, %910 : vector<8x128xf32>
    %912 = arith.addf %909, %911 : vector<8x128xf32>
    %cst_553 = arith.constant 3.024250e-01 : f32
    %913 = vector.broadcast %cst_553 : f32 to vector<8x128xf32>
    %914 = arith.mulf %830, %913 : vector<8x128xf32>
    %915 = arith.addf %912, %914 : vector<8x128xf32>
    %cst_554 = arith.constant 0.135983124 : f32
    %916 = vector.broadcast %cst_554 : f32 to vector<8x128xf32>
    %917 = arith.mulf %857, %916 : vector<8x128xf32>
    %918 = arith.addf %915, %917 : vector<8x128xf32>
    %cst_555 = arith.constant -0.362297148 : f32
    %919 = vector.broadcast %cst_555 : f32 to vector<8x128xf32>
    %920 = arith.mulf %858, %919 : vector<8x128xf32>
    %921 = arith.addf %918, %920 : vector<8x128xf32>
    %cst_556 = arith.constant 0.160507426 : f32
    %922 = vector.broadcast %cst_556 : f32 to vector<8x128xf32>
    %923 = arith.mulf %865, %922 : vector<8x128xf32>
    %924 = arith.addf %921, %923 : vector<8x128xf32>
    %cst_557 = arith.constant 0.0563736558 : f32
    %925 = vector.broadcast %cst_557 : f32 to vector<8x128xf32>
    %926 = arith.mulf %866, %925 : vector<8x128xf32>
    %927 = arith.addf %924, %926 : vector<8x128xf32>
    %cst_558 = arith.constant -0.0353370644 : f32
    %928 = vector.broadcast %cst_558 : f32 to vector<8x128xf32>
    %929 = arith.mulf %873, %928 : vector<8x128xf32>
    %930 = arith.addf %927, %929 : vector<8x128xf32>
    %cst_559 = arith.constant -0.26457268 : f32
    %931 = vector.broadcast %cst_559 : f32 to vector<8x128xf32>
    %932 = arith.mulf %874, %931 : vector<8x128xf32>
    %933 = arith.addf %930, %932 : vector<8x128xf32>
    %934 = arith.mulf %933, %204 : vector<8x128xf32>
    %935 = arith.addf %10, %934 : vector<8x128xf32>
    %cst_560 = arith.constant -0.224055082 : f32
    %936 = vector.broadcast %cst_560 : f32 to vector<8x128xf32>
    %937 = arith.mulf %801, %936 : vector<8x128xf32>
    %cst_561 = arith.constant 8.93320423E-4 : f32
    %938 = vector.broadcast %cst_561 : f32 to vector<8x128xf32>
    %939 = arith.mulf %802, %938 : vector<8x128xf32>
    %940 = arith.addf %937, %939 : vector<8x128xf32>
    %cst_562 = arith.constant -0.422667354 : f32
    %941 = vector.broadcast %cst_562 : f32 to vector<8x128xf32>
    %942 = arith.mulf %829, %941 : vector<8x128xf32>
    %943 = arith.addf %940, %942 : vector<8x128xf32>
    %cst_563 = arith.constant -0.120717846 : f32
    %944 = vector.broadcast %cst_563 : f32 to vector<8x128xf32>
    %945 = arith.mulf %830, %944 : vector<8x128xf32>
    %946 = arith.addf %943, %945 : vector<8x128xf32>
    %cst_564 = arith.constant 0.198751733 : f32
    %947 = vector.broadcast %cst_564 : f32 to vector<8x128xf32>
    %948 = arith.mulf %857, %947 : vector<8x128xf32>
    %949 = arith.addf %946, %948 : vector<8x128xf32>
    %cst_565 = arith.constant -0.155963883 : f32
    %950 = vector.broadcast %cst_565 : f32 to vector<8x128xf32>
    %951 = arith.mulf %858, %950 : vector<8x128xf32>
    %952 = arith.addf %949, %951 : vector<8x128xf32>
    %cst_566 = arith.constant 0.170216545 : f32
    %953 = vector.broadcast %cst_566 : f32 to vector<8x128xf32>
    %954 = arith.mulf %865, %953 : vector<8x128xf32>
    %955 = arith.addf %952, %954 : vector<8x128xf32>
    %cst_567 = arith.constant 0.106127702 : f32
    %956 = vector.broadcast %cst_567 : f32 to vector<8x128xf32>
    %957 = arith.mulf %866, %956 : vector<8x128xf32>
    %958 = arith.addf %955, %957 : vector<8x128xf32>
    %cst_568 = arith.constant 0.0344793163 : f32
    %959 = vector.broadcast %cst_568 : f32 to vector<8x128xf32>
    %960 = arith.mulf %873, %959 : vector<8x128xf32>
    %961 = arith.addf %958, %960 : vector<8x128xf32>
    %cst_569 = arith.constant -0.0417861231 : f32
    %962 = vector.broadcast %cst_569 : f32 to vector<8x128xf32>
    %963 = arith.mulf %874, %962 : vector<8x128xf32>
    %964 = arith.addf %961, %963 : vector<8x128xf32>
    %965 = arith.mulf %964, %206 : vector<8x128xf32>
    %966 = arith.addf %19, %965 : vector<8x128xf32>
    %c0_570 = arith.constant 0 : index
    %c2_571 = arith.constant 2 : index
    %c0_572 = arith.constant 0 : index
    %c0_573 = arith.constant 0 : index
    %967 = vector.load %arg4[%c0_570, %c2_571, %c0_572, %c0_573] : memref<3x3x8x128xf32, #tpu.memory_space<vmem>>, vector<1x1x8x128xf32>
    %968 = vector.shape_cast %967 : vector<1x1x8x128xf32> to vector<8x128xf32>
    %c0_574 = arith.constant 0 : index
    %c2_575 = arith.constant 2 : index
    %c0_576 = arith.constant 0 : index
    %c0_577 = arith.constant 0 : index
    %969 = vector.load %arg5[%c0_574, %c2_575, %c0_576, %c0_577] : memref<3x3x8x128xf32, #tpu.memory_space<vmem>>, vector<1x1x8x128xf32>
    %970 = vector.shape_cast %969 : vector<1x1x8x128xf32> to vector<8x128xf32>
    %c1_578 = arith.constant 1 : index
    %c2_579 = arith.constant 2 : index
    %c0_580 = arith.constant 0 : index
    %c0_581 = arith.constant 0 : index
    %971 = vector.load %arg4[%c1_578, %c2_579, %c0_580, %c0_581] : memref<3x3x8x128xf32, #tpu.memory_space<vmem>>, vector<1x1x8x128xf32>
    %972 = vector.shape_cast %971 : vector<1x1x8x128xf32> to vector<8x128xf32>
    %c1_582 = arith.constant 1 : index
    %c2_583 = arith.constant 2 : index
    %c0_584 = arith.constant 0 : index
    %c0_585 = arith.constant 0 : index
    %973 = vector.load %arg5[%c1_582, %c2_583, %c0_584, %c0_585] : memref<3x3x8x128xf32, #tpu.memory_space<vmem>>, vector<1x1x8x128xf32>
    %974 = vector.shape_cast %973 : vector<1x1x8x128xf32> to vector<8x128xf32>
    %c2_586 = arith.constant 2 : index
    %c2_587 = arith.constant 2 : index
    %c0_588 = arith.constant 0 : index
    %c0_589 = arith.constant 0 : index
    %975 = vector.load %arg4[%c2_586, %c2_587, %c0_588, %c0_589] : memref<3x3x8x128xf32, #tpu.memory_space<vmem>>, vector<1x1x8x128xf32>
    %976 = vector.shape_cast %975 : vector<1x1x8x128xf32> to vector<8x128xf32>
    %c2_590 = arith.constant 2 : index
    %c2_591 = arith.constant 2 : index
    %c0_592 = arith.constant 0 : index
    %c0_593 = arith.constant 0 : index
    %977 = vector.load %arg5[%c2_590, %c2_591, %c0_592, %c0_593] : memref<3x3x8x128xf32, #tpu.memory_space<vmem>>, vector<1x1x8x128xf32>
    %978 = vector.shape_cast %977 : vector<1x1x8x128xf32> to vector<8x128xf32>
    %c0_594 = arith.constant 0 : index
    %c1_595 = arith.constant 1 : index
    %c0_596 = arith.constant 0 : index
    %c0_597 = arith.constant 0 : index
    %979 = vector.load %arg4[%c0_594, %c1_595, %c0_596, %c0_597] : memref<3x3x8x128xf32, #tpu.memory_space<vmem>>, vector<1x1x8x128xf32>
    %980 = vector.shape_cast %979 : vector<1x1x8x128xf32> to vector<8x128xf32>
    %c0_598 = arith.constant 0 : index
    %c1_599 = arith.constant 1 : index
    %c0_600 = arith.constant 0 : index
    %c0_601 = arith.constant 0 : index
    %981 = vector.load %arg5[%c0_598, %c1_599, %c0_600, %c0_601] : memref<3x3x8x128xf32, #tpu.memory_space<vmem>>, vector<1x1x8x128xf32>
    %982 = vector.shape_cast %981 : vector<1x1x8x128xf32> to vector<8x128xf32>
    %983 = arith.mulf %980, %968 : vector<8x128xf32>
    %984 = arith.mulf %982, %970 : vector<8x128xf32>
    %985 = arith.subf %983, %984 : vector<8x128xf32>
    %986 = arith.mulf %980, %970 : vector<8x128xf32>
    %987 = arith.mulf %982, %968 : vector<8x128xf32>
    %988 = arith.addf %986, %987 : vector<8x128xf32>
    %989 = arith.mulf %980, %972 : vector<8x128xf32>
    %990 = arith.mulf %982, %974 : vector<8x128xf32>
    %991 = arith.subf %989, %990 : vector<8x128xf32>
    %992 = arith.mulf %980, %974 : vector<8x128xf32>
    %993 = arith.mulf %982, %972 : vector<8x128xf32>
    %994 = arith.addf %992, %993 : vector<8x128xf32>
    %995 = arith.mulf %980, %976 : vector<8x128xf32>
    %996 = arith.mulf %982, %978 : vector<8x128xf32>
    %997 = arith.subf %995, %996 : vector<8x128xf32>
    %998 = arith.mulf %980, %978 : vector<8x128xf32>
    %999 = arith.mulf %982, %976 : vector<8x128xf32>
    %1000 = arith.addf %998, %999 : vector<8x128xf32>
    %c1_602 = arith.constant 1 : index
    %c1_603 = arith.constant 1 : index
    %c0_604 = arith.constant 0 : index
    %c0_605 = arith.constant 0 : index
    %1001 = vector.load %arg4[%c1_602, %c1_603, %c0_604, %c0_605] : memref<3x3x8x128xf32, #tpu.memory_space<vmem>>, vector<1x1x8x128xf32>
    %1002 = vector.shape_cast %1001 : vector<1x1x8x128xf32> to vector<8x128xf32>
    %c1_606 = arith.constant 1 : index
    %c1_607 = arith.constant 1 : index
    %c0_608 = arith.constant 0 : index
    %c0_609 = arith.constant 0 : index
    %1003 = vector.load %arg5[%c1_606, %c1_607, %c0_608, %c0_609] : memref<3x3x8x128xf32, #tpu.memory_space<vmem>>, vector<1x1x8x128xf32>
    %1004 = vector.shape_cast %1003 : vector<1x1x8x128xf32> to vector<8x128xf32>
    %1005 = arith.mulf %1002, %968 : vector<8x128xf32>
    %1006 = arith.mulf %1004, %970 : vector<8x128xf32>
    %1007 = arith.subf %1005, %1006 : vector<8x128xf32>
    %1008 = arith.mulf %1002, %970 : vector<8x128xf32>
    %1009 = arith.mulf %1004, %968 : vector<8x128xf32>
    %1010 = arith.addf %1008, %1009 : vector<8x128xf32>
    %1011 = arith.addf %991, %1007 : vector<8x128xf32>
    %1012 = arith.addf %994, %1010 : vector<8x128xf32>
    %1013 = arith.mulf %1002, %972 : vector<8x128xf32>
    %1014 = arith.mulf %1004, %974 : vector<8x128xf32>
    %1015 = arith.subf %1013, %1014 : vector<8x128xf32>
    %1016 = arith.mulf %1002, %974 : vector<8x128xf32>
    %1017 = arith.mulf %1004, %972 : vector<8x128xf32>
    %1018 = arith.addf %1016, %1017 : vector<8x128xf32>
    %1019 = arith.addf %997, %1015 : vector<8x128xf32>
    %1020 = arith.addf %1000, %1018 : vector<8x128xf32>
    %1021 = arith.mulf %1002, %976 : vector<8x128xf32>
    %1022 = arith.mulf %1004, %978 : vector<8x128xf32>
    %1023 = arith.subf %1021, %1022 : vector<8x128xf32>
    %1024 = arith.mulf %1002, %978 : vector<8x128xf32>
    %1025 = arith.mulf %1004, %976 : vector<8x128xf32>
    %1026 = arith.addf %1024, %1025 : vector<8x128xf32>
    %c2_610 = arith.constant 2 : index
    %c1_611 = arith.constant 1 : index
    %c0_612 = arith.constant 0 : index
    %c0_613 = arith.constant 0 : index
    %1027 = vector.load %arg4[%c2_610, %c1_611, %c0_612, %c0_613] : memref<3x3x8x128xf32, #tpu.memory_space<vmem>>, vector<1x1x8x128xf32>
    %1028 = vector.shape_cast %1027 : vector<1x1x8x128xf32> to vector<8x128xf32>
    %c2_614 = arith.constant 2 : index
    %c1_615 = arith.constant 1 : index
    %c0_616 = arith.constant 0 : index
    %c0_617 = arith.constant 0 : index
    %1029 = vector.load %arg5[%c2_614, %c1_615, %c0_616, %c0_617] : memref<3x3x8x128xf32, #tpu.memory_space<vmem>>, vector<1x1x8x128xf32>
    %1030 = vector.shape_cast %1029 : vector<1x1x8x128xf32> to vector<8x128xf32>
    %1031 = arith.mulf %1028, %968 : vector<8x128xf32>
    %1032 = arith.mulf %1030, %970 : vector<8x128xf32>
    %1033 = arith.subf %1031, %1032 : vector<8x128xf32>
    %1034 = arith.mulf %1028, %970 : vector<8x128xf32>
    %1035 = arith.mulf %1030, %968 : vector<8x128xf32>
    %1036 = arith.addf %1034, %1035 : vector<8x128xf32>
    %1037 = arith.addf %1019, %1033 : vector<8x128xf32>
    %1038 = arith.addf %1020, %1036 : vector<8x128xf32>
    %1039 = arith.mulf %1028, %972 : vector<8x128xf32>
    %1040 = arith.mulf %1030, %974 : vector<8x128xf32>
    %1041 = arith.subf %1039, %1040 : vector<8x128xf32>
    %1042 = arith.mulf %1028, %974 : vector<8x128xf32>
    %1043 = arith.mulf %1030, %972 : vector<8x128xf32>
    %1044 = arith.addf %1042, %1043 : vector<8x128xf32>
    %1045 = arith.addf %1023, %1041 : vector<8x128xf32>
    %1046 = arith.addf %1026, %1044 : vector<8x128xf32>
    %1047 = arith.mulf %1028, %976 : vector<8x128xf32>
    %1048 = arith.mulf %1030, %978 : vector<8x128xf32>
    %1049 = arith.subf %1047, %1048 : vector<8x128xf32>
    %1050 = arith.mulf %1028, %978 : vector<8x128xf32>
    %1051 = arith.mulf %1030, %976 : vector<8x128xf32>
    %1052 = arith.addf %1050, %1051 : vector<8x128xf32>
    %c0_618 = arith.constant 0 : index
    %c1_619 = arith.constant 1 : index
    %c0_620 = arith.constant 0 : index
    %c0_621 = arith.constant 0 : index
    %1053 = vector.load %arg4[%c0_618, %c1_619, %c0_620, %c0_621] : memref<3x3x8x128xf32, #tpu.memory_space<vmem>>, vector<1x1x8x128xf32>
    %1054 = vector.shape_cast %1053 : vector<1x1x8x128xf32> to vector<8x128xf32>
    %c0_622 = arith.constant 0 : index
    %c1_623 = arith.constant 1 : index
    %c0_624 = arith.constant 0 : index
    %c0_625 = arith.constant 0 : index
    %1055 = vector.load %arg5[%c0_622, %c1_623, %c0_624, %c0_625] : memref<3x3x8x128xf32, #tpu.memory_space<vmem>>, vector<1x1x8x128xf32>
    %1056 = vector.shape_cast %1055 : vector<1x1x8x128xf32> to vector<8x128xf32>
    %c1_626 = arith.constant 1 : index
    %c1_627 = arith.constant 1 : index
    %c0_628 = arith.constant 0 : index
    %c0_629 = arith.constant 0 : index
    %1057 = vector.load %arg4[%c1_626, %c1_627, %c0_628, %c0_629] : memref<3x3x8x128xf32, #tpu.memory_space<vmem>>, vector<1x1x8x128xf32>
    %1058 = vector.shape_cast %1057 : vector<1x1x8x128xf32> to vector<8x128xf32>
    %c1_630 = arith.constant 1 : index
    %c1_631 = arith.constant 1 : index
    %c0_632 = arith.constant 0 : index
    %c0_633 = arith.constant 0 : index
    %1059 = vector.load %arg5[%c1_630, %c1_631, %c0_632, %c0_633] : memref<3x3x8x128xf32, #tpu.memory_space<vmem>>, vector<1x1x8x128xf32>
    %1060 = vector.shape_cast %1059 : vector<1x1x8x128xf32> to vector<8x128xf32>
    %c2_634 = arith.constant 2 : index
    %c1_635 = arith.constant 1 : index
    %c0_636 = arith.constant 0 : index
    %c0_637 = arith.constant 0 : index
    %1061 = vector.load %arg4[%c2_634, %c1_635, %c0_636, %c0_637] : memref<3x3x8x128xf32, #tpu.memory_space<vmem>>, vector<1x1x8x128xf32>
    %1062 = vector.shape_cast %1061 : vector<1x1x8x128xf32> to vector<8x128xf32>
    %c2_638 = arith.constant 2 : index
    %c1_639 = arith.constant 1 : index
    %c0_640 = arith.constant 0 : index
    %c0_641 = arith.constant 0 : index
    %1063 = vector.load %arg5[%c2_638, %c1_639, %c0_640, %c0_641] : memref<3x3x8x128xf32, #tpu.memory_space<vmem>>, vector<1x1x8x128xf32>
    %1064 = vector.shape_cast %1063 : vector<1x1x8x128xf32> to vector<8x128xf32>
    %c0_642 = arith.constant 0 : index
    %c2_643 = arith.constant 2 : index
    %c0_644 = arith.constant 0 : index
    %c0_645 = arith.constant 0 : index
    %1065 = vector.load %arg4[%c0_642, %c2_643, %c0_644, %c0_645] : memref<3x3x8x128xf32, #tpu.memory_space<vmem>>, vector<1x1x8x128xf32>
    %1066 = vector.shape_cast %1065 : vector<1x1x8x128xf32> to vector<8x128xf32>
    %c0_646 = arith.constant 0 : index
    %c2_647 = arith.constant 2 : index
    %c0_648 = arith.constant 0 : index
    %c0_649 = arith.constant 0 : index
    %1067 = vector.load %arg5[%c0_646, %c2_647, %c0_648, %c0_649] : memref<3x3x8x128xf32, #tpu.memory_space<vmem>>, vector<1x1x8x128xf32>
    %1068 = vector.shape_cast %1067 : vector<1x1x8x128xf32> to vector<8x128xf32>
    %1069 = arith.mulf %1066, %1054 : vector<8x128xf32>
    %1070 = arith.mulf %1068, %1056 : vector<8x128xf32>
    %1071 = arith.subf %1069, %1070 : vector<8x128xf32>
    %1072 = arith.mulf %1066, %1056 : vector<8x128xf32>
    %1073 = arith.mulf %1068, %1054 : vector<8x128xf32>
    %1074 = arith.addf %1072, %1073 : vector<8x128xf32>
    %1075 = arith.addf %985, %1071 : vector<8x128xf32>
    %1076 = arith.addf %988, %1074 : vector<8x128xf32>
    %1077 = arith.mulf %1066, %1058 : vector<8x128xf32>
    %1078 = arith.mulf %1068, %1060 : vector<8x128xf32>
    %1079 = arith.subf %1077, %1078 : vector<8x128xf32>
    %1080 = arith.mulf %1066, %1060 : vector<8x128xf32>
    %1081 = arith.mulf %1068, %1058 : vector<8x128xf32>
    %1082 = arith.addf %1080, %1081 : vector<8x128xf32>
    %1083 = arith.addf %1011, %1079 : vector<8x128xf32>
    %1084 = arith.addf %1012, %1082 : vector<8x128xf32>
    %1085 = arith.mulf %1066, %1062 : vector<8x128xf32>
    %1086 = arith.mulf %1068, %1064 : vector<8x128xf32>
    %1087 = arith.subf %1085, %1086 : vector<8x128xf32>
    %1088 = arith.mulf %1066, %1064 : vector<8x128xf32>
    %1089 = arith.mulf %1068, %1062 : vector<8x128xf32>
    %1090 = arith.addf %1088, %1089 : vector<8x128xf32>
    %1091 = arith.addf %1037, %1087 : vector<8x128xf32>
    %1092 = arith.addf %1038, %1090 : vector<8x128xf32>
    %c1_650 = arith.constant 1 : index
    %c2_651 = arith.constant 2 : index
    %c0_652 = arith.constant 0 : index
    %c0_653 = arith.constant 0 : index
    %1093 = vector.load %arg4[%c1_650, %c2_651, %c0_652, %c0_653] : memref<3x3x8x128xf32, #tpu.memory_space<vmem>>, vector<1x1x8x128xf32>
    %1094 = vector.shape_cast %1093 : vector<1x1x8x128xf32> to vector<8x128xf32>
    %c1_654 = arith.constant 1 : index
    %c2_655 = arith.constant 2 : index
    %c0_656 = arith.constant 0 : index
    %c0_657 = arith.constant 0 : index
    %1095 = vector.load %arg5[%c1_654, %c2_655, %c0_656, %c0_657] : memref<3x3x8x128xf32, #tpu.memory_space<vmem>>, vector<1x1x8x128xf32>
    %1096 = vector.shape_cast %1095 : vector<1x1x8x128xf32> to vector<8x128xf32>
    %1097 = arith.mulf %1094, %1054 : vector<8x128xf32>
    %1098 = arith.mulf %1096, %1056 : vector<8x128xf32>
    %1099 = arith.subf %1097, %1098 : vector<8x128xf32>
    %1100 = arith.mulf %1094, %1056 : vector<8x128xf32>
    %1101 = arith.mulf %1096, %1054 : vector<8x128xf32>
    %1102 = arith.addf %1100, %1101 : vector<8x128xf32>
    %1103 = arith.addf %1083, %1099 : vector<8x128xf32>
    %1104 = arith.addf %1084, %1102 : vector<8x128xf32>
    %1105 = arith.mulf %1094, %1058 : vector<8x128xf32>
    %1106 = arith.mulf %1096, %1060 : vector<8x128xf32>
    %1107 = arith.subf %1105, %1106 : vector<8x128xf32>
    %1108 = arith.mulf %1094, %1060 : vector<8x128xf32>
    %1109 = arith.mulf %1096, %1058 : vector<8x128xf32>
    %1110 = arith.addf %1108, %1109 : vector<8x128xf32>
    %1111 = arith.addf %1091, %1107 : vector<8x128xf32>
    %1112 = arith.addf %1092, %1110 : vector<8x128xf32>
    %1113 = arith.mulf %1094, %1062 : vector<8x128xf32>
    %1114 = arith.mulf %1096, %1064 : vector<8x128xf32>
    %1115 = arith.subf %1113, %1114 : vector<8x128xf32>
    %1116 = arith.mulf %1094, %1064 : vector<8x128xf32>
    %1117 = arith.mulf %1096, %1062 : vector<8x128xf32>
    %1118 = arith.addf %1116, %1117 : vector<8x128xf32>
    %1119 = arith.addf %1045, %1115 : vector<8x128xf32>
    %1120 = arith.addf %1046, %1118 : vector<8x128xf32>
    %c2_658 = arith.constant 2 : index
    %c2_659 = arith.constant 2 : index
    %c0_660 = arith.constant 0 : index
    %c0_661 = arith.constant 0 : index
    %1121 = vector.load %arg4[%c2_658, %c2_659, %c0_660, %c0_661] : memref<3x3x8x128xf32, #tpu.memory_space<vmem>>, vector<1x1x8x128xf32>
    %1122 = vector.shape_cast %1121 : vector<1x1x8x128xf32> to vector<8x128xf32>
    %c2_662 = arith.constant 2 : index
    %c2_663 = arith.constant 2 : index
    %c0_664 = arith.constant 0 : index
    %c0_665 = arith.constant 0 : index
    %1123 = vector.load %arg5[%c2_662, %c2_663, %c0_664, %c0_665] : memref<3x3x8x128xf32, #tpu.memory_space<vmem>>, vector<1x1x8x128xf32>
    %1124 = vector.shape_cast %1123 : vector<1x1x8x128xf32> to vector<8x128xf32>
    %1125 = arith.mulf %1122, %1054 : vector<8x128xf32>
    %1126 = arith.mulf %1124, %1056 : vector<8x128xf32>
    %1127 = arith.subf %1125, %1126 : vector<8x128xf32>
    %1128 = arith.mulf %1122, %1056 : vector<8x128xf32>
    %1129 = arith.mulf %1124, %1054 : vector<8x128xf32>
    %1130 = arith.addf %1128, %1129 : vector<8x128xf32>
    %1131 = arith.addf %1111, %1127 : vector<8x128xf32>
    %1132 = arith.addf %1112, %1130 : vector<8x128xf32>
    %1133 = arith.mulf %1122, %1058 : vector<8x128xf32>
    %1134 = arith.mulf %1124, %1060 : vector<8x128xf32>
    %1135 = arith.subf %1133, %1134 : vector<8x128xf32>
    %1136 = arith.mulf %1122, %1060 : vector<8x128xf32>
    %1137 = arith.mulf %1124, %1058 : vector<8x128xf32>
    %1138 = arith.addf %1136, %1137 : vector<8x128xf32>
    %1139 = arith.addf %1119, %1135 : vector<8x128xf32>
    %1140 = arith.addf %1120, %1138 : vector<8x128xf32>
    %1141 = arith.mulf %1122, %1062 : vector<8x128xf32>
    %1142 = arith.mulf %1124, %1064 : vector<8x128xf32>
    %1143 = arith.subf %1141, %1142 : vector<8x128xf32>
    %1144 = arith.mulf %1122, %1064 : vector<8x128xf32>
    %1145 = arith.mulf %1124, %1062 : vector<8x128xf32>
    %1146 = arith.addf %1144, %1145 : vector<8x128xf32>
    %1147 = arith.addf %1049, %1143 : vector<8x128xf32>
    %1148 = arith.addf %1052, %1146 : vector<8x128xf32>
    %c0_666 = arith.constant 0 : index
    %c3_667 = arith.constant 3 : index
    %c0_668 = arith.constant 0 : index
    %c0_669 = arith.constant 0 : index
    %1149 = vector.load %arg6[%c0_666, %c3_667, %c0_668, %c0_669] : memref<5x5x8x128xf32, #tpu.memory_space<vmem>>, vector<1x1x8x128xf32>
    %1150 = vector.shape_cast %1149 : vector<1x1x8x128xf32> to vector<8x128xf32>
    %1151 = vector.shape_cast %1075 : vector<8x128xf32> to vector<1x1x8x128xf32>
    tpu.vector_store %arg6[%c0_666, %c3_667, %c0_668, %c0_669], %1151 {strides = array<i32>} : memref<5x5x8x128xf32, #tpu.memory_space<vmem>>, vector<1x1x8x128xf32>,
    %c0_670 = arith.constant 0 : index
    %c3_671 = arith.constant 3 : index
    %c0_672 = arith.constant 0 : index
    %c0_673 = arith.constant 0 : index
    %1152 = vector.load %arg7[%c0_670, %c3_671, %c0_672, %c0_673] : memref<5x5x8x128xf32, #tpu.memory_space<vmem>>, vector<1x1x8x128xf32>
    %1153 = vector.shape_cast %1152 : vector<1x1x8x128xf32> to vector<8x128xf32>
    %1154 = vector.shape_cast %1076 : vector<8x128xf32> to vector<1x1x8x128xf32>
    tpu.vector_store %arg7[%c0_670, %c3_671, %c0_672, %c0_673], %1154 {strides = array<i32>} : memref<5x5x8x128xf32, #tpu.memory_space<vmem>>, vector<1x1x8x128xf32>,
    %c1_674 = arith.constant 1 : index
    %c3_675 = arith.constant 3 : index
    %c0_676 = arith.constant 0 : index
    %c0_677 = arith.constant 0 : index
    %1155 = vector.load %arg6[%c1_674, %c3_675, %c0_676, %c0_677] : memref<5x5x8x128xf32, #tpu.memory_space<vmem>>, vector<1x1x8x128xf32>
    %1156 = vector.shape_cast %1155 : vector<1x1x8x128xf32> to vector<8x128xf32>
    %1157 = vector.shape_cast %1103 : vector<8x128xf32> to vector<1x1x8x128xf32>
    tpu.vector_store %arg6[%c1_674, %c3_675, %c0_676, %c0_677], %1157 {strides = array<i32>} : memref<5x5x8x128xf32, #tpu.memory_space<vmem>>, vector<1x1x8x128xf32>,
    %c1_678 = arith.constant 1 : index
    %c3_679 = arith.constant 3 : index
    %c0_680 = arith.constant 0 : index
    %c0_681 = arith.constant 0 : index
    %1158 = vector.load %arg7[%c1_678, %c3_679, %c0_680, %c0_681] : memref<5x5x8x128xf32, #tpu.memory_space<vmem>>, vector<1x1x8x128xf32>
    %1159 = vector.shape_cast %1158 : vector<1x1x8x128xf32> to vector<8x128xf32>
    %1160 = vector.shape_cast %1104 : vector<8x128xf32> to vector<1x1x8x128xf32>
    tpu.vector_store %arg7[%c1_678, %c3_679, %c0_680, %c0_681], %1160 {strides = array<i32>} : memref<5x5x8x128xf32, #tpu.memory_space<vmem>>, vector<1x1x8x128xf32>,
    %c2_682 = arith.constant 2 : index
    %c3_683 = arith.constant 3 : index
    %c0_684 = arith.constant 0 : index
    %c0_685 = arith.constant 0 : index
    %1161 = vector.load %arg6[%c2_682, %c3_683, %c0_684, %c0_685] : memref<5x5x8x128xf32, #tpu.memory_space<vmem>>, vector<1x1x8x128xf32>
    %1162 = vector.shape_cast %1161 : vector<1x1x8x128xf32> to vector<8x128xf32>
    %1163 = vector.shape_cast %1131 : vector<8x128xf32> to vector<1x1x8x128xf32>
    tpu.vector_store %arg6[%c2_682, %c3_683, %c0_684, %c0_685], %1163 {strides = array<i32>} : memref<5x5x8x128xf32, #tpu.memory_space<vmem>>, vector<1x1x8x128xf32>,
    %c2_686 = arith.constant 2 : index
    %c3_687 = arith.constant 3 : index
    %c0_688 = arith.constant 0 : index
    %c0_689 = arith.constant 0 : index
    %1164 = vector.load %arg7[%c2_686, %c3_687, %c0_688, %c0_689] : memref<5x5x8x128xf32, #tpu.memory_space<vmem>>, vector<1x1x8x128xf32>
    %1165 = vector.shape_cast %1164 : vector<1x1x8x128xf32> to vector<8x128xf32>
    %1166 = vector.shape_cast %1132 : vector<8x128xf32> to vector<1x1x8x128xf32>
    tpu.vector_store %arg7[%c2_686, %c3_687, %c0_688, %c0_689], %1166 {strides = array<i32>} : memref<5x5x8x128xf32, #tpu.memory_space<vmem>>, vector<1x1x8x128xf32>,
    %c3_690 = arith.constant 3 : index
    %c3_691 = arith.constant 3 : index
    %c0_692 = arith.constant 0 : index
    %c0_693 = arith.constant 0 : index
    %1167 = vector.load %arg6[%c3_690, %c3_691, %c0_692, %c0_693] : memref<5x5x8x128xf32, #tpu.memory_space<vmem>>, vector<1x1x8x128xf32>
    %1168 = vector.shape_cast %1167 : vector<1x1x8x128xf32> to vector<8x128xf32>
    %1169 = vector.shape_cast %1139 : vector<8x128xf32> to vector<1x1x8x128xf32>
    tpu.vector_store %arg6[%c3_690, %c3_691, %c0_692, %c0_693], %1169 {strides = array<i32>} : memref<5x5x8x128xf32, #tpu.memory_space<vmem>>, vector<1x1x8x128xf32>,
    %c3_694 = arith.constant 3 : index
    %c3_695 = arith.constant 3 : index
    %c0_696 = arith.constant 0 : index
    %c0_697 = arith.constant 0 : index
    %1170 = vector.load %arg7[%c3_694, %c3_695, %c0_696, %c0_697] : memref<5x5x8x128xf32, #tpu.memory_space<vmem>>, vector<1x1x8x128xf32>
    %1171 = vector.shape_cast %1170 : vector<1x1x8x128xf32> to vector<8x128xf32>
    %1172 = vector.shape_cast %1140 : vector<8x128xf32> to vector<1x1x8x128xf32>
    tpu.vector_store %arg7[%c3_694, %c3_695, %c0_696, %c0_697], %1172 {strides = array<i32>} : memref<5x5x8x128xf32, #tpu.memory_space<vmem>>, vector<1x1x8x128xf32>,
    %c4_698 = arith.constant 4 : index
    %c3_699 = arith.constant 3 : index
    %c0_700 = arith.constant 0 : index
    %c0_701 = arith.constant 0 : index
    %1173 = vector.load %arg6[%c4_698, %c3_699, %c0_700, %c0_701] : memref<5x5x8x128xf32, #tpu.memory_space<vmem>>, vector<1x1x8x128xf32>
    %1174 = vector.shape_cast %1173 : vector<1x1x8x128xf32> to vector<8x128xf32>
    %1175 = vector.shape_cast %1147 : vector<8x128xf32> to vector<1x1x8x128xf32>
    tpu.vector_store %arg6[%c4_698, %c3_699, %c0_700, %c0_701], %1175 {strides = array<i32>} : memref<5x5x8x128xf32, #tpu.memory_space<vmem>>, vector<1x1x8x128xf32>,
    %c4_702 = arith.constant 4 : index
    %c3_703 = arith.constant 3 : index
    %c0_704 = arith.constant 0 : index
    %c0_705 = arith.constant 0 : index
    %1176 = vector.load %arg7[%c4_702, %c3_703, %c0_704, %c0_705] : memref<5x5x8x128xf32, #tpu.memory_space<vmem>>, vector<1x1x8x128xf32>
    %1177 = vector.shape_cast %1176 : vector<1x1x8x128xf32> to vector<8x128xf32>
    %1178 = vector.shape_cast %1148 : vector<8x128xf32> to vector<1x1x8x128xf32>
    tpu.vector_store %arg7[%c4_702, %c3_703, %c0_704, %c0_705], %1178 {strides = array<i32>} : memref<5x5x8x128xf32, #tpu.memory_space<vmem>>, vector<1x1x8x128xf32>,
    %cst_706 = arith.constant -0.156793222 : f32
    %1179 = vector.broadcast %cst_706 : f32 to vector<8x128xf32>
    %1180 = arith.mulf %1075, %1179 : vector<8x128xf32>
    %cst_707 = arith.constant -0.251669079 : f32
    %1181 = vector.broadcast %cst_707 : f32 to vector<8x128xf32>
    %1182 = arith.mulf %1076, %1181 : vector<8x128xf32>
    %1183 = arith.addf %1180, %1182 : vector<8x128xf32>
    %cst_708 = arith.constant -0.0444099121 : f32
    %1184 = vector.broadcast %cst_708 : f32 to vector<8x128xf32>
    %1185 = arith.mulf %1103, %1184 : vector<8x128xf32>
    %1186 = arith.addf %1183, %1185 : vector<8x128xf32>
    %cst_709 = arith.constant -0.218483433 : f32
    %1187 = vector.broadcast %cst_709 : f32 to vector<8x128xf32>
    %1188 = arith.mulf %1104, %1187 : vector<8x128xf32>
    %1189 = arith.addf %1186, %1188 : vector<8x128xf32>
    %cst_710 = arith.constant -0.180452034 : f32
    %1190 = vector.broadcast %cst_710 : f32 to vector<8x128xf32>
    %1191 = arith.mulf %1131, %1190 : vector<8x128xf32>
    %1192 = arith.addf %1189, %1191 : vector<8x128xf32>
    %cst_711 = arith.constant 0.0341611244 : f32
    %1193 = vector.broadcast %cst_711 : f32 to vector<8x128xf32>
    %1194 = arith.mulf %1132, %1193 : vector<8x128xf32>
    %1195 = arith.addf %1192, %1194 : vector<8x128xf32>
    %cst_712 = arith.constant 0.323481768 : f32
    %1196 = vector.broadcast %cst_712 : f32 to vector<8x128xf32>
    %1197 = arith.mulf %1139, %1196 : vector<8x128xf32>
    %1198 = arith.addf %1195, %1197 : vector<8x128xf32>
    %cst_713 = arith.constant -0.0337808803 : f32
    %1199 = vector.broadcast %cst_713 : f32 to vector<8x128xf32>
    %1200 = arith.mulf %1140, %1199 : vector<8x128xf32>
    %1201 = arith.addf %1198, %1200 : vector<8x128xf32>
    %cst_714 = arith.constant -0.120947719 : f32
    %1202 = vector.broadcast %cst_714 : f32 to vector<8x128xf32>
    %1203 = arith.mulf %1147, %1202 : vector<8x128xf32>
    %1204 = arith.addf %1201, %1203 : vector<8x128xf32>
    %cst_715 = arith.constant 0.116846062 : f32
    %1205 = vector.broadcast %cst_715 : f32 to vector<8x128xf32>
    %1206 = arith.mulf %1148, %1205 : vector<8x128xf32>
    %1207 = arith.addf %1204, %1206 : vector<8x128xf32>
    %1208 = arith.mulf %1207, %204 : vector<8x128xf32>
    %1209 = arith.addf %13, %1208 : vector<8x128xf32>
    %cst_716 = arith.constant 0.298725039 : f32
    %1210 = vector.broadcast %cst_716 : f32 to vector<8x128xf32>
    %1211 = arith.mulf %1075, %1210 : vector<8x128xf32>
    %cst_717 = arith.constant -0.310745478 : f32
    %1212 = vector.broadcast %cst_717 : f32 to vector<8x128xf32>
    %1213 = arith.mulf %1076, %1212 : vector<8x128xf32>
    %1214 = arith.addf %1211, %1213 : vector<8x128xf32>
    %cst_718 = arith.constant -0.370117903 : f32
    %1215 = vector.broadcast %cst_718 : f32 to vector<8x128xf32>
    %1216 = arith.mulf %1103, %1215 : vector<8x128xf32>
    %1217 = arith.addf %1214, %1216 : vector<8x128xf32>
    %cst_719 = arith.constant 0.287420958 : f32
    %1218 = vector.broadcast %cst_719 : f32 to vector<8x128xf32>
    %1219 = arith.mulf %1104, %1218 : vector<8x128xf32>
    %1220 = arith.addf %1217, %1219 : vector<8x128xf32>
    %cst_720 = arith.constant 0.158124149 : f32
    %1221 = vector.broadcast %cst_720 : f32 to vector<8x128xf32>
    %1222 = arith.mulf %1131, %1221 : vector<8x128xf32>
    %1223 = arith.addf %1220, %1222 : vector<8x128xf32>
    %cst_721 = arith.constant 0.248478889 : f32
    %1224 = vector.broadcast %cst_721 : f32 to vector<8x128xf32>
    %1225 = arith.mulf %1132, %1224 : vector<8x128xf32>
    %1226 = arith.addf %1223, %1225 : vector<8x128xf32>
    %cst_722 = arith.constant 0.160024792 : f32
    %1227 = vector.broadcast %cst_722 : f32 to vector<8x128xf32>
    %1228 = arith.mulf %1139, %1227 : vector<8x128xf32>
    %1229 = arith.addf %1226, %1228 : vector<8x128xf32>
    %cst_723 = arith.constant 0.0918727442 : f32
    %1230 = vector.broadcast %cst_723 : f32 to vector<8x128xf32>
    %1231 = arith.mulf %1140, %1230 : vector<8x128xf32>
    %1232 = arith.addf %1229, %1231 : vector<8x128xf32>
    %cst_724 = arith.constant 0.27364561 : f32
    %1233 = vector.broadcast %cst_724 : f32 to vector<8x128xf32>
    %1234 = arith.mulf %1147, %1233 : vector<8x128xf32>
    %1235 = arith.addf %1232, %1234 : vector<8x128xf32>
    %cst_725 = arith.constant -0.098407261 : f32
    %1236 = vector.broadcast %cst_725 : f32 to vector<8x128xf32>
    %1237 = arith.mulf %1148, %1236 : vector<8x128xf32>
    %1238 = arith.addf %1235, %1237 : vector<8x128xf32>
    %1239 = arith.mulf %1238, %206 : vector<8x128xf32>
    %1240 = arith.addf %22, %1239 : vector<8x128xf32>
    %c0_726 = arith.constant 0 : index
    %c2_727 = arith.constant 2 : index
    %c0_728 = arith.constant 0 : index
    %c0_729 = arith.constant 0 : index
    %1241 = vector.load %arg4[%c0_726, %c2_727, %c0_728, %c0_729] : memref<3x3x8x128xf32, #tpu.memory_space<vmem>>, vector<1x1x8x128xf32>
    %1242 = vector.shape_cast %1241 : vector<1x1x8x128xf32> to vector<8x128xf32>
    %c0_730 = arith.constant 0 : index
    %c2_731 = arith.constant 2 : index
    %c0_732 = arith.constant 0 : index
    %c0_733 = arith.constant 0 : index
    %1243 = vector.load %arg5[%c0_730, %c2_731, %c0_732, %c0_733] : memref<3x3x8x128xf32, #tpu.memory_space<vmem>>, vector<1x1x8x128xf32>
    %1244 = vector.shape_cast %1243 : vector<1x1x8x128xf32> to vector<8x128xf32>
    %c1_734 = arith.constant 1 : index
    %c2_735 = arith.constant 2 : index
    %c0_736 = arith.constant 0 : index
    %c0_737 = arith.constant 0 : index
    %1245 = vector.load %arg4[%c1_734, %c2_735, %c0_736, %c0_737] : memref<3x3x8x128xf32, #tpu.memory_space<vmem>>, vector<1x1x8x128xf32>
    %1246 = vector.shape_cast %1245 : vector<1x1x8x128xf32> to vector<8x128xf32>
    %c1_738 = arith.constant 1 : index
    %c2_739 = arith.constant 2 : index
    %c0_740 = arith.constant 0 : index
    %c0_741 = arith.constant 0 : index
    %1247 = vector.load %arg5[%c1_738, %c2_739, %c0_740, %c0_741] : memref<3x3x8x128xf32, #tpu.memory_space<vmem>>, vector<1x1x8x128xf32>
    %1248 = vector.shape_cast %1247 : vector<1x1x8x128xf32> to vector<8x128xf32>
    %c2_742 = arith.constant 2 : index
    %c2_743 = arith.constant 2 : index
    %c0_744 = arith.constant 0 : index
    %c0_745 = arith.constant 0 : index
    %1249 = vector.load %arg4[%c2_742, %c2_743, %c0_744, %c0_745] : memref<3x3x8x128xf32, #tpu.memory_space<vmem>>, vector<1x1x8x128xf32>
    %1250 = vector.shape_cast %1249 : vector<1x1x8x128xf32> to vector<8x128xf32>
    %c2_746 = arith.constant 2 : index
    %c2_747 = arith.constant 2 : index
    %c0_748 = arith.constant 0 : index
    %c0_749 = arith.constant 0 : index
    %1251 = vector.load %arg5[%c2_746, %c2_747, %c0_748, %c0_749] : memref<3x3x8x128xf32, #tpu.memory_space<vmem>>, vector<1x1x8x128xf32>
    %1252 = vector.shape_cast %1251 : vector<1x1x8x128xf32> to vector<8x128xf32>
    %c0_750 = arith.constant 0 : index
    %c2_751 = arith.constant 2 : index
    %c0_752 = arith.constant 0 : index
    %c0_753 = arith.constant 0 : index
    %1253 = vector.load %arg4[%c0_750, %c2_751, %c0_752, %c0_753] : memref<3x3x8x128xf32, #tpu.memory_space<vmem>>, vector<1x1x8x128xf32>
    %1254 = vector.shape_cast %1253 : vector<1x1x8x128xf32> to vector<8x128xf32>
    %c0_754 = arith.constant 0 : index
    %c2_755 = arith.constant 2 : index
    %c0_756 = arith.constant 0 : index
    %c0_757 = arith.constant 0 : index
    %1255 = vector.load %arg5[%c0_754, %c2_755, %c0_756, %c0_757] : memref<3x3x8x128xf32, #tpu.memory_space<vmem>>, vector<1x1x8x128xf32>
    %1256 = vector.shape_cast %1255 : vector<1x1x8x128xf32> to vector<8x128xf32>
    %1257 = arith.mulf %1254, %1242 : vector<8x128xf32>
    %1258 = arith.mulf %1256, %1244 : vector<8x128xf32>
    %1259 = arith.subf %1257, %1258 : vector<8x128xf32>
    %1260 = arith.mulf %1254, %1244 : vector<8x128xf32>
    %1261 = arith.mulf %1256, %1242 : vector<8x128xf32>
    %1262 = arith.addf %1260, %1261 : vector<8x128xf32>
    %1263 = arith.mulf %1254, %1246 : vector<8x128xf32>
    %1264 = arith.mulf %1256, %1248 : vector<8x128xf32>
    %1265 = arith.subf %1263, %1264 : vector<8x128xf32>
    %1266 = arith.mulf %1254, %1248 : vector<8x128xf32>
    %1267 = arith.mulf %1256, %1246 : vector<8x128xf32>
    %1268 = arith.addf %1266, %1267 : vector<8x128xf32>
    %1269 = arith.mulf %1254, %1250 : vector<8x128xf32>
    %1270 = arith.mulf %1256, %1252 : vector<8x128xf32>
    %1271 = arith.subf %1269, %1270 : vector<8x128xf32>
    %1272 = arith.mulf %1254, %1252 : vector<8x128xf32>
    %1273 = arith.mulf %1256, %1250 : vector<8x128xf32>
    %1274 = arith.addf %1272, %1273 : vector<8x128xf32>
    %c1_758 = arith.constant 1 : index
    %c2_759 = arith.constant 2 : index
    %c0_760 = arith.constant 0 : index
    %c0_761 = arith.constant 0 : index
    %1275 = vector.load %arg4[%c1_758, %c2_759, %c0_760, %c0_761] : memref<3x3x8x128xf32, #tpu.memory_space<vmem>>, vector<1x1x8x128xf32>
    %1276 = vector.shape_cast %1275 : vector<1x1x8x128xf32> to vector<8x128xf32>
    %c1_762 = arith.constant 1 : index
    %c2_763 = arith.constant 2 : index
    %c0_764 = arith.constant 0 : index
    %c0_765 = arith.constant 0 : index
    %1277 = vector.load %arg5[%c1_762, %c2_763, %c0_764, %c0_765] : memref<3x3x8x128xf32, #tpu.memory_space<vmem>>, vector<1x1x8x128xf32>
    %1278 = vector.shape_cast %1277 : vector<1x1x8x128xf32> to vector<8x128xf32>
    %1279 = arith.mulf %1276, %1242 : vector<8x128xf32>
    %1280 = arith.mulf %1278, %1244 : vector<8x128xf32>
    %1281 = arith.subf %1279, %1280 : vector<8x128xf32>
    %1282 = arith.mulf %1276, %1244 : vector<8x128xf32>
    %1283 = arith.mulf %1278, %1242 : vector<8x128xf32>
    %1284 = arith.addf %1282, %1283 : vector<8x128xf32>
    %1285 = arith.addf %1265, %1281 : vector<8x128xf32>
    %1286 = arith.addf %1268, %1284 : vector<8x128xf32>
    %1287 = arith.mulf %1276, %1246 : vector<8x128xf32>
    %1288 = arith.mulf %1278, %1248 : vector<8x128xf32>
    %1289 = arith.subf %1287, %1288 : vector<8x128xf32>
    %1290 = arith.mulf %1276, %1248 : vector<8x128xf32>
    %1291 = arith.mulf %1278, %1246 : vector<8x128xf32>
    %1292 = arith.addf %1290, %1291 : vector<8x128xf32>
    %1293 = arith.addf %1271, %1289 : vector<8x128xf32>
    %1294 = arith.addf %1274, %1292 : vector<8x128xf32>
    %1295 = arith.mulf %1276, %1250 : vector<8x128xf32>
    %1296 = arith.mulf %1278, %1252 : vector<8x128xf32>
    %1297 = arith.subf %1295, %1296 : vector<8x128xf32>
    %1298 = arith.mulf %1276, %1252 : vector<8x128xf32>
    %1299 = arith.mulf %1278, %1250 : vector<8x128xf32>
    %1300 = arith.addf %1298, %1299 : vector<8x128xf32>
    %c2_766 = arith.constant 2 : index
    %c2_767 = arith.constant 2 : index
    %c0_768 = arith.constant 0 : index
    %c0_769 = arith.constant 0 : index
    %1301 = vector.load %arg4[%c2_766, %c2_767, %c0_768, %c0_769] : memref<3x3x8x128xf32, #tpu.memory_space<vmem>>, vector<1x1x8x128xf32>
    %1302 = vector.shape_cast %1301 : vector<1x1x8x128xf32> to vector<8x128xf32>
    %c2_770 = arith.constant 2 : index
    %c2_771 = arith.constant 2 : index
    %c0_772 = arith.constant 0 : index
    %c0_773 = arith.constant 0 : index
    %1303 = vector.load %arg5[%c2_770, %c2_771, %c0_772, %c0_773] : memref<3x3x8x128xf32, #tpu.memory_space<vmem>>, vector<1x1x8x128xf32>
    %1304 = vector.shape_cast %1303 : vector<1x1x8x128xf32> to vector<8x128xf32>
    %1305 = arith.mulf %1302, %1242 : vector<8x128xf32>
    %1306 = arith.mulf %1304, %1244 : vector<8x128xf32>
    %1307 = arith.subf %1305, %1306 : vector<8x128xf32>
    %1308 = arith.mulf %1302, %1244 : vector<8x128xf32>
    %1309 = arith.mulf %1304, %1242 : vector<8x128xf32>
    %1310 = arith.addf %1308, %1309 : vector<8x128xf32>
    %1311 = arith.addf %1293, %1307 : vector<8x128xf32>
    %1312 = arith.addf %1294, %1310 : vector<8x128xf32>
    %1313 = arith.mulf %1302, %1246 : vector<8x128xf32>
    %1314 = arith.mulf %1304, %1248 : vector<8x128xf32>
    %1315 = arith.subf %1313, %1314 : vector<8x128xf32>
    %1316 = arith.mulf %1302, %1248 : vector<8x128xf32>
    %1317 = arith.mulf %1304, %1246 : vector<8x128xf32>
    %1318 = arith.addf %1316, %1317 : vector<8x128xf32>
    %1319 = arith.addf %1297, %1315 : vector<8x128xf32>
    %1320 = arith.addf %1300, %1318 : vector<8x128xf32>
    %1321 = arith.mulf %1302, %1250 : vector<8x128xf32>
    %1322 = arith.mulf %1304, %1252 : vector<8x128xf32>
    %1323 = arith.subf %1321, %1322 : vector<8x128xf32>
    %1324 = arith.mulf %1302, %1252 : vector<8x128xf32>
    %1325 = arith.mulf %1304, %1250 : vector<8x128xf32>
    %1326 = arith.addf %1324, %1325 : vector<8x128xf32>
    %c0_774 = arith.constant 0 : index
    %c4_775 = arith.constant 4 : index
    %c0_776 = arith.constant 0 : index
    %c0_777 = arith.constant 0 : index
    %1327 = vector.load %arg6[%c0_774, %c4_775, %c0_776, %c0_777] : memref<5x5x8x128xf32, #tpu.memory_space<vmem>>, vector<1x1x8x128xf32>
    %1328 = vector.shape_cast %1327 : vector<1x1x8x128xf32> to vector<8x128xf32>
    %1329 = vector.shape_cast %1259 : vector<8x128xf32> to vector<1x1x8x128xf32>
    tpu.vector_store %arg6[%c0_774, %c4_775, %c0_776, %c0_777], %1329 {strides = array<i32>} : memref<5x5x8x128xf32, #tpu.memory_space<vmem>>, vector<1x1x8x128xf32>,
    %c0_778 = arith.constant 0 : index
    %c4_779 = arith.constant 4 : index
    %c0_780 = arith.constant 0 : index
    %c0_781 = arith.constant 0 : index
    %1330 = vector.load %arg7[%c0_778, %c4_779, %c0_780, %c0_781] : memref<5x5x8x128xf32, #tpu.memory_space<vmem>>, vector<1x1x8x128xf32>
    %1331 = vector.shape_cast %1330 : vector<1x1x8x128xf32> to vector<8x128xf32>
    %1332 = vector.shape_cast %1262 : vector<8x128xf32> to vector<1x1x8x128xf32>
    tpu.vector_store %arg7[%c0_778, %c4_779, %c0_780, %c0_781], %1332 {strides = array<i32>} : memref<5x5x8x128xf32, #tpu.memory_space<vmem>>, vector<1x1x8x128xf32>,
    %c1_782 = arith.constant 1 : index
    %c4_783 = arith.constant 4 : index
    %c0_784 = arith.constant 0 : index
    %c0_785 = arith.constant 0 : index
    %1333 = vector.load %arg6[%c1_782, %c4_783, %c0_784, %c0_785] : memref<5x5x8x128xf32, #tpu.memory_space<vmem>>, vector<1x1x8x128xf32>
    %1334 = vector.shape_cast %1333 : vector<1x1x8x128xf32> to vector<8x128xf32>
    %1335 = vector.shape_cast %1285 : vector<8x128xf32> to vector<1x1x8x128xf32>
    tpu.vector_store %arg6[%c1_782, %c4_783, %c0_784, %c0_785], %1335 {strides = array<i32>} : memref<5x5x8x128xf32, #tpu.memory_space<vmem>>, vector<1x1x8x128xf32>,
    %c1_786 = arith.constant 1 : index
    %c4_787 = arith.constant 4 : index
    %c0_788 = arith.constant 0 : index
    %c0_789 = arith.constant 0 : index
    %1336 = vector.load %arg7[%c1_786, %c4_787, %c0_788, %c0_789] : memref<5x5x8x128xf32, #tpu.memory_space<vmem>>, vector<1x1x8x128xf32>
    %1337 = vector.shape_cast %1336 : vector<1x1x8x128xf32> to vector<8x128xf32>
    %1338 = vector.shape_cast %1286 : vector<8x128xf32> to vector<1x1x8x128xf32>
    tpu.vector_store %arg7[%c1_786, %c4_787, %c0_788, %c0_789], %1338 {strides = array<i32>} : memref<5x5x8x128xf32, #tpu.memory_space<vmem>>, vector<1x1x8x128xf32>,
    %c2_790 = arith.constant 2 : index
    %c4_791 = arith.constant 4 : index
    %c0_792 = arith.constant 0 : index
    %c0_793 = arith.constant 0 : index
    %1339 = vector.load %arg6[%c2_790, %c4_791, %c0_792, %c0_793] : memref<5x5x8x128xf32, #tpu.memory_space<vmem>>, vector<1x1x8x128xf32>
    %1340 = vector.shape_cast %1339 : vector<1x1x8x128xf32> to vector<8x128xf32>
    %1341 = vector.shape_cast %1311 : vector<8x128xf32> to vector<1x1x8x128xf32>
    tpu.vector_store %arg6[%c2_790, %c4_791, %c0_792, %c0_793], %1341 {strides = array<i32>} : memref<5x5x8x128xf32, #tpu.memory_space<vmem>>, vector<1x1x8x128xf32>,
    %c2_794 = arith.constant 2 : index
    %c4_795 = arith.constant 4 : index
    %c0_796 = arith.constant 0 : index
    %c0_797 = arith.constant 0 : index
    %1342 = vector.load %arg7[%c2_794, %c4_795, %c0_796, %c0_797] : memref<5x5x8x128xf32, #tpu.memory_space<vmem>>, vector<1x1x8x128xf32>
    %1343 = vector.shape_cast %1342 : vector<1x1x8x128xf32> to vector<8x128xf32>
    %1344 = vector.shape_cast %1312 : vector<8x128xf32> to vector<1x1x8x128xf32>
    tpu.vector_store %arg7[%c2_794, %c4_795, %c0_796, %c0_797], %1344 {strides = array<i32>} : memref<5x5x8x128xf32, #tpu.memory_space<vmem>>, vector<1x1x8x128xf32>,
    %c3_798 = arith.constant 3 : index
    %c4_799 = arith.constant 4 : index
    %c0_800 = arith.constant 0 : index
    %c0_801 = arith.constant 0 : index
    %1345 = vector.load %arg6[%c3_798, %c4_799, %c0_800, %c0_801] : memref<5x5x8x128xf32, #tpu.memory_space<vmem>>, vector<1x1x8x128xf32>
    %1346 = vector.shape_cast %1345 : vector<1x1x8x128xf32> to vector<8x128xf32>
    %1347 = vector.shape_cast %1319 : vector<8x128xf32> to vector<1x1x8x128xf32>
    tpu.vector_store %arg6[%c3_798, %c4_799, %c0_800, %c0_801], %1347 {strides = array<i32>} : memref<5x5x8x128xf32, #tpu.memory_space<vmem>>, vector<1x1x8x128xf32>,
    %c3_802 = arith.constant 3 : index
    %c4_803 = arith.constant 4 : index
    %c0_804 = arith.constant 0 : index
    %c0_805 = arith.constant 0 : index
    %1348 = vector.load %arg7[%c3_802, %c4_803, %c0_804, %c0_805] : memref<5x5x8x128xf32, #tpu.memory_space<vmem>>, vector<1x1x8x128xf32>
    %1349 = vector.shape_cast %1348 : vector<1x1x8x128xf32> to vector<8x128xf32>
    %1350 = vector.shape_cast %1320 : vector<8x128xf32> to vector<1x1x8x128xf32>
    tpu.vector_store %arg7[%c3_802, %c4_803, %c0_804, %c0_805], %1350 {strides = array<i32>} : memref<5x5x8x128xf32, #tpu.memory_space<vmem>>, vector<1x1x8x128xf32>,
    %c4_806 = arith.constant 4 : index
    %c4_807 = arith.constant 4 : index
    %c0_808 = arith.constant 0 : index
    %c0_809 = arith.constant 0 : index
    %1351 = vector.load %arg6[%c4_806, %c4_807, %c0_808, %c0_809] : memref<5x5x8x128xf32, #tpu.memory_space<vmem>>, vector<1x1x8x128xf32>
    %1352 = vector.shape_cast %1351 : vector<1x1x8x128xf32> to vector<8x128xf32>
    %1353 = vector.shape_cast %1323 : vector<8x128xf32> to vector<1x1x8x128xf32>
    tpu.vector_store %arg6[%c4_806, %c4_807, %c0_808, %c0_809], %1353 {strides = array<i32>} : memref<5x5x8x128xf32, #tpu.memory_space<vmem>>, vector<1x1x8x128xf32>,
    %c4_810 = arith.constant 4 : index
    %c4_811 = arith.constant 4 : index
    %c0_812 = arith.constant 0 : index
    %c0_813 = arith.constant 0 : index
    %1354 = vector.load %arg7[%c4_810, %c4_811, %c0_812, %c0_813] : memref<5x5x8x128xf32, #tpu.memory_space<vmem>>, vector<1x1x8x128xf32>
    %1355 = vector.shape_cast %1354 : vector<1x1x8x128xf32> to vector<8x128xf32>
    %1356 = vector.shape_cast %1326 : vector<8x128xf32> to vector<1x1x8x128xf32>
    tpu.vector_store %arg7[%c4_810, %c4_811, %c0_812, %c0_813], %1356 {strides = array<i32>} : memref<5x5x8x128xf32, #tpu.memory_space<vmem>>, vector<1x1x8x128xf32>,
    %c2_814 = arith.constant 2 : index
    %c0_815 = arith.constant 0 : index
    %c0_816 = arith.constant 0 : index
    %c0_817 = arith.constant 0 : index
    %1357 = vector.load %arg2[%c2_814, %c0_815, %c0_816, %c0_817] : memref<3x2x8x128xf32, #tpu.memory_space<vmem>>, vector<1x1x8x128xf32>
    %1358 = vector.shape_cast %1357 : vector<1x1x8x128xf32> to vector<8x128xf32>
    %c2_818 = arith.constant 2 : index
    %c1_819 = arith.constant 1 : index
    %c0_820 = arith.constant 0 : index
    %c0_821 = arith.constant 0 : index
    %1359 = vector.load %arg2[%c2_818, %c1_819, %c0_820, %c0_821] : memref<3x2x8x128xf32, #tpu.memory_space<vmem>>, vector<1x1x8x128xf32>
    %1360 = vector.shape_cast %1359 : vector<1x1x8x128xf32> to vector<8x128xf32>
    %c0_822 = arith.constant 0 : index
    %c2_823 = arith.constant 2 : index
    %c0_824 = arith.constant 0 : index
    %c0_825 = arith.constant 0 : index
    %1361 = vector.load %arg6[%c0_822, %c2_823, %c0_824, %c0_825] : memref<5x5x8x128xf32, #tpu.memory_space<vmem>>, vector<1x1x8x128xf32>
    %1362 = vector.shape_cast %1361 : vector<1x1x8x128xf32> to vector<8x128xf32>
    %c0_826 = arith.constant 0 : index
    %c2_827 = arith.constant 2 : index
    %c0_828 = arith.constant 0 : index
    %c0_829 = arith.constant 0 : index
    %1363 = vector.load %arg7[%c0_826, %c2_827, %c0_828, %c0_829] : memref<5x5x8x128xf32, #tpu.memory_space<vmem>>, vector<1x1x8x128xf32>
    %1364 = vector.shape_cast %1363 : vector<1x1x8x128xf32> to vector<8x128xf32>
    %c1_830 = arith.constant 1 : index
    %c2_831 = arith.constant 2 : index
    %c0_832 = arith.constant 0 : index
    %c0_833 = arith.constant 0 : index
    %1365 = vector.load %arg6[%c1_830, %c2_831, %c0_832, %c0_833] : memref<5x5x8x128xf32, #tpu.memory_space<vmem>>, vector<1x1x8x128xf32>
    %1366 = vector.shape_cast %1365 : vector<1x1x8x128xf32> to vector<8x128xf32>
    %c1_834 = arith.constant 1 : index
    %c2_835 = arith.constant 2 : index
    %c0_836 = arith.constant 0 : index
    %c0_837 = arith.constant 0 : index
    %1367 = vector.load %arg7[%c1_834, %c2_835, %c0_836, %c0_837] : memref<5x5x8x128xf32, #tpu.memory_space<vmem>>, vector<1x1x8x128xf32>
    %1368 = vector.shape_cast %1367 : vector<1x1x8x128xf32> to vector<8x128xf32>
    %c2_838 = arith.constant 2 : index
    %c2_839 = arith.constant 2 : index
    %c0_840 = arith.constant 0 : index
    %c0_841 = arith.constant 0 : index
    %1369 = vector.load %arg6[%c2_838, %c2_839, %c0_840, %c0_841] : memref<5x5x8x128xf32, #tpu.memory_space<vmem>>, vector<1x1x8x128xf32>
    %1370 = vector.shape_cast %1369 : vector<1x1x8x128xf32> to vector<8x128xf32>
    %c2_842 = arith.constant 2 : index
    %c2_843 = arith.constant 2 : index
    %c0_844 = arith.constant 0 : index
    %c0_845 = arith.constant 0 : index
    %1371 = vector.load %arg7[%c2_842, %c2_843, %c0_844, %c0_845] : memref<5x5x8x128xf32, #tpu.memory_space<vmem>>, vector<1x1x8x128xf32>
    %1372 = vector.shape_cast %1371 : vector<1x1x8x128xf32> to vector<8x128xf32>
    %c3_846 = arith.constant 3 : index
    %c2_847 = arith.constant 2 : index
    %c0_848 = arith.constant 0 : index
    %c0_849 = arith.constant 0 : index
    %1373 = vector.load %arg6[%c3_846, %c2_847, %c0_848, %c0_849] : memref<5x5x8x128xf32, #tpu.memory_space<vmem>>, vector<1x1x8x128xf32>
    %1374 = vector.shape_cast %1373 : vector<1x1x8x128xf32> to vector<8x128xf32>
    %c3_850 = arith.constant 3 : index
    %c2_851 = arith.constant 2 : index
    %c0_852 = arith.constant 0 : index
    %c0_853 = arith.constant 0 : index
    %1375 = vector.load %arg7[%c3_850, %c2_851, %c0_852, %c0_853] : memref<5x5x8x128xf32, #tpu.memory_space<vmem>>, vector<1x1x8x128xf32>
    %1376 = vector.shape_cast %1375 : vector<1x1x8x128xf32> to vector<8x128xf32>
    %c4_854 = arith.constant 4 : index
    %c2_855 = arith.constant 2 : index
    %c0_856 = arith.constant 0 : index
    %c0_857 = arith.constant 0 : index
    %1377 = vector.load %arg6[%c4_854, %c2_855, %c0_856, %c0_857] : memref<5x5x8x128xf32, #tpu.memory_space<vmem>>, vector<1x1x8x128xf32>
    %1378 = vector.shape_cast %1377 : vector<1x1x8x128xf32> to vector<8x128xf32>
    %c4_858 = arith.constant 4 : index
    %c2_859 = arith.constant 2 : index
    %c0_860 = arith.constant 0 : index
    %c0_861 = arith.constant 0 : index
    %1379 = vector.load %arg7[%c4_858, %c2_859, %c0_860, %c0_861] : memref<5x5x8x128xf32, #tpu.memory_space<vmem>>, vector<1x1x8x128xf32>
    %1380 = vector.shape_cast %1379 : vector<1x1x8x128xf32> to vector<8x128xf32>
    %c0_862 = arith.constant 0 : index
    %c0_863 = arith.constant 0 : index
    %c0_864 = arith.constant 0 : index
    %c0_865 = arith.constant 0 : index
    %1381 = vector.load %arg4[%c0_862, %c0_863, %c0_864, %c0_865] : memref<3x3x8x128xf32, #tpu.memory_space<vmem>>, vector<1x1x8x128xf32>
    %1382 = vector.shape_cast %1381 : vector<1x1x8x128xf32> to vector<8x128xf32>
    %c0_866 = arith.constant 0 : index
    %c0_867 = arith.constant 0 : index
    %c0_868 = arith.constant 0 : index
    %c0_869 = arith.constant 0 : index
    %1383 = vector.load %arg5[%c0_866, %c0_867, %c0_868, %c0_869] : memref<3x3x8x128xf32, #tpu.memory_space<vmem>>, vector<1x1x8x128xf32>
    %1384 = vector.shape_cast %1383 : vector<1x1x8x128xf32> to vector<8x128xf32>
    %1385 = arith.mulf %1382, %1362 : vector<8x128xf32>
    %1386 = arith.mulf %1384, %1364 : vector<8x128xf32>
    %1387 = arith.subf %1385, %1386 : vector<8x128xf32>
    %1388 = arith.mulf %1382, %1364 : vector<8x128xf32>
    %1389 = arith.mulf %1384, %1362 : vector<8x128xf32>
    %1390 = arith.addf %1388, %1389 : vector<8x128xf32>
    %1391 = arith.mulf %1382, %1366 : vector<8x128xf32>
    %1392 = arith.mulf %1384, %1368 : vector<8x128xf32>
    %1393 = arith.subf %1391, %1392 : vector<8x128xf32>
    %1394 = arith.mulf %1382, %1368 : vector<8x128xf32>
    %1395 = arith.mulf %1384, %1366 : vector<8x128xf32>
    %1396 = arith.addf %1394, %1395 : vector<8x128xf32>
    %1397 = arith.mulf %1382, %1370 : vector<8x128xf32>
    %1398 = arith.mulf %1384, %1372 : vector<8x128xf32>
    %1399 = arith.subf %1397, %1398 : vector<8x128xf32>
    %1400 = arith.mulf %1382, %1372 : vector<8x128xf32>
    %1401 = arith.mulf %1384, %1370 : vector<8x128xf32>
    %1402 = arith.addf %1400, %1401 : vector<8x128xf32>
    %1403 = arith.mulf %1382, %1374 : vector<8x128xf32>
    %1404 = arith.mulf %1384, %1376 : vector<8x128xf32>
    %1405 = arith.subf %1403, %1404 : vector<8x128xf32>
    %1406 = arith.mulf %1382, %1376 : vector<8x128xf32>
    %1407 = arith.mulf %1384, %1374 : vector<8x128xf32>
    %1408 = arith.addf %1406, %1407 : vector<8x128xf32>
    %1409 = arith.mulf %1382, %1378 : vector<8x128xf32>
    %1410 = arith.mulf %1384, %1380 : vector<8x128xf32>
    %1411 = arith.subf %1409, %1410 : vector<8x128xf32>
    %1412 = arith.mulf %1382, %1380 : vector<8x128xf32>
    %1413 = arith.mulf %1384, %1378 : vector<8x128xf32>
    %1414 = arith.addf %1412, %1413 : vector<8x128xf32>
    %c1_870 = arith.constant 1 : index
    %c0_871 = arith.constant 0 : index
    %c0_872 = arith.constant 0 : index
    %c0_873 = arith.constant 0 : index
    %1415 = vector.load %arg4[%c1_870, %c0_871, %c0_872, %c0_873] : memref<3x3x8x128xf32, #tpu.memory_space<vmem>>, vector<1x1x8x128xf32>
    %1416 = vector.shape_cast %1415 : vector<1x1x8x128xf32> to vector<8x128xf32>
    %c1_874 = arith.constant 1 : index
    %c0_875 = arith.constant 0 : index
    %c0_876 = arith.constant 0 : index
    %c0_877 = arith.constant 0 : index
    %1417 = vector.load %arg5[%c1_874, %c0_875, %c0_876, %c0_877] : memref<3x3x8x128xf32, #tpu.memory_space<vmem>>, vector<1x1x8x128xf32>
    %1418 = vector.shape_cast %1417 : vector<1x1x8x128xf32> to vector<8x128xf32>
    %1419 = arith.mulf %1416, %1362 : vector<8x128xf32>
    %1420 = arith.mulf %1418, %1364 : vector<8x128xf32>
    %1421 = arith.subf %1419, %1420 : vector<8x128xf32>
    %1422 = arith.mulf %1416, %1364 : vector<8x128xf32>
    %1423 = arith.mulf %1418, %1362 : vector<8x128xf32>
    %1424 = arith.addf %1422, %1423 : vector<8x128xf32>
    %1425 = arith.addf %1393, %1421 : vector<8x128xf32>
    %1426 = arith.addf %1396, %1424 : vector<8x128xf32>
    %1427 = arith.mulf %1416, %1366 : vector<8x128xf32>
    %1428 = arith.mulf %1418, %1368 : vector<8x128xf32>
    %1429 = arith.subf %1427, %1428 : vector<8x128xf32>
    %1430 = arith.mulf %1416, %1368 : vector<8x128xf32>
    %1431 = arith.mulf %1418, %1366 : vector<8x128xf32>
    %1432 = arith.addf %1430, %1431 : vector<8x128xf32>
    %1433 = arith.addf %1399, %1429 : vector<8x128xf32>
    %1434 = arith.addf %1402, %1432 : vector<8x128xf32>
    %1435 = arith.mulf %1416, %1370 : vector<8x128xf32>
    %1436 = arith.mulf %1418, %1372 : vector<8x128xf32>
    %1437 = arith.subf %1435, %1436 : vector<8x128xf32>
    %1438 = arith.mulf %1416, %1372 : vector<8x128xf32>
    %1439 = arith.mulf %1418, %1370 : vector<8x128xf32>
    %1440 = arith.addf %1438, %1439 : vector<8x128xf32>
    %1441 = arith.addf %1405, %1437 : vector<8x128xf32>
    %1442 = arith.addf %1408, %1440 : vector<8x128xf32>
    %1443 = arith.mulf %1416, %1374 : vector<8x128xf32>
    %1444 = arith.mulf %1418, %1376 : vector<8x128xf32>
    %1445 = arith.subf %1443, %1444 : vector<8x128xf32>
    %1446 = arith.mulf %1416, %1376 : vector<8x128xf32>
    %1447 = arith.mulf %1418, %1374 : vector<8x128xf32>
    %1448 = arith.addf %1446, %1447 : vector<8x128xf32>
    %1449 = arith.addf %1411, %1445 : vector<8x128xf32>
    %1450 = arith.addf %1414, %1448 : vector<8x128xf32>
    %1451 = arith.mulf %1416, %1378 : vector<8x128xf32>
    %1452 = arith.mulf %1418, %1380 : vector<8x128xf32>
    %1453 = arith.subf %1451, %1452 : vector<8x128xf32>
    %1454 = arith.mulf %1416, %1380 : vector<8x128xf32>
    %1455 = arith.mulf %1418, %1378 : vector<8x128xf32>
    %1456 = arith.addf %1454, %1455 : vector<8x128xf32>
    %c2_878 = arith.constant 2 : index
    %c0_879 = arith.constant 0 : index
    %c0_880 = arith.constant 0 : index
    %c0_881 = arith.constant 0 : index
    %1457 = vector.load %arg4[%c2_878, %c0_879, %c0_880, %c0_881] : memref<3x3x8x128xf32, #tpu.memory_space<vmem>>, vector<1x1x8x128xf32>
    %1458 = vector.shape_cast %1457 : vector<1x1x8x128xf32> to vector<8x128xf32>
    %c2_882 = arith.constant 2 : index
    %c0_883 = arith.constant 0 : index
    %c0_884 = arith.constant 0 : index
    %c0_885 = arith.constant 0 : index
    %1459 = vector.load %arg5[%c2_882, %c0_883, %c0_884, %c0_885] : memref<3x3x8x128xf32, #tpu.memory_space<vmem>>, vector<1x1x8x128xf32>
    %1460 = vector.shape_cast %1459 : vector<1x1x8x128xf32> to vector<8x128xf32>
    %1461 = arith.mulf %1458, %1362 : vector<8x128xf32>
    %1462 = arith.mulf %1460, %1364 : vector<8x128xf32>
    %1463 = arith.subf %1461, %1462 : vector<8x128xf32>
    %1464 = arith.mulf %1458, %1364 : vector<8x128xf32>
    %1465 = arith.mulf %1460, %1362 : vector<8x128xf32>
    %1466 = arith.addf %1464, %1465 : vector<8x128xf32>
    %1467 = arith.addf %1433, %1463 : vector<8x128xf32>
    %1468 = arith.addf %1434, %1466 : vector<8x128xf32>
    %1469 = arith.mulf %1458, %1366 : vector<8x128xf32>
    %1470 = arith.mulf %1460, %1368 : vector<8x128xf32>
    %1471 = arith.subf %1469, %1470 : vector<8x128xf32>
    %1472 = arith.mulf %1458, %1368 : vector<8x128xf32>
    %1473 = arith.mulf %1460, %1366 : vector<8x128xf32>
    %1474 = arith.addf %1472, %1473 : vector<8x128xf32>
    %1475 = arith.addf %1441, %1471 : vector<8x128xf32>
    %1476 = arith.addf %1442, %1474 : vector<8x128xf32>
    %1477 = arith.mulf %1458, %1370 : vector<8x128xf32>
    %1478 = arith.mulf %1460, %1372 : vector<8x128xf32>
    %1479 = arith.subf %1477, %1478 : vector<8x128xf32>
    %1480 = arith.mulf %1458, %1372 : vector<8x128xf32>
    %1481 = arith.mulf %1460, %1370 : vector<8x128xf32>
    %1482 = arith.addf %1480, %1481 : vector<8x128xf32>
    %1483 = arith.addf %1449, %1479 : vector<8x128xf32>
    %1484 = arith.addf %1450, %1482 : vector<8x128xf32>
    %1485 = arith.mulf %1458, %1374 : vector<8x128xf32>
    %1486 = arith.mulf %1460, %1376 : vector<8x128xf32>
    %1487 = arith.subf %1485, %1486 : vector<8x128xf32>
    %1488 = arith.mulf %1458, %1376 : vector<8x128xf32>
    %1489 = arith.mulf %1460, %1374 : vector<8x128xf32>
    %1490 = arith.addf %1488, %1489 : vector<8x128xf32>
    %1491 = arith.addf %1453, %1487 : vector<8x128xf32>
    %1492 = arith.addf %1456, %1490 : vector<8x128xf32>
    %1493 = arith.mulf %1458, %1378 : vector<8x128xf32>
    %1494 = arith.mulf %1460, %1380 : vector<8x128xf32>
    %1495 = arith.subf %1493, %1494 : vector<8x128xf32>
    %1496 = arith.mulf %1458, %1380 : vector<8x128xf32>
    %1497 = arith.mulf %1460, %1378 : vector<8x128xf32>
    %1498 = arith.addf %1496, %1497 : vector<8x128xf32>
    %c0_886 = arith.constant 0 : index
    %c1_887 = arith.constant 1 : index
    %c0_888 = arith.constant 0 : index
    %c0_889 = arith.constant 0 : index
    %1499 = vector.load %arg6[%c0_886, %c1_887, %c0_888, %c0_889] : memref<5x5x8x128xf32, #tpu.memory_space<vmem>>, vector<1x1x8x128xf32>
    %1500 = vector.shape_cast %1499 : vector<1x1x8x128xf32> to vector<8x128xf32>
    %c0_890 = arith.constant 0 : index
    %c1_891 = arith.constant 1 : index
    %c0_892 = arith.constant 0 : index
    %c0_893 = arith.constant 0 : index
    %1501 = vector.load %arg7[%c0_890, %c1_891, %c0_892, %c0_893] : memref<5x5x8x128xf32, #tpu.memory_space<vmem>>, vector<1x1x8x128xf32>
    %1502 = vector.shape_cast %1501 : vector<1x1x8x128xf32> to vector<8x128xf32>
    %c1_894 = arith.constant 1 : index
    %c1_895 = arith.constant 1 : index
    %c0_896 = arith.constant 0 : index
    %c0_897 = arith.constant 0 : index
    %1503 = vector.load %arg6[%c1_894, %c1_895, %c0_896, %c0_897] : memref<5x5x8x128xf32, #tpu.memory_space<vmem>>, vector<1x1x8x128xf32>
    %1504 = vector.shape_cast %1503 : vector<1x1x8x128xf32> to vector<8x128xf32>
    %c1_898 = arith.constant 1 : index
    %c1_899 = arith.constant 1 : index
    %c0_900 = arith.constant 0 : index
    %c0_901 = arith.constant 0 : index
    %1505 = vector.load %arg7[%c1_898, %c1_899, %c0_900, %c0_901] : memref<5x5x8x128xf32, #tpu.memory_space<vmem>>, vector<1x1x8x128xf32>
    %1506 = vector.shape_cast %1505 : vector<1x1x8x128xf32> to vector<8x128xf32>
    %c2_902 = arith.constant 2 : index
    %c1_903 = arith.constant 1 : index
    %c0_904 = arith.constant 0 : index
    %c0_905 = arith.constant 0 : index
    %1507 = vector.load %arg6[%c2_902, %c1_903, %c0_904, %c0_905] : memref<5x5x8x128xf32, #tpu.memory_space<vmem>>, vector<1x1x8x128xf32>
    %1508 = vector.shape_cast %1507 : vector<1x1x8x128xf32> to vector<8x128xf32>
    %c2_906 = arith.constant 2 : index
    %c1_907 = arith.constant 1 : index
    %c0_908 = arith.constant 0 : index
    %c0_909 = arith.constant 0 : index
    %1509 = vector.load %arg7[%c2_906, %c1_907, %c0_908, %c0_909] : memref<5x5x8x128xf32, #tpu.memory_space<vmem>>, vector<1x1x8x128xf32>
    %1510 = vector.shape_cast %1509 : vector<1x1x8x128xf32> to vector<8x128xf32>
    %c3_910 = arith.constant 3 : index
    %c1_911 = arith.constant 1 : index
    %c0_912 = arith.constant 0 : index
    %c0_913 = arith.constant 0 : index
    %1511 = vector.load %arg6[%c3_910, %c1_911, %c0_912, %c0_913] : memref<5x5x8x128xf32, #tpu.memory_space<vmem>>, vector<1x1x8x128xf32>
    %1512 = vector.shape_cast %1511 : vector<1x1x8x128xf32> to vector<8x128xf32>
    %c3_914 = arith.constant 3 : index
    %c1_915 = arith.constant 1 : index
    %c0_916 = arith.constant 0 : index
    %c0_917 = arith.constant 0 : index
    %1513 = vector.load %arg7[%c3_914, %c1_915, %c0_916, %c0_917] : memref<5x5x8x128xf32, #tpu.memory_space<vmem>>, vector<1x1x8x128xf32>
    %1514 = vector.shape_cast %1513 : vector<1x1x8x128xf32> to vector<8x128xf32>
    %c4_918 = arith.constant 4 : index
    %c1_919 = arith.constant 1 : index
    %c0_920 = arith.constant 0 : index
    %c0_921 = arith.constant 0 : index
    %1515 = vector.load %arg6[%c4_918, %c1_919, %c0_920, %c0_921] : memref<5x5x8x128xf32, #tpu.memory_space<vmem>>, vector<1x1x8x128xf32>
    %1516 = vector.shape_cast %1515 : vector<1x1x8x128xf32> to vector<8x128xf32>
    %c4_922 = arith.constant 4 : index
    %c1_923 = arith.constant 1 : index
    %c0_924 = arith.constant 0 : index
    %c0_925 = arith.constant 0 : index
    %1517 = vector.load %arg7[%c4_922, %c1_923, %c0_924, %c0_925] : memref<5x5x8x128xf32, #tpu.memory_space<vmem>>, vector<1x1x8x128xf32>
    %1518 = vector.shape_cast %1517 : vector<1x1x8x128xf32> to vector<8x128xf32>
    %c0_926 = arith.constant 0 : index
    %c1_927 = arith.constant 1 : index
    %c0_928 = arith.constant 0 : index
    %c0_929 = arith.constant 0 : index
    %1519 = vector.load %arg4[%c0_926, %c1_927, %c0_928, %c0_929] : memref<3x3x8x128xf32, #tpu.memory_space<vmem>>, vector<1x1x8x128xf32>
    %1520 = vector.shape_cast %1519 : vector<1x1x8x128xf32> to vector<8x128xf32>
    %c0_930 = arith.constant 0 : index
    %c1_931 = arith.constant 1 : index
    %c0_932 = arith.constant 0 : index
    %c0_933 = arith.constant 0 : index
    %1521 = vector.load %arg5[%c0_930, %c1_931, %c0_932, %c0_933] : memref<3x3x8x128xf32, #tpu.memory_space<vmem>>, vector<1x1x8x128xf32>
    %1522 = vector.shape_cast %1521 : vector<1x1x8x128xf32> to vector<8x128xf32>
    %1523 = arith.mulf %1520, %1500 : vector<8x128xf32>
    %1524 = arith.mulf %1522, %1502 : vector<8x128xf32>
    %1525 = arith.subf %1523, %1524 : vector<8x128xf32>
    %1526 = arith.mulf %1520, %1502 : vector<8x128xf32>
    %1527 = arith.mulf %1522, %1500 : vector<8x128xf32>
    %1528 = arith.addf %1526, %1527 : vector<8x128xf32>
    %1529 = arith.addf %1387, %1525 : vector<8x128xf32>
    %1530 = arith.addf %1390, %1528 : vector<8x128xf32>
    %1531 = arith.mulf %1520, %1504 : vector<8x128xf32>
    %1532 = arith.mulf %1522, %1506 : vector<8x128xf32>
    %1533 = arith.subf %1531, %1532 : vector<8x128xf32>
    %1534 = arith.mulf %1520, %1506 : vector<8x128xf32>
    %1535 = arith.mulf %1522, %1504 : vector<8x128xf32>
    %1536 = arith.addf %1534, %1535 : vector<8x128xf32>
    %1537 = arith.addf %1425, %1533 : vector<8x128xf32>
    %1538 = arith.addf %1426, %1536 : vector<8x128xf32>
    %1539 = arith.mulf %1520, %1508 : vector<8x128xf32>
    %1540 = arith.mulf %1522, %1510 : vector<8x128xf32>
    %1541 = arith.subf %1539, %1540 : vector<8x128xf32>
    %1542 = arith.mulf %1520, %1510 : vector<8x128xf32>
    %1543 = arith.mulf %1522, %1508 : vector<8x128xf32>
    %1544 = arith.addf %1542, %1543 : vector<8x128xf32>
    %1545 = arith.addf %1467, %1541 : vector<8x128xf32>
    %1546 = arith.addf %1468, %1544 : vector<8x128xf32>
    %1547 = arith.mulf %1520, %1512 : vector<8x128xf32>
    %1548 = arith.mulf %1522, %1514 : vector<8x128xf32>
    %1549 = arith.subf %1547, %1548 : vector<8x128xf32>
    %1550 = arith.mulf %1520, %1514 : vector<8x128xf32>
    %1551 = arith.mulf %1522, %1512 : vector<8x128xf32>
    %1552 = arith.addf %1550, %1551 : vector<8x128xf32>
    %1553 = arith.addf %1475, %1549 : vector<8x128xf32>
    %1554 = arith.addf %1476, %1552 : vector<8x128xf32>
    %1555 = arith.mulf %1520, %1516 : vector<8x128xf32>
    %1556 = arith.mulf %1522, %1518 : vector<8x128xf32>
    %1557 = arith.subf %1555, %1556 : vector<8x128xf32>
    %1558 = arith.mulf %1520, %1518 : vector<8x128xf32>
    %1559 = arith.mulf %1522, %1516 : vector<8x128xf32>
    %1560 = arith.addf %1558, %1559 : vector<8x128xf32>
    %1561 = arith.addf %1483, %1557 : vector<8x128xf32>
    %1562 = arith.addf %1484, %1560 : vector<8x128xf32>
    %c1_934 = arith.constant 1 : index
    %c1_935 = arith.constant 1 : index
    %c0_936 = arith.constant 0 : index
    %c0_937 = arith.constant 0 : index
    %1563 = vector.load %arg4[%c1_934, %c1_935, %c0_936, %c0_937] : memref<3x3x8x128xf32, #tpu.memory_space<vmem>>, vector<1x1x8x128xf32>
    %1564 = vector.shape_cast %1563 : vector<1x1x8x128xf32> to vector<8x128xf32>
    %c1_938 = arith.constant 1 : index
    %c1_939 = arith.constant 1 : index
    %c0_940 = arith.constant 0 : index
    %c0_941 = arith.constant 0 : index
    %1565 = vector.load %arg5[%c1_938, %c1_939, %c0_940, %c0_941] : memref<3x3x8x128xf32, #tpu.memory_space<vmem>>, vector<1x1x8x128xf32>
    %1566 = vector.shape_cast %1565 : vector<1x1x8x128xf32> to vector<8x128xf32>
    %1567 = arith.mulf %1564, %1500 : vector<8x128xf32>
    %1568 = arith.mulf %1566, %1502 : vector<8x128xf32>
    %1569 = arith.subf %1567, %1568 : vector<8x128xf32>
    %1570 = arith.mulf %1564, %1502 : vector<8x128xf32>
    %1571 = arith.mulf %1566, %1500 : vector<8x128xf32>
    %1572 = arith.addf %1570, %1571 : vector<8x128xf32>
    %1573 = arith.addf %1537, %1569 : vector<8x128xf32>
    %1574 = arith.addf %1538, %1572 : vector<8x128xf32>
    %1575 = arith.mulf %1564, %1504 : vector<8x128xf32>
    %1576 = arith.mulf %1566, %1506 : vector<8x128xf32>
    %1577 = arith.subf %1575, %1576 : vector<8x128xf32>
    %1578 = arith.mulf %1564, %1506 : vector<8x128xf32>
    %1579 = arith.mulf %1566, %1504 : vector<8x128xf32>
    %1580 = arith.addf %1578, %1579 : vector<8x128xf32>
    %1581 = arith.addf %1545, %1577 : vector<8x128xf32>
    %1582 = arith.addf %1546, %1580 : vector<8x128xf32>
    %1583 = arith.mulf %1564, %1508 : vector<8x128xf32>
    %1584 = arith.mulf %1566, %1510 : vector<8x128xf32>
    %1585 = arith.subf %1583, %1584 : vector<8x128xf32>
    %1586 = arith.mulf %1564, %1510 : vector<8x128xf32>
    %1587 = arith.mulf %1566, %1508 : vector<8x128xf32>
    %1588 = arith.addf %1586, %1587 : vector<8x128xf32>
    %1589 = arith.addf %1553, %1585 : vector<8x128xf32>
    %1590 = arith.addf %1554, %1588 : vector<8x128xf32>
    %1591 = arith.mulf %1564, %1512 : vector<8x128xf32>
    %1592 = arith.mulf %1566, %1514 : vector<8x128xf32>
    %1593 = arith.subf %1591, %1592 : vector<8x128xf32>
    %1594 = arith.mulf %1564, %1514 : vector<8x128xf32>
    %1595 = arith.mulf %1566, %1512 : vector<8x128xf32>
    %1596 = arith.addf %1594, %1595 : vector<8x128xf32>
    %1597 = arith.addf %1561, %1593 : vector<8x128xf32>
    %1598 = arith.addf %1562, %1596 : vector<8x128xf32>
    %1599 = arith.mulf %1564, %1516 : vector<8x128xf32>
    %1600 = arith.mulf %1566, %1518 : vector<8x128xf32>
    %1601 = arith.subf %1599, %1600 : vector<8x128xf32>
    %1602 = arith.mulf %1564, %1518 : vector<8x128xf32>
    %1603 = arith.mulf %1566, %1516 : vector<8x128xf32>
    %1604 = arith.addf %1602, %1603 : vector<8x128xf32>
    %1605 = arith.addf %1491, %1601 : vector<8x128xf32>
    %1606 = arith.addf %1492, %1604 : vector<8x128xf32>
    %c2_942 = arith.constant 2 : index
    %c1_943 = arith.constant 1 : index
    %c0_944 = arith.constant 0 : index
    %c0_945 = arith.constant 0 : index
    %1607 = vector.load %arg4[%c2_942, %c1_943, %c0_944, %c0_945] : memref<3x3x8x128xf32, #tpu.memory_space<vmem>>, vector<1x1x8x128xf32>
    %1608 = vector.shape_cast %1607 : vector<1x1x8x128xf32> to vector<8x128xf32>
    %c2_946 = arith.constant 2 : index
    %c1_947 = arith.constant 1 : index
    %c0_948 = arith.constant 0 : index
    %c0_949 = arith.constant 0 : index
    %1609 = vector.load %arg5[%c2_946, %c1_947, %c0_948, %c0_949] : memref<3x3x8x128xf32, #tpu.memory_space<vmem>>, vector<1x1x8x128xf32>
    %1610 = vector.shape_cast %1609 : vector<1x1x8x128xf32> to vector<8x128xf32>
    %1611 = arith.mulf %1608, %1500 : vector<8x128xf32>
    %1612 = arith.mulf %1610, %1502 : vector<8x128xf32>
    %1613 = arith.subf %1611, %1612 : vector<8x128xf32>
    %1614 = arith.mulf %1608, %1502 : vector<8x128xf32>
    %1615 = arith.mulf %1610, %1500 : vector<8x128xf32>
    %1616 = arith.addf %1614, %1615 : vector<8x128xf32>
    %1617 = arith.addf %1581, %1613 : vector<8x128xf32>
    %1618 = arith.addf %1582, %1616 : vector<8x128xf32>
    %1619 = arith.mulf %1608, %1504 : vector<8x128xf32>
    %1620 = arith.mulf %1610, %1506 : vector<8x128xf32>
    %1621 = arith.subf %1619, %1620 : vector<8x128xf32>
    %1622 = arith.mulf %1608, %1506 : vector<8x128xf32>
    %1623 = arith.mulf %1610, %1504 : vector<8x128xf32>
    %1624 = arith.addf %1622, %1623 : vector<8x128xf32>
    %1625 = arith.addf %1589, %1621 : vector<8x128xf32>
    %1626 = arith.addf %1590, %1624 : vector<8x128xf32>
    %1627 = arith.mulf %1608, %1508 : vector<8x128xf32>
    %1628 = arith.mulf %1610, %1510 : vector<8x128xf32>
    %1629 = arith.subf %1627, %1628 : vector<8x128xf32>
    %1630 = arith.mulf %1608, %1510 : vector<8x128xf32>
    %1631 = arith.mulf %1610, %1508 : vector<8x128xf32>
    %1632 = arith.addf %1630, %1631 : vector<8x128xf32>
    %1633 = arith.addf %1597, %1629 : vector<8x128xf32>
    %1634 = arith.addf %1598, %1632 : vector<8x128xf32>
    %1635 = arith.mulf %1608, %1512 : vector<8x128xf32>
    %1636 = arith.mulf %1610, %1514 : vector<8x128xf32>
    %1637 = arith.subf %1635, %1636 : vector<8x128xf32>
    %1638 = arith.mulf %1608, %1514 : vector<8x128xf32>
    %1639 = arith.mulf %1610, %1512 : vector<8x128xf32>
    %1640 = arith.addf %1638, %1639 : vector<8x128xf32>
    %1641 = arith.addf %1605, %1637 : vector<8x128xf32>
    %1642 = arith.addf %1606, %1640 : vector<8x128xf32>
    %1643 = arith.mulf %1608, %1516 : vector<8x128xf32>
    %1644 = arith.mulf %1610, %1518 : vector<8x128xf32>
    %1645 = arith.subf %1643, %1644 : vector<8x128xf32>
    %1646 = arith.mulf %1608, %1518 : vector<8x128xf32>
    %1647 = arith.mulf %1610, %1516 : vector<8x128xf32>
    %1648 = arith.addf %1646, %1647 : vector<8x128xf32>
    %1649 = arith.addf %1495, %1645 : vector<8x128xf32>
    %1650 = arith.addf %1498, %1648 : vector<8x128xf32>
    %c0_950 = arith.constant 0 : index
    %c0_951 = arith.constant 0 : index
    %c0_952 = arith.constant 0 : index
    %c0_953 = arith.constant 0 : index
    %1651 = vector.load %arg6[%c0_950, %c0_951, %c0_952, %c0_953] : memref<5x5x8x128xf32, #tpu.memory_space<vmem>>, vector<1x1x8x128xf32>
    %1652 = vector.shape_cast %1651 : vector<1x1x8x128xf32> to vector<8x128xf32>
    %c0_954 = arith.constant 0 : index
    %c0_955 = arith.constant 0 : index
    %c0_956 = arith.constant 0 : index
    %c0_957 = arith.constant 0 : index
    %1653 = vector.load %arg7[%c0_954, %c0_955, %c0_956, %c0_957] : memref<5x5x8x128xf32, #tpu.memory_space<vmem>>, vector<1x1x8x128xf32>
    %1654 = vector.shape_cast %1653 : vector<1x1x8x128xf32> to vector<8x128xf32>
    %c1_958 = arith.constant 1 : index
    %c0_959 = arith.constant 0 : index
    %c0_960 = arith.constant 0 : index
    %c0_961 = arith.constant 0 : index
    %1655 = vector.load %arg6[%c1_958, %c0_959, %c0_960, %c0_961] : memref<5x5x8x128xf32, #tpu.memory_space<vmem>>, vector<1x1x8x128xf32>
    %1656 = vector.shape_cast %1655 : vector<1x1x8x128xf32> to vector<8x128xf32>
    %c1_962 = arith.constant 1 : index
    %c0_963 = arith.constant 0 : index
    %c0_964 = arith.constant 0 : index
    %c0_965 = arith.constant 0 : index
    %1657 = vector.load %arg7[%c1_962, %c0_963, %c0_964, %c0_965] : memref<5x5x8x128xf32, #tpu.memory_space<vmem>>, vector<1x1x8x128xf32>
    %1658 = vector.shape_cast %1657 : vector<1x1x8x128xf32> to vector<8x128xf32>
    %c2_966 = arith.constant 2 : index
    %c0_967 = arith.constant 0 : index
    %c0_968 = arith.constant 0 : index
    %c0_969 = arith.constant 0 : index
    %1659 = vector.load %arg6[%c2_966, %c0_967, %c0_968, %c0_969] : memref<5x5x8x128xf32, #tpu.memory_space<vmem>>, vector<1x1x8x128xf32>
    %1660 = vector.shape_cast %1659 : vector<1x1x8x128xf32> to vector<8x128xf32>
    %c2_970 = arith.constant 2 : index
    %c0_971 = arith.constant 0 : index
    %c0_972 = arith.constant 0 : index
    %c0_973 = arith.constant 0 : index
    %1661 = vector.load %arg7[%c2_970, %c0_971, %c0_972, %c0_973] : memref<5x5x8x128xf32, #tpu.memory_space<vmem>>, vector<1x1x8x128xf32>
    %1662 = vector.shape_cast %1661 : vector<1x1x8x128xf32> to vector<8x128xf32>
    %c3_974 = arith.constant 3 : index
    %c0_975 = arith.constant 0 : index
    %c0_976 = arith.constant 0 : index
    %c0_977 = arith.constant 0 : index
    %1663 = vector.load %arg6[%c3_974, %c0_975, %c0_976, %c0_977] : memref<5x5x8x128xf32, #tpu.memory_space<vmem>>, vector<1x1x8x128xf32>
    %1664 = vector.shape_cast %1663 : vector<1x1x8x128xf32> to vector<8x128xf32>
    %c3_978 = arith.constant 3 : index
    %c0_979 = arith.constant 0 : index
    %c0_980 = arith.constant 0 : index
    %c0_981 = arith.constant 0 : index
    %1665 = vector.load %arg7[%c3_978, %c0_979, %c0_980, %c0_981] : memref<5x5x8x128xf32, #tpu.memory_space<vmem>>, vector<1x1x8x128xf32>
    %1666 = vector.shape_cast %1665 : vector<1x1x8x128xf32> to vector<8x128xf32>
    %c4_982 = arith.constant 4 : index
    %c0_983 = arith.constant 0 : index
    %c0_984 = arith.constant 0 : index
    %c0_985 = arith.constant 0 : index
    %1667 = vector.load %arg6[%c4_982, %c0_983, %c0_984, %c0_985] : memref<5x5x8x128xf32, #tpu.memory_space<vmem>>, vector<1x1x8x128xf32>
    %1668 = vector.shape_cast %1667 : vector<1x1x8x128xf32> to vector<8x128xf32>
    %c4_986 = arith.constant 4 : index
    %c0_987 = arith.constant 0 : index
    %c0_988 = arith.constant 0 : index
    %c0_989 = arith.constant 0 : index
    %1669 = vector.load %arg7[%c4_986, %c0_987, %c0_988, %c0_989] : memref<5x5x8x128xf32, #tpu.memory_space<vmem>>, vector<1x1x8x128xf32>
    %1670 = vector.shape_cast %1669 : vector<1x1x8x128xf32> to vector<8x128xf32>
    %c0_990 = arith.constant 0 : index
    %c2_991 = arith.constant 2 : index
    %c0_992 = arith.constant 0 : index
    %c0_993 = arith.constant 0 : index
    %1671 = vector.load %arg4[%c0_990, %c2_991, %c0_992, %c0_993] : memref<3x3x8x128xf32, #tpu.memory_space<vmem>>, vector<1x1x8x128xf32>
    %1672 = vector.shape_cast %1671 : vector<1x1x8x128xf32> to vector<8x128xf32>
    %c0_994 = arith.constant 0 : index
    %c2_995 = arith.constant 2 : index
    %c0_996 = arith.constant 0 : index
    %c0_997 = arith.constant 0 : index
    %1673 = vector.load %arg5[%c0_994, %c2_995, %c0_996, %c0_997] : memref<3x3x8x128xf32, #tpu.memory_space<vmem>>, vector<1x1x8x128xf32>
    %1674 = vector.shape_cast %1673 : vector<1x1x8x128xf32> to vector<8x128xf32>
    %1675 = arith.mulf %1672, %1652 : vector<8x128xf32>
    %1676 = arith.mulf %1674, %1654 : vector<8x128xf32>
    %1677 = arith.subf %1675, %1676 : vector<8x128xf32>
    %1678 = arith.mulf %1672, %1654 : vector<8x128xf32>
    %1679 = arith.mulf %1674, %1652 : vector<8x128xf32>
    %1680 = arith.addf %1678, %1679 : vector<8x128xf32>
    %1681 = arith.addf %1529, %1677 : vector<8x128xf32>
    %1682 = arith.addf %1530, %1680 : vector<8x128xf32>
    %1683 = arith.mulf %1672, %1656 : vector<8x128xf32>
    %1684 = arith.mulf %1674, %1658 : vector<8x128xf32>
    %1685 = arith.subf %1683, %1684 : vector<8x128xf32>
    %1686 = arith.mulf %1672, %1658 : vector<8x128xf32>
    %1687 = arith.mulf %1674, %1656 : vector<8x128xf32>
    %1688 = arith.addf %1686, %1687 : vector<8x128xf32>
    %1689 = arith.addf %1573, %1685 : vector<8x128xf32>
    %1690 = arith.addf %1574, %1688 : vector<8x128xf32>
    %1691 = arith.mulf %1672, %1660 : vector<8x128xf32>
    %1692 = arith.mulf %1674, %1662 : vector<8x128xf32>
    %1693 = arith.subf %1691, %1692 : vector<8x128xf32>
    %1694 = arith.mulf %1672, %1662 : vector<8x128xf32>
    %1695 = arith.mulf %1674, %1660 : vector<8x128xf32>
    %1696 = arith.addf %1694, %1695 : vector<8x128xf32>
    %1697 = arith.addf %1617, %1693 : vector<8x128xf32>
    %1698 = arith.addf %1618, %1696 : vector<8x128xf32>
    %1699 = arith.mulf %1672, %1664 : vector<8x128xf32>
    %1700 = arith.mulf %1674, %1666 : vector<8x128xf32>
    %1701 = arith.subf %1699, %1700 : vector<8x128xf32>
    %1702 = arith.mulf %1672, %1666 : vector<8x128xf32>
    %1703 = arith.mulf %1674, %1664 : vector<8x128xf32>
    %1704 = arith.addf %1702, %1703 : vector<8x128xf32>
    %1705 = arith.addf %1625, %1701 : vector<8x128xf32>
    %1706 = arith.addf %1626, %1704 : vector<8x128xf32>
    %1707 = arith.mulf %1672, %1668 : vector<8x128xf32>
    %1708 = arith.mulf %1674, %1670 : vector<8x128xf32>
    %1709 = arith.subf %1707, %1708 : vector<8x128xf32>
    %1710 = arith.mulf %1672, %1670 : vector<8x128xf32>
    %1711 = arith.mulf %1674, %1668 : vector<8x128xf32>
    %1712 = arith.addf %1710, %1711 : vector<8x128xf32>
    %1713 = arith.addf %1633, %1709 : vector<8x128xf32>
    %1714 = arith.addf %1634, %1712 : vector<8x128xf32>
    %c1_998 = arith.constant 1 : index
    %c2_999 = arith.constant 2 : index
    %c0_1000 = arith.constant 0 : index
    %c0_1001 = arith.constant 0 : index
    %1715 = vector.load %arg4[%c1_998, %c2_999, %c0_1000, %c0_1001] : memref<3x3x8x128xf32, #tpu.memory_space<vmem>>, vector<1x1x8x128xf32>
    %1716 = vector.shape_cast %1715 : vector<1x1x8x128xf32> to vector<8x128xf32>
    %c1_1002 = arith.constant 1 : index
    %c2_1003 = arith.constant 2 : index
    %c0_1004 = arith.constant 0 : index
    %c0_1005 = arith.constant 0 : index
    %1717 = vector.load %arg5[%c1_1002, %c2_1003, %c0_1004, %c0_1005] : memref<3x3x8x128xf32, #tpu.memory_space<vmem>>, vector<1x1x8x128xf32>
    %1718 = vector.shape_cast %1717 : vector<1x1x8x128xf32> to vector<8x128xf32>
    %1719 = arith.mulf %1716, %1652 : vector<8x128xf32>
    %1720 = arith.mulf %1718, %1654 : vector<8x128xf32>
    %1721 = arith.subf %1719, %1720 : vector<8x128xf32>
    %1722 = arith.mulf %1716, %1654 : vector<8x128xf32>
    %1723 = arith.mulf %1718, %1652 : vector<8x128xf32>
    %1724 = arith.addf %1722, %1723 : vector<8x128xf32>
    %1725 = arith.addf %1689, %1721 : vector<8x128xf32>
    %1726 = arith.addf %1690, %1724 : vector<8x128xf32>
    %1727 = arith.mulf %1716, %1656 : vector<8x128xf32>
    %1728 = arith.mulf %1718, %1658 : vector<8x128xf32>
    %1729 = arith.subf %1727, %1728 : vector<8x128xf32>
    %1730 = arith.mulf %1716, %1658 : vector<8x128xf32>
    %1731 = arith.mulf %1718, %1656 : vector<8x128xf32>
    %1732 = arith.addf %1730, %1731 : vector<8x128xf32>
    %1733 = arith.addf %1697, %1729 : vector<8x128xf32>
    %1734 = arith.addf %1698, %1732 : vector<8x128xf32>
    %1735 = arith.mulf %1716, %1660 : vector<8x128xf32>
    %1736 = arith.mulf %1718, %1662 : vector<8x128xf32>
    %1737 = arith.subf %1735, %1736 : vector<8x128xf32>
    %1738 = arith.mulf %1716, %1662 : vector<8x128xf32>
    %1739 = arith.mulf %1718, %1660 : vector<8x128xf32>
    %1740 = arith.addf %1738, %1739 : vector<8x128xf32>
    %1741 = arith.addf %1705, %1737 : vector<8x128xf32>
    %1742 = arith.addf %1706, %1740 : vector<8x128xf32>
    %1743 = arith.mulf %1716, %1664 : vector<8x128xf32>
    %1744 = arith.mulf %1718, %1666 : vector<8x128xf32>
    %1745 = arith.subf %1743, %1744 : vector<8x128xf32>
    %1746 = arith.mulf %1716, %1666 : vector<8x128xf32>
    %1747 = arith.mulf %1718, %1664 : vector<8x128xf32>
    %1748 = arith.addf %1746, %1747 : vector<8x128xf32>
    %1749 = arith.addf %1713, %1745 : vector<8x128xf32>
    %1750 = arith.addf %1714, %1748 : vector<8x128xf32>
    %1751 = arith.mulf %1716, %1668 : vector<8x128xf32>
    %1752 = arith.mulf %1718, %1670 : vector<8x128xf32>
    %1753 = arith.subf %1751, %1752 : vector<8x128xf32>
    %1754 = arith.mulf %1716, %1670 : vector<8x128xf32>
    %1755 = arith.mulf %1718, %1668 : vector<8x128xf32>
    %1756 = arith.addf %1754, %1755 : vector<8x128xf32>
    %1757 = arith.addf %1641, %1753 : vector<8x128xf32>
    %1758 = arith.addf %1642, %1756 : vector<8x128xf32>
    %c2_1006 = arith.constant 2 : index
    %c2_1007 = arith.constant 2 : index
    %c0_1008 = arith.constant 0 : index
    %c0_1009 = arith.constant 0 : index
    %1759 = vector.load %arg4[%c2_1006, %c2_1007, %c0_1008, %c0_1009] : memref<3x3x8x128xf32, #tpu.memory_space<vmem>>, vector<1x1x8x128xf32>
    %1760 = vector.shape_cast %1759 : vector<1x1x8x128xf32> to vector<8x128xf32>
    %c2_1010 = arith.constant 2 : index
    %c2_1011 = arith.constant 2 : index
    %c0_1012 = arith.constant 0 : index
    %c0_1013 = arith.constant 0 : index
    %1761 = vector.load %arg5[%c2_1010, %c2_1011, %c0_1012, %c0_1013] : memref<3x3x8x128xf32, #tpu.memory_space<vmem>>, vector<1x1x8x128xf32>
    %1762 = vector.shape_cast %1761 : vector<1x1x8x128xf32> to vector<8x128xf32>
    %1763 = arith.mulf %1760, %1652 : vector<8x128xf32>
    %1764 = arith.mulf %1762, %1654 : vector<8x128xf32>
    %1765 = arith.subf %1763, %1764 : vector<8x128xf32>
    %1766 = arith.mulf %1760, %1654 : vector<8x128xf32>
    %1767 = arith.mulf %1762, %1652 : vector<8x128xf32>
    %1768 = arith.addf %1766, %1767 : vector<8x128xf32>
    %1769 = arith.addf %1733, %1765 : vector<8x128xf32>
    %1770 = arith.addf %1734, %1768 : vector<8x128xf32>
    %1771 = arith.mulf %1760, %1656 : vector<8x128xf32>
    %1772 = arith.mulf %1762, %1658 : vector<8x128xf32>
    %1773 = arith.subf %1771, %1772 : vector<8x128xf32>
    %1774 = arith.mulf %1760, %1658 : vector<8x128xf32>
    %1775 = arith.mulf %1762, %1656 : vector<8x128xf32>
    %1776 = arith.addf %1774, %1775 : vector<8x128xf32>
    %1777 = arith.addf %1741, %1773 : vector<8x128xf32>
    %1778 = arith.addf %1742, %1776 : vector<8x128xf32>
    %1779 = arith.mulf %1760, %1660 : vector<8x128xf32>
    %1780 = arith.mulf %1762, %1662 : vector<8x128xf32>
    %1781 = arith.subf %1779, %1780 : vector<8x128xf32>
    %1782 = arith.mulf %1760, %1662 : vector<8x128xf32>
    %1783 = arith.mulf %1762, %1660 : vector<8x128xf32>
    %1784 = arith.addf %1782, %1783 : vector<8x128xf32>
    %1785 = arith.addf %1749, %1781 : vector<8x128xf32>
    %1786 = arith.addf %1750, %1784 : vector<8x128xf32>
    %1787 = arith.mulf %1760, %1664 : vector<8x128xf32>
    %1788 = arith.mulf %1762, %1666 : vector<8x128xf32>
    %1789 = arith.subf %1787, %1788 : vector<8x128xf32>
    %1790 = arith.mulf %1760, %1666 : vector<8x128xf32>
    %1791 = arith.mulf %1762, %1664 : vector<8x128xf32>
    %1792 = arith.addf %1790, %1791 : vector<8x128xf32>
    %1793 = arith.addf %1757, %1789 : vector<8x128xf32>
    %1794 = arith.addf %1758, %1792 : vector<8x128xf32>
    %1795 = arith.mulf %1760, %1668 : vector<8x128xf32>
    %1796 = arith.mulf %1762, %1670 : vector<8x128xf32>
    %1797 = arith.subf %1795, %1796 : vector<8x128xf32>
    %1798 = arith.mulf %1760, %1670 : vector<8x128xf32>
    %1799 = arith.mulf %1762, %1668 : vector<8x128xf32>
    %1800 = arith.addf %1798, %1799 : vector<8x128xf32>
    %1801 = arith.addf %1649, %1797 : vector<8x128xf32>
    %1802 = arith.addf %1650, %1800 : vector<8x128xf32>
    %cst_1014 = arith.constant 0.26036644 : f32
    %1803 = vector.broadcast %cst_1014 : f32 to vector<8x128xf32>
    %1804 = arith.mulf %1681, %1803 : vector<8x128xf32>
    %cst_1015 = arith.constant -0.056398876 : f32
    %1805 = vector.broadcast %cst_1015 : f32 to vector<8x128xf32>
    %1806 = arith.mulf %1682, %1805 : vector<8x128xf32>
    %1807 = arith.addf %1804, %1806 : vector<8x128xf32>
    %cst_1016 = arith.constant -0.0119125871 : f32
    %1808 = vector.broadcast %cst_1016 : f32 to vector<8x128xf32>
    %1809 = arith.mulf %1725, %1808 : vector<8x128xf32>
    %1810 = arith.addf %1807, %1809 : vector<8x128xf32>
    %cst_1017 = arith.constant -0.262807339 : f32
    %1811 = vector.broadcast %cst_1017 : f32 to vector<8x128xf32>
    %1812 = arith.mulf %1726, %1811 : vector<8x128xf32>
    %1813 = arith.addf %1810, %1812 : vector<8x128xf32>
    %cst_1018 = arith.constant -0.0124805495 : f32
    %1814 = vector.broadcast %cst_1018 : f32 to vector<8x128xf32>
    %1815 = arith.mulf %1769, %1814 : vector<8x128xf32>
    %1816 = arith.addf %1813, %1815 : vector<8x128xf32>
    %cst_1019 = arith.constant -0.346476555 : f32
    %1817 = vector.broadcast %cst_1019 : f32 to vector<8x128xf32>
    %1818 = arith.mulf %1770, %1817 : vector<8x128xf32>
    %1819 = arith.addf %1816, %1818 : vector<8x128xf32>
    %cst_1020 = arith.constant 0.0439380966 : f32
    %1820 = vector.broadcast %cst_1020 : f32 to vector<8x128xf32>
    %1821 = arith.mulf %1777, %1820 : vector<8x128xf32>
    %1822 = arith.addf %1819, %1821 : vector<8x128xf32>
    %cst_1021 = arith.constant -0.17052795 : f32
    %1823 = vector.broadcast %cst_1021 : f32 to vector<8x128xf32>
    %1824 = arith.mulf %1778, %1823 : vector<8x128xf32>
    %1825 = arith.addf %1822, %1824 : vector<8x128xf32>
    %cst_1022 = arith.constant -0.311891288 : f32
    %1826 = vector.broadcast %cst_1022 : f32 to vector<8x128xf32>
    %1827 = arith.mulf %1785, %1826 : vector<8x128xf32>
    %1828 = arith.addf %1825, %1827 : vector<8x128xf32>
    %cst_1023 = arith.constant -0.540071785 : f32
    %1829 = vector.broadcast %cst_1023 : f32 to vector<8x128xf32>
    %1830 = arith.mulf %1786, %1829 : vector<8x128xf32>
    %1831 = arith.addf %1828, %1830 : vector<8x128xf32>
    %cst_1024 = arith.constant 0.356373459 : f32
    %1832 = vector.broadcast %cst_1024 : f32 to vector<8x128xf32>
    %1833 = arith.mulf %1793, %1832 : vector<8x128xf32>
    %1834 = arith.addf %1831, %1833 : vector<8x128xf32>
    %cst_1025 = arith.constant -0.144357443 : f32
    %1835 = vector.broadcast %cst_1025 : f32 to vector<8x128xf32>
    %1836 = arith.mulf %1794, %1835 : vector<8x128xf32>
    %1837 = arith.addf %1834, %1836 : vector<8x128xf32>
    %cst_1026 = arith.constant -0.216947943 : f32
    %1838 = vector.broadcast %cst_1026 : f32 to vector<8x128xf32>
    %1839 = arith.mulf %1801, %1838 : vector<8x128xf32>
    %1840 = arith.addf %1837, %1839 : vector<8x128xf32>
    %cst_1027 = arith.constant -0.0689737498 : f32
    %1841 = vector.broadcast %cst_1027 : f32 to vector<8x128xf32>
    %1842 = arith.mulf %1802, %1841 : vector<8x128xf32>
    %1843 = arith.addf %1840, %1842 : vector<8x128xf32>
    %1844 = arith.mulf %1843, %1358 : vector<8x128xf32>
    %1845 = arith.addf %565, %1844 : vector<8x128xf32>
    %cst_1028 = arith.constant -0.093722634 : f32
    %1846 = vector.broadcast %cst_1028 : f32 to vector<8x128xf32>
    %1847 = arith.mulf %1681, %1846 : vector<8x128xf32>
    %cst_1029 = arith.constant -0.253893554 : f32
    %1848 = vector.broadcast %cst_1029 : f32 to vector<8x128xf32>
    %1849 = arith.mulf %1682, %1848 : vector<8x128xf32>
    %1850 = arith.addf %1847, %1849 : vector<8x128xf32>
    %cst_1030 = arith.constant 0.133070916 : f32
    %1851 = vector.broadcast %cst_1030 : f32 to vector<8x128xf32>
    %1852 = arith.mulf %1725, %1851 : vector<8x128xf32>
    %1853 = arith.addf %1850, %1852 : vector<8x128xf32>
    %cst_1031 = arith.constant -0.102816977 : f32
    %1854 = vector.broadcast %cst_1031 : f32 to vector<8x128xf32>
    %1855 = arith.mulf %1726, %1854 : vector<8x128xf32>
    %1856 = arith.addf %1853, %1855 : vector<8x128xf32>
    %cst_1032 = arith.constant 0.0178196337 : f32
    %1857 = vector.broadcast %cst_1032 : f32 to vector<8x128xf32>
    %1858 = arith.mulf %1769, %1857 : vector<8x128xf32>
    %1859 = arith.addf %1856, %1858 : vector<8x128xf32>
    %cst_1033 = arith.constant -0.267090529 : f32
    %1860 = vector.broadcast %cst_1033 : f32 to vector<8x128xf32>
    %1861 = arith.mulf %1770, %1860 : vector<8x128xf32>
    %1862 = arith.addf %1859, %1861 : vector<8x128xf32>
    %cst_1034 = arith.constant 0.306425065 : f32
    %1863 = vector.broadcast %cst_1034 : f32 to vector<8x128xf32>
    %1864 = arith.mulf %1777, %1863 : vector<8x128xf32>
    %1865 = arith.addf %1862, %1864 : vector<8x128xf32>
    %cst_1035 = arith.constant 0.631291568 : f32
    %1866 = vector.broadcast %cst_1035 : f32 to vector<8x128xf32>
    %1867 = arith.mulf %1778, %1866 : vector<8x128xf32>
    %1868 = arith.addf %1865, %1867 : vector<8x128xf32>
    %cst_1036 = arith.constant -0.0335183255 : f32
    %1869 = vector.broadcast %cst_1036 : f32 to vector<8x128xf32>
    %1870 = arith.mulf %1785, %1869 : vector<8x128xf32>
    %1871 = arith.addf %1868, %1870 : vector<8x128xf32>
    %cst_1037 = arith.constant -0.158765748 : f32
    %1872 = vector.broadcast %cst_1037 : f32 to vector<8x128xf32>
    %1873 = arith.mulf %1786, %1872 : vector<8x128xf32>
    %1874 = arith.addf %1871, %1873 : vector<8x128xf32>
    %cst_1038 = arith.constant -0.037711326 : f32
    %1875 = vector.broadcast %cst_1038 : f32 to vector<8x128xf32>
    %1876 = arith.mulf %1793, %1875 : vector<8x128xf32>
    %1877 = arith.addf %1874, %1876 : vector<8x128xf32>
    %cst_1039 = arith.constant -3.419110e-01 : f32
    %1878 = vector.broadcast %cst_1039 : f32 to vector<8x128xf32>
    %1879 = arith.mulf %1794, %1878 : vector<8x128xf32>
    %1880 = arith.addf %1877, %1879 : vector<8x128xf32>
    %cst_1040 = arith.constant -0.232503444 : f32
    %1881 = vector.broadcast %cst_1040 : f32 to vector<8x128xf32>
    %1882 = arith.mulf %1801, %1881 : vector<8x128xf32>
    %1883 = arith.addf %1880, %1882 : vector<8x128xf32>
    %cst_1041 = arith.constant 0.326967329 : f32
    %1884 = vector.broadcast %cst_1041 : f32 to vector<8x128xf32>
    %1885 = arith.mulf %1802, %1884 : vector<8x128xf32>
    %1886 = arith.addf %1883, %1885 : vector<8x128xf32>
    %1887 = arith.mulf %1886, %1360 : vector<8x128xf32>
    %1888 = arith.addf %596, %1887 : vector<8x128xf32>
    %c0_1042 = arith.constant 0 : index
    %c3_1043 = arith.constant 3 : index
    %c0_1044 = arith.constant 0 : index
    %c0_1045 = arith.constant 0 : index
    %1889 = vector.load %arg6[%c0_1042, %c3_1043, %c0_1044, %c0_1045] : memref<5x5x8x128xf32, #tpu.memory_space<vmem>>, vector<1x1x8x128xf32>
    %1890 = vector.shape_cast %1889 : vector<1x1x8x128xf32> to vector<8x128xf32>
    %c0_1046 = arith.constant 0 : index
    %c3_1047 = arith.constant 3 : index
    %c0_1048 = arith.constant 0 : index
    %c0_1049 = arith.constant 0 : index
    %1891 = vector.load %arg7[%c0_1046, %c3_1047, %c0_1048, %c0_1049] : memref<5x5x8x128xf32, #tpu.memory_space<vmem>>, vector<1x1x8x128xf32>
    %1892 = vector.shape_cast %1891 : vector<1x1x8x128xf32> to vector<8x128xf32>
    %c1_1050 = arith.constant 1 : index
    %c3_1051 = arith.constant 3 : index
    %c0_1052 = arith.constant 0 : index
    %c0_1053 = arith.constant 0 : index
    %1893 = vector.load %arg6[%c1_1050, %c3_1051, %c0_1052, %c0_1053] : memref<5x5x8x128xf32, #tpu.memory_space<vmem>>, vector<1x1x8x128xf32>
    %1894 = vector.shape_cast %1893 : vector<1x1x8x128xf32> to vector<8x128xf32>
    %c1_1054 = arith.constant 1 : index
    %c3_1055 = arith.constant 3 : index
    %c0_1056 = arith.constant 0 : index
    %c0_1057 = arith.constant 0 : index
    %1895 = vector.load %arg7[%c1_1054, %c3_1055, %c0_1056, %c0_1057] : memref<5x5x8x128xf32, #tpu.memory_space<vmem>>, vector<1x1x8x128xf32>
    %1896 = vector.shape_cast %1895 : vector<1x1x8x128xf32> to vector<8x128xf32>
    %c2_1058 = arith.constant 2 : index
    %c3_1059 = arith.constant 3 : index
    %c0_1060 = arith.constant 0 : index
    %c0_1061 = arith.constant 0 : index
    %1897 = vector.load %arg6[%c2_1058, %c3_1059, %c0_1060, %c0_1061] : memref<5x5x8x128xf32, #tpu.memory_space<vmem>>, vector<1x1x8x128xf32>
    %1898 = vector.shape_cast %1897 : vector<1x1x8x128xf32> to vector<8x128xf32>
    %c2_1062 = arith.constant 2 : index
    %c3_1063 = arith.constant 3 : index
    %c0_1064 = arith.constant 0 : index
    %c0_1065 = arith.constant 0 : index
    %1899 = vector.load %arg7[%c2_1062, %c3_1063, %c0_1064, %c0_1065] : memref<5x5x8x128xf32, #tpu.memory_space<vmem>>, vector<1x1x8x128xf32>
    %1900 = vector.shape_cast %1899 : vector<1x1x8x128xf32> to vector<8x128xf32>
    %c3_1066 = arith.constant 3 : index
    %c3_1067 = arith.constant 3 : index
    %c0_1068 = arith.constant 0 : index
    %c0_1069 = arith.constant 0 : index
    %1901 = vector.load %arg6[%c3_1066, %c3_1067, %c0_1068, %c0_1069] : memref<5x5x8x128xf32, #tpu.memory_space<vmem>>, vector<1x1x8x128xf32>
    %1902 = vector.shape_cast %1901 : vector<1x1x8x128xf32> to vector<8x128xf32>
    %c3_1070 = arith.constant 3 : index
    %c3_1071 = arith.constant 3 : index
    %c0_1072 = arith.constant 0 : index
    %c0_1073 = arith.constant 0 : index
    %1903 = vector.load %arg7[%c3_1070, %c3_1071, %c0_1072, %c0_1073] : memref<5x5x8x128xf32, #tpu.memory_space<vmem>>, vector<1x1x8x128xf32>
    %1904 = vector.shape_cast %1903 : vector<1x1x8x128xf32> to vector<8x128xf32>
    %c4_1074 = arith.constant 4 : index
    %c3_1075 = arith.constant 3 : index
    %c0_1076 = arith.constant 0 : index
    %c0_1077 = arith.constant 0 : index
    %1905 = vector.load %arg6[%c4_1074, %c3_1075, %c0_1076, %c0_1077] : memref<5x5x8x128xf32, #tpu.memory_space<vmem>>, vector<1x1x8x128xf32>
    %1906 = vector.shape_cast %1905 : vector<1x1x8x128xf32> to vector<8x128xf32>
    %c4_1078 = arith.constant 4 : index
    %c3_1079 = arith.constant 3 : index
    %c0_1080 = arith.constant 0 : index
    %c0_1081 = arith.constant 0 : index
    %1907 = vector.load %arg7[%c4_1078, %c3_1079, %c0_1080, %c0_1081] : memref<5x5x8x128xf32, #tpu.memory_space<vmem>>, vector<1x1x8x128xf32>
    %1908 = vector.shape_cast %1907 : vector<1x1x8x128xf32> to vector<8x128xf32>
    %c0_1082 = arith.constant 0 : index
    %c0_1083 = arith.constant 0 : index
    %c0_1084 = arith.constant 0 : index
    %c0_1085 = arith.constant 0 : index
    %1909 = vector.load %arg4[%c0_1082, %c0_1083, %c0_1084, %c0_1085] : memref<3x3x8x128xf32, #tpu.memory_space<vmem>>, vector<1x1x8x128xf32>
    %1910 = vector.shape_cast %1909 : vector<1x1x8x128xf32> to vector<8x128xf32>
    %c0_1086 = arith.constant 0 : index
    %c0_1087 = arith.constant 0 : index
    %c0_1088 = arith.constant 0 : index
    %c0_1089 = arith.constant 0 : index
    %1911 = vector.load %arg5[%c0_1086, %c0_1087, %c0_1088, %c0_1089] : memref<3x3x8x128xf32, #tpu.memory_space<vmem>>, vector<1x1x8x128xf32>
    %1912 = vector.shape_cast %1911 : vector<1x1x8x128xf32> to vector<8x128xf32>
    %1913 = arith.mulf %1910, %1890 : vector<8x128xf32>
    %1914 = arith.mulf %1912, %1892 : vector<8x128xf32>
    %1915 = arith.subf %1913, %1914 : vector<8x128xf32>
    %1916 = arith.mulf %1910, %1892 : vector<8x128xf32>
    %1917 = arith.mulf %1912, %1890 : vector<8x128xf32>
    %1918 = arith.addf %1916, %1917 : vector<8x128xf32>
    %1919 = arith.mulf %1910, %1894 : vector<8x128xf32>
    %1920 = arith.mulf %1912, %1896 : vector<8x128xf32>
    %1921 = arith.subf %1919, %1920 : vector<8x128xf32>
    %1922 = arith.mulf %1910, %1896 : vector<8x128xf32>
    %1923 = arith.mulf %1912, %1894 : vector<8x128xf32>
    %1924 = arith.addf %1922, %1923 : vector<8x128xf32>
    %1925 = arith.mulf %1910, %1898 : vector<8x128xf32>
    %1926 = arith.mulf %1912, %1900 : vector<8x128xf32>
    %1927 = arith.subf %1925, %1926 : vector<8x128xf32>
    %1928 = arith.mulf %1910, %1900 : vector<8x128xf32>
    %1929 = arith.mulf %1912, %1898 : vector<8x128xf32>
    %1930 = arith.addf %1928, %1929 : vector<8x128xf32>
    %1931 = arith.mulf %1910, %1902 : vector<8x128xf32>
    %1932 = arith.mulf %1912, %1904 : vector<8x128xf32>
    %1933 = arith.subf %1931, %1932 : vector<8x128xf32>
    %1934 = arith.mulf %1910, %1904 : vector<8x128xf32>
    %1935 = arith.mulf %1912, %1902 : vector<8x128xf32>
    %1936 = arith.addf %1934, %1935 : vector<8x128xf32>
    %1937 = arith.mulf %1910, %1906 : vector<8x128xf32>
    %1938 = arith.mulf %1912, %1908 : vector<8x128xf32>
    %1939 = arith.subf %1937, %1938 : vector<8x128xf32>
    %1940 = arith.mulf %1910, %1908 : vector<8x128xf32>
    %1941 = arith.mulf %1912, %1906 : vector<8x128xf32>
    %1942 = arith.addf %1940, %1941 : vector<8x128xf32>
    %c1_1090 = arith.constant 1 : index
    %c0_1091 = arith.constant 0 : index
    %c0_1092 = arith.constant 0 : index
    %c0_1093 = arith.constant 0 : index
    %1943 = vector.load %arg4[%c1_1090, %c0_1091, %c0_1092, %c0_1093] : memref<3x3x8x128xf32, #tpu.memory_space<vmem>>, vector<1x1x8x128xf32>
    %1944 = vector.shape_cast %1943 : vector<1x1x8x128xf32> to vector<8x128xf32>
    %c1_1094 = arith.constant 1 : index
    %c0_1095 = arith.constant 0 : index
    %c0_1096 = arith.constant 0 : index
    %c0_1097 = arith.constant 0 : index
    %1945 = vector.load %arg5[%c1_1094, %c0_1095, %c0_1096, %c0_1097] : memref<3x3x8x128xf32, #tpu.memory_space<vmem>>, vector<1x1x8x128xf32>
    %1946 = vector.shape_cast %1945 : vector<1x1x8x128xf32> to vector<8x128xf32>
    %1947 = arith.mulf %1944, %1890 : vector<8x128xf32>
    %1948 = arith.mulf %1946, %1892 : vector<8x128xf32>
    %1949 = arith.subf %1947, %1948 : vector<8x128xf32>
    %1950 = arith.mulf %1944, %1892 : vector<8x128xf32>
    %1951 = arith.mulf %1946, %1890 : vector<8x128xf32>
    %1952 = arith.addf %1950, %1951 : vector<8x128xf32>
    %1953 = arith.addf %1921, %1949 : vector<8x128xf32>
    %1954 = arith.addf %1924, %1952 : vector<8x128xf32>
    %1955 = arith.mulf %1944, %1894 : vector<8x128xf32>
    %1956 = arith.mulf %1946, %1896 : vector<8x128xf32>
    %1957 = arith.subf %1955, %1956 : vector<8x128xf32>
    %1958 = arith.mulf %1944, %1896 : vector<8x128xf32>
    %1959 = arith.mulf %1946, %1894 : vector<8x128xf32>
    %1960 = arith.addf %1958, %1959 : vector<8x128xf32>
    %1961 = arith.addf %1927, %1957 : vector<8x128xf32>
    %1962 = arith.addf %1930, %1960 : vector<8x128xf32>
    %1963 = arith.mulf %1944, %1898 : vector<8x128xf32>
    %1964 = arith.mulf %1946, %1900 : vector<8x128xf32>
    %1965 = arith.subf %1963, %1964 : vector<8x128xf32>
    %1966 = arith.mulf %1944, %1900 : vector<8x128xf32>
    %1967 = arith.mulf %1946, %1898 : vector<8x128xf32>
    %1968 = arith.addf %1966, %1967 : vector<8x128xf32>
    %1969 = arith.addf %1933, %1965 : vector<8x128xf32>
    %1970 = arith.addf %1936, %1968 : vector<8x128xf32>
    %1971 = arith.mulf %1944, %1902 : vector<8x128xf32>
    %1972 = arith.mulf %1946, %1904 : vector<8x128xf32>
    %1973 = arith.subf %1971, %1972 : vector<8x128xf32>
    %1974 = arith.mulf %1944, %1904 : vector<8x128xf32>
    %1975 = arith.mulf %1946, %1902 : vector<8x128xf32>
    %1976 = arith.addf %1974, %1975 : vector<8x128xf32>
    %1977 = arith.addf %1939, %1973 : vector<8x128xf32>
    %1978 = arith.addf %1942, %1976 : vector<8x128xf32>
    %1979 = arith.mulf %1944, %1906 : vector<8x128xf32>
    %1980 = arith.mulf %1946, %1908 : vector<8x128xf32>
    %1981 = arith.subf %1979, %1980 : vector<8x128xf32>
    %1982 = arith.mulf %1944, %1908 : vector<8x128xf32>
    %1983 = arith.mulf %1946, %1906 : vector<8x128xf32>
    %1984 = arith.addf %1982, %1983 : vector<8x128xf32>
    %c2_1098 = arith.constant 2 : index
    %c0_1099 = arith.constant 0 : index
    %c0_1100 = arith.constant 0 : index
    %c0_1101 = arith.constant 0 : index
    %1985 = vector.load %arg4[%c2_1098, %c0_1099, %c0_1100, %c0_1101] : memref<3x3x8x128xf32, #tpu.memory_space<vmem>>, vector<1x1x8x128xf32>
    %1986 = vector.shape_cast %1985 : vector<1x1x8x128xf32> to vector<8x128xf32>
    %c2_1102 = arith.constant 2 : index
    %c0_1103 = arith.constant 0 : index
    %c0_1104 = arith.constant 0 : index
    %c0_1105 = arith.constant 0 : index
    %1987 = vector.load %arg5[%c2_1102, %c0_1103, %c0_1104, %c0_1105] : memref<3x3x8x128xf32, #tpu.memory_space<vmem>>, vector<1x1x8x128xf32>
    %1988 = vector.shape_cast %1987 : vector<1x1x8x128xf32> to vector<8x128xf32>
    %1989 = arith.mulf %1986, %1890 : vector<8x128xf32>
    %1990 = arith.mulf %1988, %1892 : vector<8x128xf32>
    %1991 = arith.subf %1989, %1990 : vector<8x128xf32>
    %1992 = arith.mulf %1986, %1892 : vector<8x128xf32>
    %1993 = arith.mulf %1988, %1890 : vector<8x128xf32>
    %1994 = arith.addf %1992, %1993 : vector<8x128xf32>
    %1995 = arith.addf %1961, %1991 : vector<8x128xf32>
    %1996 = arith.addf %1962, %1994 : vector<8x128xf32>
    %1997 = arith.mulf %1986, %1894 : vector<8x128xf32>
    %1998 = arith.mulf %1988, %1896 : vector<8x128xf32>
    %1999 = arith.subf %1997, %1998 : vector<8x128xf32>
    %2000 = arith.mulf %1986, %1896 : vector<8x128xf32>
    %2001 = arith.mulf %1988, %1894 : vector<8x128xf32>
    %2002 = arith.addf %2000, %2001 : vector<8x128xf32>
    %2003 = arith.addf %1969, %1999 : vector<8x128xf32>
    %2004 = arith.addf %1970, %2002 : vector<8x128xf32>
    %2005 = arith.mulf %1986, %1898 : vector<8x128xf32>
    %2006 = arith.mulf %1988, %1900 : vector<8x128xf32>
    %2007 = arith.subf %2005, %2006 : vector<8x128xf32>
    %2008 = arith.mulf %1986, %1900 : vector<8x128xf32>
    %2009 = arith.mulf %1988, %1898 : vector<8x128xf32>
    %2010 = arith.addf %2008, %2009 : vector<8x128xf32>
    %2011 = arith.addf %1977, %2007 : vector<8x128xf32>
    %2012 = arith.addf %1978, %2010 : vector<8x128xf32>
    %2013 = arith.mulf %1986, %1902 : vector<8x128xf32>
    %2014 = arith.mulf %1988, %1904 : vector<8x128xf32>
    %2015 = arith.subf %2013, %2014 : vector<8x128xf32>
    %2016 = arith.mulf %1986, %1904 : vector<8x128xf32>
    %2017 = arith.mulf %1988, %1902 : vector<8x128xf32>
    %2018 = arith.addf %2016, %2017 : vector<8x128xf32>
    %2019 = arith.addf %1981, %2015 : vector<8x128xf32>
    %2020 = arith.addf %1984, %2018 : vector<8x128xf32>
    %2021 = arith.mulf %1986, %1906 : vector<8x128xf32>
    %2022 = arith.mulf %1988, %1908 : vector<8x128xf32>
    %2023 = arith.subf %2021, %2022 : vector<8x128xf32>
    %2024 = arith.mulf %1986, %1908 : vector<8x128xf32>
    %2025 = arith.mulf %1988, %1906 : vector<8x128xf32>
    %2026 = arith.addf %2024, %2025 : vector<8x128xf32>
    %c0_1106 = arith.constant 0 : index
    %c2_1107 = arith.constant 2 : index
    %c0_1108 = arith.constant 0 : index
    %c0_1109 = arith.constant 0 : index
    %2027 = vector.load %arg6[%c0_1106, %c2_1107, %c0_1108, %c0_1109] : memref<5x5x8x128xf32, #tpu.memory_space<vmem>>, vector<1x1x8x128xf32>
    %2028 = vector.shape_cast %2027 : vector<1x1x8x128xf32> to vector<8x128xf32>
    %c0_1110 = arith.constant 0 : index
    %c2_1111 = arith.constant 2 : index
    %c0_1112 = arith.constant 0 : index
    %c0_1113 = arith.constant 0 : index
    %2029 = vector.load %arg7[%c0_1110, %c2_1111, %c0_1112, %c0_1113] : memref<5x5x8x128xf32, #tpu.memory_space<vmem>>, vector<1x1x8x128xf32>
    %2030 = vector.shape_cast %2029 : vector<1x1x8x128xf32> to vector<8x128xf32>
    %c1_1114 = arith.constant 1 : index
    %c2_1115 = arith.constant 2 : index
    %c0_1116 = arith.constant 0 : index
    %c0_1117 = arith.constant 0 : index
    %2031 = vector.load %arg6[%c1_1114, %c2_1115, %c0_1116, %c0_1117] : memref<5x5x8x128xf32, #tpu.memory_space<vmem>>, vector<1x1x8x128xf32>
    %2032 = vector.shape_cast %2031 : vector<1x1x8x128xf32> to vector<8x128xf32>
    %c1_1118 = arith.constant 1 : index
    %c2_1119 = arith.constant 2 : index
    %c0_1120 = arith.constant 0 : index
    %c0_1121 = arith.constant 0 : index
    %2033 = vector.load %arg7[%c1_1118, %c2_1119, %c0_1120, %c0_1121] : memref<5x5x8x128xf32, #tpu.memory_space<vmem>>, vector<1x1x8x128xf32>
    %2034 = vector.shape_cast %2033 : vector<1x1x8x128xf32> to vector<8x128xf32>
    %c2_1122 = arith.constant 2 : index
    %c2_1123 = arith.constant 2 : index
    %c0_1124 = arith.constant 0 : index
    %c0_1125 = arith.constant 0 : index
    %2035 = vector.load %arg6[%c2_1122, %c2_1123, %c0_1124, %c0_1125] : memref<5x5x8x128xf32, #tpu.memory_space<vmem>>, vector<1x1x8x128xf32>
    %2036 = vector.shape_cast %2035 : vector<1x1x8x128xf32> to vector<8x128xf32>
    %c2_1126 = arith.constant 2 : index
    %c2_1127 = arith.constant 2 : index
    %c0_1128 = arith.constant 0 : index
    %c0_1129 = arith.constant 0 : index
    %2037 = vector.load %arg7[%c2_1126, %c2_1127, %c0_1128, %c0_1129] : memref<5x5x8x128xf32, #tpu.memory_space<vmem>>, vector<1x1x8x128xf32>
    %2038 = vector.shape_cast %2037 : vector<1x1x8x128xf32> to vector<8x128xf32>
    %c3_1130 = arith.constant 3 : index
    %c2_1131 = arith.constant 2 : index
    %c0_1132 = arith.constant 0 : index
    %c0_1133 = arith.constant 0 : index
    %2039 = vector.load %arg6[%c3_1130, %c2_1131, %c0_1132, %c0_1133] : memref<5x5x8x128xf32, #tpu.memory_space<vmem>>, vector<1x1x8x128xf32>
    %2040 = vector.shape_cast %2039 : vector<1x1x8x128xf32> to vector<8x128xf32>
    %c3_1134 = arith.constant 3 : index
    %c2_1135 = arith.constant 2 : index
    %c0_1136 = arith.constant 0 : index
    %c0_1137 = arith.constant 0 : index
    %2041 = vector.load %arg7[%c3_1134, %c2_1135, %c0_1136, %c0_1137] : memref<5x5x8x128xf32, #tpu.memory_space<vmem>>, vector<1x1x8x128xf32>
    %2042 = vector.shape_cast %2041 : vector<1x1x8x128xf32> to vector<8x128xf32>
    %c4_1138 = arith.constant 4 : index
    %c2_1139 = arith.constant 2 : index
    %c0_1140 = arith.constant 0 : index
    %c0_1141 = arith.constant 0 : index
    %2043 = vector.load %arg6[%c4_1138, %c2_1139, %c0_1140, %c0_1141] : memref<5x5x8x128xf32, #tpu.memory_space<vmem>>, vector<1x1x8x128xf32>
    %2044 = vector.shape_cast %2043 : vector<1x1x8x128xf32> to vector<8x128xf32>
    %c4_1142 = arith.constant 4 : index
    %c2_1143 = arith.constant 2 : index
    %c0_1144 = arith.constant 0 : index
    %c0_1145 = arith.constant 0 : index
    %2045 = vector.load %arg7[%c4_1142, %c2_1143, %c0_1144, %c0_1145] : memref<5x5x8x128xf32, #tpu.memory_space<vmem>>, vector<1x1x8x128xf32>
    %2046 = vector.shape_cast %2045 : vector<1x1x8x128xf32> to vector<8x128xf32>
    %c0_1146 = arith.constant 0 : index
    %c1_1147 = arith.constant 1 : index
    %c0_1148 = arith.constant 0 : index
    %c0_1149 = arith.constant 0 : index
    %2047 = vector.load %arg4[%c0_1146, %c1_1147, %c0_1148, %c0_1149] : memref<3x3x8x128xf32, #tpu.memory_space<vmem>>, vector<1x1x8x128xf32>
    %2048 = vector.shape_cast %2047 : vector<1x1x8x128xf32> to vector<8x128xf32>
    %c0_1150 = arith.constant 0 : index
    %c1_1151 = arith.constant 1 : index
    %c0_1152 = arith.constant 0 : index
    %c0_1153 = arith.constant 0 : index
    %2049 = vector.load %arg5[%c0_1150, %c1_1151, %c0_1152, %c0_1153] : memref<3x3x8x128xf32, #tpu.memory_space<vmem>>, vector<1x1x8x128xf32>
    %2050 = vector.shape_cast %2049 : vector<1x1x8x128xf32> to vector<8x128xf32>
    %2051 = arith.mulf %2048, %2028 : vector<8x128xf32>
    %2052 = arith.mulf %2050, %2030 : vector<8x128xf32>
    %2053 = arith.subf %2051, %2052 : vector<8x128xf32>
    %2054 = arith.mulf %2048, %2030 : vector<8x128xf32>
    %2055 = arith.mulf %2050, %2028 : vector<8x128xf32>
    %2056 = arith.addf %2054, %2055 : vector<8x128xf32>
    %2057 = arith.addf %1915, %2053 : vector<8x128xf32>
    %2058 = arith.addf %1918, %2056 : vector<8x128xf32>
    %2059 = arith.mulf %2048, %2032 : vector<8x128xf32>
    %2060 = arith.mulf %2050, %2034 : vector<8x128xf32>
    %2061 = arith.subf %2059, %2060 : vector<8x128xf32>
    %2062 = arith.mulf %2048, %2034 : vector<8x128xf32>
    %2063 = arith.mulf %2050, %2032 : vector<8x128xf32>
    %2064 = arith.addf %2062, %2063 : vector<8x128xf32>
    %2065 = arith.addf %1953, %2061 : vector<8x128xf32>
    %2066 = arith.addf %1954, %2064 : vector<8x128xf32>
    %2067 = arith.mulf %2048, %2036 : vector<8x128xf32>
    %2068 = arith.mulf %2050, %2038 : vector<8x128xf32>
    %2069 = arith.subf %2067, %2068 : vector<8x128xf32>
    %2070 = arith.mulf %2048, %2038 : vector<8x128xf32>
    %2071 = arith.mulf %2050, %2036 : vector<8x128xf32>
    %2072 = arith.addf %2070, %2071 : vector<8x128xf32>
    %2073 = arith.addf %1995, %2069 : vector<8x128xf32>
    %2074 = arith.addf %1996, %2072 : vector<8x128xf32>
    %2075 = arith.mulf %2048, %2040 : vector<8x128xf32>
    %2076 = arith.mulf %2050, %2042 : vector<8x128xf32>
    %2077 = arith.subf %2075, %2076 : vector<8x128xf32>
    %2078 = arith.mulf %2048, %2042 : vector<8x128xf32>
    %2079 = arith.mulf %2050, %2040 : vector<8x128xf32>
    %2080 = arith.addf %2078, %2079 : vector<8x128xf32>
    %2081 = arith.addf %2003, %2077 : vector<8x128xf32>
    %2082 = arith.addf %2004, %2080 : vector<8x128xf32>
    %2083 = arith.mulf %2048, %2044 : vector<8x128xf32>
    %2084 = arith.mulf %2050, %2046 : vector<8x128xf32>
    %2085 = arith.subf %2083, %2084 : vector<8x128xf32>
    %2086 = arith.mulf %2048, %2046 : vector<8x128xf32>
    %2087 = arith.mulf %2050, %2044 : vector<8x128xf32>
    %2088 = arith.addf %2086, %2087 : vector<8x128xf32>
    %2089 = arith.addf %2011, %2085 : vector<8x128xf32>
    %2090 = arith.addf %2012, %2088 : vector<8x128xf32>
    %c1_1154 = arith.constant 1 : index
    %c1_1155 = arith.constant 1 : index
    %c0_1156 = arith.constant 0 : index
    %c0_1157 = arith.constant 0 : index
    %2091 = vector.load %arg4[%c1_1154, %c1_1155, %c0_1156, %c0_1157] : memref<3x3x8x128xf32, #tpu.memory_space<vmem>>, vector<1x1x8x128xf32>
    %2092 = vector.shape_cast %2091 : vector<1x1x8x128xf32> to vector<8x128xf32>
    %c1_1158 = arith.constant 1 : index
    %c1_1159 = arith.constant 1 : index
    %c0_1160 = arith.constant 0 : index
    %c0_1161 = arith.constant 0 : index
    %2093 = vector.load %arg5[%c1_1158, %c1_1159, %c0_1160, %c0_1161] : memref<3x3x8x128xf32, #tpu.memory_space<vmem>>, vector<1x1x8x128xf32>
    %2094 = vector.shape_cast %2093 : vector<1x1x8x128xf32> to vector<8x128xf32>
    %2095 = arith.mulf %2092, %2028 : vector<8x128xf32>
    %2096 = arith.mulf %2094, %2030 : vector<8x128xf32>
    %2097 = arith.subf %2095, %2096 : vector<8x128xf32>
    %2098 = arith.mulf %2092, %2030 : vector<8x128xf32>
    %2099 = arith.mulf %2094, %2028 : vector<8x128xf32>
    %2100 = arith.addf %2098, %2099 : vector<8x128xf32>
    %2101 = arith.addf %2065, %2097 : vector<8x128xf32>
    %2102 = arith.addf %2066, %2100 : vector<8x128xf32>
    %2103 = arith.mulf %2092, %2032 : vector<8x128xf32>
    %2104 = arith.mulf %2094, %2034 : vector<8x128xf32>
    %2105 = arith.subf %2103, %2104 : vector<8x128xf32>
    %2106 = arith.mulf %2092, %2034 : vector<8x128xf32>
    %2107 = arith.mulf %2094, %2032 : vector<8x128xf32>
    %2108 = arith.addf %2106, %2107 : vector<8x128xf32>
    %2109 = arith.addf %2073, %2105 : vector<8x128xf32>
    %2110 = arith.addf %2074, %2108 : vector<8x128xf32>
    %2111 = arith.mulf %2092, %2036 : vector<8x128xf32>
    %2112 = arith.mulf %2094, %2038 : vector<8x128xf32>
    %2113 = arith.subf %2111, %2112 : vector<8x128xf32>
    %2114 = arith.mulf %2092, %2038 : vector<8x128xf32>
    %2115 = arith.mulf %2094, %2036 : vector<8x128xf32>
    %2116 = arith.addf %2114, %2115 : vector<8x128xf32>
    %2117 = arith.addf %2081, %2113 : vector<8x128xf32>
    %2118 = arith.addf %2082, %2116 : vector<8x128xf32>
    %2119 = arith.mulf %2092, %2040 : vector<8x128xf32>
    %2120 = arith.mulf %2094, %2042 : vector<8x128xf32>
    %2121 = arith.subf %2119, %2120 : vector<8x128xf32>
    %2122 = arith.mulf %2092, %2042 : vector<8x128xf32>
    %2123 = arith.mulf %2094, %2040 : vector<8x128xf32>
    %2124 = arith.addf %2122, %2123 : vector<8x128xf32>
    %2125 = arith.addf %2089, %2121 : vector<8x128xf32>
    %2126 = arith.addf %2090, %2124 : vector<8x128xf32>
    %2127 = arith.mulf %2092, %2044 : vector<8x128xf32>
    %2128 = arith.mulf %2094, %2046 : vector<8x128xf32>
    %2129 = arith.subf %2127, %2128 : vector<8x128xf32>
    %2130 = arith.mulf %2092, %2046 : vector<8x128xf32>
    %2131 = arith.mulf %2094, %2044 : vector<8x128xf32>
    %2132 = arith.addf %2130, %2131 : vector<8x128xf32>
    %2133 = arith.addf %2019, %2129 : vector<8x128xf32>
    %2134 = arith.addf %2020, %2132 : vector<8x128xf32>
    %c2_1162 = arith.constant 2 : index
    %c1_1163 = arith.constant 1 : index
    %c0_1164 = arith.constant 0 : index
    %c0_1165 = arith.constant 0 : index
    %2135 = vector.load %arg4[%c2_1162, %c1_1163, %c0_1164, %c0_1165] : memref<3x3x8x128xf32, #tpu.memory_space<vmem>>, vector<1x1x8x128xf32>
    %2136 = vector.shape_cast %2135 : vector<1x1x8x128xf32> to vector<8x128xf32>
    %c2_1166 = arith.constant 2 : index
    %c1_1167 = arith.constant 1 : index
    %c0_1168 = arith.constant 0 : index
    %c0_1169 = arith.constant 0 : index
    %2137 = vector.load %arg5[%c2_1166, %c1_1167, %c0_1168, %c0_1169] : memref<3x3x8x128xf32, #tpu.memory_space<vmem>>, vector<1x1x8x128xf32>
    %2138 = vector.shape_cast %2137 : vector<1x1x8x128xf32> to vector<8x128xf32>
    %2139 = arith.mulf %2136, %2028 : vector<8x128xf32>
    %2140 = arith.mulf %2138, %2030 : vector<8x128xf32>
    %2141 = arith.subf %2139, %2140 : vector<8x128xf32>
    %2142 = arith.mulf %2136, %2030 : vector<8x128xf32>
    %2143 = arith.mulf %2138, %2028 : vector<8x128xf32>
    %2144 = arith.addf %2142, %2143 : vector<8x128xf32>
    %2145 = arith.addf %2109, %2141 : vector<8x128xf32>
    %2146 = arith.addf %2110, %2144 : vector<8x128xf32>
    %2147 = arith.mulf %2136, %2032 : vector<8x128xf32>
    %2148 = arith.mulf %2138, %2034 : vector<8x128xf32>
    %2149 = arith.subf %2147, %2148 : vector<8x128xf32>
    %2150 = arith.mulf %2136, %2034 : vector<8x128xf32>
    %2151 = arith.mulf %2138, %2032 : vector<8x128xf32>
    %2152 = arith.addf %2150, %2151 : vector<8x128xf32>
    %2153 = arith.addf %2117, %2149 : vector<8x128xf32>
    %2154 = arith.addf %2118, %2152 : vector<8x128xf32>
    %2155 = arith.mulf %2136, %2036 : vector<8x128xf32>
    %2156 = arith.mulf %2138, %2038 : vector<8x128xf32>
    %2157 = arith.subf %2155, %2156 : vector<8x128xf32>
    %2158 = arith.mulf %2136, %2038 : vector<8x128xf32>
    %2159 = arith.mulf %2138, %2036 : vector<8x128xf32>
    %2160 = arith.addf %2158, %2159 : vector<8x128xf32>
    %2161 = arith.addf %2125, %2157 : vector<8x128xf32>
    %2162 = arith.addf %2126, %2160 : vector<8x128xf32>
    %2163 = arith.mulf %2136, %2040 : vector<8x128xf32>
    %2164 = arith.mulf %2138, %2042 : vector<8x128xf32>
    %2165 = arith.subf %2163, %2164 : vector<8x128xf32>
    %2166 = arith.mulf %2136, %2042 : vector<8x128xf32>
    %2167 = arith.mulf %2138, %2040 : vector<8x128xf32>
    %2168 = arith.addf %2166, %2167 : vector<8x128xf32>
    %2169 = arith.addf %2133, %2165 : vector<8x128xf32>
    %2170 = arith.addf %2134, %2168 : vector<8x128xf32>
    %2171 = arith.mulf %2136, %2044 : vector<8x128xf32>
    %2172 = arith.mulf %2138, %2046 : vector<8x128xf32>
    %2173 = arith.subf %2171, %2172 : vector<8x128xf32>
    %2174 = arith.mulf %2136, %2046 : vector<8x128xf32>
    %2175 = arith.mulf %2138, %2044 : vector<8x128xf32>
    %2176 = arith.addf %2174, %2175 : vector<8x128xf32>
    %2177 = arith.addf %2023, %2173 : vector<8x128xf32>
    %2178 = arith.addf %2026, %2176 : vector<8x128xf32>
    %c0_1170 = arith.constant 0 : index
    %c1_1171 = arith.constant 1 : index
    %c0_1172 = arith.constant 0 : index
    %c0_1173 = arith.constant 0 : index
    %2179 = vector.load %arg6[%c0_1170, %c1_1171, %c0_1172, %c0_1173] : memref<5x5x8x128xf32, #tpu.memory_space<vmem>>, vector<1x1x8x128xf32>
    %2180 = vector.shape_cast %2179 : vector<1x1x8x128xf32> to vector<8x128xf32>
    %c0_1174 = arith.constant 0 : index
    %c1_1175 = arith.constant 1 : index
    %c0_1176 = arith.constant 0 : index
    %c0_1177 = arith.constant 0 : index
    %2181 = vector.load %arg7[%c0_1174, %c1_1175, %c0_1176, %c0_1177] : memref<5x5x8x128xf32, #tpu.memory_space<vmem>>, vector<1x1x8x128xf32>
    %2182 = vector.shape_cast %2181 : vector<1x1x8x128xf32> to vector<8x128xf32>
    %c1_1178 = arith.constant 1 : index
    %c1_1179 = arith.constant 1 : index
    %c0_1180 = arith.constant 0 : index
    %c0_1181 = arith.constant 0 : index
    %2183 = vector.load %arg6[%c1_1178, %c1_1179, %c0_1180, %c0_1181] : memref<5x5x8x128xf32, #tpu.memory_space<vmem>>, vector<1x1x8x128xf32>
    %2184 = vector.shape_cast %2183 : vector<1x1x8x128xf32> to vector<8x128xf32>
    %c1_1182 = arith.constant 1 : index
    %c1_1183 = arith.constant 1 : index
    %c0_1184 = arith.constant 0 : index
    %c0_1185 = arith.constant 0 : index
    %2185 = vector.load %arg7[%c1_1182, %c1_1183, %c0_1184, %c0_1185] : memref<5x5x8x128xf32, #tpu.memory_space<vmem>>, vector<1x1x8x128xf32>
    %2186 = vector.shape_cast %2185 : vector<1x1x8x128xf32> to vector<8x128xf32>
    %c2_1186 = arith.constant 2 : index
    %c1_1187 = arith.constant 1 : index
    %c0_1188 = arith.constant 0 : index
    %c0_1189 = arith.constant 0 : index
    %2187 = vector.load %arg6[%c2_1186, %c1_1187, %c0_1188, %c0_1189] : memref<5x5x8x128xf32, #tpu.memory_space<vmem>>, vector<1x1x8x128xf32>
    %2188 = vector.shape_cast %2187 : vector<1x1x8x128xf32> to vector<8x128xf32>
    %c2_1190 = arith.constant 2 : index
    %c1_1191 = arith.constant 1 : index
    %c0_1192 = arith.constant 0 : index
    %c0_1193 = arith.constant 0 : index
    %2189 = vector.load %arg7[%c2_1190, %c1_1191, %c0_1192, %c0_1193] : memref<5x5x8x128xf32, #tpu.memory_space<vmem>>, vector<1x1x8x128xf32>
    %2190 = vector.shape_cast %2189 : vector<1x1x8x128xf32> to vector<8x128xf32>
    %c3_1194 = arith.constant 3 : index
    %c1_1195 = arith.constant 1 : index
    %c0_1196 = arith.constant 0 : index
    %c0_1197 = arith.constant 0 : index
    %2191 = vector.load %arg6[%c3_1194, %c1_1195, %c0_1196, %c0_1197] : memref<5x5x8x128xf32, #tpu.memory_space<vmem>>, vector<1x1x8x128xf32>
    %2192 = vector.shape_cast %2191 : vector<1x1x8x128xf32> to vector<8x128xf32>
    %c3_1198 = arith.constant 3 : index
    %c1_1199 = arith.constant 1 : index
    %c0_1200 = arith.constant 0 : index
    %c0_1201 = arith.constant 0 : index
    %2193 = vector.load %arg7[%c3_1198, %c1_1199, %c0_1200, %c0_1201] : memref<5x5x8x128xf32, #tpu.memory_space<vmem>>, vector<1x1x8x128xf32>
    %2194 = vector.shape_cast %2193 : vector<1x1x8x128xf32> to vector<8x128xf32>
    %c4_1202 = arith.constant 4 : index
    %c1_1203 = arith.constant 1 : index
    %c0_1204 = arith.constant 0 : index
    %c0_1205 = arith.constant 0 : index
    %2195 = vector.load %arg6[%c4_1202, %c1_1203, %c0_1204, %c0_1205] : memref<5x5x8x128xf32, #tpu.memory_space<vmem>>, vector<1x1x8x128xf32>
    %2196 = vector.shape_cast %2195 : vector<1x1x8x128xf32> to vector<8x128xf32>
    %c4_1206 = arith.constant 4 : index
    %c1_1207 = arith.constant 1 : index
    %c0_1208 = arith.constant 0 : index
    %c0_1209 = arith.constant 0 : index
    %2197 = vector.load %arg7[%c4_1206, %c1_1207, %c0_1208, %c0_1209] : memref<5x5x8x128xf32, #tpu.memory_space<vmem>>, vector<1x1x8x128xf32>
    %2198 = vector.shape_cast %2197 : vector<1x1x8x128xf32> to vector<8x128xf32>
    %c0_1210 = arith.constant 0 : index
    %c2_1211 = arith.constant 2 : index
    %c0_1212 = arith.constant 0 : index
    %c0_1213 = arith.constant 0 : index
    %2199 = vector.load %arg4[%c0_1210, %c2_1211, %c0_1212, %c0_1213] : memref<3x3x8x128xf32, #tpu.memory_space<vmem>>, vector<1x1x8x128xf32>
    %2200 = vector.shape_cast %2199 : vector<1x1x8x128xf32> to vector<8x128xf32>
    %c0_1214 = arith.constant 0 : index
    %c2_1215 = arith.constant 2 : index
    %c0_1216 = arith.constant 0 : index
    %c0_1217 = arith.constant 0 : index
    %2201 = vector.load %arg5[%c0_1214, %c2_1215, %c0_1216, %c0_1217] : memref<3x3x8x128xf32, #tpu.memory_space<vmem>>, vector<1x1x8x128xf32>
    %2202 = vector.shape_cast %2201 : vector<1x1x8x128xf32> to vector<8x128xf32>
    %2203 = arith.mulf %2200, %2180 : vector<8x128xf32>
    %2204 = arith.mulf %2202, %2182 : vector<8x128xf32>
    %2205 = arith.subf %2203, %2204 : vector<8x128xf32>
    %2206 = arith.mulf %2200, %2182 : vector<8x128xf32>
    %2207 = arith.mulf %2202, %2180 : vector<8x128xf32>
    %2208 = arith.addf %2206, %2207 : vector<8x128xf32>
    %2209 = arith.addf %2057, %2205 : vector<8x128xf32>
    %2210 = arith.addf %2058, %2208 : vector<8x128xf32>
    %2211 = arith.mulf %2200, %2184 : vector<8x128xf32>
    %2212 = arith.mulf %2202, %2186 : vector<8x128xf32>
    %2213 = arith.subf %2211, %2212 : vector<8x128xf32>
    %2214 = arith.mulf %2200, %2186 : vector<8x128xf32>
    %2215 = arith.mulf %2202, %2184 : vector<8x128xf32>
    %2216 = arith.addf %2214, %2215 : vector<8x128xf32>
    %2217 = arith.addf %2101, %2213 : vector<8x128xf32>
    %2218 = arith.addf %2102, %2216 : vector<8x128xf32>
    %2219 = arith.mulf %2200, %2188 : vector<8x128xf32>
    %2220 = arith.mulf %2202, %2190 : vector<8x128xf32>
    %2221 = arith.subf %2219, %2220 : vector<8x128xf32>
    %2222 = arith.mulf %2200, %2190 : vector<8x128xf32>
    %2223 = arith.mulf %2202, %2188 : vector<8x128xf32>
    %2224 = arith.addf %2222, %2223 : vector<8x128xf32>
    %2225 = arith.addf %2145, %2221 : vector<8x128xf32>
    %2226 = arith.addf %2146, %2224 : vector<8x128xf32>
    %2227 = arith.mulf %2200, %2192 : vector<8x128xf32>
    %2228 = arith.mulf %2202, %2194 : vector<8x128xf32>
    %2229 = arith.subf %2227, %2228 : vector<8x128xf32>
    %2230 = arith.mulf %2200, %2194 : vector<8x128xf32>
    %2231 = arith.mulf %2202, %2192 : vector<8x128xf32>
    %2232 = arith.addf %2230, %2231 : vector<8x128xf32>
    %2233 = arith.addf %2153, %2229 : vector<8x128xf32>
    %2234 = arith.addf %2154, %2232 : vector<8x128xf32>
    %2235 = arith.mulf %2200, %2196 : vector<8x128xf32>
    %2236 = arith.mulf %2202, %2198 : vector<8x128xf32>
    %2237 = arith.subf %2235, %2236 : vector<8x128xf32>
    %2238 = arith.mulf %2200, %2198 : vector<8x128xf32>
    %2239 = arith.mulf %2202, %2196 : vector<8x128xf32>
    %2240 = arith.addf %2238, %2239 : vector<8x128xf32>
    %2241 = arith.addf %2161, %2237 : vector<8x128xf32>
    %2242 = arith.addf %2162, %2240 : vector<8x128xf32>
    %c1_1218 = arith.constant 1 : index
    %c2_1219 = arith.constant 2 : index
    %c0_1220 = arith.constant 0 : index
    %c0_1221 = arith.constant 0 : index
    %2243 = vector.load %arg4[%c1_1218, %c2_1219, %c0_1220, %c0_1221] : memref<3x3x8x128xf32, #tpu.memory_space<vmem>>, vector<1x1x8x128xf32>
    %2244 = vector.shape_cast %2243 : vector<1x1x8x128xf32> to vector<8x128xf32>
    %c1_1222 = arith.constant 1 : index
    %c2_1223 = arith.constant 2 : index
    %c0_1224 = arith.constant 0 : index
    %c0_1225 = arith.constant 0 : index
    %2245 = vector.load %arg5[%c1_1222, %c2_1223, %c0_1224, %c0_1225] : memref<3x3x8x128xf32, #tpu.memory_space<vmem>>, vector<1x1x8x128xf32>
    %2246 = vector.shape_cast %2245 : vector<1x1x8x128xf32> to vector<8x128xf32>
    %2247 = arith.mulf %2244, %2180 : vector<8x128xf32>
    %2248 = arith.mulf %2246, %2182 : vector<8x128xf32>
    %2249 = arith.subf %2247, %2248 : vector<8x128xf32>
    %2250 = arith.mulf %2244, %2182 : vector<8x128xf32>
    %2251 = arith.mulf %2246, %2180 : vector<8x128xf32>
    %2252 = arith.addf %2250, %2251 : vector<8x128xf32>
    %2253 = arith.addf %2217, %2249 : vector<8x128xf32>
    %2254 = arith.addf %2218, %2252 : vector<8x128xf32>
    %2255 = arith.mulf %2244, %2184 : vector<8x128xf32>
    %2256 = arith.mulf %2246, %2186 : vector<8x128xf32>
    %2257 = arith.subf %2255, %2256 : vector<8x128xf32>
    %2258 = arith.mulf %2244, %2186 : vector<8x128xf32>
    %2259 = arith.mulf %2246, %2184 : vector<8x128xf32>
    %2260 = arith.addf %2258, %2259 : vector<8x128xf32>
    %2261 = arith.addf %2225, %2257 : vector<8x128xf32>
    %2262 = arith.addf %2226, %2260 : vector<8x128xf32>
    %2263 = arith.mulf %2244, %2188 : vector<8x128xf32>
    %2264 = arith.mulf %2246, %2190 : vector<8x128xf32>
    %2265 = arith.subf %2263, %2264 : vector<8x128xf32>
    %2266 = arith.mulf %2244, %2190 : vector<8x128xf32>
    %2267 = arith.mulf %2246, %2188 : vector<8x128xf32>
    %2268 = arith.addf %2266, %2267 : vector<8x128xf32>
    %2269 = arith.addf %2233, %2265 : vector<8x128xf32>
    %2270 = arith.addf %2234, %2268 : vector<8x128xf32>
    %2271 = arith.mulf %2244, %2192 : vector<8x128xf32>
    %2272 = arith.mulf %2246, %2194 : vector<8x128xf32>
    %2273 = arith.subf %2271, %2272 : vector<8x128xf32>
    %2274 = arith.mulf %2244, %2194 : vector<8x128xf32>
    %2275 = arith.mulf %2246, %2192 : vector<8x128xf32>
    %2276 = arith.addf %2274, %2275 : vector<8x128xf32>
    %2277 = arith.addf %2241, %2273 : vector<8x128xf32>
    %2278 = arith.addf %2242, %2276 : vector<8x128xf32>
    %2279 = arith.mulf %2244, %2196 : vector<8x128xf32>
    %2280 = arith.mulf %2246, %2198 : vector<8x128xf32>
    %2281 = arith.subf %2279, %2280 : vector<8x128xf32>
    %2282 = arith.mulf %2244, %2198 : vector<8x128xf32>
    %2283 = arith.mulf %2246, %2196 : vector<8x128xf32>
    %2284 = arith.addf %2282, %2283 : vector<8x128xf32>
    %2285 = arith.addf %2169, %2281 : vector<8x128xf32>
    %2286 = arith.addf %2170, %2284 : vector<8x128xf32>
    %c2_1226 = arith.constant 2 : index
    %c2_1227 = arith.constant 2 : index
    %c0_1228 = arith.constant 0 : index
    %c0_1229 = arith.constant 0 : index
    %2287 = vector.load %arg4[%c2_1226, %c2_1227, %c0_1228, %c0_1229] : memref<3x3x8x128xf32, #tpu.memory_space<vmem>>, vector<1x1x8x128xf32>
    %2288 = vector.shape_cast %2287 : vector<1x1x8x128xf32> to vector<8x128xf32>
    %c2_1230 = arith.constant 2 : index
    %c2_1231 = arith.constant 2 : index
    %c0_1232 = arith.constant 0 : index
    %c0_1233 = arith.constant 0 : index
    %2289 = vector.load %arg5[%c2_1230, %c2_1231, %c0_1232, %c0_1233] : memref<3x3x8x128xf32, #tpu.memory_space<vmem>>, vector<1x1x8x128xf32>
    %2290 = vector.shape_cast %2289 : vector<1x1x8x128xf32> to vector<8x128xf32>
    %2291 = arith.mulf %2288, %2180 : vector<8x128xf32>
    %2292 = arith.mulf %2290, %2182 : vector<8x128xf32>
    %2293 = arith.subf %2291, %2292 : vector<8x128xf32>
    %2294 = arith.mulf %2288, %2182 : vector<8x128xf32>
    %2295 = arith.mulf %2290, %2180 : vector<8x128xf32>
    %2296 = arith.addf %2294, %2295 : vector<8x128xf32>
    %2297 = arith.addf %2261, %2293 : vector<8x128xf32>
    %2298 = arith.addf %2262, %2296 : vector<8x128xf32>
    %2299 = arith.mulf %2288, %2184 : vector<8x128xf32>
    %2300 = arith.mulf %2290, %2186 : vector<8x128xf32>
    %2301 = arith.subf %2299, %2300 : vector<8x128xf32>
    %2302 = arith.mulf %2288, %2186 : vector<8x128xf32>
    %2303 = arith.mulf %2290, %2184 : vector<8x128xf32>
    %2304 = arith.addf %2302, %2303 : vector<8x128xf32>
    %2305 = arith.addf %2269, %2301 : vector<8x128xf32>
    %2306 = arith.addf %2270, %2304 : vector<8x128xf32>
    %2307 = arith.mulf %2288, %2188 : vector<8x128xf32>
    %2308 = arith.mulf %2290, %2190 : vector<8x128xf32>
    %2309 = arith.subf %2307, %2308 : vector<8x128xf32>
    %2310 = arith.mulf %2288, %2190 : vector<8x128xf32>
    %2311 = arith.mulf %2290, %2188 : vector<8x128xf32>
    %2312 = arith.addf %2310, %2311 : vector<8x128xf32>
    %2313 = arith.addf %2277, %2309 : vector<8x128xf32>
    %2314 = arith.addf %2278, %2312 : vector<8x128xf32>
    %2315 = arith.mulf %2288, %2192 : vector<8x128xf32>
    %2316 = arith.mulf %2290, %2194 : vector<8x128xf32>
    %2317 = arith.subf %2315, %2316 : vector<8x128xf32>
    %2318 = arith.mulf %2288, %2194 : vector<8x128xf32>
    %2319 = arith.mulf %2290, %2192 : vector<8x128xf32>
    %2320 = arith.addf %2318, %2319 : vector<8x128xf32>
    %2321 = arith.addf %2285, %2317 : vector<8x128xf32>
    %2322 = arith.addf %2286, %2320 : vector<8x128xf32>
    %2323 = arith.mulf %2288, %2196 : vector<8x128xf32>
    %2324 = arith.mulf %2290, %2198 : vector<8x128xf32>
    %2325 = arith.subf %2323, %2324 : vector<8x128xf32>
    %2326 = arith.mulf %2288, %2198 : vector<8x128xf32>
    %2327 = arith.mulf %2290, %2196 : vector<8x128xf32>
    %2328 = arith.addf %2326, %2327 : vector<8x128xf32>
    %2329 = arith.addf %2177, %2325 : vector<8x128xf32>
    %2330 = arith.addf %2178, %2328 : vector<8x128xf32>
    %cst_1234 = arith.constant -0.0461969636 : f32
    %2331 = vector.broadcast %cst_1234 : f32 to vector<8x128xf32>
    %2332 = arith.mulf %2209, %2331 : vector<8x128xf32>
    %cst_1235 = arith.constant -0.142986879 : f32
    %2333 = vector.broadcast %cst_1235 : f32 to vector<8x128xf32>
    %2334 = arith.mulf %2210, %2333 : vector<8x128xf32>
    %2335 = arith.addf %2332, %2334 : vector<8x128xf32>
    %cst_1236 = arith.constant 0.0359894745 : f32
    %2336 = vector.broadcast %cst_1236 : f32 to vector<8x128xf32>
    %2337 = arith.mulf %2253, %2336 : vector<8x128xf32>
    %2338 = arith.addf %2335, %2337 : vector<8x128xf32>
    %cst_1237 = arith.constant 0.155416951 : f32
    %2339 = vector.broadcast %cst_1237 : f32 to vector<8x128xf32>
    %2340 = arith.mulf %2254, %2339 : vector<8x128xf32>
    %2341 = arith.addf %2338, %2340 : vector<8x128xf32>
    %cst_1238 = arith.constant -0.2015692 : f32
    %2342 = vector.broadcast %cst_1238 : f32 to vector<8x128xf32>
    %2343 = arith.mulf %2297, %2342 : vector<8x128xf32>
    %2344 = arith.addf %2341, %2343 : vector<8x128xf32>
    %cst_1239 = arith.constant 0.214246228 : f32
    %2345 = vector.broadcast %cst_1239 : f32 to vector<8x128xf32>
    %2346 = arith.mulf %2298, %2345 : vector<8x128xf32>
    %2347 = arith.addf %2344, %2346 : vector<8x128xf32>
    %cst_1240 = arith.constant 0.19473803 : f32
    %2348 = vector.broadcast %cst_1240 : f32 to vector<8x128xf32>
    %2349 = arith.mulf %2305, %2348 : vector<8x128xf32>
    %2350 = arith.addf %2347, %2349 : vector<8x128xf32>
    %cst_1241 = arith.constant 0.0443833843 : f32
    %2351 = vector.broadcast %cst_1241 : f32 to vector<8x128xf32>
    %2352 = arith.mulf %2306, %2351 : vector<8x128xf32>
    %2353 = arith.addf %2350, %2352 : vector<8x128xf32>
    %cst_1242 = arith.constant 0.259278059 : f32
    %2354 = vector.broadcast %cst_1242 : f32 to vector<8x128xf32>
    %2355 = arith.mulf %2313, %2354 : vector<8x128xf32>
    %2356 = arith.addf %2353, %2355 : vector<8x128xf32>
    %cst_1243 = arith.constant -0.117665008 : f32
    %2357 = vector.broadcast %cst_1243 : f32 to vector<8x128xf32>
    %2358 = arith.mulf %2314, %2357 : vector<8x128xf32>
    %2359 = arith.addf %2356, %2358 : vector<8x128xf32>
    %cst_1244 = arith.constant 0.0209646653 : f32
    %2360 = vector.broadcast %cst_1244 : f32 to vector<8x128xf32>
    %2361 = arith.mulf %2321, %2360 : vector<8x128xf32>
    %2362 = arith.addf %2359, %2361 : vector<8x128xf32>
    %cst_1245 = arith.constant -0.136363581 : f32
    %2363 = vector.broadcast %cst_1245 : f32 to vector<8x128xf32>
    %2364 = arith.mulf %2322, %2363 : vector<8x128xf32>
    %2365 = arith.addf %2362, %2364 : vector<8x128xf32>
    %cst_1246 = arith.constant 0.128635809 : f32
    %2366 = vector.broadcast %cst_1246 : f32 to vector<8x128xf32>
    %2367 = arith.mulf %2329, %2366 : vector<8x128xf32>
    %2368 = arith.addf %2365, %2367 : vector<8x128xf32>
    %cst_1247 = arith.constant 0.119720928 : f32
    %2369 = vector.broadcast %cst_1247 : f32 to vector<8x128xf32>
    %2370 = arith.mulf %2330, %2369 : vector<8x128xf32>
    %2371 = arith.addf %2368, %2370 : vector<8x128xf32>
    %2372 = arith.mulf %2371, %1358 : vector<8x128xf32>
    %2373 = arith.addf %935, %2372 : vector<8x128xf32>
    %cst_1248 = arith.constant 0.218890771 : f32
    %2374 = vector.broadcast %cst_1248 : f32 to vector<8x128xf32>
    %2375 = arith.mulf %2209, %2374 : vector<8x128xf32>
    %cst_1249 = arith.constant 0.0918372198 : f32
    %2376 = vector.broadcast %cst_1249 : f32 to vector<8x128xf32>
    %2377 = arith.mulf %2210, %2376 : vector<8x128xf32>
    %2378 = arith.addf %2375, %2377 : vector<8x128xf32>
    %cst_1250 = arith.constant -0.334521323 : f32
    %2379 = vector.broadcast %cst_1250 : f32 to vector<8x128xf32>
    %2380 = arith.mulf %2253, %2379 : vector<8x128xf32>
    %2381 = arith.addf %2378, %2380 : vector<8x128xf32>
    %cst_1251 = arith.constant -0.0317861475 : f32
    %2382 = vector.broadcast %cst_1251 : f32 to vector<8x128xf32>
    %2383 = arith.mulf %2254, %2382 : vector<8x128xf32>
    %2384 = arith.addf %2381, %2383 : vector<8x128xf32>
    %cst_1252 = arith.constant -0.0329663754 : f32
    %2385 = vector.broadcast %cst_1252 : f32 to vector<8x128xf32>
    %2386 = arith.mulf %2297, %2385 : vector<8x128xf32>
    %2387 = arith.addf %2384, %2386 : vector<8x128xf32>
    %cst_1253 = arith.constant -0.349483758 : f32
    %2388 = vector.broadcast %cst_1253 : f32 to vector<8x128xf32>
    %2389 = arith.mulf %2298, %2388 : vector<8x128xf32>
    %2390 = arith.addf %2387, %2389 : vector<8x128xf32>
    %cst_1254 = arith.constant -0.0667708814 : f32
    %2391 = vector.broadcast %cst_1254 : f32 to vector<8x128xf32>
    %2392 = arith.mulf %2305, %2391 : vector<8x128xf32>
    %2393 = arith.addf %2390, %2392 : vector<8x128xf32>
    %cst_1255 = arith.constant -0.151960656 : f32
    %2394 = vector.broadcast %cst_1255 : f32 to vector<8x128xf32>
    %2395 = arith.mulf %2306, %2394 : vector<8x128xf32>
    %2396 = arith.addf %2393, %2395 : vector<8x128xf32>
    %cst_1256 = arith.constant 0.352404356 : f32
    %2397 = vector.broadcast %cst_1256 : f32 to vector<8x128xf32>
    %2398 = arith.mulf %2313, %2397 : vector<8x128xf32>
    %2399 = arith.addf %2396, %2398 : vector<8x128xf32>
    %cst_1257 = arith.constant -0.203699991 : f32
    %2400 = vector.broadcast %cst_1257 : f32 to vector<8x128xf32>
    %2401 = arith.mulf %2314, %2400 : vector<8x128xf32>
    %2402 = arith.addf %2399, %2401 : vector<8x128xf32>
    %cst_1258 = arith.constant -0.240118816 : f32
    %2403 = vector.broadcast %cst_1258 : f32 to vector<8x128xf32>
    %2404 = arith.mulf %2321, %2403 : vector<8x128xf32>
    %2405 = arith.addf %2402, %2404 : vector<8x128xf32>
    %cst_1259 = arith.constant 0.00158377201 : f32
    %2406 = vector.broadcast %cst_1259 : f32 to vector<8x128xf32>
    %2407 = arith.mulf %2322, %2406 : vector<8x128xf32>
    %2408 = arith.addf %2405, %2407 : vector<8x128xf32>
    %cst_1260 = arith.constant 0.120895877 : f32
    %2409 = vector.broadcast %cst_1260 : f32 to vector<8x128xf32>
    %2410 = arith.mulf %2329, %2409 : vector<8x128xf32>
    %2411 = arith.addf %2408, %2410 : vector<8x128xf32>
    %cst_1261 = arith.constant -0.0372625552 : f32
    %2412 = vector.broadcast %cst_1261 : f32 to vector<8x128xf32>
    %2413 = arith.mulf %2330, %2412 : vector<8x128xf32>
    %2414 = arith.addf %2411, %2413 : vector<8x128xf32>
    %2415 = arith.mulf %2414, %1360 : vector<8x128xf32>
    %2416 = arith.addf %966, %2415 : vector<8x128xf32>
    %c0_1262 = arith.constant 0 : index
    %c4_1263 = arith.constant 4 : index
    %c0_1264 = arith.constant 0 : index
    %c0_1265 = arith.constant 0 : index
    %2417 = vector.load %arg6[%c0_1262, %c4_1263, %c0_1264, %c0_1265] : memref<5x5x8x128xf32, #tpu.memory_space<vmem>>, vector<1x1x8x128xf32>
    %2418 = vector.shape_cast %2417 : vector<1x1x8x128xf32> to vector<8x128xf32>
    %c0_1266 = arith.constant 0 : index
    %c4_1267 = arith.constant 4 : index
    %c0_1268 = arith.constant 0 : index
    %c0_1269 = arith.constant 0 : index
    %2419 = vector.load %arg7[%c0_1266, %c4_1267, %c0_1268, %c0_1269] : memref<5x5x8x128xf32, #tpu.memory_space<vmem>>, vector<1x1x8x128xf32>
    %2420 = vector.shape_cast %2419 : vector<1x1x8x128xf32> to vector<8x128xf32>
    %c1_1270 = arith.constant 1 : index
    %c4_1271 = arith.constant 4 : index
    %c0_1272 = arith.constant 0 : index
    %c0_1273 = arith.constant 0 : index
    %2421 = vector.load %arg6[%c1_1270, %c4_1271, %c0_1272, %c0_1273] : memref<5x5x8x128xf32, #tpu.memory_space<vmem>>, vector<1x1x8x128xf32>
    %2422 = vector.shape_cast %2421 : vector<1x1x8x128xf32> to vector<8x128xf32>
    %c1_1274 = arith.constant 1 : index
    %c4_1275 = arith.constant 4 : index
    %c0_1276 = arith.constant 0 : index
    %c0_1277 = arith.constant 0 : index
    %2423 = vector.load %arg7[%c1_1274, %c4_1275, %c0_1276, %c0_1277] : memref<5x5x8x128xf32, #tpu.memory_space<vmem>>, vector<1x1x8x128xf32>
    %2424 = vector.shape_cast %2423 : vector<1x1x8x128xf32> to vector<8x128xf32>
    %c2_1278 = arith.constant 2 : index
    %c4_1279 = arith.constant 4 : index
    %c0_1280 = arith.constant 0 : index
    %c0_1281 = arith.constant 0 : index
    %2425 = vector.load %arg6[%c2_1278, %c4_1279, %c0_1280, %c0_1281] : memref<5x5x8x128xf32, #tpu.memory_space<vmem>>, vector<1x1x8x128xf32>
    %2426 = vector.shape_cast %2425 : vector<1x1x8x128xf32> to vector<8x128xf32>
    %c2_1282 = arith.constant 2 : index
    %c4_1283 = arith.constant 4 : index
    %c0_1284 = arith.constant 0 : index
    %c0_1285 = arith.constant 0 : index
    %2427 = vector.load %arg7[%c2_1282, %c4_1283, %c0_1284, %c0_1285] : memref<5x5x8x128xf32, #tpu.memory_space<vmem>>, vector<1x1x8x128xf32>
    %2428 = vector.shape_cast %2427 : vector<1x1x8x128xf32> to vector<8x128xf32>
    %c3_1286 = arith.constant 3 : index
    %c4_1287 = arith.constant 4 : index
    %c0_1288 = arith.constant 0 : index
    %c0_1289 = arith.constant 0 : index
    %2429 = vector.load %arg6[%c3_1286, %c4_1287, %c0_1288, %c0_1289] : memref<5x5x8x128xf32, #tpu.memory_space<vmem>>, vector<1x1x8x128xf32>
    %2430 = vector.shape_cast %2429 : vector<1x1x8x128xf32> to vector<8x128xf32>
    %c3_1290 = arith.constant 3 : index
    %c4_1291 = arith.constant 4 : index
    %c0_1292 = arith.constant 0 : index
    %c0_1293 = arith.constant 0 : index
    %2431 = vector.load %arg7[%c3_1290, %c4_1291, %c0_1292, %c0_1293] : memref<5x5x8x128xf32, #tpu.memory_space<vmem>>, vector<1x1x8x128xf32>
    %2432 = vector.shape_cast %2431 : vector<1x1x8x128xf32> to vector<8x128xf32>
    %c4_1294 = arith.constant 4 : index
    %c4_1295 = arith.constant 4 : index
    %c0_1296 = arith.constant 0 : index
    %c0_1297 = arith.constant 0 : index
    %2433 = vector.load %arg6[%c4_1294, %c4_1295, %c0_1296, %c0_1297] : memref<5x5x8x128xf32, #tpu.memory_space<vmem>>, vector<1x1x8x128xf32>
    %2434 = vector.shape_cast %2433 : vector<1x1x8x128xf32> to vector<8x128xf32>
    %c4_1298 = arith.constant 4 : index
    %c4_1299 = arith.constant 4 : index
    %c0_1300 = arith.constant 0 : index
    %c0_1301 = arith.constant 0 : index
    %2435 = vector.load %arg7[%c4_1298, %c4_1299, %c0_1300, %c0_1301] : memref<5x5x8x128xf32, #tpu.memory_space<vmem>>, vector<1x1x8x128xf32>
    %2436 = vector.shape_cast %2435 : vector<1x1x8x128xf32> to vector<8x128xf32>
    %c0_1302 = arith.constant 0 : index
    %c0_1303 = arith.constant 0 : index
    %c0_1304 = arith.constant 0 : index
    %c0_1305 = arith.constant 0 : index
    %2437 = vector.load %arg4[%c0_1302, %c0_1303, %c0_1304, %c0_1305] : memref<3x3x8x128xf32, #tpu.memory_space<vmem>>, vector<1x1x8x128xf32>
    %2438 = vector.shape_cast %2437 : vector<1x1x8x128xf32> to vector<8x128xf32>
    %c0_1306 = arith.constant 0 : index
    %c0_1307 = arith.constant 0 : index
    %c0_1308 = arith.constant 0 : index
    %c0_1309 = arith.constant 0 : index
    %2439 = vector.load %arg5[%c0_1306, %c0_1307, %c0_1308, %c0_1309] : memref<3x3x8x128xf32, #tpu.memory_space<vmem>>, vector<1x1x8x128xf32>
    %2440 = vector.shape_cast %2439 : vector<1x1x8x128xf32> to vector<8x128xf32>
    %2441 = arith.mulf %2438, %2418 : vector<8x128xf32>
    %2442 = arith.mulf %2440, %2420 : vector<8x128xf32>
    %2443 = arith.subf %2441, %2442 : vector<8x128xf32>
    %2444 = arith.mulf %2438, %2420 : vector<8x128xf32>
    %2445 = arith.mulf %2440, %2418 : vector<8x128xf32>
    %2446 = arith.addf %2444, %2445 : vector<8x128xf32>
    %2447 = arith.mulf %2438, %2422 : vector<8x128xf32>
    %2448 = arith.mulf %2440, %2424 : vector<8x128xf32>
    %2449 = arith.subf %2447, %2448 : vector<8x128xf32>
    %2450 = arith.mulf %2438, %2424 : vector<8x128xf32>
    %2451 = arith.mulf %2440, %2422 : vector<8x128xf32>
    %2452 = arith.addf %2450, %2451 : vector<8x128xf32>
    %2453 = arith.mulf %2438, %2426 : vector<8x128xf32>
    %2454 = arith.mulf %2440, %2428 : vector<8x128xf32>
    %2455 = arith.subf %2453, %2454 : vector<8x128xf32>
    %2456 = arith.mulf %2438, %2428 : vector<8x128xf32>
    %2457 = arith.mulf %2440, %2426 : vector<8x128xf32>
    %2458 = arith.addf %2456, %2457 : vector<8x128xf32>
    %2459 = arith.mulf %2438, %2430 : vector<8x128xf32>
    %2460 = arith.mulf %2440, %2432 : vector<8x128xf32>
    %2461 = arith.subf %2459, %2460 : vector<8x128xf32>
    %2462 = arith.mulf %2438, %2432 : vector<8x128xf32>
    %2463 = arith.mulf %2440, %2430 : vector<8x128xf32>
    %2464 = arith.addf %2462, %2463 : vector<8x128xf32>
    %2465 = arith.mulf %2438, %2434 : vector<8x128xf32>
    %2466 = arith.mulf %2440, %2436 : vector<8x128xf32>
    %2467 = arith.subf %2465, %2466 : vector<8x128xf32>
    %2468 = arith.mulf %2438, %2436 : vector<8x128xf32>
    %2469 = arith.mulf %2440, %2434 : vector<8x128xf32>
    %2470 = arith.addf %2468, %2469 : vector<8x128xf32>
    %c1_1310 = arith.constant 1 : index
    %c0_1311 = arith.constant 0 : index
    %c0_1312 = arith.constant 0 : index
    %c0_1313 = arith.constant 0 : index
    %2471 = vector.load %arg4[%c1_1310, %c0_1311, %c0_1312, %c0_1313] : memref<3x3x8x128xf32, #tpu.memory_space<vmem>>, vector<1x1x8x128xf32>
    %2472 = vector.shape_cast %2471 : vector<1x1x8x128xf32> to vector<8x128xf32>
    %c1_1314 = arith.constant 1 : index
    %c0_1315 = arith.constant 0 : index
    %c0_1316 = arith.constant 0 : index
    %c0_1317 = arith.constant 0 : index
    %2473 = vector.load %arg5[%c1_1314, %c0_1315, %c0_1316, %c0_1317] : memref<3x3x8x128xf32, #tpu.memory_space<vmem>>, vector<1x1x8x128xf32>
    %2474 = vector.shape_cast %2473 : vector<1x1x8x128xf32> to vector<8x128xf32>
    %2475 = arith.mulf %2472, %2418 : vector<8x128xf32>
    %2476 = arith.mulf %2474, %2420 : vector<8x128xf32>
    %2477 = arith.subf %2475, %2476 : vector<8x128xf32>
    %2478 = arith.mulf %2472, %2420 : vector<8x128xf32>
    %2479 = arith.mulf %2474, %2418 : vector<8x128xf32>
    %2480 = arith.addf %2478, %2479 : vector<8x128xf32>
    %2481 = arith.addf %2449, %2477 : vector<8x128xf32>
    %2482 = arith.addf %2452, %2480 : vector<8x128xf32>
    %2483 = arith.mulf %2472, %2422 : vector<8x128xf32>
    %2484 = arith.mulf %2474, %2424 : vector<8x128xf32>
    %2485 = arith.subf %2483, %2484 : vector<8x128xf32>
    %2486 = arith.mulf %2472, %2424 : vector<8x128xf32>
    %2487 = arith.mulf %2474, %2422 : vector<8x128xf32>
    %2488 = arith.addf %2486, %2487 : vector<8x128xf32>
    %2489 = arith.addf %2455, %2485 : vector<8x128xf32>
    %2490 = arith.addf %2458, %2488 : vector<8x128xf32>
    %2491 = arith.mulf %2472, %2426 : vector<8x128xf32>
    %2492 = arith.mulf %2474, %2428 : vector<8x128xf32>
    %2493 = arith.subf %2491, %2492 : vector<8x128xf32>
    %2494 = arith.mulf %2472, %2428 : vector<8x128xf32>
    %2495 = arith.mulf %2474, %2426 : vector<8x128xf32>
    %2496 = arith.addf %2494, %2495 : vector<8x128xf32>
    %2497 = arith.addf %2461, %2493 : vector<8x128xf32>
    %2498 = arith.addf %2464, %2496 : vector<8x128xf32>
    %2499 = arith.mulf %2472, %2430 : vector<8x128xf32>
    %2500 = arith.mulf %2474, %2432 : vector<8x128xf32>
    %2501 = arith.subf %2499, %2500 : vector<8x128xf32>
    %2502 = arith.mulf %2472, %2432 : vector<8x128xf32>
    %2503 = arith.mulf %2474, %2430 : vector<8x128xf32>
    %2504 = arith.addf %2502, %2503 : vector<8x128xf32>
    %2505 = arith.addf %2467, %2501 : vector<8x128xf32>
    %2506 = arith.addf %2470, %2504 : vector<8x128xf32>
    %2507 = arith.mulf %2472, %2434 : vector<8x128xf32>
    %2508 = arith.mulf %2474, %2436 : vector<8x128xf32>
    %2509 = arith.subf %2507, %2508 : vector<8x128xf32>
    %2510 = arith.mulf %2472, %2436 : vector<8x128xf32>
    %2511 = arith.mulf %2474, %2434 : vector<8x128xf32>
    %2512 = arith.addf %2510, %2511 : vector<8x128xf32>
    %c2_1318 = arith.constant 2 : index
    %c0_1319 = arith.constant 0 : index
    %c0_1320 = arith.constant 0 : index
    %c0_1321 = arith.constant 0 : index
    %2513 = vector.load %arg4[%c2_1318, %c0_1319, %c0_1320, %c0_1321] : memref<3x3x8x128xf32, #tpu.memory_space<vmem>>, vector<1x1x8x128xf32>
    %2514 = vector.shape_cast %2513 : vector<1x1x8x128xf32> to vector<8x128xf32>
    %c2_1322 = arith.constant 2 : index
    %c0_1323 = arith.constant 0 : index
    %c0_1324 = arith.constant 0 : index
    %c0_1325 = arith.constant 0 : index
    %2515 = vector.load %arg5[%c2_1322, %c0_1323, %c0_1324, %c0_1325] : memref<3x3x8x128xf32, #tpu.memory_space<vmem>>, vector<1x1x8x128xf32>
    %2516 = vector.shape_cast %2515 : vector<1x1x8x128xf32> to vector<8x128xf32>
    %2517 = arith.mulf %2514, %2418 : vector<8x128xf32>
    %2518 = arith.mulf %2516, %2420 : vector<8x128xf32>
    %2519 = arith.subf %2517, %2518 : vector<8x128xf32>
    %2520 = arith.mulf %2514, %2420 : vector<8x128xf32>
    %2521 = arith.mulf %2516, %2418 : vector<8x128xf32>
    %2522 = arith.addf %2520, %2521 : vector<8x128xf32>
    %2523 = arith.addf %2489, %2519 : vector<8x128xf32>
    %2524 = arith.addf %2490, %2522 : vector<8x128xf32>
    %2525 = arith.mulf %2514, %2422 : vector<8x128xf32>
    %2526 = arith.mulf %2516, %2424 : vector<8x128xf32>
    %2527 = arith.subf %2525, %2526 : vector<8x128xf32>
    %2528 = arith.mulf %2514, %2424 : vector<8x128xf32>
    %2529 = arith.mulf %2516, %2422 : vector<8x128xf32>
    %2530 = arith.addf %2528, %2529 : vector<8x128xf32>
    %2531 = arith.addf %2497, %2527 : vector<8x128xf32>
    %2532 = arith.addf %2498, %2530 : vector<8x128xf32>
    %2533 = arith.mulf %2514, %2426 : vector<8x128xf32>
    %2534 = arith.mulf %2516, %2428 : vector<8x128xf32>
    %2535 = arith.subf %2533, %2534 : vector<8x128xf32>
    %2536 = arith.mulf %2514, %2428 : vector<8x128xf32>
    %2537 = arith.mulf %2516, %2426 : vector<8x128xf32>
    %2538 = arith.addf %2536, %2537 : vector<8x128xf32>
    %2539 = arith.addf %2505, %2535 : vector<8x128xf32>
    %2540 = arith.addf %2506, %2538 : vector<8x128xf32>
    %2541 = arith.mulf %2514, %2430 : vector<8x128xf32>
    %2542 = arith.mulf %2516, %2432 : vector<8x128xf32>
    %2543 = arith.subf %2541, %2542 : vector<8x128xf32>
    %2544 = arith.mulf %2514, %2432 : vector<8x128xf32>
    %2545 = arith.mulf %2516, %2430 : vector<8x128xf32>
    %2546 = arith.addf %2544, %2545 : vector<8x128xf32>
    %2547 = arith.addf %2509, %2543 : vector<8x128xf32>
    %2548 = arith.addf %2512, %2546 : vector<8x128xf32>
    %2549 = arith.mulf %2514, %2434 : vector<8x128xf32>
    %2550 = arith.mulf %2516, %2436 : vector<8x128xf32>
    %2551 = arith.subf %2549, %2550 : vector<8x128xf32>
    %2552 = arith.mulf %2514, %2436 : vector<8x128xf32>
    %2553 = arith.mulf %2516, %2434 : vector<8x128xf32>
    %2554 = arith.addf %2552, %2553 : vector<8x128xf32>
    %c0_1326 = arith.constant 0 : index
    %c3_1327 = arith.constant 3 : index
    %c0_1328 = arith.constant 0 : index
    %c0_1329 = arith.constant 0 : index
    %2555 = vector.load %arg6[%c0_1326, %c3_1327, %c0_1328, %c0_1329] : memref<5x5x8x128xf32, #tpu.memory_space<vmem>>, vector<1x1x8x128xf32>
    %2556 = vector.shape_cast %2555 : vector<1x1x8x128xf32> to vector<8x128xf32>
    %c0_1330 = arith.constant 0 : index
    %c3_1331 = arith.constant 3 : index
    %c0_1332 = arith.constant 0 : index
    %c0_1333 = arith.constant 0 : index
    %2557 = vector.load %arg7[%c0_1330, %c3_1331, %c0_1332, %c0_1333] : memref<5x5x8x128xf32, #tpu.memory_space<vmem>>, vector<1x1x8x128xf32>
    %2558 = vector.shape_cast %2557 : vector<1x1x8x128xf32> to vector<8x128xf32>
    %c1_1334 = arith.constant 1 : index
    %c3_1335 = arith.constant 3 : index
    %c0_1336 = arith.constant 0 : index
    %c0_1337 = arith.constant 0 : index
    %2559 = vector.load %arg6[%c1_1334, %c3_1335, %c0_1336, %c0_1337] : memref<5x5x8x128xf32, #tpu.memory_space<vmem>>, vector<1x1x8x128xf32>
    %2560 = vector.shape_cast %2559 : vector<1x1x8x128xf32> to vector<8x128xf32>
    %c1_1338 = arith.constant 1 : index
    %c3_1339 = arith.constant 3 : index
    %c0_1340 = arith.constant 0 : index
    %c0_1341 = arith.constant 0 : index
    %2561 = vector.load %arg7[%c1_1338, %c3_1339, %c0_1340, %c0_1341] : memref<5x5x8x128xf32, #tpu.memory_space<vmem>>, vector<1x1x8x128xf32>
    %2562 = vector.shape_cast %2561 : vector<1x1x8x128xf32> to vector<8x128xf32>
    %c2_1342 = arith.constant 2 : index
    %c3_1343 = arith.constant 3 : index
    %c0_1344 = arith.constant 0 : index
    %c0_1345 = arith.constant 0 : index
    %2563 = vector.load %arg6[%c2_1342, %c3_1343, %c0_1344, %c0_1345] : memref<5x5x8x128xf32, #tpu.memory_space<vmem>>, vector<1x1x8x128xf32>
    %2564 = vector.shape_cast %2563 : vector<1x1x8x128xf32> to vector<8x128xf32>
    %c2_1346 = arith.constant 2 : index
    %c3_1347 = arith.constant 3 : index
    %c0_1348 = arith.constant 0 : index
    %c0_1349 = arith.constant 0 : index
    %2565 = vector.load %arg7[%c2_1346, %c3_1347, %c0_1348, %c0_1349] : memref<5x5x8x128xf32, #tpu.memory_space<vmem>>, vector<1x1x8x128xf32>
    %2566 = vector.shape_cast %2565 : vector<1x1x8x128xf32> to vector<8x128xf32>
    %c3_1350 = arith.constant 3 : index
    %c3_1351 = arith.constant 3 : index
    %c0_1352 = arith.constant 0 : index
    %c0_1353 = arith.constant 0 : index
    %2567 = vector.load %arg6[%c3_1350, %c3_1351, %c0_1352, %c0_1353] : memref<5x5x8x128xf32, #tpu.memory_space<vmem>>, vector<1x1x8x128xf32>
    %2568 = vector.shape_cast %2567 : vector<1x1x8x128xf32> to vector<8x128xf32>
    %c3_1354 = arith.constant 3 : index
    %c3_1355 = arith.constant 3 : index
    %c0_1356 = arith.constant 0 : index
    %c0_1357 = arith.constant 0 : index
    %2569 = vector.load %arg7[%c3_1354, %c3_1355, %c0_1356, %c0_1357] : memref<5x5x8x128xf32, #tpu.memory_space<vmem>>, vector<1x1x8x128xf32>
    %2570 = vector.shape_cast %2569 : vector<1x1x8x128xf32> to vector<8x128xf32>
    %c4_1358 = arith.constant 4 : index
    %c3_1359 = arith.constant 3 : index
    %c0_1360 = arith.constant 0 : index
    %c0_1361 = arith.constant 0 : index
    %2571 = vector.load %arg6[%c4_1358, %c3_1359, %c0_1360, %c0_1361] : memref<5x5x8x128xf32, #tpu.memory_space<vmem>>, vector<1x1x8x128xf32>
    %2572 = vector.shape_cast %2571 : vector<1x1x8x128xf32> to vector<8x128xf32>
    %c4_1362 = arith.constant 4 : index
    %c3_1363 = arith.constant 3 : index
    %c0_1364 = arith.constant 0 : index
    %c0_1365 = arith.constant 0 : index
    %2573 = vector.load %arg7[%c4_1362, %c3_1363, %c0_1364, %c0_1365] : memref<5x5x8x128xf32, #tpu.memory_space<vmem>>, vector<1x1x8x128xf32>
    %2574 = vector.shape_cast %2573 : vector<1x1x8x128xf32> to vector<8x128xf32>
    %c0_1366 = arith.constant 0 : index
    %c1_1367 = arith.constant 1 : index
    %c0_1368 = arith.constant 0 : index
    %c0_1369 = arith.constant 0 : index
    %2575 = vector.load %arg4[%c0_1366, %c1_1367, %c0_1368, %c0_1369] : memref<3x3x8x128xf32, #tpu.memory_space<vmem>>, vector<1x1x8x128xf32>
    %2576 = vector.shape_cast %2575 : vector<1x1x8x128xf32> to vector<8x128xf32>
    %c0_1370 = arith.constant 0 : index
    %c1_1371 = arith.constant 1 : index
    %c0_1372 = arith.constant 0 : index
    %c0_1373 = arith.constant 0 : index
    %2577 = vector.load %arg5[%c0_1370, %c1_1371, %c0_1372, %c0_1373] : memref<3x3x8x128xf32, #tpu.memory_space<vmem>>, vector<1x1x8x128xf32>
    %2578 = vector.shape_cast %2577 : vector<1x1x8x128xf32> to vector<8x128xf32>
    %2579 = arith.mulf %2576, %2556 : vector<8x128xf32>
    %2580 = arith.mulf %2578, %2558 : vector<8x128xf32>
    %2581 = arith.subf %2579, %2580 : vector<8x128xf32>
    %2582 = arith.mulf %2576, %2558 : vector<8x128xf32>
    %2583 = arith.mulf %2578, %2556 : vector<8x128xf32>
    %2584 = arith.addf %2582, %2583 : vector<8x128xf32>
    %2585 = arith.addf %2443, %2581 : vector<8x128xf32>
    %2586 = arith.addf %2446, %2584 : vector<8x128xf32>
    %2587 = arith.mulf %2576, %2560 : vector<8x128xf32>
    %2588 = arith.mulf %2578, %2562 : vector<8x128xf32>
    %2589 = arith.subf %2587, %2588 : vector<8x128xf32>
    %2590 = arith.mulf %2576, %2562 : vector<8x128xf32>
    %2591 = arith.mulf %2578, %2560 : vector<8x128xf32>
    %2592 = arith.addf %2590, %2591 : vector<8x128xf32>
    %2593 = arith.addf %2481, %2589 : vector<8x128xf32>
    %2594 = arith.addf %2482, %2592 : vector<8x128xf32>
    %2595 = arith.mulf %2576, %2564 : vector<8x128xf32>
    %2596 = arith.mulf %2578, %2566 : vector<8x128xf32>
    %2597 = arith.subf %2595, %2596 : vector<8x128xf32>
    %2598 = arith.mulf %2576, %2566 : vector<8x128xf32>
    %2599 = arith.mulf %2578, %2564 : vector<8x128xf32>
    %2600 = arith.addf %2598, %2599 : vector<8x128xf32>
    %2601 = arith.addf %2523, %2597 : vector<8x128xf32>
    %2602 = arith.addf %2524, %2600 : vector<8x128xf32>
    %2603 = arith.mulf %2576, %2568 : vector<8x128xf32>
    %2604 = arith.mulf %2578, %2570 : vector<8x128xf32>
    %2605 = arith.subf %2603, %2604 : vector<8x128xf32>
    %2606 = arith.mulf %2576, %2570 : vector<8x128xf32>
    %2607 = arith.mulf %2578, %2568 : vector<8x128xf32>
    %2608 = arith.addf %2606, %2607 : vector<8x128xf32>
    %2609 = arith.addf %2531, %2605 : vector<8x128xf32>
    %2610 = arith.addf %2532, %2608 : vector<8x128xf32>
    %2611 = arith.mulf %2576, %2572 : vector<8x128xf32>
    %2612 = arith.mulf %2578, %2574 : vector<8x128xf32>
    %2613 = arith.subf %2611, %2612 : vector<8x128xf32>
    %2614 = arith.mulf %2576, %2574 : vector<8x128xf32>
    %2615 = arith.mulf %2578, %2572 : vector<8x128xf32>
    %2616 = arith.addf %2614, %2615 : vector<8x128xf32>
    %2617 = arith.addf %2539, %2613 : vector<8x128xf32>
    %2618 = arith.addf %2540, %2616 : vector<8x128xf32>
    %c1_1374 = arith.constant 1 : index
    %c1_1375 = arith.constant 1 : index
    %c0_1376 = arith.constant 0 : index
    %c0_1377 = arith.constant 0 : index
    %2619 = vector.load %arg4[%c1_1374, %c1_1375, %c0_1376, %c0_1377] : memref<3x3x8x128xf32, #tpu.memory_space<vmem>>, vector<1x1x8x128xf32>
    %2620 = vector.shape_cast %2619 : vector<1x1x8x128xf32> to vector<8x128xf32>
    %c1_1378 = arith.constant 1 : index
    %c1_1379 = arith.constant 1 : index
    %c0_1380 = arith.constant 0 : index
    %c0_1381 = arith.constant 0 : index
    %2621 = vector.load %arg5[%c1_1378, %c1_1379, %c0_1380, %c0_1381] : memref<3x3x8x128xf32, #tpu.memory_space<vmem>>, vector<1x1x8x128xf32>
    %2622 = vector.shape_cast %2621 : vector<1x1x8x128xf32> to vector<8x128xf32>
    %2623 = arith.mulf %2620, %2556 : vector<8x128xf32>
    %2624 = arith.mulf %2622, %2558 : vector<8x128xf32>
    %2625 = arith.subf %2623, %2624 : vector<8x128xf32>
    %2626 = arith.mulf %2620, %2558 : vector<8x128xf32>
    %2627 = arith.mulf %2622, %2556 : vector<8x128xf32>
    %2628 = arith.addf %2626, %2627 : vector<8x128xf32>
    %2629 = arith.addf %2593, %2625 : vector<8x128xf32>
    %2630 = arith.addf %2594, %2628 : vector<8x128xf32>
    %2631 = arith.mulf %2620, %2560 : vector<8x128xf32>
    %2632 = arith.mulf %2622, %2562 : vector<8x128xf32>
    %2633 = arith.subf %2631, %2632 : vector<8x128xf32>
    %2634 = arith.mulf %2620, %2562 : vector<8x128xf32>
    %2635 = arith.mulf %2622, %2560 : vector<8x128xf32>
    %2636 = arith.addf %2634, %2635 : vector<8x128xf32>
    %2637 = arith.addf %2601, %2633 : vector<8x128xf32>
    %2638 = arith.addf %2602, %2636 : vector<8x128xf32>
    %2639 = arith.mulf %2620, %2564 : vector<8x128xf32>
    %2640 = arith.mulf %2622, %2566 : vector<8x128xf32>
    %2641 = arith.subf %2639, %2640 : vector<8x128xf32>
    %2642 = arith.mulf %2620, %2566 : vector<8x128xf32>
    %2643 = arith.mulf %2622, %2564 : vector<8x128xf32>
    %2644 = arith.addf %2642, %2643 : vector<8x128xf32>
    %2645 = arith.addf %2609, %2641 : vector<8x128xf32>
    %2646 = arith.addf %2610, %2644 : vector<8x128xf32>
    %2647 = arith.mulf %2620, %2568 : vector<8x128xf32>
    %2648 = arith.mulf %2622, %2570 : vector<8x128xf32>
    %2649 = arith.subf %2647, %2648 : vector<8x128xf32>
    %2650 = arith.mulf %2620, %2570 : vector<8x128xf32>
    %2651 = arith.mulf %2622, %2568 : vector<8x128xf32>
    %2652 = arith.addf %2650, %2651 : vector<8x128xf32>
    %2653 = arith.addf %2617, %2649 : vector<8x128xf32>
    %2654 = arith.addf %2618, %2652 : vector<8x128xf32>
    %2655 = arith.mulf %2620, %2572 : vector<8x128xf32>
    %2656 = arith.mulf %2622, %2574 : vector<8x128xf32>
    %2657 = arith.subf %2655, %2656 : vector<8x128xf32>
    %2658 = arith.mulf %2620, %2574 : vector<8x128xf32>
    %2659 = arith.mulf %2622, %2572 : vector<8x128xf32>
    %2660 = arith.addf %2658, %2659 : vector<8x128xf32>
    %2661 = arith.addf %2547, %2657 : vector<8x128xf32>
    %2662 = arith.addf %2548, %2660 : vector<8x128xf32>
    %c2_1382 = arith.constant 2 : index
    %c1_1383 = arith.constant 1 : index
    %c0_1384 = arith.constant 0 : index
    %c0_1385 = arith.constant 0 : index
    %2663 = vector.load %arg4[%c2_1382, %c1_1383, %c0_1384, %c0_1385] : memref<3x3x8x128xf32, #tpu.memory_space<vmem>>, vector<1x1x8x128xf32>
    %2664 = vector.shape_cast %2663 : vector<1x1x8x128xf32> to vector<8x128xf32>
    %c2_1386 = arith.constant 2 : index
    %c1_1387 = arith.constant 1 : index
    %c0_1388 = arith.constant 0 : index
    %c0_1389 = arith.constant 0 : index
    %2665 = vector.load %arg5[%c2_1386, %c1_1387, %c0_1388, %c0_1389] : memref<3x3x8x128xf32, #tpu.memory_space<vmem>>, vector<1x1x8x128xf32>
    %2666 = vector.shape_cast %2665 : vector<1x1x8x128xf32> to vector<8x128xf32>
    %2667 = arith.mulf %2664, %2556 : vector<8x128xf32>
    %2668 = arith.mulf %2666, %2558 : vector<8x128xf32>
    %2669 = arith.subf %2667, %2668 : vector<8x128xf32>
    %2670 = arith.mulf %2664, %2558 : vector<8x128xf32>
    %2671 = arith.mulf %2666, %2556 : vector<8x128xf32>
    %2672 = arith.addf %2670, %2671 : vector<8x128xf32>
    %2673 = arith.addf %2637, %2669 : vector<8x128xf32>
    %2674 = arith.addf %2638, %2672 : vector<8x128xf32>
    %2675 = arith.mulf %2664, %2560 : vector<8x128xf32>
    %2676 = arith.mulf %2666, %2562 : vector<8x128xf32>
    %2677 = arith.subf %2675, %2676 : vector<8x128xf32>
    %2678 = arith.mulf %2664, %2562 : vector<8x128xf32>
    %2679 = arith.mulf %2666, %2560 : vector<8x128xf32>
    %2680 = arith.addf %2678, %2679 : vector<8x128xf32>
    %2681 = arith.addf %2645, %2677 : vector<8x128xf32>
    %2682 = arith.addf %2646, %2680 : vector<8x128xf32>
    %2683 = arith.mulf %2664, %2564 : vector<8x128xf32>
    %2684 = arith.mulf %2666, %2566 : vector<8x128xf32>
    %2685 = arith.subf %2683, %2684 : vector<8x128xf32>
    %2686 = arith.mulf %2664, %2566 : vector<8x128xf32>
    %2687 = arith.mulf %2666, %2564 : vector<8x128xf32>
    %2688 = arith.addf %2686, %2687 : vector<8x128xf32>
    %2689 = arith.addf %2653, %2685 : vector<8x128xf32>
    %2690 = arith.addf %2654, %2688 : vector<8x128xf32>
    %2691 = arith.mulf %2664, %2568 : vector<8x128xf32>
    %2692 = arith.mulf %2666, %2570 : vector<8x128xf32>
    %2693 = arith.subf %2691, %2692 : vector<8x128xf32>
    %2694 = arith.mulf %2664, %2570 : vector<8x128xf32>
    %2695 = arith.mulf %2666, %2568 : vector<8x128xf32>
    %2696 = arith.addf %2694, %2695 : vector<8x128xf32>
    %2697 = arith.addf %2661, %2693 : vector<8x128xf32>
    %2698 = arith.addf %2662, %2696 : vector<8x128xf32>
    %2699 = arith.mulf %2664, %2572 : vector<8x128xf32>
    %2700 = arith.mulf %2666, %2574 : vector<8x128xf32>
    %2701 = arith.subf %2699, %2700 : vector<8x128xf32>
    %2702 = arith.mulf %2664, %2574 : vector<8x128xf32>
    %2703 = arith.mulf %2666, %2572 : vector<8x128xf32>
    %2704 = arith.addf %2702, %2703 : vector<8x128xf32>
    %2705 = arith.addf %2551, %2701 : vector<8x128xf32>
    %2706 = arith.addf %2554, %2704 : vector<8x128xf32>
    %c0_1390 = arith.constant 0 : index
    %c2_1391 = arith.constant 2 : index
    %c0_1392 = arith.constant 0 : index
    %c0_1393 = arith.constant 0 : index
    %2707 = vector.load %arg6[%c0_1390, %c2_1391, %c0_1392, %c0_1393] : memref<5x5x8x128xf32, #tpu.memory_space<vmem>>, vector<1x1x8x128xf32>
    %2708 = vector.shape_cast %2707 : vector<1x1x8x128xf32> to vector<8x128xf32>
    %c0_1394 = arith.constant 0 : index
    %c2_1395 = arith.constant 2 : index
    %c0_1396 = arith.constant 0 : index
    %c0_1397 = arith.constant 0 : index
    %2709 = vector.load %arg7[%c0_1394, %c2_1395, %c0_1396, %c0_1397] : memref<5x5x8x128xf32, #tpu.memory_space<vmem>>, vector<1x1x8x128xf32>
    %2710 = vector.shape_cast %2709 : vector<1x1x8x128xf32> to vector<8x128xf32>
    %c1_1398 = arith.constant 1 : index
    %c2_1399 = arith.constant 2 : index
    %c0_1400 = arith.constant 0 : index
    %c0_1401 = arith.constant 0 : index
    %2711 = vector.load %arg6[%c1_1398, %c2_1399, %c0_1400, %c0_1401] : memref<5x5x8x128xf32, #tpu.memory_space<vmem>>, vector<1x1x8x128xf32>
    %2712 = vector.shape_cast %2711 : vector<1x1x8x128xf32> to vector<8x128xf32>
    %c1_1402 = arith.constant 1 : index
    %c2_1403 = arith.constant 2 : index
    %c0_1404 = arith.constant 0 : index
    %c0_1405 = arith.constant 0 : index
    %2713 = vector.load %arg7[%c1_1402, %c2_1403, %c0_1404, %c0_1405] : memref<5x5x8x128xf32, #tpu.memory_space<vmem>>, vector<1x1x8x128xf32>
    %2714 = vector.shape_cast %2713 : vector<1x1x8x128xf32> to vector<8x128xf32>
    %c2_1406 = arith.constant 2 : index
    %c2_1407 = arith.constant 2 : index
    %c0_1408 = arith.constant 0 : index
    %c0_1409 = arith.constant 0 : index
    %2715 = vector.load %arg6[%c2_1406, %c2_1407, %c0_1408, %c0_1409] : memref<5x5x8x128xf32, #tpu.memory_space<vmem>>, vector<1x1x8x128xf32>
    %2716 = vector.shape_cast %2715 : vector<1x1x8x128xf32> to vector<8x128xf32>
    %c2_1410 = arith.constant 2 : index
    %c2_1411 = arith.constant 2 : index
    %c0_1412 = arith.constant 0 : index
    %c0_1413 = arith.constant 0 : index
    %2717 = vector.load %arg7[%c2_1410, %c2_1411, %c0_1412, %c0_1413] : memref<5x5x8x128xf32, #tpu.memory_space<vmem>>, vector<1x1x8x128xf32>
    %2718 = vector.shape_cast %2717 : vector<1x1x8x128xf32> to vector<8x128xf32>
    %c3_1414 = arith.constant 3 : index
    %c2_1415 = arith.constant 2 : index
    %c0_1416 = arith.constant 0 : index
    %c0_1417 = arith.constant 0 : index
    %2719 = vector.load %arg6[%c3_1414, %c2_1415, %c0_1416, %c0_1417] : memref<5x5x8x128xf32, #tpu.memory_space<vmem>>, vector<1x1x8x128xf32>
    %2720 = vector.shape_cast %2719 : vector<1x1x8x128xf32> to vector<8x128xf32>
    %c3_1418 = arith.constant 3 : index
    %c2_1419 = arith.constant 2 : index
    %c0_1420 = arith.constant 0 : index
    %c0_1421 = arith.constant 0 : index
    %2721 = vector.load %arg7[%c3_1418, %c2_1419, %c0_1420, %c0_1421] : memref<5x5x8x128xf32, #tpu.memory_space<vmem>>, vector<1x1x8x128xf32>
    %2722 = vector.shape_cast %2721 : vector<1x1x8x128xf32> to vector<8x128xf32>
    %c4_1422 = arith.constant 4 : index
    %c2_1423 = arith.constant 2 : index
    %c0_1424 = arith.constant 0 : index
    %c0_1425 = arith.constant 0 : index
    %2723 = vector.load %arg6[%c4_1422, %c2_1423, %c0_1424, %c0_1425] : memref<5x5x8x128xf32, #tpu.memory_space<vmem>>, vector<1x1x8x128xf32>
    %2724 = vector.shape_cast %2723 : vector<1x1x8x128xf32> to vector<8x128xf32>
    %c4_1426 = arith.constant 4 : index
    %c2_1427 = arith.constant 2 : index
    %c0_1428 = arith.constant 0 : index
    %c0_1429 = arith.constant 0 : index
    %2725 = vector.load %arg7[%c4_1426, %c2_1427, %c0_1428, %c0_1429] : memref<5x5x8x128xf32, #tpu.memory_space<vmem>>, vector<1x1x8x128xf32>
    %2726 = vector.shape_cast %2725 : vector<1x1x8x128xf32> to vector<8x128xf32>
    %c0_1430 = arith.constant 0 : index
    %c2_1431 = arith.constant 2 : index
    %c0_1432 = arith.constant 0 : index
    %c0_1433 = arith.constant 0 : index
    %2727 = vector.load %arg4[%c0_1430, %c2_1431, %c0_1432, %c0_1433] : memref<3x3x8x128xf32, #tpu.memory_space<vmem>>, vector<1x1x8x128xf32>
    %2728 = vector.shape_cast %2727 : vector<1x1x8x128xf32> to vector<8x128xf32>
    %c0_1434 = arith.constant 0 : index
    %c2_1435 = arith.constant 2 : index
    %c0_1436 = arith.constant 0 : index
    %c0_1437 = arith.constant 0 : index
    %2729 = vector.load %arg5[%c0_1434, %c2_1435, %c0_1436, %c0_1437] : memref<3x3x8x128xf32, #tpu.memory_space<vmem>>, vector<1x1x8x128xf32>
    %2730 = vector.shape_cast %2729 : vector<1x1x8x128xf32> to vector<8x128xf32>
    %2731 = arith.mulf %2728, %2708 : vector<8x128xf32>
    %2732 = arith.mulf %2730, %2710 : vector<8x128xf32>
    %2733 = arith.subf %2731, %2732 : vector<8x128xf32>
    %2734 = arith.mulf %2728, %2710 : vector<8x128xf32>
    %2735 = arith.mulf %2730, %2708 : vector<8x128xf32>
    %2736 = arith.addf %2734, %2735 : vector<8x128xf32>
    %2737 = arith.addf %2585, %2733 : vector<8x128xf32>
    %2738 = arith.addf %2586, %2736 : vector<8x128xf32>
    %2739 = arith.mulf %2728, %2712 : vector<8x128xf32>
    %2740 = arith.mulf %2730, %2714 : vector<8x128xf32>
    %2741 = arith.subf %2739, %2740 : vector<8x128xf32>
    %2742 = arith.mulf %2728, %2714 : vector<8x128xf32>
    %2743 = arith.mulf %2730, %2712 : vector<8x128xf32>
    %2744 = arith.addf %2742, %2743 : vector<8x128xf32>
    %2745 = arith.addf %2629, %2741 : vector<8x128xf32>
    %2746 = arith.addf %2630, %2744 : vector<8x128xf32>
    %2747 = arith.mulf %2728, %2716 : vector<8x128xf32>
    %2748 = arith.mulf %2730, %2718 : vector<8x128xf32>
    %2749 = arith.subf %2747, %2748 : vector<8x128xf32>
    %2750 = arith.mulf %2728, %2718 : vector<8x128xf32>
    %2751 = arith.mulf %2730, %2716 : vector<8x128xf32>
    %2752 = arith.addf %2750, %2751 : vector<8x128xf32>
    %2753 = arith.addf %2673, %2749 : vector<8x128xf32>
    %2754 = arith.addf %2674, %2752 : vector<8x128xf32>
    %2755 = arith.mulf %2728, %2720 : vector<8x128xf32>
    %2756 = arith.mulf %2730, %2722 : vector<8x128xf32>
    %2757 = arith.subf %2755, %2756 : vector<8x128xf32>
    %2758 = arith.mulf %2728, %2722 : vector<8x128xf32>
    %2759 = arith.mulf %2730, %2720 : vector<8x128xf32>
    %2760 = arith.addf %2758, %2759 : vector<8x128xf32>
    %2761 = arith.addf %2681, %2757 : vector<8x128xf32>
    %2762 = arith.addf %2682, %2760 : vector<8x128xf32>
    %2763 = arith.mulf %2728, %2724 : vector<8x128xf32>
    %2764 = arith.mulf %2730, %2726 : vector<8x128xf32>
    %2765 = arith.subf %2763, %2764 : vector<8x128xf32>
    %2766 = arith.mulf %2728, %2726 : vector<8x128xf32>
    %2767 = arith.mulf %2730, %2724 : vector<8x128xf32>
    %2768 = arith.addf %2766, %2767 : vector<8x128xf32>
    %2769 = arith.addf %2689, %2765 : vector<8x128xf32>
    %2770 = arith.addf %2690, %2768 : vector<8x128xf32>
    %c1_1438 = arith.constant 1 : index
    %c2_1439 = arith.constant 2 : index
    %c0_1440 = arith.constant 0 : index
    %c0_1441 = arith.constant 0 : index
    %2771 = vector.load %arg4[%c1_1438, %c2_1439, %c0_1440, %c0_1441] : memref<3x3x8x128xf32, #tpu.memory_space<vmem>>, vector<1x1x8x128xf32>
    %2772 = vector.shape_cast %2771 : vector<1x1x8x128xf32> to vector<8x128xf32>
    %c1_1442 = arith.constant 1 : index
    %c2_1443 = arith.constant 2 : index
    %c0_1444 = arith.constant 0 : index
    %c0_1445 = arith.constant 0 : index
    %2773 = vector.load %arg5[%c1_1442, %c2_1443, %c0_1444, %c0_1445] : memref<3x3x8x128xf32, #tpu.memory_space<vmem>>, vector<1x1x8x128xf32>
    %2774 = vector.shape_cast %2773 : vector<1x1x8x128xf32> to vector<8x128xf32>
    %2775 = arith.mulf %2772, %2708 : vector<8x128xf32>
    %2776 = arith.mulf %2774, %2710 : vector<8x128xf32>
    %2777 = arith.subf %2775, %2776 : vector<8x128xf32>
    %2778 = arith.mulf %2772, %2710 : vector<8x128xf32>
    %2779 = arith.mulf %2774, %2708 : vector<8x128xf32>
    %2780 = arith.addf %2778, %2779 : vector<8x128xf32>
    %2781 = arith.addf %2745, %2777 : vector<8x128xf32>
    %2782 = arith.addf %2746, %2780 : vector<8x128xf32>
    %2783 = arith.mulf %2772, %2712 : vector<8x128xf32>
    %2784 = arith.mulf %2774, %2714 : vector<8x128xf32>
    %2785 = arith.subf %2783, %2784 : vector<8x128xf32>
    %2786 = arith.mulf %2772, %2714 : vector<8x128xf32>
    %2787 = arith.mulf %2774, %2712 : vector<8x128xf32>
    %2788 = arith.addf %2786, %2787 : vector<8x128xf32>
    %2789 = arith.addf %2753, %2785 : vector<8x128xf32>
    %2790 = arith.addf %2754, %2788 : vector<8x128xf32>
    %2791 = arith.mulf %2772, %2716 : vector<8x128xf32>
    %2792 = arith.mulf %2774, %2718 : vector<8x128xf32>
    %2793 = arith.subf %2791, %2792 : vector<8x128xf32>
    %2794 = arith.mulf %2772, %2718 : vector<8x128xf32>
    %2795 = arith.mulf %2774, %2716 : vector<8x128xf32>
    %2796 = arith.addf %2794, %2795 : vector<8x128xf32>
    %2797 = arith.addf %2761, %2793 : vector<8x128xf32>
    %2798 = arith.addf %2762, %2796 : vector<8x128xf32>
    %2799 = arith.mulf %2772, %2720 : vector<8x128xf32>
    %2800 = arith.mulf %2774, %2722 : vector<8x128xf32>
    %2801 = arith.subf %2799, %2800 : vector<8x128xf32>
    %2802 = arith.mulf %2772, %2722 : vector<8x128xf32>
    %2803 = arith.mulf %2774, %2720 : vector<8x128xf32>
    %2804 = arith.addf %2802, %2803 : vector<8x128xf32>
    %2805 = arith.addf %2769, %2801 : vector<8x128xf32>
    %2806 = arith.addf %2770, %2804 : vector<8x128xf32>
    %2807 = arith.mulf %2772, %2724 : vector<8x128xf32>
    %2808 = arith.mulf %2774, %2726 : vector<8x128xf32>
    %2809 = arith.subf %2807, %2808 : vector<8x128xf32>
    %2810 = arith.mulf %2772, %2726 : vector<8x128xf32>
    %2811 = arith.mulf %2774, %2724 : vector<8x128xf32>
    %2812 = arith.addf %2810, %2811 : vector<8x128xf32>
    %2813 = arith.addf %2697, %2809 : vector<8x128xf32>
    %2814 = arith.addf %2698, %2812 : vector<8x128xf32>
    %c2_1446 = arith.constant 2 : index
    %c2_1447 = arith.constant 2 : index
    %c0_1448 = arith.constant 0 : index
    %c0_1449 = arith.constant 0 : index
    %2815 = vector.load %arg4[%c2_1446, %c2_1447, %c0_1448, %c0_1449] : memref<3x3x8x128xf32, #tpu.memory_space<vmem>>, vector<1x1x8x128xf32>
    %2816 = vector.shape_cast %2815 : vector<1x1x8x128xf32> to vector<8x128xf32>
    %c2_1450 = arith.constant 2 : index
    %c2_1451 = arith.constant 2 : index
    %c0_1452 = arith.constant 0 : index
    %c0_1453 = arith.constant 0 : index
    %2817 = vector.load %arg5[%c2_1450, %c2_1451, %c0_1452, %c0_1453] : memref<3x3x8x128xf32, #tpu.memory_space<vmem>>, vector<1x1x8x128xf32>
    %2818 = vector.shape_cast %2817 : vector<1x1x8x128xf32> to vector<8x128xf32>
    %2819 = arith.mulf %2816, %2708 : vector<8x128xf32>
    %2820 = arith.mulf %2818, %2710 : vector<8x128xf32>
    %2821 = arith.subf %2819, %2820 : vector<8x128xf32>
    %2822 = arith.mulf %2816, %2710 : vector<8x128xf32>
    %2823 = arith.mulf %2818, %2708 : vector<8x128xf32>
    %2824 = arith.addf %2822, %2823 : vector<8x128xf32>
    %2825 = arith.addf %2789, %2821 : vector<8x128xf32>
    %2826 = arith.addf %2790, %2824 : vector<8x128xf32>
    %2827 = arith.mulf %2816, %2712 : vector<8x128xf32>
    %2828 = arith.mulf %2818, %2714 : vector<8x128xf32>
    %2829 = arith.subf %2827, %2828 : vector<8x128xf32>
    %2830 = arith.mulf %2816, %2714 : vector<8x128xf32>
    %2831 = arith.mulf %2818, %2712 : vector<8x128xf32>
    %2832 = arith.addf %2830, %2831 : vector<8x128xf32>
    %2833 = arith.addf %2797, %2829 : vector<8x128xf32>
    %2834 = arith.addf %2798, %2832 : vector<8x128xf32>
    %2835 = arith.mulf %2816, %2716 : vector<8x128xf32>
    %2836 = arith.mulf %2818, %2718 : vector<8x128xf32>
    %2837 = arith.subf %2835, %2836 : vector<8x128xf32>
    %2838 = arith.mulf %2816, %2718 : vector<8x128xf32>
    %2839 = arith.mulf %2818, %2716 : vector<8x128xf32>
    %2840 = arith.addf %2838, %2839 : vector<8x128xf32>
    %2841 = arith.addf %2805, %2837 : vector<8x128xf32>
    %2842 = arith.addf %2806, %2840 : vector<8x128xf32>
    %2843 = arith.mulf %2816, %2720 : vector<8x128xf32>
    %2844 = arith.mulf %2818, %2722 : vector<8x128xf32>
    %2845 = arith.subf %2843, %2844 : vector<8x128xf32>
    %2846 = arith.mulf %2816, %2722 : vector<8x128xf32>
    %2847 = arith.mulf %2818, %2720 : vector<8x128xf32>
    %2848 = arith.addf %2846, %2847 : vector<8x128xf32>
    %2849 = arith.addf %2813, %2845 : vector<8x128xf32>
    %2850 = arith.addf %2814, %2848 : vector<8x128xf32>
    %2851 = arith.mulf %2816, %2724 : vector<8x128xf32>
    %2852 = arith.mulf %2818, %2726 : vector<8x128xf32>
    %2853 = arith.subf %2851, %2852 : vector<8x128xf32>
    %2854 = arith.mulf %2816, %2726 : vector<8x128xf32>
    %2855 = arith.mulf %2818, %2724 : vector<8x128xf32>
    %2856 = arith.addf %2854, %2855 : vector<8x128xf32>
    %2857 = arith.addf %2705, %2853 : vector<8x128xf32>
    %2858 = arith.addf %2706, %2856 : vector<8x128xf32>
    %cst_1454 = arith.constant -0.318552911 : f32
    %2859 = vector.broadcast %cst_1454 : f32 to vector<8x128xf32>
    %2860 = arith.mulf %2737, %2859 : vector<8x128xf32>
    %cst_1455 = arith.constant -0.258472741 : f32
    %2861 = vector.broadcast %cst_1455 : f32 to vector<8x128xf32>
    %2862 = arith.mulf %2738, %2861 : vector<8x128xf32>
    %2863 = arith.addf %2860, %2862 : vector<8x128xf32>
    %cst_1456 = arith.constant 0.330434412 : f32
    %2864 = vector.broadcast %cst_1456 : f32 to vector<8x128xf32>
    %2865 = arith.mulf %2781, %2864 : vector<8x128xf32>
    %2866 = arith.addf %2863, %2865 : vector<8x128xf32>
    %cst_1457 = arith.constant 0.124745183 : f32
    %2867 = vector.broadcast %cst_1457 : f32 to vector<8x128xf32>
    %2868 = arith.mulf %2782, %2867 : vector<8x128xf32>
    %2869 = arith.addf %2866, %2868 : vector<8x128xf32>
    %cst_1458 = arith.constant -0.0485739075 : f32
    %2870 = vector.broadcast %cst_1458 : f32 to vector<8x128xf32>
    %2871 = arith.mulf %2825, %2870 : vector<8x128xf32>
    %2872 = arith.addf %2869, %2871 : vector<8x128xf32>
    %cst_1459 = arith.constant 0.376932383 : f32
    %2873 = vector.broadcast %cst_1459 : f32 to vector<8x128xf32>
    %2874 = arith.mulf %2826, %2873 : vector<8x128xf32>
    %2875 = arith.addf %2872, %2874 : vector<8x128xf32>
    %cst_1460 = arith.constant 0.225102067 : f32
    %2876 = vector.broadcast %cst_1460 : f32 to vector<8x128xf32>
    %2877 = arith.mulf %2833, %2876 : vector<8x128xf32>
    %2878 = arith.addf %2875, %2877 : vector<8x128xf32>
    %cst_1461 = arith.constant 0.288407177 : f32
    %2879 = vector.broadcast %cst_1461 : f32 to vector<8x128xf32>
    %2880 = arith.mulf %2834, %2879 : vector<8x128xf32>
    %2881 = arith.addf %2878, %2880 : vector<8x128xf32>
    %cst_1462 = arith.constant 0.377400935 : f32
    %2882 = vector.broadcast %cst_1462 : f32 to vector<8x128xf32>
    %2883 = arith.mulf %2841, %2882 : vector<8x128xf32>
    %2884 = arith.addf %2881, %2883 : vector<8x128xf32>
    %cst_1463 = arith.constant -0.191867888 : f32
    %2885 = vector.broadcast %cst_1463 : f32 to vector<8x128xf32>
    %2886 = arith.mulf %2842, %2885 : vector<8x128xf32>
    %2887 = arith.addf %2884, %2886 : vector<8x128xf32>
    %cst_1464 = arith.constant -0.190979227 : f32
    %2888 = vector.broadcast %cst_1464 : f32 to vector<8x128xf32>
    %2889 = arith.mulf %2849, %2888 : vector<8x128xf32>
    %2890 = arith.addf %2887, %2889 : vector<8x128xf32>
    %cst_1465 = arith.constant -0.0705797374 : f32
    %2891 = vector.broadcast %cst_1465 : f32 to vector<8x128xf32>
    %2892 = arith.mulf %2850, %2891 : vector<8x128xf32>
    %2893 = arith.addf %2890, %2892 : vector<8x128xf32>
    %cst_1466 = arith.constant 0.018625943 : f32
    %2894 = vector.broadcast %cst_1466 : f32 to vector<8x128xf32>
    %2895 = arith.mulf %2857, %2894 : vector<8x128xf32>
    %2896 = arith.addf %2893, %2895 : vector<8x128xf32>
    %cst_1467 = arith.constant -0.180408344 : f32
    %2897 = vector.broadcast %cst_1467 : f32 to vector<8x128xf32>
    %2898 = arith.mulf %2858, %2897 : vector<8x128xf32>
    %2899 = arith.addf %2896, %2898 : vector<8x128xf32>
    %2900 = arith.mulf %2899, %1358 : vector<8x128xf32>
    %2901 = arith.addf %1209, %2900 : vector<8x128xf32>
    %cst_1468 = arith.constant 0.146743745 : f32
    %2902 = vector.broadcast %cst_1468 : f32 to vector<8x128xf32>
    %2903 = arith.mulf %2737, %2902 : vector<8x128xf32>
    %cst_1469 = arith.constant -0.0855942741 : f32
    %2904 = vector.broadcast %cst_1469 : f32 to vector<8x128xf32>
    %2905 = arith.mulf %2738, %2904 : vector<8x128xf32>
    %2906 = arith.addf %2903, %2905 : vector<8x128xf32>
    %cst_1470 = arith.constant -0.342179626 : f32
    %2907 = vector.broadcast %cst_1470 : f32 to vector<8x128xf32>
    %2908 = arith.mulf %2781, %2907 : vector<8x128xf32>
    %2909 = arith.addf %2906, %2908 : vector<8x128xf32>
    %cst_1471 = arith.constant -0.198562548 : f32
    %2910 = vector.broadcast %cst_1471 : f32 to vector<8x128xf32>
    %2911 = arith.mulf %2782, %2910 : vector<8x128xf32>
    %2912 = arith.addf %2909, %2911 : vector<8x128xf32>
    %cst_1472 = arith.constant 0.309764534 : f32
    %2913 = vector.broadcast %cst_1472 : f32 to vector<8x128xf32>
    %2914 = arith.mulf %2825, %2913 : vector<8x128xf32>
    %2915 = arith.addf %2912, %2914 : vector<8x128xf32>
    %cst_1473 = arith.constant 0.215047836 : f32
    %2916 = vector.broadcast %cst_1473 : f32 to vector<8x128xf32>
    %2917 = arith.mulf %2826, %2916 : vector<8x128xf32>
    %2918 = arith.addf %2915, %2917 : vector<8x128xf32>
    %cst_1474 = arith.constant -0.0395359509 : f32
    %2919 = vector.broadcast %cst_1474 : f32 to vector<8x128xf32>
    %2920 = arith.mulf %2833, %2919 : vector<8x128xf32>
    %2921 = arith.addf %2918, %2920 : vector<8x128xf32>
    %cst_1475 = arith.constant 0.098775953 : f32
    %2922 = vector.broadcast %cst_1475 : f32 to vector<8x128xf32>
    %2923 = arith.mulf %2834, %2922 : vector<8x128xf32>
    %2924 = arith.addf %2921, %2923 : vector<8x128xf32>
    %cst_1476 = arith.constant -0.0522292629 : f32
    %2925 = vector.broadcast %cst_1476 : f32 to vector<8x128xf32>
    %2926 = arith.mulf %2841, %2925 : vector<8x128xf32>
    %2927 = arith.addf %2924, %2926 : vector<8x128xf32>
    %cst_1477 = arith.constant 0.190496504 : f32
    %2928 = vector.broadcast %cst_1477 : f32 to vector<8x128xf32>
    %2929 = arith.mulf %2842, %2928 : vector<8x128xf32>
    %2930 = arith.addf %2927, %2929 : vector<8x128xf32>
    %cst_1478 = arith.constant -0.0816463381 : f32
    %2931 = vector.broadcast %cst_1478 : f32 to vector<8x128xf32>
    %2932 = arith.mulf %2849, %2931 : vector<8x128xf32>
    %2933 = arith.addf %2930, %2932 : vector<8x128xf32>
    %cst_1479 = arith.constant 0.198423922 : f32
    %2934 = vector.broadcast %cst_1479 : f32 to vector<8x128xf32>
    %2935 = arith.mulf %2850, %2934 : vector<8x128xf32>
    %2936 = arith.addf %2933, %2935 : vector<8x128xf32>
    %cst_1480 = arith.constant -0.169328302 : f32
    %2937 = vector.broadcast %cst_1480 : f32 to vector<8x128xf32>
    %2938 = arith.mulf %2857, %2937 : vector<8x128xf32>
    %2939 = arith.addf %2936, %2938 : vector<8x128xf32>
    %cst_1481 = arith.constant 0.317645282 : f32
    %2940 = vector.broadcast %cst_1481 : f32 to vector<8x128xf32>
    %2941 = arith.mulf %2858, %2940 : vector<8x128xf32>
    %2942 = arith.addf %2939, %2941 : vector<8x128xf32>
    %2943 = arith.mulf %2942, %1360 : vector<8x128xf32>
    %2944 = arith.addf %1240, %2943 : vector<8x128xf32>
    %c0_1482 = arith.constant 0 : index
    %c0_1483 = arith.constant 0 : index
    %c0_1484 = arith.constant 0 : index
    %c0_1485 = arith.constant 0 : index
    %2945 = vector.load %arg3[%c0_1482, %c0_1483, %c0_1484, %c0_1485] : memref<2x3x8x128xf32, #tpu.memory_space<vmem>>, vector<1x1x8x128xf32>
    %2946 = vector.shape_cast %2945 : vector<1x1x8x128xf32> to vector<8x128xf32>
    %2947 = vector.shape_cast %1845 : vector<8x128xf32> to vector<1x1x8x128xf32>
    tpu.vector_store %arg3[%c0_1482, %c0_1483, %c0_1484, %c0_1485], %2947 {strides = array<i32>} : memref<2x3x8x128xf32, #tpu.memory_space<vmem>>, vector<1x1x8x128xf32>,
    %c0_1486 = arith.constant 0 : index
    %c1_1487 = arith.constant 1 : index
    %c0_1488 = arith.constant 0 : index
    %c0_1489 = arith.constant 0 : index
    %2948 = vector.load %arg3[%c0_1486, %c1_1487, %c0_1488, %c0_1489] : memref<2x3x8x128xf32, #tpu.memory_space<vmem>>, vector<1x1x8x128xf32>
    %2949 = vector.shape_cast %2948 : vector<1x1x8x128xf32> to vector<8x128xf32>
    %2950 = vector.shape_cast %2373 : vector<8x128xf32> to vector<1x1x8x128xf32>
    tpu.vector_store %arg3[%c0_1486, %c1_1487, %c0_1488, %c0_1489], %2950 {strides = array<i32>} : memref<2x3x8x128xf32, #tpu.memory_space<vmem>>, vector<1x1x8x128xf32>,
    %c0_1490 = arith.constant 0 : index
    %c2_1491 = arith.constant 2 : index
    %c0_1492 = arith.constant 0 : index
    %c0_1493 = arith.constant 0 : index
    %2951 = vector.load %arg3[%c0_1490, %c2_1491, %c0_1492, %c0_1493] : memref<2x3x8x128xf32, #tpu.memory_space<vmem>>, vector<1x1x8x128xf32>
    %2952 = vector.shape_cast %2951 : vector<1x1x8x128xf32> to vector<8x128xf32>
    %2953 = vector.shape_cast %2901 : vector<8x128xf32> to vector<1x1x8x128xf32>
    tpu.vector_store %arg3[%c0_1490, %c2_1491, %c0_1492, %c0_1493], %2953 {strides = array<i32>} : memref<2x3x8x128xf32, #tpu.memory_space<vmem>>, vector<1x1x8x128xf32>,
    %c1_1494 = arith.constant 1 : index
    %c0_1495 = arith.constant 0 : index
    %c0_1496 = arith.constant 0 : index
    %c0_1497 = arith.constant 0 : index
    %2954 = vector.load %arg3[%c1_1494, %c0_1495, %c0_1496, %c0_1497] : memref<2x3x8x128xf32, #tpu.memory_space<vmem>>, vector<1x1x8x128xf32>
    %2955 = vector.shape_cast %2954 : vector<1x1x8x128xf32> to vector<8x128xf32>
    %2956 = vector.shape_cast %1888 : vector<8x128xf32> to vector<1x1x8x128xf32>
    tpu.vector_store %arg3[%c1_1494, %c0_1495, %c0_1496, %c0_1497], %2956 {strides = array<i32>} : memref<2x3x8x128xf32, #tpu.memory_space<vmem>>, vector<1x1x8x128xf32>,
    %c1_1498 = arith.constant 1 : index
    %c1_1499 = arith.constant 1 : index
    %c0_1500 = arith.constant 0 : index
    %c0_1501 = arith.constant 0 : index
    %2957 = vector.load %arg3[%c1_1498, %c1_1499, %c0_1500, %c0_1501] : memref<2x3x8x128xf32, #tpu.memory_space<vmem>>, vector<1x1x8x128xf32>
    %2958 = vector.shape_cast %2957 : vector<1x1x8x128xf32> to vector<8x128xf32>
    %2959 = vector.shape_cast %2416 : vector<8x128xf32> to vector<1x1x8x128xf32>
    tpu.vector_store %arg3[%c1_1498, %c1_1499, %c0_1500, %c0_1501], %2959 {strides = array<i32>} : memref<2x3x8x128xf32, #tpu.memory_space<vmem>>, vector<1x1x8x128xf32>,
    %c1_1502 = arith.constant 1 : index
    %c2_1503 = arith.constant 2 : index
    %c0_1504 = arith.constant 0 : index
    %c0_1505 = arith.constant 0 : index
    %2960 = vector.load %arg3[%c1_1502, %c2_1503, %c0_1504, %c0_1505] : memref<2x3x8x128xf32, #tpu.memory_space<vmem>>, vector<1x1x8x128xf32>
    %2961 = vector.shape_cast %2960 : vector<1x1x8x128xf32> to vector<8x128xf32>
    %2962 = vector.shape_cast %2944 : vector<8x128xf32> to vector<1x1x8x128xf32>
    tpu.vector_store %arg3[%c1_1502, %c2_1503, %c0_1504, %c0_1505], %2962 {strides = array<i32>} : memref<2x3x8x128xf32, #tpu.memory_space<vmem>>, vector<1x1x8x128xf32>,
    return
  }
  func.func @transform_0(%arg0: i32) -> (i32, i32, i32, i32) {
    %c0_i32 = arith.constant 0 : i32
    %c0_i32_0 = arith.constant 0 : i32
    %c0_i32_1 = arith.constant 0 : i32
    %c0_i32_2 = arith.constant 0 : i32
    return %c0_i32, %c0_i32_0, %arg0, %c0_i32_1 : i32, i32, i32, i32
  }
  func.func @transform_1(%arg0: i32) -> (i32, i32, i32, i32) {
    %c0_i32 = arith.constant 0 : i32
    %c0_i32_0 = arith.constant 0 : i32
    %c0_i32_1 = arith.constant 0 : i32
    %c0_i32_2 = arith.constant 0 : i32
    return %c0_i32, %c0_i32_0, %arg0, %c0_i32_1 : i32, i32, i32, i32
  }
  func.func @transform_2(%arg0: i32) -> (i32, i32, i32, i32) {
    %c0_i32 = arith.constant 0 : i32
    %c0_i32_0 = arith.constant 0 : i32
    %c0_i32_1 = arith.constant 0 : i32
    %c0_i32_2 = arith.constant 0 : i32
    return %c0_i32, %c0_i32_0, %arg0, %c0_i32_1 : i32, i32, i32, i32
  }
}

</mosaic_0001>

<llo_original>
// kernel: tpu_custom_call.1
$region0: #{tpu_custom_call.1}
  #allocation0 [shape = 'u32[]', space=smem, size = 0x4, offset = 0x4, fixed_abs, tag = 'smem constant byte address 0x4 - core index']
  #allocation1 [shape = 'u32[144,128]{1,0:T(1,128)}', space=vmem, size = 0x12000, scoped, tag = 'internal scratch']
  #allocation2 [shape = 'f32[3,3,8,128]{3,2,1,0:T(8,128)}', space=vmem, size = 0x9000, scoped, tag = 'scratch operand']
  #allocation3 [shape = 'f32[3,3,8,128]{3,2,1,0:T(8,128)}', space=vmem, size = 0x9000, scoped, tag = 'scratch operand']
  #allocation4 [shape = 'f32[5,5,8,128]{3,2,1,0:T(8,128)}', space=vmem, size = 0x19000, scoped, tag = 'scratch operand']
  #allocation5 [shape = 'f32[5,5,8,128]{3,2,1,0:T(8,128)}', space=vmem, size = 0x19000, scoped, tag = 'scratch operand']
  %s0 = inlined_call_operand.hbm [shape: f32[2,3,64,128], index: 0, kind: input, shape index: {}]
  %s1 = inlined_call_operand.hbm [shape: f32[3,2,64,128], index: 1, kind: input, shape index: {}]
  %s2 = inlined_call_operand.hbm [shape: f32[2,3,64,128], index: 2, kind: output, shape index: {}]
  %s3 = sld [smem:[#allocation0]]
  $region49: #{tpu_custom_call.1} parent=0
    _
  %s5 = ssub.s32 1, %s3
  %s6 = scalar_select 0, %s5, %s3
  $region1: #{tpu_custom_call.1} parent=0
    #allocation6 [shape = 'u8[49152]{0}', space=vmem, size = 0xc000, scoped, tag = 'input window, operand 0']
    #allocation7 [shape = 's32[2]{0}', space=sflag, size = 0x8, scoped, tag = 'scoped memory for tpu_custom_call.1']
    #allocation8 [shape = 's32[2]{0}', space=sflag, size = 0x8, scoped, tag = 'scoped memory for tpu_custom_call.1']
    #allocation9 [shape = 'u8[49152]{0}', space=vmem, size = 0xc000, scoped, tag = 'input window, operand 1']
    #allocation10 [shape = 's32[2]{0}', space=sflag, size = 0x8, scoped, tag = 'scoped memory for tpu_custom_call.1']
    #allocation11 [shape = 'u8[49152]{0}', space=vmem, size = 0xc000, scoped, tag = 'output window, operand 0']
    %7 = vsyncpa [#allocation7], 0
    %s8 = scalar_lea.sflag [#allocation7], 1
    %9 = vsyncpa %s8, 0
    %10 = vsyncpa [#allocation10], 0
    %s11 = scalar_lea.sflag [#allocation10], 1
    %12 = vsyncpa %s11, 0
    %13 = vsyncpa [#allocation8], 0
    %s14 = scalar_lea.sflag [#allocation8], 1
    %15 = vsyncpa %s14, 0
    loop: start=0, step=1, limit=10
    $region2: #{tpu_custom_call.1} parent=1 // loop_pre_header
      _
    $region3: #{tpu_custom_call.1} parent=1 // loop_header
      %s17 = sphi 0, %s21
      %p18 = scmp.ge.s32.totalorder %s17, 10
      %s27 = sphi 0, %s29
      %s30 = sphi 0, %s27
      %s31 = sphi 0, %s30
      %s47 = sphi 0, %s31
      %s53 = sphi 0, %s55
      %s56 = sphi 0, %s53
      %s57 = sphi 0, %s56
      %s73 = sphi 0, %s57
      %s79 = sphi 0, %s81
      %s82 = sphi 0, %s79
      %s83 = sphi 0, %s82
      %s99 = sphi 0, %s83
    $region4: #{tpu_custom_call.1} parent=1 // loop_header_branch
      %20 = sbr.rel (%p18) target = $region8
    $region5: #{tpu_custom_call.1} parent=1 // loop_body
      %s22 = ssub.s32 %s17, 1
      %s23 = ssub.s32 %s17, 2
      %s24 = sadd.s32 %s17, 1
      %s25 = ssub.s32 %s17, %s24
      %p26 = scmp.eq.s32.totalorder %s25, 0
      %s28 = sadd.s32 %s27, 1
      %s29 = scalar_select %p26, %s27, %s28
      %p32 = pneg %p26
      %p33 = scmp.eq.s32.totalorder %s17, 7
      %p34 = por %p32, %p33
      %p35 = scmp.ne.s32.totalorder %s27, %s30
      %p36 = scmp.eq.s32.totalorder %s17, 0
      %p37 = por %p35, %p36
      %p38 = scmp.ne.s32.totalorder %s27, %s30
      %p39 = scmp.eq.s32.totalorder %s22, 7
      %p40 = por %p38, %p39
      %p41 = scmp.ne.s32.totalorder %s30, %s31
      %p42 = scmp.eq.s32.totalorder %s22, 0
      %p43 = por %p41, %p42
      %p44 = scmp.ne.s32.totalorder %s30, %s31
      %p45 = scmp.eq.s32.totalorder %s23, 7
      %p46 = por %p44, %p45
      %p48 = scmp.ne.s32.totalorder %s31, %s47
      %p49 = scmp.eq.s32.totalorder %s23, 0
      %p50 = por %p48, %p49
      %s51 = ssub.s32 %s17, %s24
      %p52 = scmp.eq.s32.totalorder %s51, 0
      %s54 = sadd.s32 %s53, 1
      %s55 = scalar_select %p52, %s53, %s54
      %p58 = pneg %p52
      %p59 = scmp.eq.s32.totalorder %s17, 7
      %p60 = por %p58, %p59
      %p61 = scmp.ne.s32.totalorder %s53, %s56
      %p62 = scmp.eq.s32.totalorder %s17, 0
      %p63 = por %p61, %p62
      %p64 = scmp.ne.s32.totalorder %s53, %s56
      %p65 = scmp.eq.s32.totalorder %s22, 7
      %p66 = por %p64, %p65
      %p67 = scmp.ne.s32.totalorder %s56, %s57
      %p68 = scmp.eq.s32.totalorder %s22, 0
      %p69 = por %p67, %p68
      %p70 = scmp.ne.s32.totalorder %s56, %s57
      %p71 = scmp.eq.s32.totalorder %s23, 7
      %p72 = por %p70, %p71
      %p74 = scmp.ne.s32.totalorder %s57, %s73
      %p75 = scmp.eq.s32.totalorder %s23, 0
      %p76 = por %p74, %p75
      %s77 = ssub.s32 %s17, %s24
      %p78 = scmp.eq.s32.totalorder %s77, 0
      %s80 = sadd.s32 %s79, 1
      %s81 = scalar_select %p78, %s79, %s80
      %p84 = pneg %p78
      %p85 = scmp.eq.s32.totalorder %s17, 7
      %p86 = por %p84, %p85
      %p87 = scmp.ne.s32.totalorder %s79, %s82
      %p88 = scmp.eq.s32.totalorder %s17, 0
      %p89 = por %p87, %p88
      %p90 = scmp.ne.s32.totalorder %s79, %s82
      %p91 = scmp.eq.s32.totalorder %s22, 7
      %p92 = por %p90, %p91
      %p93 = scmp.ne.s32.totalorder %s82, %s83
      %p94 = scmp.eq.s32.totalorder %s22, 0
      %p95 = por %p93, %p94
      %p96 = scmp.ne.s32.totalorder %s82, %s83
      %p97 = scmp.eq.s32.totalorder %s23, 7
      %p98 = por %p96, %p97
      %p100 = scmp.ne.s32.totalorder %s83, %s99
      %p101 = scmp.eq.s32.totalorder %s23, 0
      %p102 = por %p100, %p101
      %p103 = scmp.le.s32.totalorder 1, %s17
      %p104 = scmp.lt.s32.totalorder %s17, 9
      %p105 = pnand %p103, %p104
      %p106 = pneg %p105
      // Predicated region
      $region9: #{tpu_custom_call.1} parent=5 // pred_check
        _
      $region10: #{tpu_custom_call.1} parent=5 // pred_check_branch
        %108 = sbr.rel (%p105) target = $region12
      $region11: #{tpu_custom_call.1} parent=5 // pred_region
        %s109 = ssub.s32 %s17, 1
      $region12: #{tpu_custom_call.1} parent=5 // pred_fallthru
        _
      %p110 = scmp.lt.s32.totalorder %s17, 8
      // Predicated region
      $region13: #{tpu_custom_call.1} parent=5 // pred_check
        %p111 = pneg %p110
      $region14: #{tpu_custom_call.1} parent=5 // pred_check_branch
        %113 = sbr.rel (%p111) target = $region16
      $region15: #{tpu_custom_call.1} parent=5 // pred_region
        // Predicated region
        $region17: #{tpu_custom_call.1} parent=15 // pred_check
          %p114 = pneg %p37
        $region18: #{tpu_custom_call.1} parent=15 // pred_check_branch
          %116 = sbr.rel (%p114) target = $region20
        $region19: #{tpu_custom_call.1} parent=15 // pred_region
          %s117 = sand.u32 %s27, 1
          %s118 = scalar_lea.sflag [#allocation7], %s117
          %s119 = sand.u32 %s27, 1
          %s120 = smul.addr %s119, 48
          %s121 = scalar_lea.vmem [#allocation6], %s120
          %s123 = ssub.s32 768, 768
          %124 = vsyncadd %s118, %s123
          %s125 = smul.addr %s17, 128
          %s126 = scalar_lea.hbm %s0, %s125
          %s127 = sshll.u32 %s121, 4
          %s128 = int_to_ptr.vmem [resolvable:$true] %s127
          %133 = dma.hbm_to_vmem [thread:$0]  %s126, 768, %s128, %s118, 1024, 128, 8
        $region20: #{tpu_custom_call.1} parent=15 // pred_fallthru
          _
        // Predicated region
        $region21: #{tpu_custom_call.1} parent=15 // pred_check
          %p134 = pneg %p63
        $region22: #{tpu_custom_call.1} parent=15 // pred_check_branch
          %136 = sbr.rel (%p134) target = $region24
        $region23: #{tpu_custom_call.1} parent=15 // pred_region
          %s137 = sand.u32 %s53, 1
          %s138 = scalar_lea.sflag [#allocation10], %s137
          %s139 = sand.u32 %s53, 1
          %s140 = smul.addr %s139, 48
          %s141 = scalar_lea.vmem [#allocation9], %s140
          %s143 = ssub.s32 768, 768
          %144 = vsyncadd %s138, %s143
          %s145 = smul.addr %s17, 128
          %s146 = scalar_lea.hbm %s1, %s145
          %s147 = sshll.u32 %s141, 4
          %s148 = int_to_ptr.vmem [resolvable:$true] %s147
          %153 = dma.hbm_to_vmem [thread:$0]  %s146, 768, %s148, %s138, 1024, 128, 8
        $region24: #{tpu_custom_call.1} parent=15 // pred_fallthru
          _
      $region16: #{tpu_custom_call.1} parent=5 // pred_fallthru
        _
      %p154 = scmp.le.s32.totalorder 1, %s17
      %p155 = scmp.lt.s32.totalorder %s17, 9
      %p156 = pnand %p154, %p155
      %p157 = pneg %p156
      // Predicated region
      $region25: #{tpu_custom_call.1} parent=5 // pred_check
        _
      $region26: #{tpu_custom_call.1} parent=5 // pred_check_branch
        %159 = sbr.rel (%p156) target = $region28
      $region27: #{tpu_custom_call.1} parent=5 // pred_region
        %s160 = ssub.s32 %s17, 1
        %s161 = sand.u32 %s30, 1
        %s162 = scalar_lea.sflag [#allocation7], %s161
        %s163 = sand.u32 %s30, 1
        %s164 = smul.addr %s163, 48
        %s165 = scalar_lea.vmem [#allocation6], %s164
        // Predicated region
        $region29: #{tpu_custom_call.1} parent=27 // pred_check
          %p166 = pneg %p43
        $region30: #{tpu_custom_call.1} parent=27 // pred_check_branch
          %168 = sbr.rel (%p166) target = $region32
        $region31: #{tpu_custom_call.1} parent=27 // pred_region
          %169 = dma.done %s162, 768
        $region32: #{tpu_custom_call.1} parent=27 // pred_fallthru
          _
        %s170 = sand.u32 %s56, 1
        %s171 = scalar_lea.sflag [#allocation10], %s170
        %s172 = sand.u32 %s56, 1
        %s173 = smul.addr %s172, 48
        %s174 = scalar_lea.vmem [#allocation9], %s173
        // Predicated region
        $region33: #{tpu_custom_call.1} parent=27 // pred_check
          %p175 = pneg %p69
        $region34: #{tpu_custom_call.1} parent=27 // pred_check_branch
          %177 = sbr.rel (%p175) target = $region36
        $region35: #{tpu_custom_call.1} parent=27 // pred_region
          %178 = dma.done %s171, 768
        $region36: #{tpu_custom_call.1} parent=27 // pred_fallthru
          _
        %s179 = sand.u32 %s30, 1
        %s180 = scalar_lea.sflag [#allocation7], %s179
        %s181 = sand.u32 %s30, 1
        %s182 = smul.addr %s181, 48
        %s183 = scalar_lea.vmem [#allocation6], %s182
        %p184 = pneg %p43
        %p185 = pneg %p40
        %s186 = sand.u32 %s56, 1
        %s187 = scalar_lea.sflag [#allocation10], %s186
        %s188 = sand.u32 %s56, 1
        %s189 = smul.addr %s188, 48
        %s190 = scalar_lea.vmem [#allocation9], %s189
        %p191 = pneg %p69
        %p192 = pneg %p66
        %p193 = pneg %p95
        %p194 = pneg %p92
        %s195 = sand.u32 %s82, 1
        %s196 = scalar_lea.sflag [#allocation8], %s195
        %s197 = sand.u32 %s82, 1
        %s198 = smul.addr %s197, 48
        %s199 = scalar_lea.vmem [#allocation11], %s198
        %v200 = vld [vmem:[%s165] sm:$0xff]
        %v201 = vld [vmem:[%s165 + $0x8] sm:$0xff]
        %v202 = vld [vmem:[%s165 + $0x10] sm:$0xff]
        %v203 = vld [vmem:[%s165 + $0x18] sm:$0xff]
        %v204 = vld [vmem:[%s165 + $0x20] sm:$0xff]
        %v205 = vld [vmem:[%s165 + $0x28] sm:$0xff]
        %v206 = vld [vmem:[%s174] sm:$0xff]
        %s207 = scalar_lea.vmem %s174, 8 [#allocation9]
        %v208 = vld [vmem:[%s207] sm:$0xff]
        %v209 = vmul.f32 %v200, %v206
        %v210 = vmul.f32 %v201, %v206
        %v211 = vmul.f32 %v202, %v206
        %v212 = vmul.f32 %v203, %v208
        %v213 = vmul.f32 %v204, %v208
        %v214 = vmul.f32 %v205, %v208
        %v215 = vmul.f32 %v200, -0.19375727
        %v216 = vmul.f32 %v200, 0.021629587
        %v217 = vmul.f32 %v203, -0.11623439
        %v218 = vadd.f32 %v215, %v217
        %v219 = vmul.f32 %v203, 0.25295752
        %v220 = vadd.f32 %v216, %v219
        %221 = vst [vmem:[#allocation2] sm:$0xff] %v218
        %222 = vst [vmem:[#allocation3] sm:$0xff] %v220
        %v223 = vmul.f32 %v201, -0.4580974
        %v224 = vmul.f32 %v201, -0.088553905
        %v225 = vmul.f32 %v204, -0.28849193
        %v226 = vadd.f32 %v223, %v225
        %v227 = vmul.f32 %v204, -0.22330709
        %v228 = vadd.f32 %v224, %v227
        %s229 = scalar_lea.vmem [#allocation2], 8
        %230 = vst [vmem:[%s229] sm:$0xff] %v226
        %s231 = scalar_lea.vmem [#allocation3], 8
        %232 = vst [vmem:[%s231] sm:$0xff] %v228
        %v233 = vmul.f32 %v202, 0.19169304
        %v234 = vmul.f32 %v202, -0.2643335
        %v235 = vmul.f32 %v205, -0.21456534
        %v236 = vadd.f32 %v233, %v235
        %v237 = vmul.f32 %v205, -0.59428346
        %v238 = vadd.f32 %v234, %v237
        %s239 = scalar_lea.vmem [#allocation2], 16
        %240 = vst [vmem:[%s239] sm:$0xff] %v236
        %s241 = scalar_lea.vmem [#allocation3], 16
        %242 = vst [vmem:[%s241] sm:$0xff] %v238
        %v243 = vmul.f32 %v200, -0.86826193
        %v244 = vmul.f32 %v200, -0.197092
        %v245 = vmul.f32 %v203, 0.62456083
        %v246 = vadd.f32 %v243, %v245
        %v247 = vmul.f32 %v203, -0.33305442
        %v248 = vadd.f32 %v244, %v247
        %s249 = scalar_lea.vmem [#allocation2], 24
        %250 = vst [vmem:[%s249] sm:$0xff] %v246
        %s251 = scalar_lea.vmem [#allocation3], 24
        %252 = vst [vmem:[%s251] sm:$0xff] %v248
        %v253 = vmul.f32 %v201, -0.38424605
        %v254 = vmul.f32 %v201, 0.70076764
        %v255 = vmul.f32 %v204, -0.07835548
        %v256 = vadd.f32 %v253, %v255
        %v257 = vmul.f32 %v204, 0.3514392
        %v258 = vadd.f32 %v254, %v257
        %s259 = scalar_lea.vmem [#allocation2], 32
        %260 = vst [vmem:[%s259] sm:$0xff] %v256
        %s261 = scalar_lea.vmem [#allocation3], 32
        %262 = vst [vmem:[%s261] sm:$0xff] %v258
        %v263 = vmul.f32 %v202, -0.11398246
        %v264 = vmul.f32 %v202, 0.43179503
        %v265 = vmul.f32 %v205, -0.16879982
        %v266 = vadd.f32 %v263, %v265
        %v267 = vmul.f32 %v205, 0.20991006
        %v268 = vadd.f32 %v264, %v267
        %s269 = scalar_lea.vmem [#allocation2], 40
        %270 = vst [vmem:[%s269] sm:$0xff] %v266
        %s271 = scalar_lea.vmem [#allocation3], 40
        %272 = vst [vmem:[%s271] sm:$0xff] %v268
        %v273 = vmul.f32 %v200, 0.25349438
        %v274 = vmul.f32 %v200, 0.17890835
        %v275 = vmul.f32 %v203, 0.35697454
        %v276 = vadd.f32 %v273, %v275
        %v277 = vmul.f32 %v203, -0.031570353
        %v278 = vadd.f32 %v274, %v277
        %s279 = scalar_lea.vmem [#allocation2], 48
        %280 = vst [vmem:[%s279] sm:$0xff] %v276
        %s281 = scalar_lea.vmem [#allocation3], 48
        %282 = vst [vmem:[%s281] sm:$0xff] %v278
        %v283 = vmul.f32 %v201, 0.04319895
        %v284 = vmul.f32 %v201, -0.03614077
        %v285 = vmul.f32 %v204, -0.22765724
        %v286 = vadd.f32 %v283, %v285
        %v287 = vmul.f32 %v204, -0.07911845
        %v288 = vadd.f32 %v284, %v287
        %s289 = scalar_lea.vmem [#allocation2], 56
        %290 = vst [vmem:[%s289] sm:$0xff] %v286
        %s291 = scalar_lea.vmem [#allocation3], 56
        %292 = vst [vmem:[%s291] sm:$0xff] %v288
        %v293 = vmul.f32 %v202, -0.062337156
        %v294 = vmul.f32 %v202, 0.10543869
        %v295 = vmul.f32 %v205, -0.14978515
        %v296 = vadd.f32 %v293, %v295
        %v297 = vmul.f32 %v205, -0.24348578
        %v298 = vadd.f32 %v294, %v297
        %s299 = scalar_lea.vmem [#allocation2], 64
        %300 = vst [vmem:[%s299] sm:$0xff] %v296
        %s301 = scalar_lea.vmem [#allocation3], 64
        %302 = vst [vmem:[%s301] sm:$0xff] %v298
        %s303 = scalar_lea.vmem %s174, 16 [#allocation9]
        %v304 = vld [vmem:[%s303] sm:$0xff]
        %s305 = scalar_lea.vmem %s174, 24 [#allocation9]
        %v306 = vld [vmem:[%s305] sm:$0xff]
        %v307 = vld [vmem:[#allocation2] sm:$0xff]
        %v308 = vld [vmem:[#allocation3] sm:$0xff]
        %v309 = vld [vmem:[%s249] sm:$0xff]
        %v310 = vld [vmem:[%s251] sm:$0xff]
        %v311 = vld [vmem:[%s279] sm:$0xff]
        %v312 = vld [vmem:[%s281] sm:$0xff]
        %v313 = vmul.f32 %v307, %v307
        %v314 = vmul.f32 %v308, %v308
        %v315 = vsub.f32 %v313, %v314
        %v316 = vmul.f32 %v307, %v308
        %v317 = vadd.f32 %v316, %v316
        %v318 = vmul.f32 %v307, %v309
        %v319 = vmul.f32 %v308, %v310
        %v320 = vsub.f32 %v318, %v319
        %v321 = vmul.f32 %v307, %v310
        %v322 = vmul.f32 %v308, %v309
        %v323 = vadd.f32 %v321, %v322
        %v324 = vmul.f32 %v307, %v311
        %v325 = vmul.f32 %v308, %v312
        %v326 = vsub.f32 %v324, %v325
        %v327 = vmul.f32 %v307, %v312
        %v328 = vmul.f32 %v308, %v311
        %v329 = vadd.f32 %v327, %v328
        %v330 = vadd.f32 %v320, %v320
        %v331 = vadd.f32 %v323, %v323
        %v332 = vmul.f32 %v309, %v309
        %v333 = vmul.f32 %v310, %v310
        %v334 = vsub.f32 %v332, %v333
        %v335 = vmul.f32 %v309, %v310
        %v336 = vadd.f32 %v335, %v335
        %v337 = vadd.f32 %v326, %v334
        %v338 = vadd.f32 %v329, %v336
        %v339 = vmul.f32 %v309, %v311
        %v340 = vmul.f32 %v310, %v312
        %v341 = vsub.f32 %v339, %v340
        %v342 = vmul.f32 %v309, %v312
        %v343 = vmul.f32 %v310, %v311
        %v344 = vadd.f32 %v342, %v343
        %v345 = vadd.f32 %v337, %v326
        %v346 = vadd.f32 %v338, %v329
        %v347 = vadd.f32 %v341, %v341
        %v348 = vadd.f32 %v344, %v344
        %v349 = vmul.f32 %v311, %v311
        %v350 = vmul.f32 %v312, %v312
        %v351 = vsub.f32 %v349, %v350
        %v352 = vmul.f32 %v311, %v312
        %v353 = vadd.f32 %v352, %v352
        %354 = vst [vmem:[#allocation4] sm:$0xff] %v315
        %355 = vst [vmem:[#allocation5] sm:$0xff] %v317
        %s356 = scalar_lea.vmem [#allocation4], 40
        %357 = vst [vmem:[%s356] sm:$0xff] %v330
        %s358 = scalar_lea.vmem [#allocation5], 40
        %359 = vst [vmem:[%s358] sm:$0xff] %v331
        %s360 = scalar_lea.vmem [#allocation4], 80
        %361 = vst [vmem:[%s360] sm:$0xff] %v345
        %s362 = scalar_lea.vmem [#allocation5], 80
        %363 = vst [vmem:[%s362] sm:$0xff] %v346
        %s364 = scalar_lea.vmem [#allocation4], 120
        %365 = vst [vmem:[%s364] sm:$0xff] %v347
        %s366 = scalar_lea.vmem [#allocation5], 120
        %367 = vst [vmem:[%s366] sm:$0xff] %v348
        %s368 = scalar_lea.vmem [#allocation4], 160
        %369 = vst [vmem:[%s368] sm:$0xff] %v351
        %s370 = scalar_lea.vmem [#allocation5], 160
        %371 = vst [vmem:[%s370] sm:$0xff] %v353
        %v372 = vld [vmem:[%s229] sm:$0xff]
        %v373 = vld [vmem:[%s231] sm:$0xff]
        %v374 = vld [vmem:[%s259] sm:$0xff]
        %v375 = vld [vmem:[%s261] sm:$0xff]
        %v376 = vld [vmem:[%s289] sm:$0xff]
        %v377 = vld [vmem:[%s291] sm:$0xff]
        %v378 = vld [vmem:[#allocation2] sm:$0xff]
        %v379 = vld [vmem:[#allocation3] sm:$0xff]
        %v380 = vmul.f32 %v378, %v372
        %v381 = vmul.f32 %v379, %v373
        %v382 = vsub.f32 %v380, %v381
        %v383 = vmul.f32 %v378, %v373
        %v384 = vmul.f32 %v379, %v372
        %v385 = vadd.f32 %v383, %v384
        %v386 = vmul.f32 %v378, %v374
        %v387 = vmul.f32 %v379, %v375
        %v388 = vsub.f32 %v386, %v387
        %v389 = vmul.f32 %v378, %v375
        %v390 = vmul.f32 %v379, %v374
        %v391 = vadd.f32 %v389, %v390
        %v392 = vmul.f32 %v378, %v376
        %v393 = vmul.f32 %v379, %v377
        %v394 = vsub.f32 %v392, %v393
        %v395 = vmul.f32 %v378, %v377
        %v396 = vmul.f32 %v379, %v376
        %v397 = vadd.f32 %v395, %v396
        %v398 = vld [vmem:[%s249] sm:$0xff]
        %v399 = vld [vmem:[%s251] sm:$0xff]
        %v400 = vmul.f32 %v398, %v372
        %v401 = vmul.f32 %v399, %v373
        %v402 = vsub.f32 %v400, %v401
        %v403 = vmul.f32 %v398, %v373
        %v404 = vmul.f32 %v399, %v372
        %v405 = vadd.f32 %v403, %v404
        %v406 = vadd.f32 %v388, %v402
        %v407 = vadd.f32 %v391, %v405
        %v408 = vmul.f32 %v398, %v374
        %v409 = vmul.f32 %v399, %v375
        %v410 = vsub.f32 %v408, %v409
        %v411 = vmul.f32 %v398, %v375
        %v412 = vmul.f32 %v399, %v374
        %v413 = vadd.f32 %v411, %v412
        %v414 = vadd.f32 %v394, %v410
        %v415 = vadd.f32 %v397, %v413
        %v416 = vmul.f32 %v398, %v376
        %v417 = vmul.f32 %v399, %v377
        %v418 = vsub.f32 %v416, %v417
        %v419 = vmul.f32 %v398, %v377
        %v420 = vmul.f32 %v399, %v376
        %v421 = vadd.f32 %v419, %v420
        %v422 = vld [vmem:[%s279] sm:$0xff]
        %v423 = vld [vmem:[%s281] sm:$0xff]
        %v424 = vmul.f32 %v422, %v372
        %v425 = vmul.f32 %v423, %v373
        %v426 = vsub.f32 %v424, %v425
        %v427 = vmul.f32 %v422, %v373
        %v428 = vmul.f32 %v423, %v372
        %v429 = vadd.f32 %v427, %v428
        %v430 = vadd.f32 %v414, %v426
        %v431 = vadd.f32 %v415, %v429
        %v432 = vmul.f32 %v422, %v374
        %v433 = vmul.f32 %v423, %v375
        %v434 = vsub.f32 %v432, %v433
        %v435 = vmul.f32 %v422, %v375
        %v436 = vmul.f32 %v423, %v374
        %v437 = vadd.f32 %v435, %v436
        %v438 = vadd.f32 %v418, %v434
        %v439 = vadd.f32 %v421, %v437
        %v440 = vmul.f32 %v422, %v376
        %v441 = vmul.f32 %v423, %v377
        %v442 = vsub.f32 %v440, %v441
        %v443 = vmul.f32 %v422, %v377
        %v444 = vmul.f32 %v423, %v376
        %v445 = vadd.f32 %v443, %v444
        %v446 = vadd.f32 %v382, %v382
        %v447 = vadd.f32 %v385, %v385
        %v448 = vadd.f32 %v406, %v402
        %v449 = vadd.f32 %v407, %v405
        %v450 = vadd.f32 %v430, %v426
        %v451 = vadd.f32 %v431, %v429
        %v452 = vadd.f32 %v448, %v388
        %v453 = vadd.f32 %v449, %v391
        %v454 = vadd.f32 %v450, %v410
        %v455 = vadd.f32 %v451, %v413
        %v456 = vadd.f32 %v438, %v434
        %v457 = vadd.f32 %v439, %v437
        %v458 = vadd.f32 %v454, %v394
        %v459 = vadd.f32 %v455, %v397
        %v460 = vadd.f32 %v456, %v418
        %v461 = vadd.f32 %v457, %v421
        %v462 = vadd.f32 %v442, %v442
        %v463 = vadd.f32 %v445, %v445
        %s464 = scalar_lea.vmem [#allocation4], 8
        %465 = vst [vmem:[%s464] sm:$0xff] %v446
        %s466 = scalar_lea.vmem [#allocation5], 8
        %467 = vst [vmem:[%s466] sm:$0xff] %v447
        %s468 = scalar_lea.vmem [#allocation4], 48
        %469 = vst [vmem:[%s468] sm:$0xff] %v452
        %s470 = scalar_lea.vmem [#allocation5], 48
        %471 = vst [vmem:[%s470] sm:$0xff] %v453
        %s472 = scalar_lea.vmem [#allocation4], 88
        %473 = vst [vmem:[%s472] sm:$0xff] %v458
        %s474 = scalar_lea.vmem [#allocation5], 88
        %475 = vst [vmem:[%s474] sm:$0xff] %v459
        %s476 = scalar_lea.vmem [#allocation4], 128
        %477 = vst [vmem:[%s476] sm:$0xff] %v460
        %s478 = scalar_lea.vmem [#allocation5], 128
        %479 = vst [vmem:[%s478] sm:$0xff] %v461
        %s480 = scalar_lea.vmem [#allocation4], 168
        %481 = vst [vmem:[%s480] sm:$0xff] %v462
        %s482 = scalar_lea.vmem [#allocation5], 168
        %483 = vst [vmem:[%s482] sm:$0xff] %v463
        %v484 = vmul.f32 %v446, -0.079417214
        %v485 = vmul.f32 %v447, 0.008700888
        %v486 = vadd.f32 %v484, %v485
        %v487 = vmul.f32 %v452, -0.21669705
        %v488 = vadd.f32 %v486, %v487
        %v489 = vmul.f32 %v453, 0.07646052
        %v490 = vadd.f32 %v488, %v489
        %v491 = vmul.f32 %v458, -0.21647929
        %v492 = vadd.f32 %v490, %v491
        %v493 = vmul.f32 %v459, -0.020798517
        %v494 = vadd.f32 %v492, %v493
        %v495 = vmul.f32 %v460, -0.276051
        %v496 = vadd.f32 %v494, %v495
        %v497 = vmul.f32 %v461, 0.09562119
        %v498 = vadd.f32 %v496, %v497
        %v499 = vmul.f32 %v462, 0.3801739
        %v500 = vadd.f32 %v498, %v499
        %v501 = vmul.f32 %v463, 0.1238608
        %v502 = vadd.f32 %v500, %v501
        %v503 = vmul.f32 %v502, %v304
        %v504 = vadd.f32 %v209, %v503
        %v505 = vmul.f32 %v446, -0.10975255
        %v506 = vmul.f32 %v447, 0.053820968
        %v507 = vadd.f32 %v505, %v506
        %v508 = vmul.f32 %v452, 0.050344296
        %v509 = vadd.f32 %v507, %v508
        %v510 = vmul.f32 %v453, 0.050666768
        %v511 = vadd.f32 %v509, %v510
        %v512 = vmul.f32 %v458, 0.23589437
        %v513 = vadd.f32 %v511, %v512
        %v514 = vmul.f32 %v459, -0.14315784
        %v515 = vadd.f32 %v513, %v514
        %v516 = vmul.f32 %v460, 0.19886027
        %v517 = vadd.f32 %v515, %v516
        %v518 = vmul.f32 %v461, -0.0044744005
        %v519 = vadd.f32 %v517, %v518
        %v520 = vmul.f32 %v462, -0.26972923
        %v521 = vadd.f32 %v519, %v520
        %v522 = vmul.f32 %v463, -0.02484279
        %v523 = vadd.f32 %v521, %v522
        %v524 = vmul.f32 %v523, %v306
        %v525 = vadd.f32 %v212, %v524
        %v526 = vld [vmem:[%s239] sm:$0xff]
        %v527 = vld [vmem:[%s241] sm:$0xff]
        %v528 = vld [vmem:[%s269] sm:$0xff]
        %v529 = vld [vmem:[%s271] sm:$0xff]
        %v530 = vld [vmem:[%s299] sm:$0xff]
        %v531 = vld [vmem:[%s301] sm:$0xff]
        %v532 = vld [vmem:[#allocation2] sm:$0xff]
        %v533 = vld [vmem:[#allocation3] sm:$0xff]
        %v534 = vmul.f32 %v532, %v526
        %v535 = vmul.f32 %v533, %v527
        %v536 = vsub.f32 %v534, %v535
        %v537 = vmul.f32 %v532, %v527
        %v538 = vmul.f32 %v533, %v526
        %v539 = vadd.f32 %v537, %v538
        %v540 = vmul.f32 %v532, %v528
        %v541 = vmul.f32 %v533, %v529
        %v542 = vsub.f32 %v540, %v541
        %v543 = vmul.f32 %v532, %v529
        %v544 = vmul.f32 %v533, %v528
        %v545 = vadd.f32 %v543, %v544
        %v546 = vmul.f32 %v532, %v530
        %v547 = vmul.f32 %v533, %v531
        %v548 = vsub.f32 %v546, %v547
        %v549 = vmul.f32 %v532, %v531
        %v550 = vmul.f32 %v533, %v530
        %v551 = vadd.f32 %v549, %v550
        %v552 = vld [vmem:[%s249] sm:$0xff]
        %v553 = vld [vmem:[%s251] sm:$0xff]
        %v554 = vmul.f32 %v552, %v526
        %v555 = vmul.f32 %v553, %v527
        %v556 = vsub.f32 %v554, %v555
        %v557 = vmul.f32 %v552, %v527
        %v558 = vmul.f32 %v553, %v526
        %v559 = vadd.f32 %v557, %v558
        %v560 = vadd.f32 %v542, %v556
        %v561 = vadd.f32 %v545, %v559
        %v562 = vmul.f32 %v552, %v528
        %v563 = vmul.f32 %v553, %v529
        %v564 = vsub.f32 %v562, %v563
        %v565 = vmul.f32 %v552, %v529
        %v566 = vmul.f32 %v553, %v528
        %v567 = vadd.f32 %v565, %v566
        %v568 = vadd.f32 %v548, %v564
        %v569 = vadd.f32 %v551, %v567
        %v570 = vmul.f32 %v552, %v530
        %v571 = vmul.f32 %v553, %v531
        %v572 = vsub.f32 %v570, %v571
        %v573 = vmul.f32 %v552, %v531
        %v574 = vmul.f32 %v553, %v530
        %v575 = vadd.f32 %v573, %v574
        %v576 = vld [vmem:[%s279] sm:$0xff]
        %v577 = vld [vmem:[%s281] sm:$0xff]
        %v578 = vmul.f32 %v576, %v526
        %v579 = vmul.f32 %v577, %v527
        %v580 = vsub.f32 %v578, %v579
        %v581 = vmul.f32 %v576, %v527
        %v582 = vmul.f32 %v577, %v526
        %v583 = vadd.f32 %v581, %v582
        %v584 = vadd.f32 %v568, %v580
        %v585 = vadd.f32 %v569, %v583
        %v586 = vmul.f32 %v576, %v528
        %v587 = vmul.f32 %v577, %v529
        %v588 = vsub.f32 %v586, %v587
        %v589 = vmul.f32 %v576, %v529
        %v590 = vmul.f32 %v577, %v528
        %v591 = vadd.f32 %v589, %v590
        %v592 = vadd.f32 %v572, %v588
        %v593 = vadd.f32 %v575, %v591
        %v594 = vmul.f32 %v576, %v530
        %v595 = vmul.f32 %v577, %v531
        %v596 = vsub.f32 %v594, %v595
        %v597 = vmul.f32 %v576, %v531
        %v598 = vmul.f32 %v577, %v530
        %v599 = vadd.f32 %v597, %v598
        %v600 = vld [vmem:[%s229] sm:$0xff]
        %v601 = vld [vmem:[%s231] sm:$0xff]
        %v602 = vld [vmem:[%s259] sm:$0xff]
        %v603 = vld [vmem:[%s261] sm:$0xff]
        %v604 = vld [vmem:[%s289] sm:$0xff]
        %v605 = vld [vmem:[%s291] sm:$0xff]
        %v606 = vmul.f32 %v600, %v600
        %v607 = vmul.f32 %v601, %v601
        %v608 = vsub.f32 %v606, %v607
        %v609 = vmul.f32 %v600, %v601
        %v610 = vadd.f32 %v609, %v609
        %v611 = vadd.f32 %v536, %v608
        %v612 = vadd.f32 %v539, %v610
        %v613 = vmul.f32 %v600, %v602
        %v614 = vmul.f32 %v601, %v603
        %v615 = vsub.f32 %v613, %v614
        %v616 = vmul.f32 %v600, %v603
        %v617 = vmul.f32 %v601, %v602
        %v618 = vadd.f32 %v616, %v617
        %v619 = vadd.f32 %v560, %v615
        %v620 = vadd.f32 %v561, %v618
        %v621 = vmul.f32 %v600, %v604
        %v622 = vmul.f32 %v601, %v605
        %v623 = vsub.f32 %v621, %v622
        %v624 = vmul.f32 %v600, %v605
        %v625 = vmul.f32 %v601, %v604
        %v626 = vadd.f32 %v624, %v625
        %v627 = vadd.f32 %v584, %v623
        %v628 = vadd.f32 %v585, %v626
        %v629 = vadd.f32 %v619, %v615
        %v630 = vadd.f32 %v620, %v618
        %v631 = vmul.f32 %v602, %v602
        %v632 = vmul.f32 %v603, %v603
        %v633 = vsub.f32 %v631, %v632
        %v634 = vmul.f32 %v602, %v603
        %v635 = vadd.f32 %v634, %v634
        %v636 = vadd.f32 %v627, %v633
        %v637 = vadd.f32 %v628, %v635
        %v638 = vmul.f32 %v602, %v604
        %v639 = vmul.f32 %v603, %v605
        %v640 = vsub.f32 %v638, %v639
        %v641 = vmul.f32 %v602, %v605
        %v642 = vmul.f32 %v603, %v604
        %v643 = vadd.f32 %v641, %v642
        %v644 = vadd.f32 %v592, %v640
        %v645 = vadd.f32 %v593, %v643
        %v646 = vadd.f32 %v636, %v623
        %v647 = vadd.f32 %v637, %v626
        %v648 = vadd.f32 %v644, %v640
        %v649 = vadd.f32 %v645, %v643
        %v650 = vmul.f32 %v604, %v604
        %v651 = vmul.f32 %v605, %v605
        %v652 = vsub.f32 %v650, %v651
        %v653 = vmul.f32 %v604, %v605
        %v654 = vadd.f32 %v653, %v653
        %v655 = vadd.f32 %v596, %v652
        %v656 = vadd.f32 %v599, %v654
        %v657 = vadd.f32 %v611, %v536
        %v658 = vadd.f32 %v612, %v539
        %v659 = vadd.f32 %v629, %v556
        %v660 = vadd.f32 %v630, %v559
        %v661 = vadd.f32 %v646, %v580
        %v662 = vadd.f32 %v647, %v583
        %v663 = vadd.f32 %v659, %v542
        %v664 = vadd.f32 %v660, %v545
        %v665 = vadd.f32 %v661, %v564
        %v666 = vadd.f32 %v662, %v567
        %v667 = vadd.f32 %v648, %v588
        %v668 = vadd.f32 %v649, %v591
        %v669 = vadd.f32 %v665, %v548
        %v670 = vadd.f32 %v666, %v551
        %v671 = vadd.f32 %v667, %v572
        %v672 = vadd.f32 %v668, %v575
        %v673 = vadd.f32 %v655, %v596
        %v674 = vadd.f32 %v656, %v599
        %s675 = scalar_lea.vmem [#allocation4], 16
        %676 = vst [vmem:[%s675] sm:$0xff] %v657
        %s677 = scalar_lea.vmem [#allocation5], 16
        %678 = vst [vmem:[%s677] sm:$0xff] %v658
        %s679 = scalar_lea.vmem [#allocation4], 56
        %680 = vst [vmem:[%s679] sm:$0xff] %v663
        %s681 = scalar_lea.vmem [#allocation5], 56
        %682 = vst [vmem:[%s681] sm:$0xff] %v664
        %s683 = scalar_lea.vmem [#allocation4], 96
        %684 = vst [vmem:[%s683] sm:$0xff] %v669
        %s685 = scalar_lea.vmem [#allocation5], 96
        %686 = vst [vmem:[%s685] sm:$0xff] %v670
        %s687 = scalar_lea.vmem [#allocation4], 136
        %688 = vst [vmem:[%s687] sm:$0xff] %v671
        %s689 = scalar_lea.vmem [#allocation5], 136
        %690 = vst [vmem:[%s689] sm:$0xff] %v672
        %s691 = scalar_lea.vmem [#allocation4], 176
        %692 = vst [vmem:[%s691] sm:$0xff] %v673
        %s693 = scalar_lea.vmem [#allocation5], 176
        %694 = vst [vmem:[%s693] sm:$0xff] %v674
        %v695 = vmul.f32 %v657, 0.29418504
        %v696 = vmul.f32 %v658, -0.009383267
        %v697 = vadd.f32 %v695, %v696
        %v698 = vmul.f32 %v663, 0.04141849
        %v699 = vadd.f32 %v697, %v698
        %v700 = vmul.f32 %v664, 0.302425
        %v701 = vadd.f32 %v699, %v700
        %v702 = vmul.f32 %v669, 0.13598312
        %v703 = vadd.f32 %v701, %v702
        %v704 = vmul.f32 %v670, -0.36229715
        %v705 = vadd.f32 %v703, %v704
        %v706 = vmul.f32 %v671, 0.16050743
        %v707 = vadd.f32 %v705, %v706
        %v708 = vmul.f32 %v672, 0.056373656
        %v709 = vadd.f32 %v707, %v708
        %v710 = vmul.f32 %v673, -0.035337064
        %v711 = vadd.f32 %v709, %v710
        %v712 = vmul.f32 %v674, -0.26457268
        %v713 = vadd.f32 %v711, %v712
        %v714 = vmul.f32 %v713, %v304
        %v715 = vadd.f32 %v210, %v714
        %v716 = vmul.f32 %v657, -0.22405508
        %v717 = vmul.f32 %v658, 0.0008933204
        %v718 = vadd.f32 %v716, %v717
        %v719 = vmul.f32 %v663, -0.42266735
        %v720 = vadd.f32 %v718, %v719
        %v721 = vmul.f32 %v664, -0.120717846
        %v722 = vadd.f32 %v720, %v721
        %v723 = vmul.f32 %v669, 0.19875173
        %v724 = vadd.f32 %v722, %v723
        %v725 = vmul.f32 %v670, -0.15596388
        %v726 = vadd.f32 %v724, %v725
        %v727 = vmul.f32 %v671, 0.17021655
        %v728 = vadd.f32 %v726, %v727
        %v729 = vmul.f32 %v672, 0.1061277
        %v730 = vadd.f32 %v728, %v729
        %v731 = vmul.f32 %v673, 0.034479316
        %v732 = vadd.f32 %v730, %v731
        %v733 = vmul.f32 %v674, -0.041786123
        %v734 = vadd.f32 %v732, %v733
        %v735 = vmul.f32 %v734, %v306
        %v736 = vadd.f32 %v213, %v735
        %v737 = vld [vmem:[%s239] sm:$0xff]
        %v738 = vld [vmem:[%s241] sm:$0xff]
        %v739 = vld [vmem:[%s269] sm:$0xff]
        %v740 = vld [vmem:[%s271] sm:$0xff]
        %v741 = vld [vmem:[%s299] sm:$0xff]
        %v742 = vld [vmem:[%s301] sm:$0xff]
        %v743 = vld [vmem:[%s229] sm:$0xff]
        %v744 = vld [vmem:[%s231] sm:$0xff]
        %v745 = vmul.f32 %v743, %v737
        %v746 = vmul.f32 %v744, %v738
        %v747 = vsub.f32 %v745, %v746
        %v748 = vmul.f32 %v743, %v738
        %v749 = vmul.f32 %v744, %v737
        %v750 = vadd.f32 %v748, %v749
        %v751 = vmul.f32 %v743, %v739
        %v752 = vmul.f32 %v744, %v740
        %v753 = vsub.f32 %v751, %v752
        %v754 = vmul.f32 %v743, %v740
        %v755 = vmul.f32 %v744, %v739
        %v756 = vadd.f32 %v754, %v755
        %v757 = vmul.f32 %v743, %v741
        %v758 = vmul.f32 %v744, %v742
        %v759 = vsub.f32 %v757, %v758
        %v760 = vmul.f32 %v743, %v742
        %v761 = vmul.f32 %v744, %v741
        %v762 = vadd.f32 %v760, %v761
        %v763 = vld [vmem:[%s259] sm:$0xff]
        %v764 = vld [vmem:[%s261] sm:$0xff]
        %v765 = vmul.f32 %v763, %v737
        %v766 = vmul.f32 %v764, %v738
        %v767 = vsub.f32 %v765, %v766
        %v768 = vmul.f32 %v763, %v738
        %v769 = vmul.f32 %v764, %v737
        %v770 = vadd.f32 %v768, %v769
        %v771 = vadd.f32 %v753, %v767
        %v772 = vadd.f32 %v756, %v770
        %v773 = vmul.f32 %v763, %v739
        %v774 = vmul.f32 %v764, %v740
        %v775 = vsub.f32 %v773, %v774
        %v776 = vmul.f32 %v763, %v740
        %v777 = vmul.f32 %v764, %v739
        %v778 = vadd.f32 %v776, %v777
        %v779 = vadd.f32 %v759, %v775
        %v780 = vadd.f32 %v762, %v778
        %v781 = vmul.f32 %v763, %v741
        %v782 = vmul.f32 %v764, %v742
        %v783 = vsub.f32 %v781, %v782
        %v784 = vmul.f32 %v763, %v742
        %v785 = vmul.f32 %v764, %v741
        %v786 = vadd.f32 %v784, %v785
        %v787 = vld [vmem:[%s289] sm:$0xff]
        %v788 = vld [vmem:[%s291] sm:$0xff]
        %v789 = vmul.f32 %v787, %v737
        %v790 = vmul.f32 %v788, %v738
        %v791 = vsub.f32 %v789, %v790
        %v792 = vmul.f32 %v787, %v738
        %v793 = vmul.f32 %v788, %v737
        %v794 = vadd.f32 %v792, %v793
        %v795 = vadd.f32 %v779, %v791
        %v796 = vadd.f32 %v780, %v794
        %v797 = vmul.f32 %v787, %v739
        %v798 = vmul.f32 %v788, %v740
        %v799 = vsub.f32 %v797, %v798
        %v800 = vmul.f32 %v787, %v740
        %v801 = vmul.f32 %v788, %v739
        %v802 = vadd.f32 %v800, %v801
        %v803 = vadd.f32 %v783, %v799
        %v804 = vadd.f32 %v786, %v802
        %v805 = vmul.f32 %v787, %v741
        %v806 = vmul.f32 %v788, %v742
        %v807 = vsub.f32 %v805, %v806
        %v808 = vmul.f32 %v787, %v742
        %v809 = vmul.f32 %v788, %v741
        %v810 = vadd.f32 %v808, %v809
        %v811 = vadd.f32 %v747, %v747
        %v812 = vadd.f32 %v750, %v750
        %v813 = vadd.f32 %v771, %v767
        %v814 = vadd.f32 %v772, %v770
        %v815 = vadd.f32 %v795, %v791
        %v816 = vadd.f32 %v796, %v794
        %v817 = vadd.f32 %v813, %v753
        %v818 = vadd.f32 %v814, %v756
        %v819 = vadd.f32 %v815, %v775
        %v820 = vadd.f32 %v816, %v778
        %v821 = vadd.f32 %v803, %v799
        %v822 = vadd.f32 %v804, %v802
        %v823 = vadd.f32 %v819, %v759
        %v824 = vadd.f32 %v820, %v762
        %v825 = vadd.f32 %v821, %v783
        %v826 = vadd.f32 %v822, %v786
        %v827 = vadd.f32 %v807, %v807
        %v828 = vadd.f32 %v810, %v810
        %s829 = scalar_lea.vmem [#allocation4], 24
        %830 = vst [vmem:[%s829] sm:$0xff] %v811
        %s831 = scalar_lea.vmem [#allocation5], 24
        %832 = vst [vmem:[%s831] sm:$0xff] %v812
        %s833 = scalar_lea.vmem [#allocation4], 64
        %834 = vst [vmem:[%s833] sm:$0xff] %v817
        %s835 = scalar_lea.vmem [#allocation5], 64
        %836 = vst [vmem:[%s835] sm:$0xff] %v818
        %s837 = scalar_lea.vmem [#allocation4], 104
        %838 = vst [vmem:[%s837] sm:$0xff] %v823
        %s839 = scalar_lea.vmem [#allocation5], 104
        %840 = vst [vmem:[%s839] sm:$0xff] %v824
        %s841 = scalar_lea.vmem [#allocation4], 144
        %842 = vst [vmem:[%s841] sm:$0xff] %v825
        %s843 = scalar_lea.vmem [#allocation5], 144
        %844 = vst [vmem:[%s843] sm:$0xff] %v826
        %s845 = scalar_lea.vmem [#allocation4], 184
        %846 = vst [vmem:[%s845] sm:$0xff] %v827
        %s847 = scalar_lea.vmem [#allocation5], 184
        %848 = vst [vmem:[%s847] sm:$0xff] %v828
        %v849 = vmul.f32 %v811, -0.15679322
        %v850 = vmul.f32 %v812, -0.25166908
        %v851 = vadd.f32 %v849, %v850
        %v852 = vmul.f32 %v817, -0.044409912
        %v853 = vadd.f32 %v851, %v852
        %v854 = vmul.f32 %v818, -0.21848343
        %v855 = vadd.f32 %v853, %v854
        %v856 = vmul.f32 %v823, -0.18045203
        %v857 = vadd.f32 %v855, %v856
        %v858 = vmul.f32 %v824, 0.034161124
        %v859 = vadd.f32 %v857, %v858
        %v860 = vmul.f32 %v825, 0.32348177
        %v861 = vadd.f32 %v859, %v860
        %v862 = vmul.f32 %v826, -0.03378088
        %v863 = vadd.f32 %v861, %v862
        %v864 = vmul.f32 %v827, -0.12094772
        %v865 = vadd.f32 %v863, %v864
        %v866 = vmul.f32 %v828, 0.11684606
        %v867 = vadd.f32 %v865, %v866
        %v868 = vmul.f32 %v867, %v304
        %v869 = vadd.f32 %v211, %v868
        %v870 = vmul.f32 %v811, 0.29872504
        %v871 = vmul.f32 %v812, -0.31074548
        %v872 = vadd.f32 %v870, %v871
        %v873 = vmul.f32 %v817, -0.3701179
        %v874 = vadd.f32 %v872, %v873
        %v875 = vmul.f32 %v818, 0.28742096
        %v876 = vadd.f32 %v874, %v875
        %v877 = vmul.f32 %v823, 0.15812415
        %v878 = vadd.f32 %v876, %v877
        %v879 = vmul.f32 %v824, 0.24847889
        %v880 = vadd.f32 %v878, %v879
        %v881 = vmul.f32 %v825, 0.16002479
        %v882 = vadd.f32 %v880, %v881
        %v883 = vmul.f32 %v826, 0.091872744
        %v884 = vadd.f32 %v882, %v883
        %v885 = vmul.f32 %v827, 0.2736456
        %v886 = vadd.f32 %v884, %v885
        %v887 = vmul.f32 %v828, -0.09840726
        %v888 = vadd.f32 %v886, %v887
        %v889 = vmul.f32 %v888, %v306
        %v890 = vadd.f32 %v214, %v889
        %v891 = vld [vmem:[%s239] sm:$0xff]
        %v892 = vld [vmem:[%s241] sm:$0xff]
        %v893 = vld [vmem:[%s269] sm:$0xff]
        %v894 = vld [vmem:[%s271] sm:$0xff]
        %v895 = vld [vmem:[%s299] sm:$0xff]
        %v896 = vld [vmem:[%s301] sm:$0xff]
        %v897 = vmul.f32 %v891, %v891
        %v898 = vmul.f32 %v892, %v892
        %v899 = vsub.f32 %v897, %v898
        %v900 = vmul.f32 %v891, %v892
        %v901 = vadd.f32 %v900, %v900
        %v902 = vmul.f32 %v891, %v893
        %v903 = vmul.f32 %v892, %v894
        %v904 = vsub.f32 %v902, %v903
        %v905 = vmul.f32 %v891, %v894
        %v906 = vmul.f32 %v892, %v893
        %v907 = vadd.f32 %v905, %v906
        %v908 = vmul.f32 %v891, %v895
        %v909 = vmul.f32 %v892, %v896
        %v910 = vsub.f32 %v908, %v909
        %v911 = vmul.f32 %v891, %v896
        %v912 = vmul.f32 %v892, %v895
        %v913 = vadd.f32 %v911, %v912
        %v914 = vadd.f32 %v904, %v904
        %v915 = vadd.f32 %v907, %v907
        %v916 = vmul.f32 %v893, %v893
        %v917 = vmul.f32 %v894, %v894
        %v918 = vsub.f32 %v916, %v917
        %v919 = vmul.f32 %v893, %v894
        %v920 = vadd.f32 %v919, %v919
        %v921 = vadd.f32 %v910, %v918
        %v922 = vadd.f32 %v913, %v920
        %v923 = vmul.f32 %v893, %v895
        %v924 = vmul.f32 %v894, %v896
        %v925 = vsub.f32 %v923, %v924
        %v926 = vmul.f32 %v893, %v896
        %v927 = vmul.f32 %v894, %v895
        %v928 = vadd.f32 %v926, %v927
        %v929 = vadd.f32 %v921, %v910
        %v930 = vadd.f32 %v922, %v913
        %v931 = vadd.f32 %v925, %v925
        %v932 = vadd.f32 %v928, %v928
        %v933 = vmul.f32 %v895, %v895
        %v934 = vmul.f32 %v896, %v896
        %v935 = vsub.f32 %v933, %v934
        %v936 = vmul.f32 %v895, %v896
        %v937 = vadd.f32 %v936, %v936
        %s938 = scalar_lea.vmem [#allocation4], 32
        %939 = vst [vmem:[%s938] sm:$0xff] %v899
        %s940 = scalar_lea.vmem [#allocation5], 32
        %941 = vst [vmem:[%s940] sm:$0xff] %v901
        %s942 = scalar_lea.vmem [#allocation4], 72
        %943 = vst [vmem:[%s942] sm:$0xff] %v914
        %s944 = scalar_lea.vmem [#allocation5], 72
        %945 = vst [vmem:[%s944] sm:$0xff] %v915
        %s946 = scalar_lea.vmem [#allocation4], 112
        %947 = vst [vmem:[%s946] sm:$0xff] %v929
        %s948 = scalar_lea.vmem [#allocation5], 112
        %949 = vst [vmem:[%s948] sm:$0xff] %v930
        %s950 = scalar_lea.vmem [#allocation4], 152
        %951 = vst [vmem:[%s950] sm:$0xff] %v931
        %s952 = scalar_lea.vmem [#allocation5], 152
        %953 = vst [vmem:[%s952] sm:$0xff] %v932
        %s954 = scalar_lea.vmem [#allocation4], 192
        %955 = vst [vmem:[%s954] sm:$0xff] %v935
        %s956 = scalar_lea.vmem [#allocation5], 192
        %957 = vst [vmem:[%s956] sm:$0xff] %v937
        %s958 = scalar_lea.vmem %s174, 32 [#allocation9]
        %v959 = vld [vmem:[%s958] sm:$0xff]
        %s960 = scalar_lea.vmem %s174, 40 [#allocation9]
        %v961 = vld [vmem:[%s960] sm:$0xff]
        %v962 = vld [vmem:[%s675] sm:$0xff]
        %v963 = vld [vmem:[%s677] sm:$0xff]
        %v964 = vld [vmem:[%s679] sm:$0xff]
        %v965 = vld [vmem:[%s681] sm:$0xff]
        %v966 = vld [vmem:[%s683] sm:$0xff]
        %v967 = vld [vmem:[%s685] sm:$0xff]
        %v968 = vld [vmem:[%s687] sm:$0xff]
        %v969 = vld [vmem:[%s689] sm:$0xff]
        %v970 = vld [vmem:[%s691] sm:$0xff]
        %v971 = vld [vmem:[%s693] sm:$0xff]
        %v972 = vld [vmem:[#allocation2] sm:$0xff]
        %v973 = vld [vmem:[#allocation3] sm:$0xff]
        %v974 = vmul.f32 %v972, %v962
        %v975 = vmul.f32 %v973, %v963
        %v976 = vsub.f32 %v974, %v975
        %v977 = vmul.f32 %v972, %v963
        %v978 = vmul.f32 %v973, %v962
        %v979 = vadd.f32 %v977, %v978
        %v980 = vmul.f32 %v972, %v964
        %v981 = vmul.f32 %v973, %v965
        %v982 = vsub.f32 %v980, %v981
        %v983 = vmul.f32 %v972, %v965
        %v984 = vmul.f32 %v973, %v964
        %v985 = vadd.f32 %v983, %v984
        %v986 = vmul.f32 %v972, %v966
        %v987 = vmul.f32 %v973, %v967
        %v988 = vsub.f32 %v986, %v987
        %v989 = vmul.f32 %v972, %v967
        %v990 = vmul.f32 %v973, %v966
        %v991 = vadd.f32 %v989, %v990
        %v992 = vmul.f32 %v972, %v968
        %v993 = vmul.f32 %v973, %v969
        %v994 = vsub.f32 %v992, %v993
        %v995 = vmul.f32 %v972, %v969
        %v996 = vmul.f32 %v973, %v968
        %v997 = vadd.f32 %v995, %v996
        %v998 = vmul.f32 %v972, %v970
        %v999 = vmul.f32 %v973, %v971
        %v1000 = vsub.f32 %v998, %v999
        %v1001 = vmul.f32 %v972, %v971
        %v1002 = vmul.f32 %v973, %v970
        %v1003 = vadd.f32 %v1001, %v1002
        %v1004 = vld [vmem:[%s249] sm:$0xff]
        %v1005 = vld [vmem:[%s251] sm:$0xff]
        %v1006 = vmul.f32 %v1004, %v962
        %v1007 = vmul.f32 %v1005, %v963
        %v1008 = vsub.f32 %v1006, %v1007
        %v1009 = vmul.f32 %v1004, %v963
        %v1010 = vmul.f32 %v1005, %v962
        %v1011 = vadd.f32 %v1009, %v1010
        %v1012 = vadd.f32 %v982, %v1008
        %v1013 = vadd.f32 %v985, %v1011
        %v1014 = vmul.f32 %v1004, %v964
        %v1015 = vmul.f32 %v1005, %v965
        %v1016 = vsub.f32 %v1014, %v1015
        %v1017 = vmul.f32 %v1004, %v965
        %v1018 = vmul.f32 %v1005, %v964
        %v1019 = vadd.f32 %v1017, %v1018
        %v1020 = vadd.f32 %v988, %v1016
        %v1021 = vadd.f32 %v991, %v1019
        %v1022 = vmul.f32 %v1004, %v966
        %v1023 = vmul.f32 %v1005, %v967
        %v1024 = vsub.f32 %v1022, %v1023
        %v1025 = vmul.f32 %v1004, %v967
        %v1026 = vmul.f32 %v1005, %v966
        %v1027 = vadd.f32 %v1025, %v1026
        %v1028 = vadd.f32 %v994, %v1024
        %v1029 = vadd.f32 %v997, %v1027
        %v1030 = vmul.f32 %v1004, %v968
        %v1031 = vmul.f32 %v1005, %v969
        %v1032 = vsub.f32 %v1030, %v1031
        %v1033 = vmul.f32 %v1004, %v969
        %v1034 = vmul.f32 %v1005, %v968
        %v1035 = vadd.f32 %v1033, %v1034
        %v1036 = vadd.f32 %v1000, %v1032
        %v1037 = vadd.f32 %v1003, %v1035
        %v1038 = vmul.f32 %v1004, %v970
        %v1039 = vmul.f32 %v1005, %v971
        %v1040 = vsub.f32 %v1038, %v1039
        %v1041 = vmul.f32 %v1004, %v971
        %v1042 = vmul.f32 %v1005, %v970
        %v1043 = vadd.f32 %v1041, %v1042
        %v1044 = vld [vmem:[%s279] sm:$0xff]
        %v1045 = vld [vmem:[%s281] sm:$0xff]
        %v1046 = vmul.f32 %v1044, %v962
        %v1047 = vmul.f32 %v1045, %v963
        %v1048 = vsub.f32 %v1046, %v1047
        %v1049 = vmul.f32 %v1044, %v963
        %v1050 = vmul.f32 %v1045, %v962
        %v1051 = vadd.f32 %v1049, %v1050
        %v1052 = vadd.f32 %v1020, %v1048
        %v1053 = vadd.f32 %v1021, %v1051
        %v1054 = vmul.f32 %v1044, %v964
        %v1055 = vmul.f32 %v1045, %v965
        %v1056 = vsub.f32 %v1054, %v1055
        %v1057 = vmul.f32 %v1044, %v965
        %v1058 = vmul.f32 %v1045, %v964
        %v1059 = vadd.f32 %v1057, %v1058
        %v1060 = vadd.f32 %v1028, %v1056
        %v1061 = vadd.f32 %v1029, %v1059
        %v1062 = vmul.f32 %v1044, %v966
        %v1063 = vmul.f32 %v1045, %v967
        %v1064 = vsub.f32 %v1062, %v1063
        %v1065 = vmul.f32 %v1044, %v967
        %v1066 = vmul.f32 %v1045, %v966
        %v1067 = vadd.f32 %v1065, %v1066
        %v1068 = vadd.f32 %v1036, %v1064
        %v1069 = vadd.f32 %v1037, %v1067
        %v1070 = vmul.f32 %v1044, %v968
        %v1071 = vmul.f32 %v1045, %v969
        %v1072 = vsub.f32 %v1070, %v1071
        %v1073 = vmul.f32 %v1044, %v969
        %v1074 = vmul.f32 %v1045, %v968
        %v1075 = vadd.f32 %v1073, %v1074
        %v1076 = vadd.f32 %v1040, %v1072
        %v1077 = vadd.f32 %v1043, %v1075
        %v1078 = vmul.f32 %v1044, %v970
        %v1079 = vmul.f32 %v1045, %v971
        %v1080 = vsub.f32 %v1078, %v1079
        %v1081 = vmul.f32 %v1044, %v971
        %v1082 = vmul.f32 %v1045, %v970
        %v1083 = vadd.f32 %v1081, %v1082
        %v1084 = vld [vmem:[%s464] sm:$0xff]
        %v1085 = vld [vmem:[%s466] sm:$0xff]
        %v1086 = vld [vmem:[%s468] sm:$0xff]
        %v1087 = vld [vmem:[%s470] sm:$0xff]
        %v1088 = vld [vmem:[%s472] sm:$0xff]
        %v1089 = vld [vmem:[%s474] sm:$0xff]
        %v1090 = vld [vmem:[%s476] sm:$0xff]
        %v1091 = vld [vmem:[%s478] sm:$0xff]
        %v1092 = vld [vmem:[%s480] sm:$0xff]
        %v1093 = vld [vmem:[%s482] sm:$0xff]
        %v1094 = vld [vmem:[%s229] sm:$0xff]
        %v1095 = vld [vmem:[%s231] sm:$0xff]
        %v1096 = vmul.f32 %v1094, %v1084
        %v1097 = vmul.f32 %v1095, %v1085
        %v1098 = vsub.f32 %v1096, %v1097
        %v1099 = vmul.f32 %v1094, %v1085
        %v1100 = vmul.f32 %v1095, %v1084
        %v1101 = vadd.f32 %v1099, %v1100
        %v1102 = vadd.f32 %v976, %v1098
        %v1103 = vadd.f32 %v979, %v1101
        %v1104 = vmul.f32 %v1094, %v1086
        %v1105 = vmul.f32 %v1095, %v1087
        %v1106 = vsub.f32 %v1104, %v1105
        %v1107 = vmul.f32 %v1094, %v1087
        %v1108 = vmul.f32 %v1095, %v1086
        %v1109 = vadd.f32 %v1107, %v1108
        %v1110 = vadd.f32 %v1012, %v1106
        %v1111 = vadd.f32 %v1013, %v1109
        %v1112 = vmul.f32 %v1094, %v1088
        %v1113 = vmul.f32 %v1095, %v1089
        %v1114 = vsub.f32 %v1112, %v1113
        %v1115 = vmul.f32 %v1094, %v1089
        %v1116 = vmul.f32 %v1095, %v1088
        %v1117 = vadd.f32 %v1115, %v1116
        %v1118 = vadd.f32 %v1052, %v1114
        %v1119 = vadd.f32 %v1053, %v1117
        %v1120 = vmul.f32 %v1094, %v1090
        %v1121 = vmul.f32 %v1095, %v1091
        %v1122 = vsub.f32 %v1120, %v1121
        %v1123 = vmul.f32 %v1094, %v1091
        %v1124 = vmul.f32 %v1095, %v1090
        %v1125 = vadd.f32 %v1123, %v1124
        %v1126 = vadd.f32 %v1060, %v1122
        %v1127 = vadd.f32 %v1061, %v1125
        %v1128 = vmul.f32 %v1094, %v1092
        %v1129 = vmul.f32 %v1095, %v1093
        %v1130 = vsub.f32 %v1128, %v1129
        %v1131 = vmul.f32 %v1094, %v1093
        %v1132 = vmul.f32 %v1095, %v1092
        %v1133 = vadd.f32 %v1131, %v1132
        %v1134 = vadd.f32 %v1068, %v1130
        %v1135 = vadd.f32 %v1069, %v1133
        %v1136 = vld [vmem:[%s259] sm:$0xff]
        %v1137 = vld [vmem:[%s261] sm:$0xff]
        %v1138 = vmul.f32 %v1136, %v1084
        %v1139 = vmul.f32 %v1137, %v1085
        %v1140 = vsub.f32 %v1138, %v1139
        %v1141 = vmul.f32 %v1136, %v1085
        %v1142 = vmul.f32 %v1137, %v1084
        %v1143 = vadd.f32 %v1141, %v1142
        %v1144 = vadd.f32 %v1110, %v1140
        %v1145 = vadd.f32 %v1111, %v1143
        %v1146 = vmul.f32 %v1136, %v1086
        %v1147 = vmul.f32 %v1137, %v1087
        %v1148 = vsub.f32 %v1146, %v1147
        %v1149 = vmul.f32 %v1136, %v1087
        %v1150 = vmul.f32 %v1137, %v1086
        %v1151 = vadd.f32 %v1149, %v1150
        %v1152 = vadd.f32 %v1118, %v1148
        %v1153 = vadd.f32 %v1119, %v1151
        %v1154 = vmul.f32 %v1136, %v1088
        %v1155 = vmul.f32 %v1137, %v1089
        %v1156 = vsub.f32 %v1154, %v1155
        %v1157 = vmul.f32 %v1136, %v1089
        %v1158 = vmul.f32 %v1137, %v1088
        %v1159 = vadd.f32 %v1157, %v1158
        %v1160 = vadd.f32 %v1126, %v1156
        %v1161 = vadd.f32 %v1127, %v1159
        %v1162 = vmul.f32 %v1136, %v1090
        %v1163 = vmul.f32 %v1137, %v1091
        %v1164 = vsub.f32 %v1162, %v1163
        %v1165 = vmul.f32 %v1136, %v1091
        %v1166 = vmul.f32 %v1137, %v1090
        %v1167 = vadd.f32 %v1165, %v1166
        %v1168 = vadd.f32 %v1134, %v1164
        %v1169 = vadd.f32 %v1135, %v1167
        %v1170 = vmul.f32 %v1136, %v1092
        %v1171 = vmul.f32 %v1137, %v1093
        %v1172 = vsub.f32 %v1170, %v1171
        %v1173 = vmul.f32 %v1136, %v1093
        %v1174 = vmul.f32 %v1137, %v1092
        %v1175 = vadd.f32 %v1173, %v1174
        %v1176 = vadd.f32 %v1076, %v1172
        %v1177 = vadd.f32 %v1077, %v1175
        %v1178 = vld [vmem:[%s289] sm:$0xff]
        %v1179 = vld [vmem:[%s291] sm:$0xff]
        %v1180 = vmul.f32 %v1178, %v1084
        %v1181 = vmul.f32 %v1179, %v1085
        %v1182 = vsub.f32 %v1180, %v1181
        %v1183 = vmul.f32 %v1178, %v1085
        %v1184 = vmul.f32 %v1179, %v1084
        %v1185 = vadd.f32 %v1183, %v1184
        %v1186 = vadd.f32 %v1152, %v1182
        %v1187 = vadd.f32 %v1153, %v1185
        %v1188 = vmul.f32 %v1178, %v1086
        %v1189 = vmul.f32 %v1179, %v1087
        %v1190 = vsub.f32 %v1188, %v1189
        %v1191 = vmul.f32 %v1178, %v1087
        %v1192 = vmul.f32 %v1179, %v1086
        %v1193 = vadd.f32 %v1191, %v1192
        %v1194 = vadd.f32 %v1160, %v1190
        %v1195 = vadd.f32 %v1161, %v1193
        %v1196 = vmul.f32 %v1178, %v1088
        %v1197 = vmul.f32 %v1179, %v1089
        %v1198 = vsub.f32 %v1196, %v1197
        %v1199 = vmul.f32 %v1178, %v1089
        %v1200 = vmul.f32 %v1179, %v1088
        %v1201 = vadd.f32 %v1199, %v1200
        %v1202 = vadd.f32 %v1168, %v1198
        %v1203 = vadd.f32 %v1169, %v1201
        %v1204 = vmul.f32 %v1178, %v1090
        %v1205 = vmul.f32 %v1179, %v1091
        %v1206 = vsub.f32 %v1204, %v1205
        %v1207 = vmul.f32 %v1178, %v1091
        %v1208 = vmul.f32 %v1179, %v1090
        %v1209 = vadd.f32 %v1207, %v1208
        %v1210 = vadd.f32 %v1176, %v1206
        %v1211 = vadd.f32 %v1177, %v1209
        %v1212 = vmul.f32 %v1178, %v1092
        %v1213 = vmul.f32 %v1179, %v1093
        %v1214 = vsub.f32 %v1212, %v1213
        %v1215 = vmul.f32 %v1178, %v1093
        %v1216 = vmul.f32 %v1179, %v1092
        %v1217 = vadd.f32 %v1215, %v1216
        %v1218 = vadd.f32 %v1080, %v1214
        %v1219 = vadd.f32 %v1083, %v1217
        %v1220 = vld [vmem:[#allocation4] sm:$0xff]
        %v1221 = vld [vmem:[#allocation5] sm:$0xff]
        %v1222 = vld [vmem:[%s356] sm:$0xff]
        %v1223 = vld [vmem:[%s358] sm:$0xff]
        %v1224 = vld [vmem:[%s360] sm:$0xff]
        %v1225 = vld [vmem:[%s362] sm:$0xff]
        %v1226 = vld [vmem:[%s364] sm:$0xff]
        %v1227 = vld [vmem:[%s366] sm:$0xff]
        %v1228 = vld [vmem:[%s368] sm:$0xff]
        %v1229 = vld [vmem:[%s370] sm:$0xff]
        %v1230 = vld [vmem:[%s239] sm:$0xff]
        %v1231 = vld [vmem:[%s241] sm:$0xff]
        %v1232 = vmul.f32 %v1230, %v1220
        %v1233 = vmul.f32 %v1231, %v1221
        %v1234 = vsub.f32 %v1232, %v1233
        %v1235 = vmul.f32 %v1230, %v1221
        %v1236 = vmul.f32 %v1231, %v1220
        %v1237 = vadd.f32 %v1235, %v1236
        %v1238 = vadd.f32 %v1102, %v1234
        %v1239 = vadd.f32 %v1103, %v1237
        %v1240 = vmul.f32 %v1230, %v1222
        %v1241 = vmul.f32 %v1231, %v1223
        %v1242 = vsub.f32 %v1240, %v1241
        %v1243 = vmul.f32 %v1230, %v1223
        %v1244 = vmul.f32 %v1231, %v1222
        %v1245 = vadd.f32 %v1243, %v1244
        %v1246 = vadd.f32 %v1144, %v1242
        %v1247 = vadd.f32 %v1145, %v1245
        %v1248 = vmul.f32 %v1230, %v1224
        %v1249 = vmul.f32 %v1231, %v1225
        %v1250 = vsub.f32 %v1248, %v1249
        %v1251 = vmul.f32 %v1230, %v1225
        %v1252 = vmul.f32 %v1231, %v1224
        %v1253 = vadd.f32 %v1251, %v1252
        %v1254 = vadd.f32 %v1186, %v1250
        %v1255 = vadd.f32 %v1187, %v1253
        %v1256 = vmul.f32 %v1230, %v1226
        %v1257 = vmul.f32 %v1231, %v1227
        %v1258 = vsub.f32 %v1256, %v1257
        %v1259 = vmul.f32 %v1230, %v1227
        %v1260 = vmul.f32 %v1231, %v1226
        %v1261 = vadd.f32 %v1259, %v1260
        %v1262 = vadd.f32 %v1194, %v1258
        %v1263 = vadd.f32 %v1195, %v1261
        %v1264 = vmul.f32 %v1230, %v1228
        %v1265 = vmul.f32 %v1231, %v1229
        %v1266 = vsub.f32 %v1264, %v1265
        %v1267 = vmul.f32 %v1230, %v1229
        %v1268 = vmul.f32 %v1231, %v1228
        %v1269 = vadd.f32 %v1267, %v1268
        %v1270 = vadd.f32 %v1202, %v1266
        %v1271 = vadd.f32 %v1203, %v1269
        %v1272 = vld [vmem:[%s269] sm:$0xff]
        %v1273 = vld [vmem:[%s271] sm:$0xff]
        %v1274 = vmul.f32 %v1272, %v1220
        %v1275 = vmul.f32 %v1273, %v1221
        %v1276 = vsub.f32 %v1274, %v1275
        %v1277 = vmul.f32 %v1272, %v1221
        %v1278 = vmul.f32 %v1273, %v1220
        %v1279 = vadd.f32 %v1277, %v1278
        %v1280 = vadd.f32 %v1246, %v1276
        %v1281 = vadd.f32 %v1247, %v1279
        %v1282 = vmul.f32 %v1272, %v1222
        %v1283 = vmul.f32 %v1273, %v1223
        %v1284 = vsub.f32 %v1282, %v1283
        %v1285 = vmul.f32 %v1272, %v1223
        %v1286 = vmul.f32 %v1273, %v1222
        %v1287 = vadd.f32 %v1285, %v1286
        %v1288 = vadd.f32 %v1254, %v1284
        %v1289 = vadd.f32 %v1255, %v1287
        %v1290 = vmul.f32 %v1272, %v1224
        %v1291 = vmul.f32 %v1273, %v1225
        %v1292 = vsub.f32 %v1290, %v1291
        %v1293 = vmul.f32 %v1272, %v1225
        %v1294 = vmul.f32 %v1273, %v1224
        %v1295 = vadd.f32 %v1293, %v1294
        %v1296 = vadd.f32 %v1262, %v1292
        %v1297 = vadd.f32 %v1263, %v1295
        %v1298 = vmul.f32 %v1272, %v1226
        %v1299 = vmul.f32 %v1273, %v1227
        %v1300 = vsub.f32 %v1298, %v1299
        %v1301 = vmul.f32 %v1272, %v1227
        %v1302 = vmul.f32 %v1273, %v1226
        %v1303 = vadd.f32 %v1301, %v1302
        %v1304 = vadd.f32 %v1270, %v1300
        %v1305 = vadd.f32 %v1271, %v1303
        %v1306 = vmul.f32 %v1272, %v1228
        %v1307 = vmul.f32 %v1273, %v1229
        %v1308 = vsub.f32 %v1306, %v1307
        %v1309 = vmul.f32 %v1272, %v1229
        %v1310 = vmul.f32 %v1273, %v1228
        %v1311 = vadd.f32 %v1309, %v1310
        %v1312 = vadd.f32 %v1210, %v1308
        %v1313 = vadd.f32 %v1211, %v1311
        %v1314 = vld [vmem:[%s299] sm:$0xff]
        %v1315 = vld [vmem:[%s301] sm:$0xff]
        %v1316 = vmul.f32 %v1314, %v1220
        %v1317 = vmul.f32 %v1315, %v1221
        %v1318 = vsub.f32 %v1316, %v1317
        %v1319 = vmul.f32 %v1314, %v1221
        %v1320 = vmul.f32 %v1315, %v1220
        %v1321 = vadd.f32 %v1319, %v1320
        %v1322 = vadd.f32 %v1288, %v1318
        %v1323 = vadd.f32 %v1289, %v1321
        %v1324 = vmul.f32 %v1314, %v1222
        %v1325 = vmul.f32 %v1315, %v1223
        %v1326 = vsub.f32 %v1324, %v1325
        %v1327 = vmul.f32 %v1314, %v1223
        %v1328 = vmul.f32 %v1315, %v1222
        %v1329 = vadd.f32 %v1327, %v1328
        %v1330 = vadd.f32 %v1296, %v1326
        %v1331 = vadd.f32 %v1297, %v1329
        %v1332 = vmul.f32 %v1314, %v1224
        %v1333 = vmul.f32 %v1315, %v1225
        %v1334 = vsub.f32 %v1332, %v1333
        %v1335 = vmul.f32 %v1314, %v1225
        %v1336 = vmul.f32 %v1315, %v1224
        %v1337 = vadd.f32 %v1335, %v1336
        %v1338 = vadd.f32 %v1304, %v1334
        %v1339 = vadd.f32 %v1305, %v1337
        %v1340 = vmul.f32 %v1314, %v1226
        %v1341 = vmul.f32 %v1315, %v1227
        %v1342 = vsub.f32 %v1340, %v1341
        %v1343 = vmul.f32 %v1314, %v1227
        %v1344 = vmul.f32 %v1315, %v1226
        %v1345 = vadd.f32 %v1343, %v1344
        %v1346 = vadd.f32 %v1312, %v1342
        %v1347 = vadd.f32 %v1313, %v1345
        %v1348 = vmul.f32 %v1314, %v1228
        %v1349 = vmul.f32 %v1315, %v1229
        %v1350 = vsub.f32 %v1348, %v1349
        %v1351 = vmul.f32 %v1314, %v1229
        %v1352 = vmul.f32 %v1315, %v1228
        %v1353 = vadd.f32 %v1351, %v1352
        %v1354 = vadd.f32 %v1218, %v1350
        %v1355 = vadd.f32 %v1219, %v1353
        %v1356 = vmul.f32 %v1238, 0.26036644
        %v1357 = vmul.f32 %v1239, -0.056398876
        %v1358 = vadd.f32 %v1356, %v1357
        %v1359 = vmul.f32 %v1280, -0.011912587
        %v1360 = vadd.f32 %v1358, %v1359
        %v1361 = vmul.f32 %v1281, -0.26280734
        %v1362 = vadd.f32 %v1360, %v1361
        %v1363 = vmul.f32 %v1322, -0.0124805495
        %v1364 = vadd.f32 %v1362, %v1363
        %v1365 = vmul.f32 %v1323, -0.34647655
        %v1366 = vadd.f32 %v1364, %v1365
        %v1367 = vmul.f32 %v1330, 0.043938097
        %v1368 = vadd.f32 %v1366, %v1367
        %v1369 = vmul.f32 %v1331, -0.17052795
        %v1370 = vadd.f32 %v1368, %v1369
        %v1371 = vmul.f32 %v1338, -0.3118913
        %v1372 = vadd.f32 %v1370, %v1371
        %v1373 = vmul.f32 %v1339, -0.5400718
        %v1374 = vadd.f32 %v1372, %v1373
        %v1375 = vmul.f32 %v1346, 0.35637346
        %v1376 = vadd.f32 %v1374, %v1375
        %v1377 = vmul.f32 %v1347, -0.14435744
        %v1378 = vadd.f32 %v1376, %v1377
        %v1379 = vmul.f32 %v1354, -0.21694794
        %v1380 = vadd.f32 %v1378, %v1379
        %v1381 = vmul.f32 %v1355, -0.06897375
        %v1382 = vadd.f32 %v1380, %v1381
        %v1383 = vmul.f32 %v1382, %v959
        %v1384 = vadd.f32 %v504, %v1383
        %v1385 = vmul.f32 %v1238, -0.093722634
        %v1386 = vmul.f32 %v1239, -0.25389355
        %v1387 = vadd.f32 %v1385, %v1386
        %v1388 = vmul.f32 %v1280, 0.13307092
        %v1389 = vadd.f32 %v1387, %v1388
        %v1390 = vmul.f32 %v1281, -0.10281698
        %v1391 = vadd.f32 %v1389, %v1390
        %v1392 = vmul.f32 %v1322, 0.017819634
        %v1393 = vadd.f32 %v1391, %v1392
        %v1394 = vmul.f32 %v1323, -0.26709053
        %v1395 = vadd.f32 %v1393, %v1394
        %v1396 = vmul.f32 %v1330, 0.30642506
        %v1397 = vadd.f32 %v1395, %v1396
        %v1398 = vmul.f32 %v1331, 0.63129157
        %v1399 = vadd.f32 %v1397, %v1398
        %v1400 = vmul.f32 %v1338, -0.033518326
        %v1401 = vadd.f32 %v1399, %v1400
        %v1402 = vmul.f32 %v1339, -0.15876575
        %v1403 = vadd.f32 %v1401, %v1402
        %v1404 = vmul.f32 %v1346, -0.037711326
        %v1405 = vadd.f32 %v1403, %v1404
        %v1406 = vmul.f32 %v1347, -0.341911
        %v1407 = vadd.f32 %v1405, %v1406
        %v1408 = vmul.f32 %v1354, -0.23250344
        %v1409 = vadd.f32 %v1407, %v1408
        %v1410 = vmul.f32 %v1355, 0.32696733
        %v1411 = vadd.f32 %v1409, %v1410
        %v1412 = vmul.f32 %v1411, %v961
        %v1413 = vadd.f32 %v525, %v1412
        %v1414 = vld [vmem:[%s829] sm:$0xff]
        %v1415 = vld [vmem:[%s831] sm:$0xff]
        %v1416 = vld [vmem:[%s833] sm:$0xff]
        %v1417 = vld [vmem:[%s835] sm:$0xff]
        %v1418 = vld [vmem:[%s837] sm:$0xff]
        %v1419 = vld [vmem:[%s839] sm:$0xff]
        %v1420 = vld [vmem:[%s841] sm:$0xff]
        %v1421 = vld [vmem:[%s843] sm:$0xff]
        %v1422 = vld [vmem:[%s845] sm:$0xff]
        %v1423 = vld [vmem:[%s847] sm:$0xff]
        %v1424 = vmul.f32 %v972, %v1414
        %v1425 = vmul.f32 %v973, %v1415
        %v1426 = vsub.f32 %v1424, %v1425
        %v1427 = vmul.f32 %v972, %v1415
        %v1428 = vmul.f32 %v973, %v1414
        %v1429 = vadd.f32 %v1427, %v1428
        %v1430 = vmul.f32 %v972, %v1416
        %v1431 = vmul.f32 %v973, %v1417
        %v1432 = vsub.f32 %v1430, %v1431
        %v1433 = vmul.f32 %v972, %v1417
        %v1434 = vmul.f32 %v973, %v1416
        %v1435 = vadd.f32 %v1433, %v1434
        %v1436 = vmul.f32 %v972, %v1418
        %v1437 = vmul.f32 %v973, %v1419
        %v1438 = vsub.f32 %v1436, %v1437
        %v1439 = vmul.f32 %v972, %v1419
        %v1440 = vmul.f32 %v973, %v1418
        %v1441 = vadd.f32 %v1439, %v1440
        %v1442 = vmul.f32 %v972, %v1420
        %v1443 = vmul.f32 %v973, %v1421
        %v1444 = vsub.f32 %v1442, %v1443
        %v1445 = vmul.f32 %v972, %v1421
        %v1446 = vmul.f32 %v973, %v1420
        %v1447 = vadd.f32 %v1445, %v1446
        %v1448 = vmul.f32 %v972, %v1422
        %v1449 = vmul.f32 %v973, %v1423
        %v1450 = vsub.f32 %v1448, %v1449
        %v1451 = vmul.f32 %v972, %v1423
        %v1452 = vmul.f32 %v973, %v1422
        %v1453 = vadd.f32 %v1451, %v1452
        %v1454 = vmul.f32 %v1004, %v1414
        %v1455 = vmul.f32 %v1005, %v1415
        %v1456 = vsub.f32 %v1454, %v1455
        %v1457 = vmul.f32 %v1004, %v1415
        %v1458 = vmul.f32 %v1005, %v1414
        %v1459 = vadd.f32 %v1457, %v1458
        %v1460 = vadd.f32 %v1432, %v1456
        %v1461 = vadd.f32 %v1435, %v1459
        %v1462 = vmul.f32 %v1004, %v1416
        %v1463 = vmul.f32 %v1005, %v1417
        %v1464 = vsub.f32 %v1462, %v1463
        %v1465 = vmul.f32 %v1004, %v1417
        %v1466 = vmul.f32 %v1005, %v1416
        %v1467 = vadd.f32 %v1465, %v1466
        %v1468 = vadd.f32 %v1438, %v1464
        %v1469 = vadd.f32 %v1441, %v1467
        %v1470 = vmul.f32 %v1004, %v1418
        %v1471 = vmul.f32 %v1005, %v1419
        %v1472 = vsub.f32 %v1470, %v1471
        %v1473 = vmul.f32 %v1004, %v1419
        %v1474 = vmul.f32 %v1005, %v1418
        %v1475 = vadd.f32 %v1473, %v1474
        %v1476 = vadd.f32 %v1444, %v1472
        %v1477 = vadd.f32 %v1447, %v1475
        %v1478 = vmul.f32 %v1004, %v1420
        %v1479 = vmul.f32 %v1005, %v1421
        %v1480 = vsub.f32 %v1478, %v1479
        %v1481 = vmul.f32 %v1004, %v1421
        %v1482 = vmul.f32 %v1005, %v1420
        %v1483 = vadd.f32 %v1481, %v1482
        %v1484 = vadd.f32 %v1450, %v1480
        %v1485 = vadd.f32 %v1453, %v1483
        %v1486 = vmul.f32 %v1004, %v1422
        %v1487 = vmul.f32 %v1005, %v1423
        %v1488 = vsub.f32 %v1486, %v1487
        %v1489 = vmul.f32 %v1004, %v1423
        %v1490 = vmul.f32 %v1005, %v1422
        %v1491 = vadd.f32 %v1489, %v1490
        %v1492 = vmul.f32 %v1044, %v1414
        %v1493 = vmul.f32 %v1045, %v1415
        %v1494 = vsub.f32 %v1492, %v1493
        %v1495 = vmul.f32 %v1044, %v1415
        %v1496 = vmul.f32 %v1045, %v1414
        %v1497 = vadd.f32 %v1495, %v1496
        %v1498 = vadd.f32 %v1468, %v1494
        %v1499 = vadd.f32 %v1469, %v1497
        %v1500 = vmul.f32 %v1044, %v1416
        %v1501 = vmul.f32 %v1045, %v1417
        %v1502 = vsub.f32 %v1500, %v1501
        %v1503 = vmul.f32 %v1044, %v1417
        %v1504 = vmul.f32 %v1045, %v1416
        %v1505 = vadd.f32 %v1503, %v1504
        %v1506 = vadd.f32 %v1476, %v1502
        %v1507 = vadd.f32 %v1477, %v1505
        %v1508 = vmul.f32 %v1044, %v1418
        %v1509 = vmul.f32 %v1045, %v1419
        %v1510 = vsub.f32 %v1508, %v1509
        %v1511 = vmul.f32 %v1044, %v1419
        %v1512 = vmul.f32 %v1045, %v1418
        %v1513 = vadd.f32 %v1511, %v1512
        %v1514 = vadd.f32 %v1484, %v1510
        %v1515 = vadd.f32 %v1485, %v1513
        %v1516 = vmul.f32 %v1044, %v1420
        %v1517 = vmul.f32 %v1045, %v1421
        %v1518 = vsub.f32 %v1516, %v1517
        %v1519 = vmul.f32 %v1044, %v1421
        %v1520 = vmul.f32 %v1045, %v1420
        %v1521 = vadd.f32 %v1519, %v1520
        %v1522 = vadd.f32 %v1488, %v1518
        %v1523 = vadd.f32 %v1491, %v1521
        %v1524 = vmul.f32 %v1044, %v1422
        %v1525 = vmul.f32 %v1045, %v1423
        %v1526 = vsub.f32 %v1524, %v1525
        %v1527 = vmul.f32 %v1044, %v1423
        %v1528 = vmul.f32 %v1045, %v1422
        %v1529 = vadd.f32 %v1527, %v1528
        %v1530 = vmul.f32 %v1094, %v962
        %v1531 = vmul.f32 %v1095, %v963
        %v1532 = vsub.f32 %v1530, %v1531
        %v1533 = vmul.f32 %v1094, %v963
        %v1534 = vmul.f32 %v1095, %v962
        %v1535 = vadd.f32 %v1533, %v1534
        %v1536 = vadd.f32 %v1426, %v1532
        %v1537 = vadd.f32 %v1429, %v1535
        %v1538 = vmul.f32 %v1094, %v964
        %v1539 = vmul.f32 %v1095, %v965
        %v1540 = vsub.f32 %v1538, %v1539
        %v1541 = vmul.f32 %v1094, %v965
        %v1542 = vmul.f32 %v1095, %v964
        %v1543 = vadd.f32 %v1541, %v1542
        %v1544 = vadd.f32 %v1460, %v1540
        %v1545 = vadd.f32 %v1461, %v1543
        %v1546 = vmul.f32 %v1094, %v966
        %v1547 = vmul.f32 %v1095, %v967
        %v1548 = vsub.f32 %v1546, %v1547
        %v1549 = vmul.f32 %v1094, %v967
        %v1550 = vmul.f32 %v1095, %v966
        %v1551 = vadd.f32 %v1549, %v1550
        %v1552 = vadd.f32 %v1498, %v1548
        %v1553 = vadd.f32 %v1499, %v1551
        %v1554 = vmul.f32 %v1094, %v968
        %v1555 = vmul.f32 %v1095, %v969
        %v1556 = vsub.f32 %v1554, %v1555
        %v1557 = vmul.f32 %v1094, %v969
        %v1558 = vmul.f32 %v1095, %v968
        %v1559 = vadd.f32 %v1557, %v1558
        %v1560 = vadd.f32 %v1506, %v1556
        %v1561 = vadd.f32 %v1507, %v1559
        %v1562 = vmul.f32 %v1094, %v970
        %v1563 = vmul.f32 %v1095, %v971
        %v1564 = vsub.f32 %v1562, %v1563
        %v1565 = vmul.f32 %v1094, %v971
        %v1566 = vmul.f32 %v1095, %v970
        %v1567 = vadd.f32 %v1565, %v1566
        %v1568 = vadd.f32 %v1514, %v1564
        %v1569 = vadd.f32 %v1515, %v1567
        %v1570 = vmul.f32 %v1136, %v962
        %v1571 = vmul.f32 %v1137, %v963
        %v1572 = vsub.f32 %v1570, %v1571
        %v1573 = vmul.f32 %v1136, %v963
        %v1574 = vmul.f32 %v1137, %v962
        %v1575 = vadd.f32 %v1573, %v1574
        %v1576 = vadd.f32 %v1544, %v1572
        %v1577 = vadd.f32 %v1545, %v1575
        %v1578 = vmul.f32 %v1136, %v964
        %v1579 = vmul.f32 %v1137, %v965
        %v1580 = vsub.f32 %v1578, %v1579
        %v1581 = vmul.f32 %v1136, %v965
        %v1582 = vmul.f32 %v1137, %v964
        %v1583 = vadd.f32 %v1581, %v1582
        %v1584 = vadd.f32 %v1552, %v1580
        %v1585 = vadd.f32 %v1553, %v1583
        %v1586 = vmul.f32 %v1136, %v966
        %v1587 = vmul.f32 %v1137, %v967
        %v1588 = vsub.f32 %v1586, %v1587
        %v1589 = vmul.f32 %v1136, %v967
        %v1590 = vmul.f32 %v1137, %v966
        %v1591 = vadd.f32 %v1589, %v1590
        %v1592 = vadd.f32 %v1560, %v1588
        %v1593 = vadd.f32 %v1561, %v1591
        %v1594 = vmul.f32 %v1136, %v968
        %v1595 = vmul.f32 %v1137, %v969
        %v1596 = vsub.f32 %v1594, %v1595
        %v1597 = vmul.f32 %v1136, %v969
        %v1598 = vmul.f32 %v1137, %v968
        %v1599 = vadd.f32 %v1597, %v1598
        %v1600 = vadd.f32 %v1568, %v1596
        %v1601 = vadd.f32 %v1569, %v1599
        %v1602 = vmul.f32 %v1136, %v970
        %v1603 = vmul.f32 %v1137, %v971
        %v1604 = vsub.f32 %v1602, %v1603
        %v1605 = vmul.f32 %v1136, %v971
        %v1606 = vmul.f32 %v1137, %v970
        %v1607 = vadd.f32 %v1605, %v1606
        %v1608 = vadd.f32 %v1522, %v1604
        %v1609 = vadd.f32 %v1523, %v1607
        %v1610 = vmul.f32 %v1178, %v962
        %v1611 = vmul.f32 %v1179, %v963
        %v1612 = vsub.f32 %v1610, %v1611
        %v1613 = vmul.f32 %v1178, %v963
        %v1614 = vmul.f32 %v1179, %v962
        %v1615 = vadd.f32 %v1613, %v1614
        %v1616 = vadd.f32 %v1584, %v1612
        %v1617 = vadd.f32 %v1585, %v1615
        %v1618 = vmul.f32 %v1178, %v964
        %v1619 = vmul.f32 %v1179, %v965
        %v1620 = vsub.f32 %v1618, %v1619
        %v1621 = vmul.f32 %v1178, %v965
        %v1622 = vmul.f32 %v1179, %v964
        %v1623 = vadd.f32 %v1621, %v1622
        %v1624 = vadd.f32 %v1592, %v1620
        %v1625 = vadd.f32 %v1593, %v1623
        %v1626 = vmul.f32 %v1178, %v966
        %v1627 = vmul.f32 %v1179, %v967
        %v1628 = vsub.f32 %v1626, %v1627
        %v1629 = vmul.f32 %v1178, %v967
        %v1630 = vmul.f32 %v1179, %v966
        %v1631 = vadd.f32 %v1629, %v1630
        %v1632 = vadd.f32 %v1600, %v1628
        %v1633 = vadd.f32 %v1601, %v1631
        %v1634 = vmul.f32 %v1178, %v968
        %v1635 = vmul.f32 %v1179, %v969
        %v1636 = vsub.f32 %v1634, %v1635
        %v1637 = vmul.f32 %v1178, %v969
        %v1638 = vmul.f32 %v1179, %v968
        %v1639 = vadd.f32 %v1637, %v1638
        %v1640 = vadd.f32 %v1608, %v1636
        %v1641 = vadd.f32 %v1609, %v1639
        %v1642 = vmul.f32 %v1178, %v970
        %v1643 = vmul.f32 %v1179, %v971
        %v1644 = vsub.f32 %v1642, %v1643
        %v1645 = vmul.f32 %v1178, %v971
        %v1646 = vmul.f32 %v1179, %v970
        %v1647 = vadd.f32 %v1645, %v1646
        %v1648 = vadd.f32 %v1526, %v1644
        %v1649 = vadd.f32 %v1529, %v1647
        %v1650 = vmul.f32 %v1230, %v1084
        %v1651 = vmul.f32 %v1231, %v1085
        %v1652 = vsub.f32 %v1650, %v1651
        %v1653 = vmul.f32 %v1230, %v1085
        %v1654 = vmul.f32 %v1231, %v1084
        %v1655 = vadd.f32 %v1653, %v1654
        %v1656 = vadd.f32 %v1536, %v1652
        %v1657 = vadd.f32 %v1537, %v1655
        %v1658 = vmul.f32 %v1230, %v1086
        %v1659 = vmul.f32 %v1231, %v1087
        %v1660 = vsub.f32 %v1658, %v1659
        %v1661 = vmul.f32 %v1230, %v1087
        %v1662 = vmul.f32 %v1231, %v1086
        %v1663 = vadd.f32 %v1661, %v1662
        %v1664 = vadd.f32 %v1576, %v1660
        %v1665 = vadd.f32 %v1577, %v1663
        %v1666 = vmul.f32 %v1230, %v1088
        %v1667 = vmul.f32 %v1231, %v1089
        %v1668 = vsub.f32 %v1666, %v1667
        %v1669 = vmul.f32 %v1230, %v1089
        %v1670 = vmul.f32 %v1231, %v1088
        %v1671 = vadd.f32 %v1669, %v1670
        %v1672 = vadd.f32 %v1616, %v1668
        %v1673 = vadd.f32 %v1617, %v1671
        %v1674 = vmul.f32 %v1230, %v1090
        %v1675 = vmul.f32 %v1231, %v1091
        %v1676 = vsub.f32 %v1674, %v1675
        %v1677 = vmul.f32 %v1230, %v1091
        %v1678 = vmul.f32 %v1231, %v1090
        %v1679 = vadd.f32 %v1677, %v1678
        %v1680 = vadd.f32 %v1624, %v1676
        %v1681 = vadd.f32 %v1625, %v1679
        %v1682 = vmul.f32 %v1230, %v1092
        %v1683 = vmul.f32 %v1231, %v1093
        %v1684 = vsub.f32 %v1682, %v1683
        %v1685 = vmul.f32 %v1230, %v1093
        %v1686 = vmul.f32 %v1231, %v1092
        %v1687 = vadd.f32 %v1685, %v1686
        %v1688 = vadd.f32 %v1632, %v1684
        %v1689 = vadd.f32 %v1633, %v1687
        %v1690 = vmul.f32 %v1272, %v1084
        %v1691 = vmul.f32 %v1273, %v1085
        %v1692 = vsub.f32 %v1690, %v1691
        %v1693 = vmul.f32 %v1272, %v1085
        %v1694 = vmul.f32 %v1273, %v1084
        %v1695 = vadd.f32 %v1693, %v1694
        %v1696 = vadd.f32 %v1664, %v1692
        %v1697 = vadd.f32 %v1665, %v1695
        %v1698 = vmul.f32 %v1272, %v1086
        %v1699 = vmul.f32 %v1273, %v1087
        %v1700 = vsub.f32 %v1698, %v1699
        %v1701 = vmul.f32 %v1272, %v1087
        %v1702 = vmul.f32 %v1273, %v1086
        %v1703 = vadd.f32 %v1701, %v1702
        %v1704 = vadd.f32 %v1672, %v1700
        %v1705 = vadd.f32 %v1673, %v1703
        %v1706 = vmul.f32 %v1272, %v1088
        %v1707 = vmul.f32 %v1273, %v1089
        %v1708 = vsub.f32 %v1706, %v1707
        %v1709 = vmul.f32 %v1272, %v1089
        %v1710 = vmul.f32 %v1273, %v1088
        %v1711 = vadd.f32 %v1709, %v1710
        %v1712 = vadd.f32 %v1680, %v1708
        %v1713 = vadd.f32 %v1681, %v1711
        %v1714 = vmul.f32 %v1272, %v1090
        %v1715 = vmul.f32 %v1273, %v1091
        %v1716 = vsub.f32 %v1714, %v1715
        %v1717 = vmul.f32 %v1272, %v1091
        %v1718 = vmul.f32 %v1273, %v1090
        %v1719 = vadd.f32 %v1717, %v1718
        %v1720 = vadd.f32 %v1688, %v1716
        %v1721 = vadd.f32 %v1689, %v1719
        %v1722 = vmul.f32 %v1272, %v1092
        %v1723 = vmul.f32 %v1273, %v1093
        %v1724 = vsub.f32 %v1722, %v1723
        %v1725 = vmul.f32 %v1272, %v1093
        %v1726 = vmul.f32 %v1273, %v1092
        %v1727 = vadd.f32 %v1725, %v1726
        %v1728 = vadd.f32 %v1640, %v1724
        %v1729 = vadd.f32 %v1641, %v1727
        %v1730 = vmul.f32 %v1314, %v1084
        %v1731 = vmul.f32 %v1315, %v1085
        %v1732 = vsub.f32 %v1730, %v1731
        %v1733 = vmul.f32 %v1314, %v1085
        %v1734 = vmul.f32 %v1315, %v1084
        %v1735 = vadd.f32 %v1733, %v1734
        %v1736 = vadd.f32 %v1704, %v1732
        %v1737 = vadd.f32 %v1705, %v1735
        %v1738 = vmul.f32 %v1314, %v1086
        %v1739 = vmul.f32 %v1315, %v1087
        %v1740 = vsub.f32 %v1738, %v1739
        %v1741 = vmul.f32 %v1314, %v1087
        %v1742 = vmul.f32 %v1315, %v1086
        %v1743 = vadd.f32 %v1741, %v1742
        %v1744 = vadd.f32 %v1712, %v1740
        %v1745 = vadd.f32 %v1713, %v1743
        %v1746 = vmul.f32 %v1314, %v1088
        %v1747 = vmul.f32 %v1315, %v1089
        %v1748 = vsub.f32 %v1746, %v1747
        %v1749 = vmul.f32 %v1314, %v1089
        %v1750 = vmul.f32 %v1315, %v1088
        %v1751 = vadd.f32 %v1749, %v1750
        %v1752 = vadd.f32 %v1720, %v1748
        %v1753 = vadd.f32 %v1721, %v1751
        %v1754 = vmul.f32 %v1314, %v1090
        %v1755 = vmul.f32 %v1315, %v1091
        %v1756 = vsub.f32 %v1754, %v1755
        %v1757 = vmul.f32 %v1314, %v1091
        %v1758 = vmul.f32 %v1315, %v1090
        %v1759 = vadd.f32 %v1757, %v1758
        %v1760 = vadd.f32 %v1728, %v1756
        %v1761 = vadd.f32 %v1729, %v1759
        %v1762 = vmul.f32 %v1314, %v1092
        %v1763 = vmul.f32 %v1315, %v1093
        %v1764 = vsub.f32 %v1762, %v1763
        %v1765 = vmul.f32 %v1314, %v1093
        %v1766 = vmul.f32 %v1315, %v1092
        %v1767 = vadd.f32 %v1765, %v1766
        %v1768 = vadd.f32 %v1648, %v1764
        %v1769 = vadd.f32 %v1649, %v1767
        %v1770 = vmul.f32 %v1656, -0.046196964
        %v1771 = vmul.f32 %v1657, -0.14298688
        %v1772 = vadd.f32 %v1770, %v1771
        %v1773 = vmul.f32 %v1696, 0.035989475
        %v1774 = vadd.f32 %v1772, %v1773
        %v1775 = vmul.f32 %v1697, 0.15541695
        %v1776 = vadd.f32 %v1774, %v1775
        %v1777 = vmul.f32 %v1736, -0.2015692
        %v1778 = vadd.f32 %v1776, %v1777
        %v1779 = vmul.f32 %v1737, 0.21424623
        %v1780 = vadd.f32 %v1778, %v1779
        %v1781 = vmul.f32 %v1744, 0.19473803
        %v1782 = vadd.f32 %v1780, %v1781
        %v1783 = vmul.f32 %v1745, 0.044383384
        %v1784 = vadd.f32 %v1782, %v1783
        %v1785 = vmul.f32 %v1752, 0.25927806
        %v1786 = vadd.f32 %v1784, %v1785
        %v1787 = vmul.f32 %v1753, -0.11766501
        %v1788 = vadd.f32 %v1786, %v1787
        %v1789 = vmul.f32 %v1760, 0.020964665
        %v1790 = vadd.f32 %v1788, %v1789
        %v1791 = vmul.f32 %v1761, -0.13636358
        %v1792 = vadd.f32 %v1790, %v1791
        %v1793 = vmul.f32 %v1768, 0.12863581
        %v1794 = vadd.f32 %v1792, %v1793
        %v1795 = vmul.f32 %v1769, 0.11972093
        %v1796 = vadd.f32 %v1794, %v1795
        %v1797 = vmul.f32 %v1796, %v959
        %v1798 = vadd.f32 %v715, %v1797
        %v1799 = vmul.f32 %v1656, 0.21889077
        %v1800 = vmul.f32 %v1657, 0.09183722
        %v1801 = vadd.f32 %v1799, %v1800
        %v1802 = vmul.f32 %v1696, -0.33452132
        %v1803 = vadd.f32 %v1801, %v1802
        %v1804 = vmul.f32 %v1697, -0.031786148
        %v1805 = vadd.f32 %v1803, %v1804
        %v1806 = vmul.f32 %v1736, -0.032966375
        %v1807 = vadd.f32 %v1805, %v1806
        %v1808 = vmul.f32 %v1737, -0.34948376
        %v1809 = vadd.f32 %v1807, %v1808
        %v1810 = vmul.f32 %v1744, -0.06677088
        %v1811 = vadd.f32 %v1809, %v1810
        %v1812 = vmul.f32 %v1745, -0.15196066
        %v1813 = vadd.f32 %v1811, %v1812
        %v1814 = vmul.f32 %v1752, 0.35240436
        %v1815 = vadd.f32 %v1813, %v1814
        %v1816 = vmul.f32 %v1753, -0.20369999
        %v1817 = vadd.f32 %v1815, %v1816
        %v1818 = vmul.f32 %v1760, -0.24011882
        %v1819 = vadd.f32 %v1817, %v1818
        %v1820 = vmul.f32 %v1761, 0.001583772
        %v1821 = vadd.f32 %v1819, %v1820
        %v1822 = vmul.f32 %v1768, 0.12089588
        %v1823 = vadd.f32 %v1821, %v1822
        %v1824 = vmul.f32 %v1769, -0.037262555
        %v1825 = vadd.f32 %v1823, %v1824
        %v1826 = vmul.f32 %v1825, %v961
        %v1827 = vadd.f32 %v736, %v1826
        %v1828 = vld [vmem:[%s938] sm:$0xff]
        %v1829 = vld [vmem:[%s940] sm:$0xff]
        %v1830 = vld [vmem:[%s942] sm:$0xff]
        %v1831 = vld [vmem:[%s944] sm:$0xff]
        %v1832 = vld [vmem:[%s946] sm:$0xff]
        %v1833 = vld [vmem:[%s948] sm:$0xff]
        %v1834 = vld [vmem:[%s950] sm:$0xff]
        %v1835 = vld [vmem:[%s952] sm:$0xff]
        %v1836 = vld [vmem:[%s954] sm:$0xff]
        %v1837 = vld [vmem:[%s956] sm:$0xff]
        %v1838 = vmul.f32 %v972, %v1828
        %v1839 = vmul.f32 %v973, %v1829
        %v1840 = vsub.f32 %v1838, %v1839
        %v1841 = vmul.f32 %v972, %v1829
        %v1842 = vmul.f32 %v973, %v1828
        %v1843 = vadd.f32 %v1841, %v1842
        %v1844 = vmul.f32 %v972, %v1830
        %v1845 = vmul.f32 %v973, %v1831
        %v1846 = vsub.f32 %v1844, %v1845
        %v1847 = vmul.f32 %v972, %v1831
        %v1848 = vmul.f32 %v973, %v1830
        %v1849 = vadd.f32 %v1847, %v1848
        %v1850 = vmul.f32 %v972, %v1832
        %v1851 = vmul.f32 %v973, %v1833
        %v1852 = vsub.f32 %v1850, %v1851
        %v1853 = vmul.f32 %v972, %v1833
        %v1854 = vmul.f32 %v973, %v1832
        %v1855 = vadd.f32 %v1853, %v1854
        %v1856 = vmul.f32 %v972, %v1834
        %v1857 = vmul.f32 %v973, %v1835
        %v1858 = vsub.f32 %v1856, %v1857
        %v1859 = vmul.f32 %v972, %v1835
        %v1860 = vmul.f32 %v973, %v1834
        %v1861 = vadd.f32 %v1859, %v1860
        %v1862 = vmul.f32 %v972, %v1836
        %v1863 = vmul.f32 %v973, %v1837
        %v1864 = vsub.f32 %v1862, %v1863
        %v1865 = vmul.f32 %v972, %v1837
        %v1866 = vmul.f32 %v973, %v1836
        %v1867 = vadd.f32 %v1865, %v1866
        %v1868 = vmul.f32 %v1004, %v1828
        %v1869 = vmul.f32 %v1005, %v1829
        %v1870 = vsub.f32 %v1868, %v1869
        %v1871 = vmul.f32 %v1004, %v1829
        %v1872 = vmul.f32 %v1005, %v1828
        %v1873 = vadd.f32 %v1871, %v1872
        %v1874 = vadd.f32 %v1846, %v1870
        %v1875 = vadd.f32 %v1849, %v1873
        %v1876 = vmul.f32 %v1004, %v1830
        %v1877 = vmul.f32 %v1005, %v1831
        %v1878 = vsub.f32 %v1876, %v1877
        %v1879 = vmul.f32 %v1004, %v1831
        %v1880 = vmul.f32 %v1005, %v1830
        %v1881 = vadd.f32 %v1879, %v1880
        %v1882 = vadd.f32 %v1852, %v1878
        %v1883 = vadd.f32 %v1855, %v1881
        %v1884 = vmul.f32 %v1004, %v1832
        %v1885 = vmul.f32 %v1005, %v1833
        %v1886 = vsub.f32 %v1884, %v1885
        %v1887 = vmul.f32 %v1004, %v1833
        %v1888 = vmul.f32 %v1005, %v1832
        %v1889 = vadd.f32 %v1887, %v1888
        %v1890 = vadd.f32 %v1858, %v1886
        %v1891 = vadd.f32 %v1861, %v1889
        %v1892 = vmul.f32 %v1004, %v1834
        %v1893 = vmul.f32 %v1005, %v1835
        %v1894 = vsub.f32 %v1892, %v1893
        %v1895 = vmul.f32 %v1004, %v1835
        %v1896 = vmul.f32 %v1005, %v1834
        %v1897 = vadd.f32 %v1895, %v1896
        %v1898 = vadd.f32 %v1864, %v1894
        %v1899 = vadd.f32 %v1867, %v1897
        %v1900 = vmul.f32 %v1004, %v1836
        %v1901 = vmul.f32 %v1005, %v1837
        %v1902 = vsub.f32 %v1900, %v1901
        %v1903 = vmul.f32 %v1004, %v1837
        %v1904 = vmul.f32 %v1005, %v1836
        %v1905 = vadd.f32 %v1903, %v1904
        %v1906 = vmul.f32 %v1044, %v1828
        %v1907 = vmul.f32 %v1045, %v1829
        %v1908 = vsub.f32 %v1906, %v1907
        %v1909 = vmul.f32 %v1044, %v1829
        %v1910 = vmul.f32 %v1045, %v1828
        %v1911 = vadd.f32 %v1909, %v1910
        %v1912 = vadd.f32 %v1882, %v1908
        %v1913 = vadd.f32 %v1883, %v1911
        %v1914 = vmul.f32 %v1044, %v1830
        %v1915 = vmul.f32 %v1045, %v1831
        %v1916 = vsub.f32 %v1914, %v1915
        %v1917 = vmul.f32 %v1044, %v1831
        %v1918 = vmul.f32 %v1045, %v1830
        %v1919 = vadd.f32 %v1917, %v1918
        %v1920 = vadd.f32 %v1890, %v1916
        %v1921 = vadd.f32 %v1891, %v1919
        %v1922 = vmul.f32 %v1044, %v1832
        %v1923 = vmul.f32 %v1045, %v1833
        %v1924 = vsub.f32 %v1922, %v1923
        %v1925 = vmul.f32 %v1044, %v1833
        %v1926 = vmul.f32 %v1045, %v1832
        %v1927 = vadd.f32 %v1925, %v1926
        %v1928 = vadd.f32 %v1898, %v1924
        %v1929 = vadd.f32 %v1899, %v1927
        %v1930 = vmul.f32 %v1044, %v1834
        %v1931 = vmul.f32 %v1045, %v1835
        %v1932 = vsub.f32 %v1930, %v1931
        %v1933 = vmul.f32 %v1044, %v1835
        %v1934 = vmul.f32 %v1045, %v1834
        %v1935 = vadd.f32 %v1933, %v1934
        %v1936 = vadd.f32 %v1902, %v1932
        %v1937 = vadd.f32 %v1905, %v1935
        %v1938 = vmul.f32 %v1044, %v1836
        %v1939 = vmul.f32 %v1045, %v1837
        %v1940 = vsub.f32 %v1938, %v1939
        %v1941 = vmul.f32 %v1044, %v1837
        %v1942 = vmul.f32 %v1045, %v1836
        %v1943 = vadd.f32 %v1941, %v1942
        %v1944 = vmul.f32 %v1094, %v1414
        %v1945 = vmul.f32 %v1095, %v1415
        %v1946 = vsub.f32 %v1944, %v1945
        %v1947 = vmul.f32 %v1094, %v1415
        %v1948 = vmul.f32 %v1095, %v1414
        %v1949 = vadd.f32 %v1947, %v1948
        %v1950 = vadd.f32 %v1840, %v1946
        %v1951 = vadd.f32 %v1843, %v1949
        %v1952 = vmul.f32 %v1094, %v1416
        %v1953 = vmul.f32 %v1095, %v1417
        %v1954 = vsub.f32 %v1952, %v1953
        %v1955 = vmul.f32 %v1094, %v1417
        %v1956 = vmul.f32 %v1095, %v1416
        %v1957 = vadd.f32 %v1955, %v1956
        %v1958 = vadd.f32 %v1874, %v1954
        %v1959 = vadd.f32 %v1875, %v1957
        %v1960 = vmul.f32 %v1094, %v1418
        %v1961 = vmul.f32 %v1095, %v1419
        %v1962 = vsub.f32 %v1960, %v1961
        %v1963 = vmul.f32 %v1094, %v1419
        %v1964 = vmul.f32 %v1095, %v1418
        %v1965 = vadd.f32 %v1963, %v1964
        %v1966 = vadd.f32 %v1912, %v1962
        %v1967 = vadd.f32 %v1913, %v1965
        %v1968 = vmul.f32 %v1094, %v1420
        %v1969 = vmul.f32 %v1095, %v1421
        %v1970 = vsub.f32 %v1968, %v1969
        %v1971 = vmul.f32 %v1094, %v1421
        %v1972 = vmul.f32 %v1095, %v1420
        %v1973 = vadd.f32 %v1971, %v1972
        %v1974 = vadd.f32 %v1920, %v1970
        %v1975 = vadd.f32 %v1921, %v1973
        %v1976 = vmul.f32 %v1094, %v1422
        %v1977 = vmul.f32 %v1095, %v1423
        %v1978 = vsub.f32 %v1976, %v1977
        %v1979 = vmul.f32 %v1094, %v1423
        %v1980 = vmul.f32 %v1095, %v1422
        %v1981 = vadd.f32 %v1979, %v1980
        %v1982 = vadd.f32 %v1928, %v1978
        %v1983 = vadd.f32 %v1929, %v1981
        %v1984 = vmul.f32 %v1136, %v1414
        %v1985 = vmul.f32 %v1137, %v1415
        %v1986 = vsub.f32 %v1984, %v1985
        %v1987 = vmul.f32 %v1136, %v1415
        %v1988 = vmul.f32 %v1137, %v1414
        %v1989 = vadd.f32 %v1987, %v1988
        %v1990 = vadd.f32 %v1958, %v1986
        %v1991 = vadd.f32 %v1959, %v1989
        %v1992 = vmul.f32 %v1136, %v1416
        %v1993 = vmul.f32 %v1137, %v1417
        %v1994 = vsub.f32 %v1992, %v1993
        %v1995 = vmul.f32 %v1136, %v1417
        %v1996 = vmul.f32 %v1137, %v1416
        %v1997 = vadd.f32 %v1995, %v1996
        %v1998 = vadd.f32 %v1966, %v1994
        %v1999 = vadd.f32 %v1967, %v1997
        %v2000 = vmul.f32 %v1136, %v1418
        %v2001 = vmul.f32 %v1137, %v1419
        %v2002 = vsub.f32 %v2000, %v2001
        %v2003 = vmul.f32 %v1136, %v1419
        %v2004 = vmul.f32 %v1137, %v1418
        %v2005 = vadd.f32 %v2003, %v2004
        %v2006 = vadd.f32 %v1974, %v2002
        %v2007 = vadd.f32 %v1975, %v2005
        %v2008 = vmul.f32 %v1136, %v1420
        %v2009 = vmul.f32 %v1137, %v1421
        %v2010 = vsub.f32 %v2008, %v2009
        %v2011 = vmul.f32 %v1136, %v1421
        %v2012 = vmul.f32 %v1137, %v1420
        %v2013 = vadd.f32 %v2011, %v2012
        %v2014 = vadd.f32 %v1982, %v2010
        %v2015 = vadd.f32 %v1983, %v2013
        %v2016 = vmul.f32 %v1136, %v1422
        %v2017 = vmul.f32 %v1137, %v1423
        %v2018 = vsub.f32 %v2016, %v2017
        %v2019 = vmul.f32 %v1136, %v1423
        %v2020 = vmul.f32 %v1137, %v1422
        %v2021 = vadd.f32 %v2019, %v2020
        %v2022 = vadd.f32 %v1936, %v2018
        %v2023 = vadd.f32 %v1937, %v2021
        %v2024 = vmul.f32 %v1178, %v1414
        %v2025 = vmul.f32 %v1179, %v1415
        %v2026 = vsub.f32 %v2024, %v2025
        %v2027 = vmul.f32 %v1178, %v1415
        %v2028 = vmul.f32 %v1179, %v1414
        %v2029 = vadd.f32 %v2027, %v2028
        %v2030 = vadd.f32 %v1998, %v2026
        %v2031 = vadd.f32 %v1999, %v2029
        %v2032 = vmul.f32 %v1178, %v1416
        %v2033 = vmul.f32 %v1179, %v1417
        %v2034 = vsub.f32 %v2032, %v2033
        %v2035 = vmul.f32 %v1178, %v1417
        %v2036 = vmul.f32 %v1179, %v1416
        %v2037 = vadd.f32 %v2035, %v2036
        %v2038 = vadd.f32 %v2006, %v2034
        %v2039 = vadd.f32 %v2007, %v2037
        %v2040 = vmul.f32 %v1178, %v1418
        %v2041 = vmul.f32 %v1179, %v1419
        %v2042 = vsub.f32 %v2040, %v2041
        %v2043 = vmul.f32 %v1178, %v1419
        %v2044 = vmul.f32 %v1179, %v1418
        %v2045 = vadd.f32 %v2043, %v2044
        %v2046 = vadd.f32 %v2014, %v2042
        %v2047 = vadd.f32 %v2015, %v2045
        %v2048 = vmul.f32 %v1178, %v1420
        %v2049 = vmul.f32 %v1179, %v1421
        %v2050 = vsub.f32 %v2048, %v2049
        %v2051 = vmul.f32 %v1178, %v1421
        %v2052 = vmul.f32 %v1179, %v1420
        %v2053 = vadd.f32 %v2051, %v2052
        %v2054 = vadd.f32 %v2022, %v2050
        %v2055 = vadd.f32 %v2023, %v2053
        %v2056 = vmul.f32 %v1178, %v1422
        %v2057 = vmul.f32 %v1179, %v1423
        %v2058 = vsub.f32 %v2056, %v2057
        %v2059 = vmul.f32 %v1178, %v1423
        %v2060 = vmul.f32 %v1179, %v1422
        %v2061 = vadd.f32 %v2059, %v2060
        %v2062 = vadd.f32 %v1940, %v2058
        %v2063 = vadd.f32 %v1943, %v2061
        %v2064 = vmul.f32 %v1230, %v962
        %v2065 = vmul.f32 %v1231, %v963
        %v2066 = vsub.f32 %v2064, %v2065
        %v2067 = vmul.f32 %v1230, %v963
        %v2068 = vmul.f32 %v1231, %v962
        %v2069 = vadd.f32 %v2067, %v2068
        %v2070 = vadd.f32 %v1950, %v2066
        %v2071 = vadd.f32 %v1951, %v2069
        %v2072 = vmul.f32 %v1230, %v964
        %v2073 = vmul.f32 %v1231, %v965
        %v2074 = vsub.f32 %v2072, %v2073
        %v2075 = vmul.f32 %v1230, %v965
        %v2076 = vmul.f32 %v1231, %v964
        %v2077 = vadd.f32 %v2075, %v2076
        %v2078 = vadd.f32 %v1990, %v2074
        %v2079 = vadd.f32 %v1991, %v2077
        %v2080 = vmul.f32 %v1230, %v966
        %v2081 = vmul.f32 %v1231, %v967
        %v2082 = vsub.f32 %v2080, %v2081
        %v2083 = vmul.f32 %v1230, %v967
        %v2084 = vmul.f32 %v1231, %v966
        %v2085 = vadd.f32 %v2083, %v2084
        %v2086 = vadd.f32 %v2030, %v2082
        %v2087 = vadd.f32 %v2031, %v2085
        %v2088 = vmul.f32 %v1230, %v968
        %v2089 = vmul.f32 %v1231, %v969
        %v2090 = vsub.f32 %v2088, %v2089
        %v2091 = vmul.f32 %v1230, %v969
        %v2092 = vmul.f32 %v1231, %v968
        %v2093 = vadd.f32 %v2091, %v2092
        %v2094 = vadd.f32 %v2038, %v2090
        %v2095 = vadd.f32 %v2039, %v2093
        %v2096 = vmul.f32 %v1230, %v970
        %v2097 = vmul.f32 %v1231, %v971
        %v2098 = vsub.f32 %v2096, %v2097
        %v2099 = vmul.f32 %v1230, %v971
        %v2100 = vmul.f32 %v1231, %v970
        %v2101 = vadd.f32 %v2099, %v2100
        %v2102 = vadd.f32 %v2046, %v2098
        %v2103 = vadd.f32 %v2047, %v2101
        %v2104 = vmul.f32 %v1272, %v962
        %v2105 = vmul.f32 %v1273, %v963
        %v2106 = vsub.f32 %v2104, %v2105
        %v2107 = vmul.f32 %v1272, %v963
        %v2108 = vmul.f32 %v1273, %v962
        %v2109 = vadd.f32 %v2107, %v2108
        %v2110 = vadd.f32 %v2078, %v2106
        %v2111 = vadd.f32 %v2079, %v2109
        %v2112 = vmul.f32 %v1272, %v964
        %v2113 = vmul.f32 %v1273, %v965
        %v2114 = vsub.f32 %v2112, %v2113
        %v2115 = vmul.f32 %v1272, %v965
        %v2116 = vmul.f32 %v1273, %v964
        %v2117 = vadd.f32 %v2115, %v2116
        %v2118 = vadd.f32 %v2086, %v2114
        %v2119 = vadd.f32 %v2087, %v2117
        %v2120 = vmul.f32 %v1272, %v966
        %v2121 = vmul.f32 %v1273, %v967
        %v2122 = vsub.f32 %v2120, %v2121
        %v2123 = vmul.f32 %v1272, %v967
        %v2124 = vmul.f32 %v1273, %v966
        %v2125 = vadd.f32 %v2123, %v2124
        %v2126 = vadd.f32 %v2094, %v2122
        %v2127 = vadd.f32 %v2095, %v2125
        %v2128 = vmul.f32 %v1272, %v968
        %v2129 = vmul.f32 %v1273, %v969
        %v2130 = vsub.f32 %v2128, %v2129
        %v2131 = vmul.f32 %v1272, %v969
        %v2132 = vmul.f32 %v1273, %v968
        %v2133 = vadd.f32 %v2131, %v2132
        %v2134 = vadd.f32 %v2102, %v2130
        %v2135 = vadd.f32 %v2103, %v2133
        %v2136 = vmul.f32 %v1272, %v970
        %v2137 = vmul.f32 %v1273, %v971
        %v2138 = vsub.f32 %v2136, %v2137
        %v2139 = vmul.f32 %v1272, %v971
        %v2140 = vmul.f32 %v1273, %v970
        %v2141 = vadd.f32 %v2139, %v2140
        %v2142 = vadd.f32 %v2054, %v2138
        %v2143 = vadd.f32 %v2055, %v2141
        %v2144 = vmul.f32 %v1314, %v962
        %v2145 = vmul.f32 %v1315, %v963
        %v2146 = vsub.f32 %v2144, %v2145
        %v2147 = vmul.f32 %v1314, %v963
        %v2148 = vmul.f32 %v1315, %v962
        %v2149 = vadd.f32 %v2147, %v2148
        %v2150 = vadd.f32 %v2118, %v2146
        %v2151 = vadd.f32 %v2119, %v2149
        %v2152 = vmul.f32 %v1314, %v964
        %v2153 = vmul.f32 %v1315, %v965
        %v2154 = vsub.f32 %v2152, %v2153
        %v2155 = vmul.f32 %v1314, %v965
        %v2156 = vmul.f32 %v1315, %v964
        %v2157 = vadd.f32 %v2155, %v2156
        %v2158 = vadd.f32 %v2126, %v2154
        %v2159 = vadd.f32 %v2127, %v2157
        %v2160 = vmul.f32 %v1314, %v966
        %v2161 = vmul.f32 %v1315, %v967
        %v2162 = vsub.f32 %v2160, %v2161
        %v2163 = vmul.f32 %v1314, %v967
        %v2164 = vmul.f32 %v1315, %v966
        %v2165 = vadd.f32 %v2163, %v2164
        %v2166 = vadd.f32 %v2134, %v2162
        %v2167 = vadd.f32 %v2135, %v2165
        %v2168 = vmul.f32 %v1314, %v968
        %v2169 = vmul.f32 %v1315, %v969
        %v2170 = vsub.f32 %v2168, %v2169
        %v2171 = vmul.f32 %v1314, %v969
        %v2172 = vmul.f32 %v1315, %v968
        %v2173 = vadd.f32 %v2171, %v2172
        %v2174 = vadd.f32 %v2142, %v2170
        %v2175 = vadd.f32 %v2143, %v2173
        %v2176 = vmul.f32 %v1314, %v970
        %v2177 = vmul.f32 %v1315, %v971
        %v2178 = vsub.f32 %v2176, %v2177
        %v2179 = vmul.f32 %v1314, %v971
        %v2180 = vmul.f32 %v1315, %v970
        %v2181 = vadd.f32 %v2179, %v2180
        %v2182 = vadd.f32 %v2062, %v2178
        %v2183 = vadd.f32 %v2063, %v2181
        %v2184 = vmul.f32 %v2070, -0.3185529
        %v2185 = vmul.f32 %v2071, -0.25847274
        %v2186 = vadd.f32 %v2184, %v2185
        %v2187 = vmul.f32 %v2110, 0.3304344
        %v2188 = vadd.f32 %v2186, %v2187
        %v2189 = vmul.f32 %v2111, 0.12474518
        %v2190 = vadd.f32 %v2188, %v2189
        %v2191 = vmul.f32 %v2150, -0.048573907
        %v2192 = vadd.f32 %v2190, %v2191
        %v2193 = vmul.f32 %v2151, 0.37693238
        %v2194 = vadd.f32 %v2192, %v2193
        %v2195 = vmul.f32 %v2158, 0.22510207
        %v2196 = vadd.f32 %v2194, %v2195
        %v2197 = vmul.f32 %v2159, 0.28840718
        %v2198 = vadd.f32 %v2196, %v2197
        %v2199 = vmul.f32 %v2166, 0.37740093
        %v2200 = vadd.f32 %v2198, %v2199
        %v2201 = vmul.f32 %v2167, -0.19186789
        %v2202 = vadd.f32 %v2200, %v2201
        %v2203 = vmul.f32 %v2174, -0.19097923
        %v2204 = vadd.f32 %v2202, %v2203
        %v2205 = vmul.f32 %v2175, -0.07057974
        %v2206 = vadd.f32 %v2204, %v2205
        %v2207 = vmul.f32 %v2182, 0.018625943
        %v2208 = vadd.f32 %v2206, %v2207
        %v2209 = vmul.f32 %v2183, -0.18040834
        %v2210 = vadd.f32 %v2208, %v2209
        %v2211 = vmul.f32 %v2210, %v959
        %v2212 = vadd.f32 %v869, %v2211
        %v2213 = vmul.f32 %v2070, 0.14674374
        %v2214 = vmul.f32 %v2071, -0.085594274
        %v2215 = vadd.f32 %v2213, %v2214
        %v2216 = vmul.f32 %v2110, -0.34217963
        %v2217 = vadd.f32 %v2215, %v2216
        %v2218 = vmul.f32 %v2111, -0.19856255
        %v2219 = vadd.f32 %v2217, %v2218
        %v2220 = vmul.f32 %v2150, 0.30976453
        %v2221 = vadd.f32 %v2219, %v2220
        %v2222 = vmul.f32 %v2151, 0.21504784
        %v2223 = vadd.f32 %v2221, %v2222
        %v2224 = vmul.f32 %v2158, -0.03953595
        %v2225 = vadd.f32 %v2223, %v2224
        %v2226 = vmul.f32 %v2159, 0.09877595
        %v2227 = vadd.f32 %v2225, %v2226
        %v2228 = vmul.f32 %v2166, -0.052229263
        %v2229 = vadd.f32 %v2227, %v2228
        %v2230 = vmul.f32 %v2167, 0.1904965
        %v2231 = vadd.f32 %v2229, %v2230
        %v2232 = vmul.f32 %v2174, -0.08164634
        %v2233 = vadd.f32 %v2231, %v2232
        %v2234 = vmul.f32 %v2175, 0.19842392
        %v2235 = vadd.f32 %v2233, %v2234
        %v2236 = vmul.f32 %v2182, -0.1693283
        %v2237 = vadd.f32 %v2235, %v2236
        %v2238 = vmul.f32 %v2183, 0.31764528
        %v2239 = vadd.f32 %v2237, %v2238
        %v2240 = vmul.f32 %v2239, %v961
        %v2241 = vadd.f32 %v890, %v2240
        %2242 = vst [vmem:[%s199] sm:$0xff] %v1384
        %s2243 = scalar_lea.vmem %s199, 8 [#allocation11]
        %2244 = vst [vmem:[%s2243] sm:$0xff] %v1798
        %s2245 = scalar_lea.vmem %s199, 16 [#allocation11]
        %2246 = vst [vmem:[%s2245] sm:$0xff] %v2212
        %s2247 = scalar_lea.vmem %s199, 24 [#allocation11]
        %2248 = vst [vmem:[%s2247] sm:$0xff] %v1413
        %s2249 = scalar_lea.vmem %s199, 32 [#allocation11]
        %2250 = vst [vmem:[%s2249] sm:$0xff] %v1827
        %s2251 = scalar_lea.vmem %s199, 40 [#allocation11]
        %2252 = vst [vmem:[%s2251] sm:$0xff] %v2241
        %s2253 = sand.u32 %s82, 1
        %s2254 = scalar_lea.sflag [#allocation8], %s2253
        %s2255 = sand.u32 %s82, 1
        %s2256 = smul.addr %s2255, 48
        %s2257 = scalar_lea.vmem [#allocation11], %s2256
        // Predicated region
        $region37: #{tpu_custom_call.1} parent=27 // pred_check
          %p2258 = pneg %p92
        $region38: #{tpu_custom_call.1} parent=27 // pred_check_branch
          %2260 = sbr.rel (%p2258) target = $region40
        $region39: #{tpu_custom_call.1} parent=27 // pred_region
          %s2262 = ssub.s32 768, 768
          %2263 = vsyncadd %s2254, %s2262
          %s2264 = smul.addr %s22, 128
          %s2265 = scalar_lea.hbm %s2, %s2264
          %s2266 = sshll.u32 %s2257, 4
          %s2267 = int_to_ptr.vmem [resolvable:$true] %s2266
          %2272 = dma.vmem_to_hbm [thread:$0]  %s2267, 768, %s2265, %s2254, 128, 1024, 8
        $region40: #{tpu_custom_call.1} parent=27 // pred_fallthru
          _
      $region28: #{tpu_custom_call.1} parent=5 // pred_fallthru
        _
      %p2273 = scmp.le.s32.totalorder 2, %s17
      // Predicated region
      $region41: #{tpu_custom_call.1} parent=5 // pred_check
        %p2274 = pneg %p2273
      $region42: #{tpu_custom_call.1} parent=5 // pred_check_branch
        %2276 = sbr.rel (%p2274) target = $region44
      $region43: #{tpu_custom_call.1} parent=5 // pred_region
        %s2277 = ssub.s32 %s17, 2
        // Predicated region
        $region45: #{tpu_custom_call.1} parent=43 // pred_check
          %p2278 = pneg %p98
        $region46: #{tpu_custom_call.1} parent=43 // pred_check_branch
          %2280 = sbr.rel (%p2278) target = $region48
        $region47: #{tpu_custom_call.1} parent=43 // pred_region
          %s2281 = sand.u32 %s83, 1
          %s2282 = scalar_lea.sflag [#allocation8], %s2281
          %s2283 = sand.u32 %s83, 1
          %s2284 = smul.addr %s2283, 48
          %s2285 = scalar_lea.vmem [#allocation11], %s2284
          %2286 = dma.done %s2282, 768
        $region48: #{tpu_custom_call.1} parent=43 // pred_fallthru
          _
      $region44: #{tpu_custom_call.1} parent=5 // pred_fallthru
        _
    $region6: #{tpu_custom_call.1} parent=1 // loop_footer
      %s21 = sadd.s32 1, %s17
    $region7: #{tpu_custom_call.1} parent=1 // loop_footer_branch
      %16 = sbr.rel target = $region3
    $region8: #{tpu_custom_call.1} parent=1 // loop_exit
      _
    %2287 = vsyncpa [#allocation7], 1
    %s2288 = scalar_lea.sflag [#allocation7], 1
    %2289 = vsyncpa %s2288, 1
    %2290 = vsyncpa [#allocation10], 1
    %s2291 = scalar_lea.sflag [#allocation10], 1
    %2292 = vsyncpa %s2291, 1
    %2293 = vsyncpa [#allocation8], 1
    %s2294 = scalar_lea.sflag [#allocation8], 1
    %2295 = vsyncpa %s2294, 1

</llo_original>
